<compile_context>
chip_gen: v6e
topology: v6e:2x2x1
jax: 0.10.0
libtpu: 0.0.40
codegen_flags: <defaults>
</compile_context>

<pallas_src>
import math
from functools import partial

import jax
import jax.numpy as jnp
from jax import lax
from jax.experimental import pallas as pl
from jax.experimental.pallas import tpu as pltpu

_PAD = 8        # 8-aligned left margin of the column-padded scratch (data at cols [8, 8+W))
_WPAD = 16      # total extra scratch columns; col 7 / col W+8 are the (masked) conv halo


def _conv_shuffle_gelu_kernel(
    xm_ref, xt_ref, xb_ref, w_ref, b_ref,       # inputs
    o_ref,                                      # output
    xs_scr,                                     # VMEM scratch (TH+2, W+_WPAD, Cin), matmul dtype
    *, TH, W, Cin, r, out_dim, CH, approx_gelu,
):
    """One (batch n, row-tile i) grid step.

    xm_ref : (1, TH, W, Cin)       input rows [i*TH, i*TH+TH)
    xt_ref : (1, 1,  W, Cin)       input row  i*TH-1   (clamped; masked to 0 when i == 0)
    xb_ref : (1, 1,  W, Cin)       input row  i*TH+TH  (clamped; masked to 0 when i == last)
    w_ref  : (9*Cin, r*r*out_dim)  conv weight, rows = (ky, kx, cin), cols = (ry, rx, c)
    b_ref  : (1, r*r*out_dim)      bias in the same (ry, rx, c) order, f32
    o_ref  : (1, TH, r, W, r*out_dim) pixel-shuffled, GELU'd output tile
    """
    K = r * out_dim
    Cconv = r * r * out_dim
    dt = xs_scr.dtype
    i = pl.program_id(1)

    # ---- build the row-halo'd tile slab: single cast to matmul dtype, aligned stores only.
    xs_scr[1:TH + 1, _PAD:_PAD + W, :] = xm_ref[0].astype(dt)
    top = xt_ref[0].astype(dt)
    bot = xb_ref[0].astype(dt)
    xs_scr[0:1, _PAD:_PAD + W, :] = jnp.where(i == 0, jnp.zeros_like(top), top)
    xs_scr[TH + 1:TH + 2, _PAD:_PAD + W, :] = jnp.where(
        i == pl.num_programs(1) - 1, jnp.zeros_like(bot), bot)

    # Column index along W (hoisted out of the chunk loop); used to zero the conv halo
    # column of the shifted views (scratch cols 7 / W+8 hold garbage, never real data).
    wcol = lax.broadcasted_iota(jnp.int32, (1, W, 1), 1)
    zero = jnp.zeros((), dt)
    inv_sqrt2 = jnp.float32(1.0 / math.sqrt(2.0))
    tanh_c = jnp.float32(math.sqrt(2.0 / math.pi))

    def process_chunk(base):
        acc = jnp.zeros((CH * W, Cconv), jnp.float32)
        for dx in range(3):
            # dx-shifted view of the chunk:  shifted[j, w, c] == x[row0 + j - 1, w + dx - 1, c]
            # (one relayout per dx thanks to the aligned, column-padded scratch; the view is
            #  shared by the 3 dy taps below, whose slices are free leading-dim views).
            shifted = xs_scr[pl.ds(base, CH + 2), pl.ds(_PAD - 1 + dx, W), :]
            if dx == 0:
                shifted = jnp.where(wcol == 0, zero, shifted)          # left conv padding
            elif dx == 2:
                shifted = jnp.where(wcol == W - 1, zero, shifted)      # right conv padding
            for dy in range(3):
                a = shifted[dy:dy + CH].reshape(CH * W, Cin)
                wk = w_ref[(dy * 3 + dx) * Cin:(dy * 3 + dx + 1) * Cin, :]
                acc = acc + jnp.dot(a, wk, preferred_element_type=jnp.float32)
        acc = acc + b_ref[...]

        # GELU epilogue (exact erf matches torch.nn.GELU default numerics).
        if approx_gelu:
            y = 0.5 * acc * (1.0 + jnp.tanh(tanh_c * (acc + 0.044715 * acc * acc * acc)))
        else:
            y = 0.5 * acc * (1.0 + lax.erf(acc * inv_sqrt2))

        # Fused PixelShuffle: columns are already in (ry, rx, c) order -> pure slicing.
        for ry in range(r):
            o_ref[0, pl.ds(base, CH), ry, :, :] = (
                y[:, ry * K:(ry + 1) * K].reshape(CH, W, K).astype(o_ref.dtype))

    nchunks = TH // CH
    if nchunks == 1:
        process_chunk(0)
    elif nchunks <= 8:
        for c in range(nchunks):                     # static unroll for short trip counts
            process_chunk(c * CH)
    else:
        def body(c, carry):
            process_chunk(c * CH)
            return carry
        lax.fori_loop(0, nchunks, body, 0)


def _pick_chunk_rows(TH, W, Cin, Cconv, mdt_bytes, f32_cap):
    """Largest divisor CH of TH whose per-chunk live set (shifted view + f32 acc + GELU temp)
    fits f32_cap -> bounds VMEM/vreg pressure independently of TH (v7x guidance)."""
    best = 1
    for d in range(1, TH + 1):
        if TH % d:
            continue
        live = (d + 2) * W * Cin * mdt_bytes + 2 * d * W * Cconv * 4
        if live <= f32_cap:
            best = d
    return best


def _working_set_bytes(TH, CH, W, Cin, Cconv, in_bytes, out_bytes, mdt_bytes):
    inp = 2 * TH * W * Cin * in_bytes                      # main tile, double-buffered
    halo = 2 * 2 * W * Cin * in_bytes                      # two 1-row halos, double-buffered
    wgt = 2 * (9 * Cin * Cconv * mdt_bytes + 4 * Cconv)    # conservative: 2 weight buffers
    outp = 2 * TH * W * Cconv * out_bytes                  # output tile, double-buffered
    scr = (TH + 2) * (W + _WPAD) * Cin * mdt_bytes         # column-padded scratch
    chnk = (CH + 2) * W * Cin * mdt_bytes + 2 * CH * W * Cconv * 4
    return inp + halo + wgt + outp + scr + chnk


def _pick_tile_rows(N, H, W, Cin, Cconv, in_bytes, out_bytes, mdt_bytes,
                    budget, f32_cap, prefer_multi_row_tiles):
    """Largest divisor TH of H (TH = H allowed, prime H included) whose working set fits.
    On v7x with N == 1, prefer >= 2 row tiles so both TensorCores get grid points."""
    fits = []
    for th in [d for d in range(H, 0, -1) if H % d == 0]:
        ch = _pick_chunk_rows(th, W, Cin, Cconv, mdt_bytes, f32_cap)
        if _working_set_bytes(th, ch, W, Cin, Cconv, in_bytes, out_bytes, mdt_bytes) <= budget:
            fits.append((th, ch))
    if not fits:
        th = 1
        return th, _pick_chunk_rows(th, W, Cin, Cconv, mdt_bytes, f32_cap)
    th, ch = fits[0]
    if prefer_multi_row_tiles and (H // th) < 2:
        for th2, ch2 in fits[1:]:
            if H // th2 >= 2 and th2 * W >= 512:
                return th2, ch2
    return th, ch


def _is_v7x():
    try:
        return "v7" in jax.devices()[0].device_kind.lower()
    except Exception:
        return False


def upsample_forward(x, weight, bias, *, up_scale, out_dim,
                     matmul_dtype=jnp.bfloat16, tile_rows=None, chunk_rows=None,
                     approx_gelu=False):
    """x: (N, H, W, Cin) NHWC.  weight: (3, 3, Cin, r^2*out_dim) HWIO.  bias: (r^2*out_dim,).
    Returns (N, H*r, W*r, out_dim) NHWC, matching the PyTorch module."""
    N, H, W, Cin = x.shape
    r = up_scale
    Cconv = r * r * out_dim
    K = r * out_dim
    assert weight.shape == (3, 3, Cin, Cconv)
    assert bias.shape == (Cconv,)
    assert W % 8 == 0, "W must be a multiple of 8 (sublane tiling)"

    # Permute conv-output channels from PixelShuffle's (c, ry, rx) to (ry, rx, c) so the
    # in-kernel shuffle is pure slicing; rows ordered (ky, kx, cin) to match the tap slices.
    w6 = weight.reshape(3, 3, Cin, out_dim, r, r)
    w6 = jnp.transpose(w6, (0, 1, 2, 4, 5, 3))                  # (3,3,Cin,r,r,out_dim)
    w_mat = w6.reshape(9 * Cin, Cconv).astype(matmul_dtype)
    b_mat = jnp.transpose(bias.reshape(out_dim, r, r), (1, 2, 0)).reshape(1, Cconv)
    b_mat = b_mat.astype(jnp.float32)

    in_bytes = jnp.dtype(x.dtype).itemsize
    out_bytes = in_bytes
    mdt_bytes = jnp.dtype(matmul_dtype).itemsize

    try:   # generation-aware VMEM budget (v7x: 64 MiB/TC, v5e/v6e: 128 MiB)
        vmem_cap = int(pltpu.get_tpu_info().vmem_capacity_bytes)
    except Exception:
        vmem_cap = 64 * 1024 * 1024
    vmem_limit = int(vmem_cap * 0.78)                 # handed to the compiler
    budget = int(vmem_limit * 0.85)                   # tile-picker target (headroom for temps)
    f32_cap = min(12 * 1024 * 1024, max(budget // 3, 1))

    if tile_rows is None:
        TH, CH = _pick_tile_rows(N, H, W, Cin, Cconv, in_bytes, out_bytes, mdt_bytes,
                                 budget, f32_cap, prefer_multi_row_tiles=(_is_v7x() and N == 1))
    else:
        TH = tile_rows
        CH = _pick_chunk_rows(TH, W, Cin, Cconv, mdt_bytes, f32_cap)
    if chunk_rows is not None:
        CH = chunk_rows
    assert H % TH == 0 and TH % CH == 0
    n_row_tiles = H // TH

    kernel = partial(_conv_shuffle_gelu_kernel, TH=TH, W=W, Cin=Cin, r=r,
                     out_dim=out_dim, CH=CH, approx_gelu=approx_gelu)

    cost = pl.CostEstimate(
        flops=2 * N * H * W * (9 * Cin) * Cconv,
        transcendentals=N * H * W * Cconv,
        bytes_accessed=(x.size * in_bytes + w_mat.size * mdt_bytes
                        + b_mat.size * 4 + N * H * W * Cconv * out_bytes),
    )

    def build(single_buffer_weights):
        wb_kwargs = dict(pipeline_mode=pl.Buffered(1)) if single_buffer_weights else {}
        in_specs = [
            # main rows of the tile
            pl.BlockSpec((1, TH, W, Cin), lambda n, i: (n, i, 0, 0)),
            # 1-row top/bottom halo, clamped at the image border (masked to zero in-kernel)
            pl.BlockSpec((1, 1, W, Cin),
                         lambda n, i: (n, jnp.maximum(i * TH - 1, 0), 0, 0)),
            pl.BlockSpec((1, 1, W, Cin),
                         lambda n, i: (n, jnp.minimum((i + 1) * TH, H - 1), 0, 0)),
            # weight/bias: constant block index -> fetched once, stays VMEM-resident
            pl.BlockSpec((9 * Cin, Cconv), lambda n, i: (0, 0), **wb_kwargs),
            pl.BlockSpec((1, Cconv), lambda n, i: (0, 0), **wb_kwargs),
        ]
        return pl.pallas_call(
            kernel,
            out_shape=jax.ShapeDtypeStruct((N, H, r, W, K), x.dtype),
            grid=(N, n_row_tiles),
            in_specs=in_specs,
            out_specs=pl.BlockSpec((1, TH, r, W, K), lambda n, i: (n, i, 0, 0, 0)),
            scratch_shapes=[pltpu.VMEM((TH + 2, W + _WPAD, Cin), matmul_dtype)],
            compiler_params=pltpu.CompilerParams(
                dimension_semantics=("parallel", "parallel"),
                vmem_limit_bytes=vmem_limit,
            ),
            cost_estimate=cost,
        )

    try:
        out5 = build(True)(x, x, x, w_mat, b_mat)
    except Exception:
        # pl.Buffered(1) (single-buffered resident weights) not accepted on this JAX
        # version -> fall back to default double buffering (budget already covers it).
        out5 = build(False)(x, x, x, w_mat, b_mat)

    # (N, H, r, W, r*out_dim) is contiguous -> metadata-only reshape, no HBM traffic.
    return out5.reshape(N, H * r, W * r, out_dim)


def _reference_upsample(x, weight, bias, *, up_scale, out_dim):
    """Pure-JAX reference: conv3x3(pad=1) -> PixelShuffle -> exact GELU, NHWC."""
    N, H, W, _ = x.shape
    r = up_scale
    conv = jax.lax.conv_general_dilated(
        x, weight, window_strides=(1, 1), padding=((1, 1), (1, 1)),
        dimension_numbers=("NHWC", "HWIO", "NHWC"),
        precision=jax.lax.Precision.HIGHEST) + bias
    t = conv.reshape(N, H, W, out_dim, r, r)
    t = jnp.transpose(t, (0, 1, 4, 2, 5, 3)).reshape(N, H * r, W * r, out_dim)
    return 0.5 * t * (1.0 + jax.lax.erf(t * jnp.float32(1.0 / math.sqrt(2.0))))


if __name__ == "__main__":
    N, H, W = 2, 16, 16
    in_dim, out_dim, up_scale = 4, 4, 2
    Cconv = up_scale ** 2 * out_dim

    key = jax.random.PRNGKey(0)
    kx, kw, kb = jax.random.split(key, 3)
    x = jax.random.normal(kx, (N, H, W, in_dim), dtype=jnp.float32)
    fan_in = in_dim * 3 * 3
    weight = jax.random.normal(kw, (3, 3, in_dim, Cconv), dtype=jnp.float32) / math.sqrt(fan_in)
    bias = jax.random.normal(kb, (Cconv,), dtype=jnp.float32) * 0.01

    ref = _reference_upsample(x, weight, bias, up_scale=up_scale, out_dim=out_dim)

    # f32-MXU path: structural correctness vs the pure-JAX reference.
    out_f32 = upsample_forward(x, weight, bias, up_scale=up_scale, out_dim=out_dim,
                               matmul_dtype=jnp.float32)
    out_f32 = jax.block_until_ready(out_f32)
    assert out_f32.shape == (N, H * up_scale, W * up_scale, out_dim), out_f32.shape
    assert jnp.allclose(out_f32, ref, atol=1e-2, rtol=1e-2), "f32 path mismatch"

    # default path: bf16 MXU operands, f32 accumulation (v6e/v7x guidance).
    out = upsample_forward(x, weight, bias, up_scale=up_scale, out_dim=out_dim)
    out = jax.block_until_ready(out)
    assert out.shape == (N, H * up_scale, W * up_scale, out_dim), out.shape
    assert jnp.allclose(out, ref, atol=6e-2, rtol=6e-2), "bf16 path mismatch"

    print("KERNEL_OK")
</pallas_src>

<mosaic_0001>
module attributes {stable_mosaic.version = 11 : i64} {
  func.func @_conv_shuffle_gelu_kernel(%arg0: i32, %arg1: i32, %arg2: memref<1x16x16x4xf32, #tpu.memory_space<vmem>>, %arg3: memref<1x1x16x4xf32, #tpu.memory_space<vmem>>, %arg4: memref<1x1x16x4xf32, #tpu.memory_space<vmem>>, %arg5: memref<36x16xf32, #tpu.memory_space<vmem>>, %arg6: memref<1x16xf32, #tpu.memory_space<vmem>>, %arg7: memref<1x16x2x16x8xf32, #tpu.memory_space<vmem>>, %arg8: memref<18x32x4xf32, #tpu.memory_space<vmem>>) attributes {dimension_semantics = [#tpu.dimension_semantics<parallel>, #tpu.dimension_semantics<parallel>], iteration_bounds = array<i64: 2, 1>, scalar_prefetch = 0 : i64, scratch_operands = 1 : i64, tpu.core_type = #tpu.core_type<tc>, window_params = [{transform_indices = @transform_0, window_bounds = array<i64: 1, 16, 16, 4>}, {transform_indices = @transform_1, window_bounds = array<i64: 1, 1, 16, 4>}, {transform_indices = @transform_2, window_bounds = array<i64: 1, 1, 16, 4>}, {pipeline_mode = #tpu.pipeline_mode<synchronous>, transform_indices = @transform_3, window_bounds = array<i64: 36, 16>}, {pipeline_mode = #tpu.pipeline_mode<synchronous>, transform_indices = @transform_4, window_bounds = array<i64: 1, 16>}, {transform_indices = @transform_5, window_bounds = array<i64: 1, 16, 2, 16, 8>}]} {
    %c0 = arith.constant 0 : index
    %c0_0 = arith.constant 0 : index
    %c0_1 = arith.constant 0 : index
    %c0_2 = arith.constant 0 : index
    %0 = vector.load %arg2[%c0, %c0_0, %c0_1, %c0_2] : memref<1x16x16x4xf32, #tpu.memory_space<vmem>>, vector<1x16x16x4xf32>
    %1 = vector.shape_cast %0 : vector<1x16x16x4xf32> to vector<16x16x4xf32>
    %c1 = arith.constant 1 : index
    %c8 = arith.constant 8 : index
    %c0_3 = arith.constant 0 : index
    %2 = vector.load %arg8[%c1, %c8, %c0_3] : memref<18x32x4xf32, #tpu.memory_space<vmem>>, vector<16x16x4xf32>
    tpu.vector_store %arg8[%c1, %c8, %c0_3], %1 {strides = array<i32>} : memref<18x32x4xf32, #tpu.memory_space<vmem>>, vector<16x16x4xf32>,
    %c0_4 = arith.constant 0 : index
    %c0_5 = arith.constant 0 : index
    %c0_6 = arith.constant 0 : index
    %c0_7 = arith.constant 0 : index
    %3 = vector.load %arg3[%c0_4, %c0_5, %c0_6, %c0_7] : memref<1x1x16x4xf32, #tpu.memory_space<vmem>>, vector<1x1x16x4xf32>
    %4 = vector.shape_cast %3 : vector<1x1x16x4xf32> to vector<1x16x4xf32>
    %c0_8 = arith.constant 0 : index
    %c0_9 = arith.constant 0 : index
    %c0_10 = arith.constant 0 : index
    %c0_11 = arith.constant 0 : index
    %5 = vector.load %arg4[%c0_8, %c0_9, %c0_10, %c0_11] : memref<1x1x16x4xf32, #tpu.memory_space<vmem>>, vector<1x1x16x4xf32>
    %6 = vector.shape_cast %5 : vector<1x1x16x4xf32> to vector<1x16x4xf32>
    %c0_i32 = arith.constant 0 : i32
    %7 = arith.cmpi eq, %arg1, %c0_i32 : i32
    %cst = arith.constant 0.000000e+00 : f32
    %8 = vector.broadcast %cst : f32 to vector<1x16x4xf32>
    %9 = arith.select %7, %8, %4 : vector<1x16x4xf32>
    %c0_12 = arith.constant 0 : index
    %c8_13 = arith.constant 8 : index
    %c0_14 = arith.constant 0 : index
    %10 = vector.load %arg8[%c0_12, %c8_13, %c0_14] : memref<18x32x4xf32, #tpu.memory_space<vmem>>, vector<1x16x4xf32>
    tpu.vector_store %arg8[%c0_12, %c8_13, %c0_14], %9 {strides = array<i32>} : memref<18x32x4xf32, #tpu.memory_space<vmem>>, vector<1x16x4xf32>,
    %c0_i32_15 = arith.constant 0 : i32
    %11 = arith.cmpi eq, %arg1, %c0_i32_15 : i32
    %cst_16 = arith.constant 0.000000e+00 : f32
    %12 = vector.broadcast %cst_16 : f32 to vector<1x16x4xf32>
    %13 = arith.select %11, %12, %6 : vector<1x16x4xf32>
    %c17 = arith.constant 17 : index
    %c8_17 = arith.constant 8 : index
    %c0_18 = arith.constant 0 : index
    %14 = vector.load %arg8[%c17, %c8_17, %c0_18] : memref<18x32x4xf32, #tpu.memory_space<vmem>>, vector<1x16x4xf32>
    tpu.vector_store %arg8[%c17, %c8_17, %c0_18], %13 {strides = array<i32>} : memref<18x32x4xf32, #tpu.memory_space<vmem>>, vector<1x16x4xf32>,
    %15 = tpu.iota {dimensions = array<i32: 1>} : vector<1x16x1xi32>
    %cst_19 = arith.constant 0.000000e+00 : f32
    %16 = vector.broadcast %cst_19 : f32 to vector<256x16xf32>
    %c0_20 = arith.constant 0 : index
    %c7 = arith.constant 7 : index
    %c0_21 = arith.constant 0 : index
    %17 = vector.load %arg8[%c0_20, %c7, %c0_21] : memref<18x32x4xf32, #tpu.memory_space<vmem>>, vector<18x16x4xf32>
    %c0_i32_22 = arith.constant 0 : i32
    %18 = vector.broadcast %c0_i32_22 : i32 to vector<1x16x1xi32>
    %19 = arith.cmpi eq, %15, %18 : vector<1x16x1xi32>
    %cst_23 = arith.constant 0.000000e+00 : f32
    %20 = vector.shape_cast %19 : vector<1x16x1xi1> to vector<1x16x1xi1>
    %21 = vector.broadcast %20 : vector<1x16x1xi1> to vector<18x16x4xi1>
    %22 = vector.broadcast %cst_23 : f32 to vector<18x16x4xf32>
    %23 = arith.select %21, %22, %17 : vector<18x16x4xi1>, vector<18x16x4xf32>
    %24 = vector.extract_strided_slice %23 {offsets = [0, 0, 0], sizes = [16, 16, 4], strides = [1, 1, 1]} : vector<18x16x4xf32> to vector<16x16x4xf32>
    %25 = vector.shape_cast %24 : vector<16x16x4xf32> to vector<256x4xf32>
    %c0_24 = arith.constant 0 : index
    %c0_25 = arith.constant 0 : index
    %26 = vector.load %arg5[%c0_24, %c0_25] : memref<36x16xf32, #tpu.memory_space<vmem>>, vector<4x16xf32>
    %cst_26 = arith.constant dense<0.000000e+00> : vector<256x16xf32>
    %27 = tpu.matmul %25, %26, %cst_26 {dimension_numbers = #tpu.dot_dimension_numbers<[1], [0], [0], [1], [0, 0, 1, 1], [], []>} : vector<256x4xf32>, vector<4x16xf32>, vector<256x16xf32> -> vector<256x16xf32>
    %28 = arith.addf %16, %27 : vector<256x16xf32>
    %29 = vector.extract_strided_slice %23 {offsets = [1, 0, 0], sizes = [16, 16, 4], strides = [1, 1, 1]} : vector<18x16x4xf32> to vector<16x16x4xf32>
    %30 = vector.shape_cast %29 : vector<16x16x4xf32> to vector<256x4xf32>
    %c12 = arith.constant 12 : index
    %c0_27 = arith.constant 0 : index
    %31 = vector.load %arg5[%c12, %c0_27] : memref<36x16xf32, #tpu.memory_space<vmem>>, vector<4x16xf32>
    %cst_28 = arith.constant dense<0.000000e+00> : vector<256x16xf32>
    %32 = tpu.matmul %30, %31, %cst_28 {dimension_numbers = #tpu.dot_dimension_numbers<[1], [0], [0], [1], [0, 0, 1, 1], [], []>} : vector<256x4xf32>, vector<4x16xf32>, vector<256x16xf32> -> vector<256x16xf32>
    %33 = arith.addf %28, %32 : vector<256x16xf32>
    %34 = vector.extract_strided_slice %23 {offsets = [2, 0, 0], sizes = [16, 16, 4], strides = [1, 1, 1]} : vector<18x16x4xf32> to vector<16x16x4xf32>
    %35 = vector.shape_cast %34 : vector<16x16x4xf32> to vector<256x4xf32>
    %c24 = arith.constant 24 : index
    %c0_29 = arith.constant 0 : index
    %36 = vector.load %arg5[%c24, %c0_29] : memref<36x16xf32, #tpu.memory_space<vmem>>, vector<4x16xf32>
    %cst_30 = arith.constant dense<0.000000e+00> : vector<256x16xf32>
    %37 = tpu.matmul %35, %36, %cst_30 {dimension_numbers = #tpu.dot_dimension_numbers<[1], [0], [0], [1], [0, 0, 1, 1], [], []>} : vector<256x4xf32>, vector<4x16xf32>, vector<256x16xf32> -> vector<256x16xf32>
    %38 = arith.addf %33, %37 : vector<256x16xf32>
    %c0_31 = arith.constant 0 : index
    %c8_32 = arith.constant 8 : index
    %c0_33 = arith.constant 0 : index
    %39 = vector.load %arg8[%c0_31, %c8_32, %c0_33] : memref<18x32x4xf32, #tpu.memory_space<vmem>>, vector<18x16x4xf32>
    %40 = vector.extract_strided_slice %39 {offsets = [0, 0, 0], sizes = [16, 16, 4], strides = [1, 1, 1]} : vector<18x16x4xf32> to vector<16x16x4xf32>
    %41 = vector.shape_cast %40 : vector<16x16x4xf32> to vector<256x4xf32>
    %c4 = arith.constant 4 : index
    %c0_34 = arith.constant 0 : index
    %42 = vector.load %arg5[%c4, %c0_34] : memref<36x16xf32, #tpu.memory_space<vmem>>, vector<4x16xf32>
    %cst_35 = arith.constant dense<0.000000e+00> : vector<256x16xf32>
    %43 = tpu.matmul %41, %42, %cst_35 {dimension_numbers = #tpu.dot_dimension_numbers<[1], [0], [0], [1], [0, 0, 1, 1], [], []>} : vector<256x4xf32>, vector<4x16xf32>, vector<256x16xf32> -> vector<256x16xf32>
    %44 = arith.addf %38, %43 : vector<256x16xf32>
    %45 = vector.extract_strided_slice %39 {offsets = [1, 0, 0], sizes = [16, 16, 4], strides = [1, 1, 1]} : vector<18x16x4xf32> to vector<16x16x4xf32>
    %46 = vector.shape_cast %45 : vector<16x16x4xf32> to vector<256x4xf32>
    %c16 = arith.constant 16 : index
    %c0_36 = arith.constant 0 : index
    %47 = vector.load %arg5[%c16, %c0_36] : memref<36x16xf32, #tpu.memory_space<vmem>>, vector<4x16xf32>
    %cst_37 = arith.constant dense<0.000000e+00> : vector<256x16xf32>
    %48 = tpu.matmul %46, %47, %cst_37 {dimension_numbers = #tpu.dot_dimension_numbers<[1], [0], [0], [1], [0, 0, 1, 1], [], []>} : vector<256x4xf32>, vector<4x16xf32>, vector<256x16xf32> -> vector<256x16xf32>
    %49 = arith.addf %44, %48 : vector<256x16xf32>
    %50 = vector.extract_strided_slice %39 {offsets = [2, 0, 0], sizes = [16, 16, 4], strides = [1, 1, 1]} : vector<18x16x4xf32> to vector<16x16x4xf32>
    %51 = vector.shape_cast %50 : vector<16x16x4xf32> to vector<256x4xf32>
    %c28 = arith.constant 28 : index
    %c0_38 = arith.constant 0 : index
    %52 = vector.load %arg5[%c28, %c0_38] : memref<36x16xf32, #tpu.memory_space<vmem>>, vector<4x16xf32>
    %cst_39 = arith.constant dense<0.000000e+00> : vector<256x16xf32>
    %53 = tpu.matmul %51, %52, %cst_39 {dimension_numbers = #tpu.dot_dimension_numbers<[1], [0], [0], [1], [0, 0, 1, 1], [], []>} : vector<256x4xf32>, vector<4x16xf32>, vector<256x16xf32> -> vector<256x16xf32>
    %54 = arith.addf %49, %53 : vector<256x16xf32>
    %c0_40 = arith.constant 0 : index
    %c9 = arith.constant 9 : index
    %c0_41 = arith.constant 0 : index
    %55 = vector.load %arg8[%c0_40, %c9, %c0_41] : memref<18x32x4xf32, #tpu.memory_space<vmem>>, vector<18x16x4xf32>
    %c15_i32 = arith.constant 15 : i32
    %56 = vector.broadcast %c15_i32 : i32 to vector<1x16x1xi32>
    %57 = arith.cmpi eq, %15, %56 : vector<1x16x1xi32>
    %cst_42 = arith.constant 0.000000e+00 : f32
    %58 = vector.shape_cast %57 : vector<1x16x1xi1> to vector<1x16x1xi1>
    %59 = vector.broadcast %58 : vector<1x16x1xi1> to vector<18x16x4xi1>
    %60 = vector.broadcast %cst_42 : f32 to vector<18x16x4xf32>
    %61 = arith.select %59, %60, %55 : vector<18x16x4xi1>, vector<18x16x4xf32>
    %62 = vector.extract_strided_slice %61 {offsets = [0, 0, 0], sizes = [16, 16, 4], strides = [1, 1, 1]} : vector<18x16x4xf32> to vector<16x16x4xf32>
    %63 = vector.shape_cast %62 : vector<16x16x4xf32> to vector<256x4xf32>
    %c8_43 = arith.constant 8 : index
    %c0_44 = arith.constant 0 : index
    %64 = vector.load %arg5[%c8_43, %c0_44] : memref<36x16xf32, #tpu.memory_space<vmem>>, vector<4x16xf32>
    %cst_45 = arith.constant dense<0.000000e+00> : vector<256x16xf32>
    %65 = tpu.matmul %63, %64, %cst_45 {dimension_numbers = #tpu.dot_dimension_numbers<[1], [0], [0], [1], [0, 0, 1, 1], [], []>} : vector<256x4xf32>, vector<4x16xf32>, vector<256x16xf32> -> vector<256x16xf32>
    %66 = arith.addf %54, %65 : vector<256x16xf32>
    %67 = vector.extract_strided_slice %61 {offsets = [1, 0, 0], sizes = [16, 16, 4], strides = [1, 1, 1]} : vector<18x16x4xf32> to vector<16x16x4xf32>
    %68 = vector.shape_cast %67 : vector<16x16x4xf32> to vector<256x4xf32>
    %c20 = arith.constant 20 : index
    %c0_46 = arith.constant 0 : index
    %69 = vector.load %arg5[%c20, %c0_46] : memref<36x16xf32, #tpu.memory_space<vmem>>, vector<4x16xf32>
    %cst_47 = arith.constant dense<0.000000e+00> : vector<256x16xf32>
    %70 = tpu.matmul %68, %69, %cst_47 {dimension_numbers = #tpu.dot_dimension_numbers<[1], [0], [0], [1], [0, 0, 1, 1], [], []>} : vector<256x4xf32>, vector<4x16xf32>, vector<256x16xf32> -> vector<256x16xf32>
    %71 = arith.addf %66, %70 : vector<256x16xf32>
    %72 = vector.extract_strided_slice %61 {offsets = [2, 0, 0], sizes = [16, 16, 4], strides = [1, 1, 1]} : vector<18x16x4xf32> to vector<16x16x4xf32>
    %73 = vector.shape_cast %72 : vector<16x16x4xf32> to vector<256x4xf32>
    %c32 = arith.constant 32 : index
    %c0_48 = arith.constant 0 : index
    %74 = vector.load %arg5[%c32, %c0_48] : memref<36x16xf32, #tpu.memory_space<vmem>>, vector<4x16xf32>
    %cst_49 = arith.constant dense<0.000000e+00> : vector<256x16xf32>
    %75 = tpu.matmul %73, %74, %cst_49 {dimension_numbers = #tpu.dot_dimension_numbers<[1], [0], [0], [1], [0, 0, 1, 1], [], []>} : vector<256x4xf32>, vector<4x16xf32>, vector<256x16xf32> -> vector<256x16xf32>
    %76 = arith.addf %71, %75 : vector<256x16xf32>
    %c0_50 = arith.constant 0 : index
    %c0_51 = arith.constant 0 : index
    %77 = vector.load %arg6[%c0_50, %c0_51] : memref<1x16xf32, #tpu.memory_space<vmem>>, vector<1x16xf32>
    %78 = vector.broadcast %77 : vector<1x16xf32> to vector<256x16xf32>
    %79 = arith.addf %76, %78 : vector<256x16xf32>
    %cst_52 = arith.constant 5.000000e-01 : f32
    %80 = vector.broadcast %cst_52 : f32 to vector<256x16xf32>
    %81 = arith.mulf %80, %79 : vector<256x16xf32>
    %cst_53 = arith.constant 0.707106769 : f32
    %82 = vector.broadcast %cst_53 : f32 to vector<256x16xf32>
    %83 = arith.mulf %79, %82 : vector<256x16xf32>
    %84 = math.erf %83 : vector<256x16xf32>
    %cst_54 = arith.constant 1.000000e+00 : f32
    %85 = vector.broadcast %cst_54 : f32 to vector<256x16xf32>
    %86 = arith.addf %85, %84 : vector<256x16xf32>
    %87 = arith.mulf %81, %86 : vector<256x16xf32>
    %88 = vector.extract_strided_slice %87 {offsets = [0, 0], sizes = [256, 8], strides = [1, 1]} : vector<256x16xf32> to vector<256x8xf32>
    %89 = vector.shape_cast %88 : vector<256x8xf32> to vector<16x16x8xf32>
    %c0_55 = arith.constant 0 : index
    %c0_56 = arith.constant 0 : index
    %c0_57 = arith.constant 0 : index
    %c0_58 = arith.constant 0 : index
    %c0_59 = arith.constant 0 : index
    %90 = vector.load %arg7[%c0_55, %c0_56, %c0_57, %c0_58, %c0_59] : memref<1x16x2x16x8xf32, #tpu.memory_space<vmem>>, vector<1x16x1x16x8xf32>
    %91 = vector.shape_cast %90 : vector<1x16x1x16x8xf32> to vector<16x16x8xf32>
    %92 = vector.shape_cast %89 : vector<16x16x8xf32> to vector<1x16x1x16x8xf32>
    tpu.vector_store %arg7[%c0_55, %c0_56, %c0_57, %c0_58, %c0_59], %92 {strides = array<i32>} : memref<1x16x2x16x8xf32, #tpu.memory_space<vmem>>, vector<1x16x1x16x8xf32>,
    %93 = vector.extract_strided_slice %87 {offsets = [0, 8], sizes = [256, 8], strides = [1, 1]} : vector<256x16xf32> to vector<256x8xf32>
    %94 = vector.shape_cast %93 : vector<256x8xf32> to vector<16x16x8xf32>
    %c0_60 = arith.constant 0 : index
    %c0_61 = arith.constant 0 : index
    %c1_62 = arith.constant 1 : index
    %c0_63 = arith.constant 0 : index
    %c0_64 = arith.constant 0 : index
    %95 = vector.load %arg7[%c0_60, %c0_61, %c1_62, %c0_63, %c0_64] : memref<1x16x2x16x8xf32, #tpu.memory_space<vmem>>, vector<1x16x1x16x8xf32>
    %96 = vector.shape_cast %95 : vector<1x16x1x16x8xf32> to vector<16x16x8xf32>
    %97 = vector.shape_cast %94 : vector<16x16x8xf32> to vector<1x16x1x16x8xf32>
    tpu.vector_store %arg7[%c0_60, %c0_61, %c1_62, %c0_63, %c0_64], %97 {strides = array<i32>} : memref<1x16x2x16x8xf32, #tpu.memory_space<vmem>>, vector<1x16x1x16x8xf32>,
    return
  }
  func.func @transform_0(%arg0: i32, %arg1: i32) -> (i32, i32, i32, i32) {
    %c0_i32 = arith.constant 0 : i32
    %c0_i32_0 = arith.constant 0 : i32
    %c0_i32_1 = arith.constant 0 : i32
    return %arg0, %arg1, %c0_i32, %c0_i32_0 : i32, i32, i32, i32
  }
  func.func @transform_1(%arg0: i32, %arg1: i32) -> (i32, i32, i32, i32) {
    %c16_i32 = arith.constant 16 : i32
    %0 = arith.muli %arg1, %c16_i32 : i32
    %c1_i32 = arith.constant 1 : i32
    %1 = arith.subi %0, %c1_i32 : i32
    %c0_i32 = arith.constant 0 : i32
    %2 = arith.maxsi %1, %c0_i32 : i32
    %c0_i32_0 = arith.constant 0 : i32
    %c0_i32_1 = arith.constant 0 : i32
    %c0_i32_2 = arith.constant 0 : i32
    return %arg0, %2, %c0_i32_0, %c0_i32_1 : i32, i32, i32, i32
  }
  func.func @transform_2(%arg0: i32, %arg1: i32) -> (i32, i32, i32, i32) {
    %c1_i32 = arith.constant 1 : i32
    %0 = arith.addi %arg1, %c1_i32 : i32
    %c16_i32 = arith.constant 16 : i32
    %1 = arith.muli %0, %c16_i32 : i32
    %c15_i32 = arith.constant 15 : i32
    %2 = arith.minsi %1, %c15_i32 : i32
    %c0_i32 = arith.constant 0 : i32
    %c0_i32_0 = arith.constant 0 : i32
    %c0_i32_1 = arith.constant 0 : i32
    return %arg0, %2, %c0_i32, %c0_i32_0 : i32, i32, i32, i32
  }
  func.func @transform_3(%arg0: i32, %arg1: i32) -> (i32, i32) {
    %c0_i32 = arith.constant 0 : i32
    %c0_i32_0 = arith.constant 0 : i32
    %c0_i32_1 = arith.constant 0 : i32
    return %c0_i32, %c0_i32_0 : i32, i32
  }
  func.func @transform_4(%arg0: i32, %arg1: i32) -> (i32, i32) {
    %c0_i32 = arith.constant 0 : i32
    %c0_i32_0 = arith.constant 0 : i32
    %c0_i32_1 = arith.constant 0 : i32
    return %c0_i32, %c0_i32_0 : i32, i32
  }
  func.func @transform_5(%arg0: i32, %arg1: i32) -> (i32, i32, i32, i32, i32) {
    %c0_i32 = arith.constant 0 : i32
    %c0_i32_0 = arith.constant 0 : i32
    %c0_i32_1 = arith.constant 0 : i32
    %c0_i32_2 = arith.constant 0 : i32
    return %arg0, %arg1, %c0_i32, %c0_i32_0, %c0_i32_1 : i32, i32, i32, i32, i32
  }
}

module attributes {stable_mosaic.version = 11 : i64} {
  func.func @_conv_shuffle_gelu_kernel(%arg0: i32, %arg1: i32, %arg2: memref<1x16x16x4xf32, #tpu.memory_space<vmem>>, %arg3: memref<1x1x16x4xf32, #tpu.memory_space<vmem>>, %arg4: memref<1x1x16x4xf32, #tpu.memory_space<vmem>>, %arg5: memref<36x16xf32, #tpu.memory_space<vmem>>, %arg6: memref<1x16xf32, #tpu.memory_space<vmem>>, %arg7: memref<1x16x2x16x8xf32, #tpu.memory_space<vmem>>, %arg8: memref<18x32x4xf32, #tpu.memory_space<vmem>>) attributes {dimension_semantics = [#tpu.dimension_semantics<parallel>, #tpu.dimension_semantics<parallel>], iteration_bounds = array<i64: 2, 1>, scalar_prefetch = 0 : i64, scratch_operands = 1 : i64, tpu.core_type = #tpu.core_type<tc>, window_params = [{transform_indices = @transform_0, window_bounds = array<i64: 1, 16, 16, 4>}, {transform_indices = @transform_1, window_bounds = array<i64: 1, 1, 16, 4>}, {transform_indices = @transform_2, window_bounds = array<i64: 1, 1, 16, 4>}, {pipeline_mode = #tpu.pipeline_mode<synchronous>, transform_indices = @transform_3, window_bounds = array<i64: 36, 16>}, {pipeline_mode = #tpu.pipeline_mode<synchronous>, transform_indices = @transform_4, window_bounds = array<i64: 1, 16>}, {transform_indices = @transform_5, window_bounds = array<i64: 1, 16, 2, 16, 8>}]} {
    %c0 = arith.constant 0 : index
    %c0_0 = arith.constant 0 : index
    %c0_1 = arith.constant 0 : index
    %c0_2 = arith.constant 0 : index
    %0 = vector.load %arg2[%c0, %c0_0, %c0_1, %c0_2] : memref<1x16x16x4xf32, #tpu.memory_space<vmem>>, vector<1x16x16x4xf32>
    %1 = vector.shape_cast %0 : vector<1x16x16x4xf32> to vector<16x16x4xf32>
    %c1 = arith.constant 1 : index
    %c8 = arith.constant 8 : index
    %c0_3 = arith.constant 0 : index
    %2 = vector.load %arg8[%c1, %c8, %c0_3] : memref<18x32x4xf32, #tpu.memory_space<vmem>>, vector<16x16x4xf32>
    tpu.vector_store %arg8[%c1, %c8, %c0_3], %1 {strides = array<i32>} : memref<18x32x4xf32, #tpu.memory_space<vmem>>, vector<16x16x4xf32>,
    %c0_4 = arith.constant 0 : index
    %c0_5 = arith.constant 0 : index
    %c0_6 = arith.constant 0 : index
    %c0_7 = arith.constant 0 : index
    %3 = vector.load %arg3[%c0_4, %c0_5, %c0_6, %c0_7] : memref<1x1x16x4xf32, #tpu.memory_space<vmem>>, vector<1x1x16x4xf32>
    %4 = vector.shape_cast %3 : vector<1x1x16x4xf32> to vector<1x16x4xf32>
    %c0_8 = arith.constant 0 : index
    %c0_9 = arith.constant 0 : index
    %c0_10 = arith.constant 0 : index
    %c0_11 = arith.constant 0 : index
    %5 = vector.load %arg4[%c0_8, %c0_9, %c0_10, %c0_11] : memref<1x1x16x4xf32, #tpu.memory_space<vmem>>, vector<1x1x16x4xf32>
    %6 = vector.shape_cast %5 : vector<1x1x16x4xf32> to vector<1x16x4xf32>
    %c0_i32 = arith.constant 0 : i32
    %7 = arith.cmpi eq, %arg1, %c0_i32 : i32
    %cst = arith.constant 0.000000e+00 : f32
    %8 = vector.broadcast %cst : f32 to vector<1x16x4xf32>
    %9 = arith.select %7, %8, %4 : vector<1x16x4xf32>
    %c0_12 = arith.constant 0 : index
    %c8_13 = arith.constant 8 : index
    %c0_14 = arith.constant 0 : index
    %10 = vector.load %arg8[%c0_12, %c8_13, %c0_14] : memref<18x32x4xf32, #tpu.memory_space<vmem>>, vector<1x16x4xf32>
    tpu.vector_store %arg8[%c0_12, %c8_13, %c0_14], %9 {strides = array<i32>} : memref<18x32x4xf32, #tpu.memory_space<vmem>>, vector<1x16x4xf32>,
    %c0_i32_15 = arith.constant 0 : i32
    %11 = arith.cmpi eq, %arg1, %c0_i32_15 : i32
    %cst_16 = arith.constant 0.000000e+00 : f32
    %12 = vector.broadcast %cst_16 : f32 to vector<1x16x4xf32>
    %13 = arith.select %11, %12, %6 : vector<1x16x4xf32>
    %c17 = arith.constant 17 : index
    %c8_17 = arith.constant 8 : index
    %c0_18 = arith.constant 0 : index
    %14 = vector.load %arg8[%c17, %c8_17, %c0_18] : memref<18x32x4xf32, #tpu.memory_space<vmem>>, vector<1x16x4xf32>
    tpu.vector_store %arg8[%c17, %c8_17, %c0_18], %13 {strides = array<i32>} : memref<18x32x4xf32, #tpu.memory_space<vmem>>, vector<1x16x4xf32>,
    %15 = tpu.iota {dimensions = array<i32: 1>} : vector<1x16x1xi32>
    %cst_19 = arith.constant 0.000000e+00 : f32
    %16 = vector.broadcast %cst_19 : f32 to vector<256x16xf32>
    %c0_20 = arith.constant 0 : index
    %c7 = arith.constant 7 : index
    %c0_21 = arith.constant 0 : index
    %17 = vector.load %arg8[%c0_20, %c7, %c0_21] : memref<18x32x4xf32, #tpu.memory_space<vmem>>, vector<18x16x4xf32>
    %c0_i32_22 = arith.constant 0 : i32
    %18 = vector.broadcast %c0_i32_22 : i32 to vector<1x16x1xi32>
    %19 = arith.cmpi eq, %15, %18 : vector<1x16x1xi32>
    %cst_23 = arith.constant 0.000000e+00 : f32
    %20 = vector.shape_cast %19 : vector<1x16x1xi1> to vector<1x16x1xi1>
    %21 = vector.broadcast %20 : vector<1x16x1xi1> to vector<18x16x4xi1>
    %22 = vector.broadcast %cst_23 : f32 to vector<18x16x4xf32>
    %23 = arith.select %21, %22, %17 : vector<18x16x4xi1>, vector<18x16x4xf32>
    %24 = vector.extract_strided_slice %23 {offsets = [0, 0, 0], sizes = [16, 16, 4], strides = [1, 1, 1]} : vector<18x16x4xf32> to vector<16x16x4xf32>
    %25 = vector.shape_cast %24 : vector<16x16x4xf32> to vector<256x4xf32>
    %c0_24 = arith.constant 0 : index
    %c0_25 = arith.constant 0 : index
    %26 = vector.load %arg5[%c0_24, %c0_25] : memref<36x16xf32, #tpu.memory_space<vmem>>, vector<4x16xf32>
    %cst_26 = arith.constant dense<0.000000e+00> : vector<256x16xf32>
    %27 = tpu.matmul %25, %26, %cst_26 {dimension_numbers = #tpu.dot_dimension_numbers<[1], [0], [0], [1], [0, 0, 1, 1], [], []>} : vector<256x4xf32>, vector<4x16xf32>, vector<256x16xf32> -> vector<256x16xf32>
    %28 = arith.addf %16, %27 : vector<256x16xf32>
    %29 = vector.extract_strided_slice %23 {offsets = [1, 0, 0], sizes = [16, 16, 4], strides = [1, 1, 1]} : vector<18x16x4xf32> to vector<16x16x4xf32>
    %30 = vector.shape_cast %29 : vector<16x16x4xf32> to vector<256x4xf32>
    %c12 = arith.constant 12 : index
    %c0_27 = arith.constant 0 : index
    %31 = vector.load %arg5[%c12, %c0_27] : memref<36x16xf32, #tpu.memory_space<vmem>>, vector<4x16xf32>
    %cst_28 = arith.constant dense<0.000000e+00> : vector<256x16xf32>
    %32 = tpu.matmul %30, %31, %cst_28 {dimension_numbers = #tpu.dot_dimension_numbers<[1], [0], [0], [1], [0, 0, 1, 1], [], []>} : vector<256x4xf32>, vector<4x16xf32>, vector<256x16xf32> -> vector<256x16xf32>
    %33 = arith.addf %28, %32 : vector<256x16xf32>
    %34 = vector.extract_strided_slice %23 {offsets = [2, 0, 0], sizes = [16, 16, 4], strides = [1, 1, 1]} : vector<18x16x4xf32> to vector<16x16x4xf32>
    %35 = vector.shape_cast %34 : vector<16x16x4xf32> to vector<256x4xf32>
    %c24 = arith.constant 24 : index
    %c0_29 = arith.constant 0 : index
    %36 = vector.load %arg5[%c24, %c0_29] : memref<36x16xf32, #tpu.memory_space<vmem>>, vector<4x16xf32>
    %cst_30 = arith.constant dense<0.000000e+00> : vector<256x16xf32>
    %37 = tpu.matmul %35, %36, %cst_30 {dimension_numbers = #tpu.dot_dimension_numbers<[1], [0], [0], [1], [0, 0, 1, 1], [], []>} : vector<256x4xf32>, vector<4x16xf32>, vector<256x16xf32> -> vector<256x16xf32>
    %38 = arith.addf %33, %37 : vector<256x16xf32>
    %c0_31 = arith.constant 0 : index
    %c8_32 = arith.constant 8 : index
    %c0_33 = arith.constant 0 : index
    %39 = vector.load %arg8[%c0_31, %c8_32, %c0_33] : memref<18x32x4xf32, #tpu.memory_space<vmem>>, vector<18x16x4xf32>
    %40 = vector.extract_strided_slice %39 {offsets = [0, 0, 0], sizes = [16, 16, 4], strides = [1, 1, 1]} : vector<18x16x4xf32> to vector<16x16x4xf32>
    %41 = vector.shape_cast %40 : vector<16x16x4xf32> to vector<256x4xf32>
    %c4 = arith.constant 4 : index
    %c0_34 = arith.constant 0 : index
    %42 = vector.load %arg5[%c4, %c0_34] : memref<36x16xf32, #tpu.memory_space<vmem>>, vector<4x16xf32>
    %cst_35 = arith.constant dense<0.000000e+00> : vector<256x16xf32>
    %43 = tpu.matmul %41, %42, %cst_35 {dimension_numbers = #tpu.dot_dimension_numbers<[1], [0], [0], [1], [0, 0, 1, 1], [], []>} : vector<256x4xf32>, vector<4x16xf32>, vector<256x16xf32> -> vector<256x16xf32>
    %44 = arith.addf %38, %43 : vector<256x16xf32>
    %45 = vector.extract_strided_slice %39 {offsets = [1, 0, 0], sizes = [16, 16, 4], strides = [1, 1, 1]} : vector<18x16x4xf32> to vector<16x16x4xf32>
    %46 = vector.shape_cast %45 : vector<16x16x4xf32> to vector<256x4xf32>
    %c16 = arith.constant 16 : index
    %c0_36 = arith.constant 0 : index
    %47 = vector.load %arg5[%c16, %c0_36] : memref<36x16xf32, #tpu.memory_space<vmem>>, vector<4x16xf32>
    %cst_37 = arith.constant dense<0.000000e+00> : vector<256x16xf32>
    %48 = tpu.matmul %46, %47, %cst_37 {dimension_numbers = #tpu.dot_dimension_numbers<[1], [0], [0], [1], [0, 0, 1, 1], [], []>} : vector<256x4xf32>, vector<4x16xf32>, vector<256x16xf32> -> vector<256x16xf32>
    %49 = arith.addf %44, %48 : vector<256x16xf32>
    %50 = vector.extract_strided_slice %39 {offsets = [2, 0, 0], sizes = [16, 16, 4], strides = [1, 1, 1]} : vector<18x16x4xf32> to vector<16x16x4xf32>
    %51 = vector.shape_cast %50 : vector<16x16x4xf32> to vector<256x4xf32>
    %c28 = arith.constant 28 : index
    %c0_38 = arith.constant 0 : index
    %52 = vector.load %arg5[%c28, %c0_38] : memref<36x16xf32, #tpu.memory_space<vmem>>, vector<4x16xf32>
    %cst_39 = arith.constant dense<0.000000e+00> : vector<256x16xf32>
    %53 = tpu.matmul %51, %52, %cst_39 {dimension_numbers = #tpu.dot_dimension_numbers<[1], [0], [0], [1], [0, 0, 1, 1], [], []>} : vector<256x4xf32>, vector<4x16xf32>, vector<256x16xf32> -> vector<256x16xf32>
    %54 = arith.addf %49, %53 : vector<256x16xf32>
    %c0_40 = arith.constant 0 : index
    %c9 = arith.constant 9 : index
    %c0_41 = arith.constant 0 : index
    %55 = vector.load %arg8[%c0_40, %c9, %c0_41] : memref<18x32x4xf32, #tpu.memory_space<vmem>>, vector<18x16x4xf32>
    %c15_i32 = arith.constant 15 : i32
    %56 = vector.broadcast %c15_i32 : i32 to vector<1x16x1xi32>
    %57 = arith.cmpi eq, %15, %56 : vector<1x16x1xi32>
    %cst_42 = arith.constant 0.000000e+00 : f32
    %58 = vector.shape_cast %57 : vector<1x16x1xi1> to vector<1x16x1xi1>
    %59 = vector.broadcast %58 : vector<1x16x1xi1> to vector<18x16x4xi1>
    %60 = vector.broadcast %cst_42 : f32 to vector<18x16x4xf32>
    %61 = arith.select %59, %60, %55 : vector<18x16x4xi1>, vector<18x16x4xf32>
    %62 = vector.extract_strided_slice %61 {offsets = [0, 0, 0], sizes = [16, 16, 4], strides = [1, 1, 1]} : vector<18x16x4xf32> to vector<16x16x4xf32>
    %63 = vector.shape_cast %62 : vector<16x16x4xf32> to vector<256x4xf32>
    %c8_43 = arith.constant 8 : index
    %c0_44 = arith.constant 0 : index
    %64 = vector.load %arg5[%c8_43, %c0_44] : memref<36x16xf32, #tpu.memory_space<vmem>>, vector<4x16xf32>
    %cst_45 = arith.constant dense<0.000000e+00> : vector<256x16xf32>
    %65 = tpu.matmul %63, %64, %cst_45 {dimension_numbers = #tpu.dot_dimension_numbers<[1], [0], [0], [1], [0, 0, 1, 1], [], []>} : vector<256x4xf32>, vector<4x16xf32>, vector<256x16xf32> -> vector<256x16xf32>
    %66 = arith.addf %54, %65 : vector<256x16xf32>
    %67 = vector.extract_strided_slice %61 {offsets = [1, 0, 0], sizes = [16, 16, 4], strides = [1, 1, 1]} : vector<18x16x4xf32> to vector<16x16x4xf32>
    %68 = vector.shape_cast %67 : vector<16x16x4xf32> to vector<256x4xf32>
    %c20 = arith.constant 20 : index
    %c0_46 = arith.constant 0 : index
    %69 = vector.load %arg5[%c20, %c0_46] : memref<36x16xf32, #tpu.memory_space<vmem>>, vector<4x16xf32>
    %cst_47 = arith.constant dense<0.000000e+00> : vector<256x16xf32>
    %70 = tpu.matmul %68, %69, %cst_47 {dimension_numbers = #tpu.dot_dimension_numbers<[1], [0], [0], [1], [0, 0, 1, 1], [], []>} : vector<256x4xf32>, vector<4x16xf32>, vector<256x16xf32> -> vector<256x16xf32>
    %71 = arith.addf %66, %70 : vector<256x16xf32>
    %72 = vector.extract_strided_slice %61 {offsets = [2, 0, 0], sizes = [16, 16, 4], strides = [1, 1, 1]} : vector<18x16x4xf32> to vector<16x16x4xf32>
    %73 = vector.shape_cast %72 : vector<16x16x4xf32> to vector<256x4xf32>
    %c32 = arith.constant 32 : index
    %c0_48 = arith.constant 0 : index
    %74 = vector.load %arg5[%c32, %c0_48] : memref<36x16xf32, #tpu.memory_space<vmem>>, vector<4x16xf32>
    %cst_49 = arith.constant dense<0.000000e+00> : vector<256x16xf32>
    %75 = tpu.matmul %73, %74, %cst_49 {dimension_numbers = #tpu.dot_dimension_numbers<[1], [0], [0], [1], [0, 0, 1, 1], [], []>} : vector<256x4xf32>, vector<4x16xf32>, vector<256x16xf32> -> vector<256x16xf32>
    %76 = arith.addf %71, %75 : vector<256x16xf32>
    %c0_50 = arith.constant 0 : index
    %c0_51 = arith.constant 0 : index
    %77 = vector.load %arg6[%c0_50, %c0_51] : memref<1x16xf32, #tpu.memory_space<vmem>>, vector<1x16xf32>
    %78 = vector.broadcast %77 : vector<1x16xf32> to vector<256x16xf32>
    %79 = arith.addf %76, %78 : vector<256x16xf32>
    %cst_52 = arith.constant 5.000000e-01 : f32
    %80 = vector.broadcast %cst_52 : f32 to vector<256x16xf32>
    %81 = arith.mulf %80, %79 : vector<256x16xf32>
    %cst_53 = arith.constant 0.707106769 : f32
    %82 = vector.broadcast %cst_53 : f32 to vector<256x16xf32>
    %83 = arith.mulf %79, %82 : vector<256x16xf32>
    %84 = math.erf %83 : vector<256x16xf32>
    %cst_54 = arith.constant 1.000000e+00 : f32
    %85 = vector.broadcast %cst_54 : f32 to vector<256x16xf32>
    %86 = arith.addf %85, %84 : vector<256x16xf32>
    %87 = arith.mulf %81, %86 : vector<256x16xf32>
    %88 = vector.extract_strided_slice %87 {offsets = [0, 0], sizes = [256, 8], strides = [1, 1]} : vector<256x16xf32> to vector<256x8xf32>
    %89 = vector.shape_cast %88 : vector<256x8xf32> to vector<16x16x8xf32>
    %c0_55 = arith.constant 0 : index
    %c0_56 = arith.constant 0 : index
    %c0_57 = arith.constant 0 : index
    %c0_58 = arith.constant 0 : index
    %c0_59 = arith.constant 0 : index
    %90 = vector.load %arg7[%c0_55, %c0_56, %c0_57, %c0_58, %c0_59] : memref<1x16x2x16x8xf32, #tpu.memory_space<vmem>>, vector<1x16x1x16x8xf32>
    %91 = vector.shape_cast %90 : vector<1x16x1x16x8xf32> to vector<16x16x8xf32>
    %92 = vector.shape_cast %89 : vector<16x16x8xf32> to vector<1x16x1x16x8xf32>
    tpu.vector_store %arg7[%c0_55, %c0_56, %c0_57, %c0_58, %c0_59], %92 {strides = array<i32>} : memref<1x16x2x16x8xf32, #tpu.memory_space<vmem>>, vector<1x16x1x16x8xf32>,
    %93 = vector.extract_strided_slice %87 {offsets = [0, 8], sizes = [256, 8], strides = [1, 1]} : vector<256x16xf32> to vector<256x8xf32>
    %94 = vector.shape_cast %93 : vector<256x8xf32> to vector<16x16x8xf32>
    %c0_60 = arith.constant 0 : index
    %c0_61 = arith.constant 0 : index
    %c1_62 = arith.constant 1 : index
    %c0_63 = arith.constant 0 : index
    %c0_64 = arith.constant 0 : index
    %95 = vector.load %arg7[%c0_60, %c0_61, %c1_62, %c0_63, %c0_64] : memref<1x16x2x16x8xf32, #tpu.memory_space<vmem>>, vector<1x16x1x16x8xf32>
    %96 = vector.shape_cast %95 : vector<1x16x1x16x8xf32> to vector<16x16x8xf32>
    %97 = vector.shape_cast %94 : vector<16x16x8xf32> to vector<1x16x1x16x8xf32>
    tpu.vector_store %arg7[%c0_60, %c0_61, %c1_62, %c0_63, %c0_64], %97 {strides = array<i32>} : memref<1x16x2x16x8xf32, #tpu.memory_space<vmem>>, vector<1x16x1x16x8xf32>,
    return
  }
  func.func @transform_0(%arg0: i32, %arg1: i32) -> (i32, i32, i32, i32) {
    %c0_i32 = arith.constant 0 : i32
    %c0_i32_0 = arith.constant 0 : i32
    %c0_i32_1 = arith.constant 0 : i32
    return %arg0, %arg1, %c0_i32, %c0_i32_0 : i32, i32, i32, i32
  }
  func.func @transform_1(%arg0: i32, %arg1: i32) -> (i32, i32, i32, i32) {
    %c16_i32 = arith.constant 16 : i32
    %0 = arith.muli %arg1, %c16_i32 : i32
    %c1_i32 = arith.constant 1 : i32
    %1 = arith.subi %0, %c1_i32 : i32
    %c0_i32 = arith.constant 0 : i32
    %2 = arith.maxsi %1, %c0_i32 : i32
    %c0_i32_0 = arith.constant 0 : i32
    %c0_i32_1 = arith.constant 0 : i32
    %c0_i32_2 = arith.constant 0 : i32
    return %arg0, %2, %c0_i32_0, %c0_i32_1 : i32, i32, i32, i32
  }
  func.func @transform_2(%arg0: i32, %arg1: i32) -> (i32, i32, i32, i32) {
    %c1_i32 = arith.constant 1 : i32
    %0 = arith.addi %arg1, %c1_i32 : i32
    %c16_i32 = arith.constant 16 : i32
    %1 = arith.muli %0, %c16_i32 : i32
    %c15_i32 = arith.constant 15 : i32
    %2 = arith.minsi %1, %c15_i32 : i32
    %c0_i32 = arith.constant 0 : i32
    %c0_i32_0 = arith.constant 0 : i32
    %c0_i32_1 = arith.constant 0 : i32
    return %arg0, %2, %c0_i32, %c0_i32_0 : i32, i32, i32, i32
  }
  func.func @transform_3(%arg0: i32, %arg1: i32) -> (i32, i32) {
    %c0_i32 = arith.constant 0 : i32
    %c0_i32_0 = arith.constant 0 : i32
    %c0_i32_1 = arith.constant 0 : i32
    return %c0_i32, %c0_i32_0 : i32, i32
  }
  func.func @transform_4(%arg0: i32, %arg1: i32) -> (i32, i32) {
    %c0_i32 = arith.constant 0 : i32
    %c0_i32_0 = arith.constant 0 : i32
    %c0_i32_1 = arith.constant 0 : i32
    return %c0_i32, %c0_i32_0 : i32, i32
  }
  func.func @transform_5(%arg0: i32, %arg1: i32) -> (i32, i32, i32, i32, i32) {
    %c0_i32 = arith.constant 0 : i32
    %c0_i32_0 = arith.constant 0 : i32
    %c0_i32_1 = arith.constant 0 : i32
    %c0_i32_2 = arith.constant 0 : i32
    return %arg0, %arg1, %c0_i32, %c0_i32_0, %c0_i32_1 : i32, i32, i32, i32, i32
  }
}

</mosaic_0001>

<llo_original>
// kernel: tpu_custom_call.1
$region0: #{tpu_custom_call.1}
  #allocation0 [shape = 'u32[]', space=smem, size = 0x4, offset = 0x4, fixed_abs, tag = 'smem constant byte address 0x4 - core index']
  #allocation1 [shape = 'u32[144,128]{1,0:T(1,128)}', space=vmem, size = 0x12000, scoped, tag = 'internal scratch']
  #allocation2 [shape = 'f32[18,32,4]{2,1,0:T(8,128)}', space=vmem, size = 0x48000, scoped, tag = 'scratch operand']
  %s0 = inlined_call_operand.vmem [shape: f32[2,16,16,4], index: 0, kind: input, shape index: {}]
  %s1 = inlined_call_operand.vmem [shape: f32[2,16,16,4], index: 1, kind: input, shape index: {}]
  %s2 = inlined_call_operand.vmem [shape: f32[2,16,16,4], index: 2, kind: input, shape index: {}]
  %s3 = inlined_call_operand.vmem [shape: f32[36,16], index: 3, kind: input, shape index: {}]
  %s4 = inlined_call_operand.vmem [shape: f32[1,16], index: 4, kind: input, shape index: {}]
  %s5 = inlined_call_operand.vmem [shape: f32[2,16,2,16,8], index: 5, kind: output, shape index: {}]
  %s6 = sld [smem:[#allocation0]]
  $region53: #{tpu_custom_call.1} parent=0
    _
  %s8 = ssub.s32 1, %s6
  %s9 = scalar_select 0, %s8, %s6
  loop: start=0, step=1, limit=4
  $region2: #{tpu_custom_call.1} parent=0 // loop_pre_header
    _
  $region3: #{tpu_custom_call.1} parent=0 // loop_header
    %s11 = sphi 0, %s15
    %p12 = scmp.ge.s32.totalorder %s11, 4
    %s18 = sphi 0, %s30
    %s19 = sphi 0, %s26
    %s20 = sphi 0, %s18
    %s21 = sphi 0, %s19
    %s22 = sphi 0, %s20
    %s23 = sphi 0, %s21
    %s35 = sphi 0, %s37
    %s38 = sphi 0, %s35
    %s39 = sphi 0, %s38
    %s55 = sphi 0, %s39
    %s71 = sphi 0, %s73
    %s74 = sphi 0, %s71
    %s75 = sphi 0, %s74
    %s91 = sphi 0, %s75
    %s107 = sphi 0, %s109
    %s110 = sphi 0, %s107
    %s111 = sphi 0, %s110
    %s127 = sphi 0, %s111
    %s131 = sphi 0, %s131
    %s133 = sphi 0, %s131
    %s134 = sphi 0, %s133
    %s148 = sphi 0, %s134
    %s152 = sphi 0, %s152
    %s154 = sphi 0, %s152
    %s155 = sphi 0, %s154
    %s169 = sphi 0, %s155
    %s177 = sphi 0, %s179
    %s180 = sphi 0, %s177
    %s181 = sphi 0, %s180
    %s197 = sphi 0, %s181
  $region4: #{tpu_custom_call.1} parent=0 // loop_header_branch
    %14 = sbr.rel (%p12) target = $region8
  $region5: #{tpu_custom_call.1} parent=0 // loop_body
    %s16 = ssub.s32 %s11, 1
    %s17 = ssub.s32 %s11, 2
    %s24 = sadd.s32 1, %s19
    %p25 = scmp.ge.s32.totalorder %s24, 1
    %s26 = scalar_select %p25, 0, %s24
    %s27 = sadd.s32 1, %s18
    %s28 = scalar_select %p25, %s27, %s18
    %p29 = scmp.ge.s32.totalorder %s28, 2
    %s30 = scalar_select %p29, 0, %s28
    %s31 = ssub.s32 %s18, %s30
    %s32 = ssub.s32 %s19, %s26
    %s33 = sor.u32 %s31, %s32
    %p34 = scmp.eq.s32.totalorder %s33, 0
    %s36 = sadd.s32 %s35, 1
    %s37 = scalar_select %p34, %s35, %s36
    %p40 = pneg %p34
    %p41 = scmp.eq.s32.totalorder %s11, 1
    %p42 = por %p40, %p41
    %p43 = scmp.ne.s32.totalorder %s35, %s38
    %p44 = scmp.eq.s32.totalorder %s11, 0
    %p45 = por %p43, %p44
    %p46 = scmp.ne.s32.totalorder %s35, %s38
    %p47 = scmp.eq.s32.totalorder %s16, 1
    %p48 = por %p46, %p47
    %p49 = scmp.ne.s32.totalorder %s38, %s39
    %p50 = scmp.eq.s32.totalorder %s16, 0
    %p51 = por %p49, %p50
    %p52 = scmp.ne.s32.totalorder %s38, %s39
    %p53 = scmp.eq.s32.totalorder %s17, 1
    %p54 = por %p52, %p53
    %p56 = scmp.ne.s32.totalorder %s39, %s55
    %p57 = scmp.eq.s32.totalorder %s17, 0
    %p58 = por %p56, %p57
    %s59 = smul.u32 %s19, 16
    %s60 = ssub.s32 %s59, 1
    %p61 = scmp.gt.s32.totalorder %s60, 0
    %s62 = scalar_select %p61, %s60, 0
    %s63 = smul.u32 %s26, 16
    %s64 = ssub.s32 %s63, 1
    %p65 = scmp.gt.s32.totalorder %s64, 0
    %s66 = scalar_select %p65, %s64, 0
    %s67 = ssub.s32 %s18, %s30
    %s68 = ssub.s32 %s62, %s66
    %s69 = sor.u32 %s67, %s68
    %p70 = scmp.eq.s32.totalorder %s69, 0
    %s72 = sadd.s32 %s71, 1
    %s73 = scalar_select %p70, %s71, %s72
    %p76 = pneg %p70
    %p77 = scmp.eq.s32.totalorder %s11, 1
    %p78 = por %p76, %p77
    %p79 = scmp.ne.s32.totalorder %s71, %s74
    %p80 = scmp.eq.s32.totalorder %s11, 0
    %p81 = por %p79, %p80
    %p82 = scmp.ne.s32.totalorder %s71, %s74
    %p83 = scmp.eq.s32.totalorder %s16, 1
    %p84 = por %p82, %p83
    %p85 = scmp.ne.s32.totalorder %s74, %s75
    %p86 = scmp.eq.s32.totalorder %s16, 0
    %p87 = por %p85, %p86
    %p88 = scmp.ne.s32.totalorder %s74, %s75
    %p89 = scmp.eq.s32.totalorder %s17, 1
    %p90 = por %p88, %p89
    %p92 = scmp.ne.s32.totalorder %s75, %s91
    %p93 = scmp.eq.s32.totalorder %s17, 0
    %p94 = por %p92, %p93
    %s95 = sadd.s32 %s19, 1
    %s96 = smul.u32 %s95, 16
    %p97 = scmp.lt.s32.totalorder %s96, 15
    %s98 = scalar_select %p97, %s96, 15
    %s99 = sadd.s32 %s26, 1
    %s100 = smul.u32 %s99, 16
    %p101 = scmp.lt.s32.totalorder %s100, 15
    %s102 = scalar_select %p101, %s100, 15
    %s103 = ssub.s32 %s18, %s30
    %s104 = ssub.s32 %s98, %s102
    %s105 = sor.u32 %s103, %s104
    %p106 = scmp.eq.s32.totalorder %s105, 0
    %s108 = sadd.s32 %s107, 1
    %s109 = scalar_select %p106, %s107, %s108
    %p112 = pneg %p106
    %p113 = scmp.eq.s32.totalorder %s11, 1
    %p114 = por %p112, %p113
    %p115 = scmp.ne.s32.totalorder %s107, %s110
    %p116 = scmp.eq.s32.totalorder %s11, 0
    %p117 = por %p115, %p116
    %p118 = scmp.ne.s32.totalorder %s107, %s110
    %p119 = scmp.eq.s32.totalorder %s16, 1
    %p120 = por %p118, %p119
    %p121 = scmp.ne.s32.totalorder %s110, %s111
    %p122 = scmp.eq.s32.totalorder %s16, 0
    %p123 = por %p121, %p122
    %p124 = scmp.ne.s32.totalorder %s110, %s111
    %p125 = scmp.eq.s32.totalorder %s17, 1
    %p126 = por %p124, %p125
    %p128 = scmp.ne.s32.totalorder %s111, %s127
    %p129 = scmp.eq.s32.totalorder %s17, 0
    %p130 = por %p128, %p129
    %s132 = sadd.s32 %s131, 1
    %p135 = scmp.eq.s32.totalorder %s11, 1
    %p136 = scmp.ne.s32.totalorder %s131, %s133
    %p137 = scmp.eq.s32.totalorder %s11, 0
    %p138 = por %p136, %p137
    %p139 = scmp.ne.s32.totalorder %s131, %s133
    %p140 = scmp.eq.s32.totalorder %s16, 1
    %p141 = por %p139, %p140
    %p142 = scmp.ne.s32.totalorder %s133, %s134
    %p143 = scmp.eq.s32.totalorder %s16, 0
    %p144 = por %p142, %p143
    %p145 = scmp.ne.s32.totalorder %s133, %s134
    %p146 = scmp.eq.s32.totalorder %s17, 1
    %p147 = por %p145, %p146
    %p149 = scmp.ne.s32.totalorder %s134, %s148
    %p150 = scmp.eq.s32.totalorder %s17, 0
    %p151 = por %p149, %p150
    %s153 = sadd.s32 %s152, 1
    %p156 = scmp.eq.s32.totalorder %s11, 1
    %p157 = scmp.ne.s32.totalorder %s152, %s154
    %p158 = scmp.eq.s32.totalorder %s11, 0
    %p159 = por %p157, %p158
    %p160 = scmp.ne.s32.totalorder %s152, %s154
    %p161 = scmp.eq.s32.totalorder %s16, 1
    %p162 = por %p160, %p161
    %p163 = scmp.ne.s32.totalorder %s154, %s155
    %p164 = scmp.eq.s32.totalorder %s16, 0
    %p165 = por %p163, %p164
    %p166 = scmp.ne.s32.totalorder %s154, %s155
    %p167 = scmp.eq.s32.totalorder %s17, 1
    %p168 = por %p166, %p167
    %p170 = scmp.ne.s32.totalorder %s155, %s169
    %p171 = scmp.eq.s32.totalorder %s17, 0
    %p172 = por %p170, %p171
    %s173 = ssub.s32 %s18, %s30
    %s174 = ssub.s32 %s19, %s26
    %s175 = sor.u32 %s173, %s174
    %p176 = scmp.eq.s32.totalorder %s175, 0
    %s178 = sadd.s32 %s177, 1
    %s179 = scalar_select %p176, %s177, %s178
    %p182 = pneg %p176
    %p183 = scmp.eq.s32.totalorder %s11, 1
    %p184 = por %p182, %p183
    %p185 = scmp.ne.s32.totalorder %s177, %s180
    %p186 = scmp.eq.s32.totalorder %s11, 0
    %p187 = por %p185, %p186
    %p188 = scmp.ne.s32.totalorder %s177, %s180
    %p189 = scmp.eq.s32.totalorder %s16, 1
    %p190 = por %p188, %p189
    %p191 = scmp.ne.s32.totalorder %s180, %s181
    %p192 = scmp.eq.s32.totalorder %s16, 0
    %p193 = por %p191, %p192
    %p194 = scmp.ne.s32.totalorder %s180, %s181
    %p195 = scmp.eq.s32.totalorder %s17, 1
    %p196 = por %p194, %p195
    %p198 = scmp.ne.s32.totalorder %s181, %s197
    %p199 = scmp.eq.s32.totalorder %s17, 0
    %p200 = por %p198, %p199
    %p201 = scmp.le.s32.totalorder 1, %s11
    %p202 = scmp.lt.s32.totalorder %s11, 3
    %p203 = pnand %p201, %p202
    %p204 = pneg %p203
    // Predicated region
    $region9: #{tpu_custom_call.1} parent=5 // pred_check
      _
    $region10: #{tpu_custom_call.1} parent=5 // pred_check_branch
      %206 = sbr.rel (%p203) target = $region12
    $region11: #{tpu_custom_call.1} parent=5 // pred_region
      %s207 = ssub.s32 %s11, 1
      // Predicated region
      $region13: #{tpu_custom_call.1} parent=11 // pred_check
        %p208 = pneg %p144
      $region14: #{tpu_custom_call.1} parent=11 // pred_check_branch
        %210 = sbr.rel (%p208) target = $region16
      $region15: #{tpu_custom_call.1} parent=11 // pred_region
        _
      $region16: #{tpu_custom_call.1} parent=11 // pred_fallthru
        _
      // Predicated region
      $region17: #{tpu_custom_call.1} parent=11 // pred_check
        %p211 = pneg %p165
      $region18: #{tpu_custom_call.1} parent=11 // pred_check_branch
        %213 = sbr.rel (%p211) target = $region20
      $region19: #{tpu_custom_call.1} parent=11 // pred_region
        _
      $region20: #{tpu_custom_call.1} parent=11 // pred_fallthru
        _
    $region12: #{tpu_custom_call.1} parent=5 // pred_fallthru
      _
    %p214 = scmp.lt.s32.totalorder %s11, 2
    // Predicated region
    $region21: #{tpu_custom_call.1} parent=5 // pred_check
      %p215 = pneg %p214
    $region22: #{tpu_custom_call.1} parent=5 // pred_check_branch
      %217 = sbr.rel (%p215) target = $region24
    $region23: #{tpu_custom_call.1} parent=5 // pred_region
      // Predicated region
      $region25: #{tpu_custom_call.1} parent=23 // pred_check
        %p218 = pneg %p45
      $region26: #{tpu_custom_call.1} parent=23 // pred_check_branch
        %220 = sbr.rel (%p218) target = $region28
      $region27: #{tpu_custom_call.1} parent=23 // pred_region
        %s221 = smul.u32 16, %s19
        %p222 = scmp.lt.s32.totalorder %s18, 1
        %s223 = scalar_select %p222, %s18, 1
        %p224 = scmp.lt.s32.totalorder %s221, 15
        %s225 = scalar_select %p224, %s221, 15
        %s226 = smul.addr %s225, 2
        %s227 = smul.addr %s223, 32
        %s228 = sadd.s32 %s226, %s227
        %s229 = smul.addr %s228, 8
        %s230 = scalar_lea.vmem %s0, %s229
        %s231 = smul.u32 16, %s19
      $region28: #{tpu_custom_call.1} parent=23 // pred_fallthru
        _
      // Predicated region
      $region29: #{tpu_custom_call.1} parent=23 // pred_check
        %p232 = pneg %p81
      $region30: #{tpu_custom_call.1} parent=23 // pred_check_branch
        %234 = sbr.rel (%p232) target = $region32
      $region31: #{tpu_custom_call.1} parent=23 // pred_region
        %s235 = smul.u32 %s19, 16
        %s236 = ssub.s32 %s235, 1
        %p237 = scmp.gt.s32.totalorder %s236, 0
        %s238 = scalar_select %p237, %s236, 0
        %p239 = scmp.lt.s32.totalorder %s18, 1
        %s240 = scalar_select %p239, %s18, 1
        %p241 = scmp.lt.s32.totalorder %s238, 15
        %s242 = scalar_select %p241, %s238, 15
        %s243 = smul.addr %s242, 2
        %s244 = smul.addr %s240, 32
        %s245 = sadd.s32 %s243, %s244
        %s246 = smul.addr %s245, 8
        %s247 = scalar_lea.vmem %s1, %s246
        %s248 = smul.u32 %s19, 16
        %s249 = ssub.s32 %s248, 1
        %p250 = scmp.gt.s32.totalorder %s249, 0
        %s251 = scalar_select %p250, %s249, 0
      $region32: #{tpu_custom_call.1} parent=23 // pred_fallthru
        _
      // Predicated region
      $region33: #{tpu_custom_call.1} parent=23 // pred_check
        %p252 = pneg %p117
      $region34: #{tpu_custom_call.1} parent=23 // pred_check_branch
        %254 = sbr.rel (%p252) target = $region36
      $region35: #{tpu_custom_call.1} parent=23 // pred_region
        %s255 = sadd.s32 %s19, 1
        %s256 = smul.u32 %s255, 16
        %p257 = scmp.lt.s32.totalorder %s256, 15
        %s258 = scalar_select %p257, %s256, 15
        %p259 = scmp.lt.s32.totalorder %s18, 1
        %s260 = scalar_select %p259, %s18, 1
        %p261 = scmp.lt.s32.totalorder %s258, 15
        %s262 = scalar_select %p261, %s258, 15
        %s263 = smul.addr %s262, 2
        %s264 = smul.addr %s260, 32
        %s265 = sadd.s32 %s263, %s264
        %s266 = smul.addr %s265, 8
        %s267 = scalar_lea.vmem %s2, %s266
        %s268 = sadd.s32 %s19, 1
        %s269 = smul.u32 %s268, 16
        %p270 = scmp.lt.s32.totalorder %s269, 15
        %s271 = scalar_select %p270, %s269, 15
      $region36: #{tpu_custom_call.1} parent=23 // pred_fallthru
        _
    $region24: #{tpu_custom_call.1} parent=5 // pred_fallthru
      _
    %p272 = scmp.le.s32.totalorder 1, %s11
    %p273 = scmp.lt.s32.totalorder %s11, 3
    %p274 = pnand %p272, %p273
    %p275 = pneg %p274
    // Predicated region
    $region37: #{tpu_custom_call.1} parent=5 // pred_check
      _
    $region38: #{tpu_custom_call.1} parent=5 // pred_check_branch
      %277 = sbr.rel (%p274) target = $region40
    $region39: #{tpu_custom_call.1} parent=5 // pred_region
      %s278 = ssub.s32 %s11, 1
      %s279 = smul.u32 16, %s21
      %p280 = scmp.lt.s32.totalorder %s20, 1
      %s281 = scalar_select %p280, %s20, 1
      %p282 = scmp.lt.s32.totalorder %s279, 15
      %s283 = scalar_select %p282, %s279, 15
      %s284 = smul.addr %s283, 2
      %s285 = smul.addr %s281, 32
      %s286 = sadd.s32 %s284, %s285
      %s287 = smul.addr %s286, 8
      %s288 = scalar_lea.vmem %s0, %s287
      %p289 = pneg %p51
      %p290 = pneg %p48
      %s291 = smul.u32 %s21, 16
      %s292 = ssub.s32 %s291, 1
      %p293 = scmp.gt.s32.totalorder %s292, 0
      %s294 = scalar_select %p293, %s292, 0
      %p295 = scmp.lt.s32.totalorder %s20, 1
      %s296 = scalar_select %p295, %s20, 1
      %p297 = scmp.lt.s32.totalorder %s294, 15
      %s298 = scalar_select %p297, %s294, 15
      %s299 = smul.addr %s298, 2
      %s300 = smul.addr %s296, 32
      %s301 = sadd.s32 %s299, %s300
      %s302 = smul.addr %s301, 8
      %s303 = scalar_lea.vmem %s1, %s302
      %p304 = pneg %p87
      %p305 = pneg %p84
      %s306 = sadd.s32 %s21, 1
      %s307 = smul.u32 %s306, 16
      %p308 = scmp.lt.s32.totalorder %s307, 15
      %s309 = scalar_select %p308, %s307, 15
      %p310 = scmp.lt.s32.totalorder %s20, 1
      %s311 = scalar_select %p310, %s20, 1
      %p312 = scmp.lt.s32.totalorder %s309, 15
      %s313 = scalar_select %p312, %s309, 15
      %s314 = smul.addr %s313, 2
      %s315 = smul.addr %s311, 32
      %s316 = sadd.s32 %s314, %s315
      %s317 = smul.addr %s316, 8
      %s318 = scalar_lea.vmem %s2, %s317
      %p319 = pneg %p123
      %p320 = pneg %p120
      %p321 = pneg %p144
      %p322 = pneg %p141
      %p323 = pneg %p165
      %p324 = pneg %p162
      %p325 = pneg %p193
      %p326 = pneg %p190
      %s327 = smul.u32 16, %s21
      %p328 = scmp.lt.s32.totalorder %s20, 1
      %s329 = scalar_select %p328, %s20, 1
      %p330 = scmp.lt.s32.totalorder %s327, 15
      %s331 = scalar_select %p330, %s327, 15
      %s332 = smul.addr %s331, 4
      %s333 = smul.addr %s329, 64
      %s334 = sadd.s32 %s332, %s333
      %s335 = smul.addr %s334, 8
      %s336 = scalar_lea.vmem %s5, %s335
      %s337 = smul.u32 16, %s21
      %p338 = scmp.lt.s32.totalorder %s20, 1
      %s339 = scalar_select %p338, %s20, 1
      %p340 = scmp.lt.s32.totalorder %s337, 15
      %s341 = scalar_select %p340, %s337, 15
      %s342 = smul.addr %s341, 2
      %s343 = smul.addr %s339, 32
      %s344 = sadd.s32 %s342, %s343
      %s345 = smul.addr %s344, 8
      %s346 = scalar_lea.vmem %s0, %s345
      %s347 = smul.u32 16, %s21
      %s348 = smul.u32 %s21, 16
      %s349 = ssub.s32 %s348, 1
      %p350 = scmp.gt.s32.totalorder %s349, 0
      %s351 = scalar_select %p350, %s349, 0
      %p352 = scmp.lt.s32.totalorder %s20, 1
      %s353 = scalar_select %p352, %s20, 1
      %p354 = scmp.lt.s32.totalorder %s351, 15
      %s355 = scalar_select %p354, %s351, 15
      %s356 = smul.addr %s355, 2
      %s357 = smul.addr %s353, 32
      %s358 = sadd.s32 %s356, %s357
      %s359 = smul.addr %s358, 8
      %s360 = scalar_lea.vmem %s1, %s359
      %s361 = smul.u32 %s21, 16
      %s362 = ssub.s32 %s361, 1
      %p363 = scmp.gt.s32.totalorder %s362, 0
      %s364 = scalar_select %p363, %s362, 0
      %s365 = sadd.s32 %s21, 1
      %s366 = smul.u32 %s365, 16
      %p367 = scmp.lt.s32.totalorder %s366, 15
      %s368 = scalar_select %p367, %s366, 15
      %p369 = scmp.lt.s32.totalorder %s20, 1
      %s370 = scalar_select %p369, %s20, 1
      %p371 = scmp.lt.s32.totalorder %s368, 15
      %s372 = scalar_select %p371, %s368, 15
      %s373 = smul.addr %s372, 2
      %s374 = smul.addr %s370, 32
      %s375 = sadd.s32 %s373, %s374
      %s376 = smul.addr %s375, 8
      %s377 = scalar_lea.vmem %s2, %s376
      %s378 = sadd.s32 %s21, 1
      %s379 = smul.u32 %s378, 16
      %p380 = scmp.lt.s32.totalorder %s379, 15
      %s381 = scalar_select %p380, %s379, 15
      %s382 = smul.u32 16, %s21
      %p383 = scmp.lt.s32.totalorder %s20, 1
      %s384 = scalar_select %p383, %s20, 1
      %p385 = scmp.lt.s32.totalorder %s382, 15
      %s386 = scalar_select %p385, %s382, 15
      %s387 = smul.addr %s386, 4
      %s388 = smul.addr %s384, 64
      %s389 = sadd.s32 %s387, %s388
      %s390 = smul.addr %s389, 8
      %s391 = scalar_lea.vmem %s5, %s390
      %s392 = smul.u32 16, %s21
      %v393 = vld [vmem:[%s346] sm:$0xff]
      %v394 = vld [vmem:[%s346 + $0x8] sm:$0xff]
      %v395 = vld [vmem:[%s346 + $0x10] sm:$0xff]
      %v396 = vld [vmem:[%s346 + $0x18] sm:$0xff]
      %v397 = vld [vmem:[%s346 + $0x20] sm:$0xff]
      %v398 = vld [vmem:[%s346 + $0x28] sm:$0xff]
      %v399 = vld [vmem:[%s346 + $0x30] sm:$0xff]
      %v400 = vld [vmem:[%s346 + $0x38] sm:$0xff]
      %v401 = vld [vmem:[%s346 + $0x40] sm:$0xff]
      %v402 = vld [vmem:[%s346 + $0x48] sm:$0xff]
      %v403 = vld [vmem:[%s346 + $0x50] sm:$0xff]
      %v404 = vld [vmem:[%s346 + $0x58] sm:$0xff]
      %v405 = vld [vmem:[%s346 + $0x60] sm:$0xff]
      %v406 = vld [vmem:[%s346 + $0x68] sm:$0xff]
      %v407 = vld [vmem:[%s346 + $0x70] sm:$0xff]
      %v408 = vld [vmem:[%s346 + $0x78] sm:$0xff]
      %v409 = vld [vmem:[%s346 + $0x80] sm:$0xff]
      %v410 = vld [vmem:[%s346 + $0x88] sm:$0xff]
      %v411 = vld [vmem:[%s346 + $0x90] sm:$0xff]
      %v412 = vld [vmem:[%s346 + $0x98] sm:$0xff]
      %v413 = vld [vmem:[%s346 + $0xa0] sm:$0xff]
      %v414 = vld [vmem:[%s346 + $0xa8] sm:$0xff]
      %v415 = vld [vmem:[%s346 + $0xb0] sm:$0xff]
      %v416 = vld [vmem:[%s346 + $0xb8] sm:$0xff]
      %v417 = vld [vmem:[%s346 + $0xc0] sm:$0xff]
      %v418 = vld [vmem:[%s346 + $0xc8] sm:$0xff]
      %v419 = vld [vmem:[%s346 + $0xd0] sm:$0xff]
      %v420 = vld [vmem:[%s346 + $0xd8] sm:$0xff]
      %v421 = vld [vmem:[%s346 + $0xe0] sm:$0xff]
      %v422 = vld [vmem:[%s346 + $0xe8] sm:$0xff]
      %v423 = vld [vmem:[%s346 + $0xf0] sm:$0xff]
      %v424 = vld [vmem:[%s346 + $0xf8] sm:$0xff]
      %s425 = scalar_lea.vmem [#allocation2], 32
      %vm426 = vcmask 31744
      %427 = vst.msk [vmem:[%s425 + $0x8] sm:$0xff] %vm426, %v393
      %428 = vst.msk [vmem:[%s425 + $0x10] sm:$0xff] %vm426, %v394
      %429 = vst.msk [vmem:[%s425 + $0x28] sm:$0xff] %vm426, %v395
      %430 = vst.msk [vmem:[%s425 + $0x30] sm:$0xff] %vm426, %v396
      %431 = vst.msk [vmem:[%s425 + $0x48] sm:$0xff] %vm426, %v397
      %432 = vst.msk [vmem:[%s425 + $0x50] sm:$0xff] %vm426, %v398
      %433 = vst.msk [vmem:[%s425 + $0x68] sm:$0xff] %vm426, %v399
      %434 = vst.msk [vmem:[%s425 + $0x70] sm:$0xff] %vm426, %v400
      %435 = vst.msk [vmem:[%s425 + $0x88] sm:$0xff] %vm426, %v401
      %436 = vst.msk [vmem:[%s425 + $0x90] sm:$0xff] %vm426, %v402
      %437 = vst.msk [vmem:[%s425 + $0xa8] sm:$0xff] %vm426, %v403
      %438 = vst.msk [vmem:[%s425 + $0xb0] sm:$0xff] %vm426, %v404
      %439 = vst.msk [vmem:[%s425 + $0xc8] sm:$0xff] %vm426, %v405
      %440 = vst.msk [vmem:[%s425 + $0xd0] sm:$0xff] %vm426, %v406
      %441 = vst.msk [vmem:[%s425 + $0xe8] sm:$0xff] %vm426, %v407
      %442 = vst.msk [vmem:[%s425 + $0xf0] sm:$0xff] %vm426, %v408
      %443 = vst.msk [vmem:[%s425 + $0x108] sm:$0xff] %vm426, %v409
      %444 = vst.msk [vmem:[%s425 + $0x110] sm:$0xff] %vm426, %v410
      %445 = vst.msk [vmem:[%s425 + $0x128] sm:$0xff] %vm426, %v411
      %446 = vst.msk [vmem:[%s425 + $0x130] sm:$0xff] %vm426, %v412
      %447 = vst.msk [vmem:[%s425 + $0x148] sm:$0xff] %vm426, %v413
      %448 = vst.msk [vmem:[%s425 + $0x150] sm:$0xff] %vm426, %v414
      %449 = vst.msk [vmem:[%s425 + $0x168] sm:$0xff] %vm426, %v415
      %450 = vst.msk [vmem:[%s425 + $0x170] sm:$0xff] %vm426, %v416
      %451 = vst.msk [vmem:[%s425 + $0x188] sm:$0xff] %vm426, %v417
      %452 = vst.msk [vmem:[%s425 + $0x190] sm:$0xff] %vm426, %v418
      %453 = vst.msk [vmem:[%s425 + $0x1a8] sm:$0xff] %vm426, %v419
      %454 = vst.msk [vmem:[%s425 + $0x1b0] sm:$0xff] %vm426, %v420
      %455 = vst.msk [vmem:[%s425 + $0x1c8] sm:$0xff] %vm426, %v421
      %456 = vst.msk [vmem:[%s425 + $0x1d0] sm:$0xff] %vm426, %v422
      %457 = vst.msk [vmem:[%s425 + $0x1e8] sm:$0xff] %vm426, %v423
      %458 = vst.msk [vmem:[%s425 + $0x1f0] sm:$0xff] %vm426, %v424
      %v459 = vld [vmem:[%s360] sm:$0xff]
      %v460 = vld [vmem:[%s360 + $0x8] sm:$0xff]
      %v461 = vld [vmem:[%s377] sm:$0xff]
      %v462 = vld [vmem:[%s377 + $0x8] sm:$0xff]
      %p463 = scmp.eq.s32.totalorder %s21, 0
      %s464 = scalar_select %p463, 1, 0
      %v465 = vstv %s464
      %vm466 = vcmp.eq.s32.totalorder %v465, 1
      %v467 = vsel %vm466, 0.0, %v459
      %v468 = vsel %vm466, 0.0, %v460
      %469 = vst.msk [vmem:[#allocation2 + $0x8] sm:$0xff] %vm426, %v467
      %470 = vst.msk [vmem:[#allocation2 + $0x10] sm:$0xff] %vm426, %v468
      %v471 = vsel %vm466, 0.0, %v461
      %v472 = vsel %vm466, 0.0, %v462
      %s473 = scalar_lea.vmem [#allocation2], 544
      %474 = vst.msk [vmem:[%s473 + $0x8] sm:$0xff] %vm426, %v471
      %475 = vst.msk [vmem:[%s473 + $0x10] sm:$0xff] %vm426, %v472
      %v476 = vlaneseq
      %v477 = vshrl.u32 %v476, 7
      %v478 = vadd.s32 %v477, 8
      %v479 = vld [vmem:[#allocation2 + $0x7] sm:$0xff]
      %v480 = vld [vmem:[#allocation2 + $0xf] sm:$0xff]
      %v481 = vld [vmem:[#allocation2 + $0x27] sm:$0xff]
      %v482 = vld [vmem:[#allocation2 + $0x2f] sm:$0xff]
      %v483 = vld [vmem:[#allocation2 + $0x47] sm:$0xff]
      %v484 = vld [vmem:[#allocation2 + $0x4f] sm:$0xff]
      %v485 = vld [vmem:[#allocation2 + $0x67] sm:$0xff]
      %v486 = vld [vmem:[#allocation2 + $0x6f] sm:$0xff]
      %v487 = vld [vmem:[#allocation2 + $0x87] sm:$0xff]
      %v488 = vld [vmem:[#allocation2 + $0x8f] sm:$0xff]
      %v489 = vld [vmem:[#allocation2 + $0xa7] sm:$0xff]
      %v490 = vld [vmem:[#allocation2 + $0xaf] sm:$0xff]
      %v491 = vld [vmem:[#allocation2 + $0xc7] sm:$0xff]
      %v492 = vld [vmem:[#allocation2 + $0xcf] sm:$0xff]
      %v493 = vld [vmem:[#allocation2 + $0xe7] sm:$0xff]
      %v494 = vld [vmem:[#allocation2 + $0xef] sm:$0xff]
      %v495 = vld [vmem:[#allocation2 + $0x107] sm:$0xff]
      %v496 = vld [vmem:[#allocation2 + $0x10f] sm:$0xff]
      %v497 = vld [vmem:[#allocation2 + $0x127] sm:$0xff]
      %v498 = vld [vmem:[#allocation2 + $0x12f] sm:$0xff]
      %v499 = vld [vmem:[#allocation2 + $0x147] sm:$0xff]
      %v500 = vld [vmem:[#allocation2 + $0x14f] sm:$0xff]
      %v501 = vld [vmem:[#allocation2 + $0x167] sm:$0xff]
      %v502 = vld [vmem:[#allocation2 + $0x16f] sm:$0xff]
      %v503 = vld [vmem:[#allocation2 + $0x187] sm:$0xff]
      %v504 = vld [vmem:[#allocation2 + $0x18f] sm:$0xff]
      %v505 = vld [vmem:[#allocation2 + $0x1a7] sm:$0xff]
      %v506 = vld [vmem:[#allocation2 + $0x1af] sm:$0xff]
      %v507 = vld [vmem:[#allocation2 + $0x1c7] sm:$0xff]
      %v508 = vld [vmem:[#allocation2 + $0x1cf] sm:$0xff]
      %v509 = vld [vmem:[#allocation2 + $0x1e7] sm:$0xff]
      %v510 = vld [vmem:[#allocation2 + $0x1ef] sm:$0xff]
      %v511 = vld [vmem:[#allocation2 + $0x207] sm:$0xff]
      %v512 = vld [vmem:[#allocation2 + $0x20f] sm:$0xff]
      %v513 = vld [vmem:[#allocation2 + $0x227] sm:$0xff]
      %v514 = vld [vmem:[#allocation2 + $0x22f] sm:$0xff]
      %vm515 = vcmp.eq.s32.totalorder %v477, 0
      %vm516 = vcmp.eq.s32.totalorder %v478, 0
      %v517 = vsel %vm515, 1, 0
      %v518 = vsel %vm516, 1, 0
      %vm519 = vcmp.eq.s32.totalorder %v517, 1
      %vm520 = vcmp.eq.s32.totalorder %v518, 1
      %v521 = vsel %vm519, 0.0, %v479
      %v522 = vsel %vm520, 0.0, %v480
      %v523 = vsel %vm519, 0.0, %v481
      %v524 = vsel %vm520, 0.0, %v482
      %v525 = vsel %vm519, 0.0, %v483
      %v526 = vsel %vm520, 0.0, %v484
      %v527 = vsel %vm519, 0.0, %v485
      %v528 = vsel %vm520, 0.0, %v486
      %v529 = vsel %vm519, 0.0, %v487
      %v530 = vsel %vm520, 0.0, %v488
      %v531 = vsel %vm519, 0.0, %v489
      %v532 = vsel %vm520, 0.0, %v490
      %v533 = vsel %vm519, 0.0, %v491
      %v534 = vsel %vm520, 0.0, %v492
      %v535 = vsel %vm519, 0.0, %v493
      %v536 = vsel %vm520, 0.0, %v494
      %v537 = vsel %vm519, 0.0, %v495
      %v538 = vsel %vm520, 0.0, %v496
      %v539 = vsel %vm519, 0.0, %v497
      %v540 = vsel %vm520, 0.0, %v498
      %v541 = vsel %vm519, 0.0, %v499
      %v542 = vsel %vm520, 0.0, %v500
      %v543 = vsel %vm519, 0.0, %v501
      %v544 = vsel %vm520, 0.0, %v502
      %v545 = vsel %vm519, 0.0, %v503
      %v546 = vsel %vm520, 0.0, %v504
      %v547 = vsel %vm519, 0.0, %v505
      %v548 = vsel %vm520, 0.0, %v506
      %v549 = vsel %vm519, 0.0, %v507
      %v550 = vsel %vm520, 0.0, %v508
      %v551 = vsel %vm519, 0.0, %v509
      %v552 = vsel %vm520, 0.0, %v510
      %v553 = vsel %vm519, 0.0, %v511
      %v554 = vsel %vm520, 0.0, %v512
      %v555 = vsel %vm519, 0.0, %v513
      %v556 = vsel %vm520, 0.0, %v514
      %v557 = vld [vmem:[%s3] sm:$0xf]
      %v558 = vld [vmem:[%s3 + $0xc] sm:$0xf]
      %v560 = vsel %vm426, %v523, 0
      %v563 = vsel %vm426, %v524, 0
      %v566 = vsel %vm426, %v525, 0
      %v569 = vsel %vm426, %v526, 0
      %v572 = vsel %vm426, %v527, 0
      %v575 = vsel %vm426, %v528, 0
      %v578 = vsel %vm426, %v529, 0
      %v581 = vsel %vm426, %v530, 0
      %v584 = vsel %vm426, %v531, 0
      %v587 = vsel %vm426, %v532, 0
      %v590 = vsel %vm426, %v533, 0
      %v593 = vsel %vm426, %v534, 0
      %v596 = vsel %vm426, %v535, 0
      %v599 = vsel %vm426, %v536, 0
      %v602 = vsel %vm426, %v537, 0
      %v605 = vsel %vm426, %v538, 0
      %v608 = vsel %vm426, %v539, 0
      %v611 = vsel %vm426, %v540, 0
      %v614 = vsel %vm426, %v541, 0
      %v617 = vsel %vm426, %v542, 0
      %v620 = vsel %vm426, %v543, 0
      %v623 = vsel %vm426, %v544, 0
      %v626 = vsel %vm426, %v545, 0
      %v629 = vsel %vm426, %v546, 0
      %v632 = vsel %vm426, %v547, 0
      %v635 = vsel %vm426, %v548, 0
      %v638 = vsel %vm426, %v549, 0
      %v641 = vsel %vm426, %v550, 0
      %v644 = vsel %vm426, %v551, 0
      %v647 = vsel %vm426, %v552, 0
      %v650 = vsel %vm426, %v553, 0
      %v653 = vsel %vm426, %v554, 0
      %vm655 = vcmask 1043456
      %v657 = vsel %vm655, %v558, 0
      %659 = vmatprep.subr.mxu0 0.0
      %660 = vmatpush1.msra.mxu0 0.0
      %661 = vmatprep.subr.mxu0 0.0
      %662 = vmatpush1.msra.mxu0 0.0
      %663 = vmatprep.subr.mxu0 0.0
      %664 = vmatpush1.msra.mxu0 0.0
      %665 = vmatprep.subr.mxu0 0.0
      %666 = vmatpush1.msra.mxu0 0.0
      %667 = vmatprep.subr.mxu0 0.0
      %668 = vmatpush1.msra.mxu0 0.0
      %669 = vmatprep.subr.mxu0 0.0
      %670 = vmatpush1.msra.mxu0 0.0
      %671 = vmatprep.subr.mxu0 0.0
      %672 = vmatpush1.msra.mxu0 0.0
      %673 = vmatprep.subr.mxu0 0.0
      %674 = vmatpush1.msra.mxu0 0.0
      %675 = vmatprep.subr.mxu0 0.0
      %676 = vmatpush1.msra.mxu0 0.0
      %677 = vmatprep.subr.mxu0 0.0
      %678 = vmatpush1.msra.mxu0 0.0
      %679 = vmatprep.subr.mxu0 0.0
      %680 = vmatpush1.msra.mxu0 0.0
      %681 = vmatprep.subr.mxu0 0.0
      %682 = vmatpush1.msra.mxu0 0.0
      %683 = vmatprep.subr.mxu0 0.0
      %684 = vmatpush1.msra.mxu0 0.0
      %685 = vmatprep.subr.mxu0 0.0
      %686 = vmatpush1.msra.mxu0 0.0
      %687 = vmatprep.subr.mxu0 0.0
      %688 = vmatpush1.msra.mxu0 0.0
      %689 = vmatprep.subr.mxu0 0.0
      %690 = vmatpush1.msra.mxu0 %v657
      %691 = vmatprep.subr.mxu0 0.0
      %692 = vmatpush2.msra.mxu0 0.0
      %693 = vmatprep.subr.mxu0 0.0
      %694 = vmatpush2.msra.mxu0 0.0
      %695 = vmatprep.subr.mxu0 0.0
      %696 = vmatpush2.msra.mxu0 0.0
      %697 = vmatprep.subr.mxu0 0.0
      %698 = vmatpush2.msra.mxu0 0.0
      %699 = vmatprep.subr.mxu0 0.0
      %700 = vmatpush2.msra.mxu0 0.0
      %701 = vmatprep.subr.mxu0 0.0
      %702 = vmatpush2.msra.mxu0 0.0
      %703 = vmatprep.subr.mxu0 0.0
      %704 = vmatpush2.msra.mxu0 0.0
      %705 = vmatprep.subr.mxu0 0.0
      %706 = vmatpush2.msra.mxu0 0.0
      %707 = vmatprep.subr.mxu0 0.0
      %708 = vmatpush2.msra.mxu0 0.0
      %709 = vmatprep.subr.mxu0 0.0
      %710 = vmatpush2.msra.mxu0 0.0
      %711 = vmatprep.subr.mxu0 0.0
      %712 = vmatpush2.msra.mxu0 0.0
      %713 = vmatprep.subr.mxu0 0.0
      %714 = vmatpush2.msra.mxu0 0.0
      %715 = vmatprep.subr.mxu0 0.0
      %716 = vmatpush2.msra.mxu0 0.0
      %717 = vmatprep.subr.mxu0 0.0
      %718 = vmatpush2.msra.mxu0 0.0
      %719 = vmatprep.subr.mxu0 0.0
      %720 = vmatpush2.msra.mxu0 0.0
      %721 = vmatprep.subr.mxu0 0.0
      %722 = vmatpush2.msra.mxu0 0.0
      %723 = vmatprep.mubr.f32.mxu0 0.0
      %724 = vmatmul.mubr.f32.gmra.mxu0 %v560
      %v725 = vpop.f32.mrf.mxu0
      %v726 = vadd.f32 0.0, %v725
      %v727 = vpop.f32.mrf.mxu0
      %728 = vmatprep.mubr.f32.mxu0 0.0
      %729 = vmatmul.mubr.f32.gmra.mxu0 %v563
      %v730 = vpop.f32.mrf.mxu0
      %v731 = vadd.f32 0.0, %v730
      %v732 = vpop.f32.mrf.mxu0
      %733 = vmatprep.mubr.f32.mxu0 0.0
      %734 = vmatmul.mubr.f32.gmra.mxu0 %v566
      %v735 = vpop.f32.mrf.mxu0
      %v736 = vadd.f32 0.0, %v735
      %v737 = vpop.f32.mrf.mxu0
      %738 = vmatprep.mubr.f32.mxu0 0.0
      %739 = vmatmul.mubr.f32.gmra.mxu0 %v569
      %v740 = vpop.f32.mrf.mxu0
      %v741 = vadd.f32 0.0, %v740
      %v742 = vpop.f32.mrf.mxu0
      %743 = vmatprep.mubr.f32.mxu0 0.0
      %744 = vmatmul.mubr.f32.gmra.mxu0 %v572
      %v745 = vpop.f32.mrf.mxu0
      %v746 = vadd.f32 0.0, %v745
      %v747 = vpop.f32.mrf.mxu0
      %748 = vmatprep.mubr.f32.mxu0 0.0
      %749 = vmatmul.mubr.f32.gmra.mxu0 %v575
      %v750 = vpop.f32.mrf.mxu0
      %v751 = vadd.f32 0.0, %v750
      %v752 = vpop.f32.mrf.mxu0
      %753 = vmatprep.mubr.f32.mxu0 0.0
      %754 = vmatmul.mubr.f32.gmra.mxu0 %v578
      %v755 = vpop.f32.mrf.mxu0
      %v756 = vadd.f32 0.0, %v755
      %v757 = vpop.f32.mrf.mxu0
      %758 = vmatprep.mubr.f32.mxu0 0.0
      %759 = vmatmul.mubr.f32.gmra.mxu0 %v581
      %v760 = vpop.f32.mrf.mxu0
      %v761 = vadd.f32 0.0, %v760
      %v762 = vpop.f32.mrf.mxu0
      %763 = vmatprep.mubr.f32.mxu0 0.0
      %764 = vmatmul.mubr.f32.gmra.mxu0 %v584
      %v765 = vpop.f32.mrf.mxu0
      %v766 = vadd.f32 0.0, %v765
      %v767 = vpop.f32.mrf.mxu0
      %768 = vmatprep.mubr.f32.mxu0 0.0
      %769 = vmatmul.mubr.f32.gmra.mxu0 %v587
      %v770 = vpop.f32.mrf.mxu0
      %v771 = vadd.f32 0.0, %v770
      %v772 = vpop.f32.mrf.mxu0
      %773 = vmatprep.mubr.f32.mxu0 0.0
      %774 = vmatmul.mubr.f32.gmra.mxu0 %v590
      %v775 = vpop.f32.mrf.mxu0
      %v776 = vadd.f32 0.0, %v775
      %v777 = vpop.f32.mrf.mxu0
      %778 = vmatprep.mubr.f32.mxu0 0.0
      %779 = vmatmul.mubr.f32.gmra.mxu0 %v593
      %v780 = vpop.f32.mrf.mxu0
      %v781 = vadd.f32 0.0, %v780
      %v782 = vpop.f32.mrf.mxu0
      %783 = vmatprep.mubr.f32.mxu0 0.0
      %784 = vmatmul.mubr.f32.gmra.mxu0 %v596
      %v785 = vpop.f32.mrf.mxu0
      %v786 = vadd.f32 0.0, %v785
      %v787 = vpop.f32.mrf.mxu0
      %788 = vmatprep.mubr.f32.mxu0 0.0
      %789 = vmatmul.mubr.f32.gmra.mxu0 %v599
      %v790 = vpop.f32.mrf.mxu0
      %v791 = vadd.f32 0.0, %v790
      %v792 = vpop.f32.mrf.mxu0
      %793 = vmatprep.mubr.f32.mxu0 0.0
      %794 = vmatmul.mubr.f32.gmra.mxu0 %v602
      %v795 = vpop.f32.mrf.mxu0
      %v796 = vadd.f32 0.0, %v795
      %v797 = vpop.f32.mrf.mxu0
      %798 = vmatprep.mubr.f32.mxu0 0.0
      %799 = vmatmul.mubr.f32.gmra.mxu0 %v605
      %v800 = vpop.f32.mrf.mxu0
      %v801 = vadd.f32 0.0, %v800
      %v802 = vpop.f32.mrf.mxu0
      %803 = vmatprep.mubr.f32.mxu0 0.0
      %804 = vmatmul.mubr.f32.gmra.mxu0 %v608
      %v805 = vpop.f32.mrf.mxu0
      %v806 = vadd.f32 0.0, %v805
      %v807 = vpop.f32.mrf.mxu0
      %808 = vmatprep.mubr.f32.mxu0 0.0
      %809 = vmatmul.mubr.f32.gmra.mxu0 %v611
      %v810 = vpop.f32.mrf.mxu0
      %v811 = vadd.f32 0.0, %v810
      %v812 = vpop.f32.mrf.mxu0
      %813 = vmatprep.mubr.f32.mxu0 0.0
      %814 = vmatmul.mubr.f32.gmra.mxu0 %v614
      %v815 = vpop.f32.mrf.mxu0
      %v816 = vadd.f32 0.0, %v815
      %v817 = vpop.f32.mrf.mxu0
      %818 = vmatprep.mubr.f32.mxu0 0.0
      %819 = vmatmul.mubr.f32.gmra.mxu0 %v617
      %v820 = vpop.f32.mrf.mxu0
      %v821 = vadd.f32 0.0, %v820
      %v822 = vpop.f32.mrf.mxu0
      %823 = vmatprep.mubr.f32.mxu0 0.0
      %824 = vmatmul.mubr.f32.gmra.mxu0 %v620
      %v825 = vpop.f32.mrf.mxu0
      %v826 = vadd.f32 0.0, %v825
      %v827 = vpop.f32.mrf.mxu0
      %828 = vmatprep.mubr.f32.mxu0 0.0
      %829 = vmatmul.mubr.f32.gmra.mxu0 %v623
      %v830 = vpop.f32.mrf.mxu0
      %v831 = vadd.f32 0.0, %v830
      %v832 = vpop.f32.mrf.mxu0
      %833 = vmatprep.mubr.f32.mxu0 0.0
      %834 = vmatmul.mubr.f32.gmra.mxu0 %v626
      %v835 = vpop.f32.mrf.mxu0
      %v836 = vadd.f32 0.0, %v835
      %v837 = vpop.f32.mrf.mxu0
      %838 = vmatprep.mubr.f32.mxu0 0.0
      %839 = vmatmul.mubr.f32.gmra.mxu0 %v629
      %v840 = vpop.f32.mrf.mxu0
      %v841 = vadd.f32 0.0, %v840
      %v842 = vpop.f32.mrf.mxu0
      %843 = vmatprep.mubr.f32.mxu0 0.0
      %844 = vmatmul.mubr.f32.gmra.mxu0 %v632
      %v845 = vpop.f32.mrf.mxu0
      %v846 = vadd.f32 0.0, %v845
      %v847 = vpop.f32.mrf.mxu0
      %848 = vmatprep.mubr.f32.mxu0 0.0
      %849 = vmatmul.mubr.f32.gmra.mxu0 %v635
      %v850 = vpop.f32.mrf.mxu0
      %v851 = vadd.f32 0.0, %v850
      %v852 = vpop.f32.mrf.mxu0
      %853 = vmatprep.mubr.f32.mxu0 0.0
      %854 = vmatmul.mubr.f32.gmra.mxu0 %v638
      %v855 = vpop.f32.mrf.mxu0
      %v856 = vadd.f32 0.0, %v855
      %v857 = vpop.f32.mrf.mxu0
      %858 = vmatprep.mubr.f32.mxu0 0.0
      %859 = vmatmul.mubr.f32.gmra.mxu0 %v641
      %v860 = vpop.f32.mrf.mxu0
      %v861 = vadd.f32 0.0, %v860
      %v862 = vpop.f32.mrf.mxu0
      %863 = vmatprep.mubr.f32.mxu0 0.0
      %864 = vmatmul.mubr.f32.gmra.mxu0 %v644
      %v865 = vpop.f32.mrf.mxu0
      %v866 = vadd.f32 0.0, %v865
      %v867 = vpop.f32.mrf.mxu0
      %868 = vmatprep.mubr.f32.mxu0 0.0
      %869 = vmatmul.mubr.f32.gmra.mxu0 %v647
      %v870 = vpop.f32.mrf.mxu0
      %v871 = vadd.f32 0.0, %v870
      %v872 = vpop.f32.mrf.mxu0
      %873 = vmatprep.mubr.f32.mxu0 0.0
      %874 = vmatmul.mubr.f32.gmra.mxu0 %v650
      %v875 = vpop.f32.mrf.mxu0
      %v876 = vadd.f32 0.0, %v875
      %v877 = vpop.f32.mrf.mxu0
      %878 = vmatprep.mubr.f32.mxu0 0.0
      %879 = vmatmul.mubr.f32.gmra.mxu0 %v653
      %v880 = vpop.f32.mrf.mxu0
      %v881 = vadd.f32 0.0, %v880
      %v882 = vpop.f32.mrf.mxu0
      %883 = vdwg.mxu0
      %v885 = vsel %vm426, %v521, 0
      %v888 = vsel %vm426, %v522, 0
      %v891 = vsel %vm655, %v557, 0
      %893 = vmatprep.subr.mxu0 0.0
      %894 = vmatpush1.msra.mxu0 0.0
      %895 = vmatprep.subr.mxu0 0.0
      %896 = vmatpush1.msra.mxu0 0.0
      %897 = vmatprep.subr.mxu0 0.0
      %898 = vmatpush1.msra.mxu0 0.0
      %899 = vmatprep.subr.mxu0 0.0
      %900 = vmatpush1.msra.mxu0 0.0
      %901 = vmatprep.subr.mxu0 0.0
      %902 = vmatpush1.msra.mxu0 0.0
      %903 = vmatprep.subr.mxu0 0.0
      %904 = vmatpush1.msra.mxu0 0.0
      %905 = vmatprep.subr.mxu0 0.0
      %906 = vmatpush1.msra.mxu0 0.0
      %907 = vmatprep.subr.mxu0 0.0
      %908 = vmatpush1.msra.mxu0 0.0
      %909 = vmatprep.subr.mxu0 0.0
      %910 = vmatpush1.msra.mxu0 0.0
      %911 = vmatprep.subr.mxu0 0.0
      %912 = vmatpush1.msra.mxu0 0.0
      %913 = vmatprep.subr.mxu0 0.0
      %914 = vmatpush1.msra.mxu0 0.0
      %915 = vmatprep.subr.mxu0 0.0
      %916 = vmatpush1.msra.mxu0 0.0
      %917 = vmatprep.subr.mxu0 0.0
      %918 = vmatpush1.msra.mxu0 0.0
      %919 = vmatprep.subr.mxu0 0.0
      %920 = vmatpush1.msra.mxu0 0.0
      %921 = vmatprep.subr.mxu0 0.0
      %922 = vmatpush1.msra.mxu0 0.0
      %923 = vmatprep.subr.mxu0 0.0
      %924 = vmatpush1.msra.mxu0 %v891
      %925 = vmatprep.subr.mxu0 0.0
      %926 = vmatpush2.msra.mxu0 0.0
      %927 = vmatprep.subr.mxu0 0.0
      %928 = vmatpush2.msra.mxu0 0.0
      %929 = vmatprep.subr.mxu0 0.0
      %930 = vmatpush2.msra.mxu0 0.0
      %931 = vmatprep.subr.mxu0 0.0
      %932 = vmatpush2.msra.mxu0 0.0
      %933 = vmatprep.subr.mxu0 0.0
      %934 = vmatpush2.msra.mxu0 0.0
      %935 = vmatprep.subr.mxu0 0.0
      %936 = vmatpush2.msra.mxu0 0.0
      %937 = vmatprep.subr.mxu0 0.0
      %938 = vmatpush2.msra.mxu0 0.0
      %939 = vmatprep.subr.mxu0 0.0
      %940 = vmatpush2.msra.mxu0 0.0
      %941 = vmatprep.subr.mxu0 0.0
      %942 = vmatpush2.msra.mxu0 0.0
      %943 = vmatprep.subr.mxu0 0.0
      %944 = vmatpush2.msra.mxu0 0.0
      %945 = vmatprep.subr.mxu0 0.0
      %946 = vmatpush2.msra.mxu0 0.0
      %947 = vmatprep.subr.mxu0 0.0
      %948 = vmatpush2.msra.mxu0 0.0
      %949 = vmatprep.subr.mxu0 0.0
      %950 = vmatpush2.msra.mxu0 0.0
      %951 = vmatprep.subr.mxu0 0.0
      %952 = vmatpush2.msra.mxu0 0.0
      %953 = vmatprep.subr.mxu0 0.0
      %954 = vmatpush2.msra.mxu0 0.0
      %955 = vmatprep.subr.mxu0 0.0
      %956 = vmatpush2.msra.mxu0 0.0
      %957 = vmatprep.mubr.f32.mxu0 0.0
      %958 = vmatmul.mubr.f32.gmra.mxu0 %v885
      %v959 = vpop.f32.mrf.mxu0
      %v960 = vadd.f32 %v726, %v959
      %v961 = vpop.f32.mrf.mxu0
      %962 = vmatprep.mubr.f32.mxu0 0.0
      %963 = vmatmul.mubr.f32.gmra.mxu0 %v888
      %v964 = vpop.f32.mrf.mxu0
      %v965 = vadd.f32 %v731, %v964
      %v966 = vpop.f32.mrf.mxu0
      %967 = vmatprep.mubr.f32.mxu0 0.0
      %968 = vmatmul.mubr.f32.gmra.mxu0 %v560
      %v969 = vpop.f32.mrf.mxu0
      %v970 = vadd.f32 %v736, %v969
      %v971 = vpop.f32.mrf.mxu0
      %972 = vmatprep.mubr.f32.mxu0 0.0
      %973 = vmatmul.mubr.f32.gmra.mxu0 %v563
      %v974 = vpop.f32.mrf.mxu0
      %v975 = vadd.f32 %v741, %v974
      %v976 = vpop.f32.mrf.mxu0
      %977 = vmatprep.mubr.f32.mxu0 0.0
      %978 = vmatmul.mubr.f32.gmra.mxu0 %v566
      %v979 = vpop.f32.mrf.mxu0
      %v980 = vadd.f32 %v746, %v979
      %v981 = vpop.f32.mrf.mxu0
      %982 = vmatprep.mubr.f32.mxu0 0.0
      %983 = vmatmul.mubr.f32.gmra.mxu0 %v569
      %v984 = vpop.f32.mrf.mxu0
      %v985 = vadd.f32 %v751, %v984
      %v986 = vpop.f32.mrf.mxu0
      %987 = vmatprep.mubr.f32.mxu0 0.0
      %988 = vmatmul.mubr.f32.gmra.mxu0 %v572
      %v989 = vpop.f32.mrf.mxu0
      %v990 = vadd.f32 %v756, %v989
      %v991 = vpop.f32.mrf.mxu0
      %992 = vmatprep.mubr.f32.mxu0 0.0
      %993 = vmatmul.mubr.f32.gmra.mxu0 %v575
      %v994 = vpop.f32.mrf.mxu0
      %v995 = vadd.f32 %v761, %v994
      %v996 = vpop.f32.mrf.mxu0
      %997 = vmatprep.mubr.f32.mxu0 0.0
      %998 = vmatmul.mubr.f32.gmra.mxu0 %v578
      %v999 = vpop.f32.mrf.mxu0
      %v1000 = vadd.f32 %v766, %v999
      %v1001 = vpop.f32.mrf.mxu0
      %1002 = vmatprep.mubr.f32.mxu0 0.0
      %1003 = vmatmul.mubr.f32.gmra.mxu0 %v581
      %v1004 = vpop.f32.mrf.mxu0
      %v1005 = vadd.f32 %v771, %v1004
      %v1006 = vpop.f32.mrf.mxu0
      %1007 = vmatprep.mubr.f32.mxu0 0.0
      %1008 = vmatmul.mubr.f32.gmra.mxu0 %v584
      %v1009 = vpop.f32.mrf.mxu0
      %v1010 = vadd.f32 %v776, %v1009
      %v1011 = vpop.f32.mrf.mxu0
      %1012 = vmatprep.mubr.f32.mxu0 0.0
      %1013 = vmatmul.mubr.f32.gmra.mxu0 %v587
      %v1014 = vpop.f32.mrf.mxu0
      %v1015 = vadd.f32 %v781, %v1014
      %v1016 = vpop.f32.mrf.mxu0
      %1017 = vmatprep.mubr.f32.mxu0 0.0
      %1018 = vmatmul.mubr.f32.gmra.mxu0 %v590
      %v1019 = vpop.f32.mrf.mxu0
      %v1020 = vadd.f32 %v786, %v1019
      %v1021 = vpop.f32.mrf.mxu0
      %1022 = vmatprep.mubr.f32.mxu0 0.0
      %1023 = vmatmul.mubr.f32.gmra.mxu0 %v593
      %v1024 = vpop.f32.mrf.mxu0
      %v1025 = vadd.f32 %v791, %v1024
      %v1026 = vpop.f32.mrf.mxu0
      %1027 = vmatprep.mubr.f32.mxu0 0.0
      %1028 = vmatmul.mubr.f32.gmra.mxu0 %v596
      %v1029 = vpop.f32.mrf.mxu0
      %v1030 = vadd.f32 %v796, %v1029
      %v1031 = vpop.f32.mrf.mxu0
      %1032 = vmatprep.mubr.f32.mxu0 0.0
      %1033 = vmatmul.mubr.f32.gmra.mxu0 %v599
      %v1034 = vpop.f32.mrf.mxu0
      %v1035 = vadd.f32 %v801, %v1034
      %v1036 = vpop.f32.mrf.mxu0
      %1037 = vmatprep.mubr.f32.mxu0 0.0
      %1038 = vmatmul.mubr.f32.gmra.mxu0 %v602
      %v1039 = vpop.f32.mrf.mxu0
      %v1040 = vadd.f32 %v806, %v1039
      %v1041 = vpop.f32.mrf.mxu0
      %1042 = vmatprep.mubr.f32.mxu0 0.0
      %1043 = vmatmul.mubr.f32.gmra.mxu0 %v605
      %v1044 = vpop.f32.mrf.mxu0
      %v1045 = vadd.f32 %v811, %v1044
      %v1046 = vpop.f32.mrf.mxu0
      %1047 = vmatprep.mubr.f32.mxu0 0.0
      %1048 = vmatmul.mubr.f32.gmra.mxu0 %v608
      %v1049 = vpop.f32.mrf.mxu0
      %v1050 = vadd.f32 %v816, %v1049
      %v1051 = vpop.f32.mrf.mxu0
      %1052 = vmatprep.mubr.f32.mxu0 0.0
      %1053 = vmatmul.mubr.f32.gmra.mxu0 %v611
      %v1054 = vpop.f32.mrf.mxu0
      %v1055 = vadd.f32 %v821, %v1054
      %v1056 = vpop.f32.mrf.mxu0
      %1057 = vmatprep.mubr.f32.mxu0 0.0
      %1058 = vmatmul.mubr.f32.gmra.mxu0 %v614
      %v1059 = vpop.f32.mrf.mxu0
      %v1060 = vadd.f32 %v826, %v1059
      %v1061 = vpop.f32.mrf.mxu0
      %1062 = vmatprep.mubr.f32.mxu0 0.0
      %1063 = vmatmul.mubr.f32.gmra.mxu0 %v617
      %v1064 = vpop.f32.mrf.mxu0
      %v1065 = vadd.f32 %v831, %v1064
      %v1066 = vpop.f32.mrf.mxu0
      %1067 = vmatprep.mubr.f32.mxu0 0.0
      %1068 = vmatmul.mubr.f32.gmra.mxu0 %v620
      %v1069 = vpop.f32.mrf.mxu0
      %v1070 = vadd.f32 %v836, %v1069
      %v1071 = vpop.f32.mrf.mxu0
      %1072 = vmatprep.mubr.f32.mxu0 0.0
      %1073 = vmatmul.mubr.f32.gmra.mxu0 %v623
      %v1074 = vpop.f32.mrf.mxu0
      %v1075 = vadd.f32 %v841, %v1074
      %v1076 = vpop.f32.mrf.mxu0
      %1077 = vmatprep.mubr.f32.mxu0 0.0
      %1078 = vmatmul.mubr.f32.gmra.mxu0 %v626
      %v1079 = vpop.f32.mrf.mxu0
      %v1080 = vadd.f32 %v846, %v1079
      %v1081 = vpop.f32.mrf.mxu0
      %1082 = vmatprep.mubr.f32.mxu0 0.0
      %1083 = vmatmul.mubr.f32.gmra.mxu0 %v629
      %v1084 = vpop.f32.mrf.mxu0
      %v1085 = vadd.f32 %v851, %v1084
      %v1086 = vpop.f32.mrf.mxu0
      %1087 = vmatprep.mubr.f32.mxu0 0.0
      %1088 = vmatmul.mubr.f32.gmra.mxu0 %v632
      %v1089 = vpop.f32.mrf.mxu0
      %v1090 = vadd.f32 %v856, %v1089
      %v1091 = vpop.f32.mrf.mxu0
      %1092 = vmatprep.mubr.f32.mxu0 0.0
      %1093 = vmatmul.mubr.f32.gmra.mxu0 %v635
      %v1094 = vpop.f32.mrf.mxu0
      %v1095 = vadd.f32 %v861, %v1094
      %v1096 = vpop.f32.mrf.mxu0
      %1097 = vmatprep.mubr.f32.mxu0 0.0
      %1098 = vmatmul.mubr.f32.gmra.mxu0 %v638
      %v1099 = vpop.f32.mrf.mxu0
      %v1100 = vadd.f32 %v866, %v1099
      %v1101 = vpop.f32.mrf.mxu0
      %1102 = vmatprep.mubr.f32.mxu0 0.0
      %1103 = vmatmul.mubr.f32.gmra.mxu0 %v641
      %v1104 = vpop.f32.mrf.mxu0
      %v1105 = vadd.f32 %v871, %v1104
      %v1106 = vpop.f32.mrf.mxu0
      %1107 = vmatprep.mubr.f32.mxu0 0.0
      %1108 = vmatmul.mubr.f32.gmra.mxu0 %v644
      %v1109 = vpop.f32.mrf.mxu0
      %v1110 = vadd.f32 %v876, %v1109
      %v1111 = vpop.f32.mrf.mxu0
      %1112 = vmatprep.mubr.f32.mxu0 0.0
      %1113 = vmatmul.mubr.f32.gmra.mxu0 %v647
      %v1114 = vpop.f32.mrf.mxu0
      %v1115 = vadd.f32 %v881, %v1114
      %v1116 = vpop.f32.mrf.mxu0
      %1117 = vdwg.mxu0
      %v1118 = vld [vmem:[%s3 + $0x18] sm:$0xf]
      %v1120 = vsel %vm426, %v555, 0
      %v1123 = vsel %vm426, %v556, 0
      %v1126 = vsel %vm655, %v1118, 0
      %1128 = vmatprep.subr.mxu0 0.0
      %1129 = vmatpush1.msra.mxu0 0.0
      %1130 = vmatprep.subr.mxu0 0.0
      %1131 = vmatpush1.msra.mxu0 0.0
      %1132 = vmatprep.subr.mxu0 0.0
      %1133 = vmatpush1.msra.mxu0 0.0
      %1134 = vmatprep.subr.mxu0 0.0
      %1135 = vmatpush1.msra.mxu0 0.0
      %1136 = vmatprep.subr.mxu0 0.0
      %1137 = vmatpush1.msra.mxu0 0.0
      %1138 = vmatprep.subr.mxu0 0.0
      %1139 = vmatpush1.msra.mxu0 0.0
      %1140 = vmatprep.subr.mxu0 0.0
      %1141 = vmatpush1.msra.mxu0 0.0
      %1142 = vmatprep.subr.mxu0 0.0
      %1143 = vmatpush1.msra.mxu0 0.0
      %1144 = vmatprep.subr.mxu0 0.0
      %1145 = vmatpush1.msra.mxu0 0.0
      %1146 = vmatprep.subr.mxu0 0.0
      %1147 = vmatpush1.msra.mxu0 0.0
      %1148 = vmatprep.subr.mxu0 0.0
      %1149 = vmatpush1.msra.mxu0 0.0
      %1150 = vmatprep.subr.mxu0 0.0
      %1151 = vmatpush1.msra.mxu0 0.0
      %1152 = vmatprep.subr.mxu0 0.0
      %1153 = vmatpush1.msra.mxu0 0.0
      %1154 = vmatprep.subr.mxu0 0.0
      %1155 = vmatpush1.msra.mxu0 0.0
      %1156 = vmatprep.subr.mxu0 0.0
      %1157 = vmatpush1.msra.mxu0 0.0
      %1158 = vmatprep.subr.mxu0 0.0
      %1159 = vmatpush1.msra.mxu0 %v1126
      %1160 = vmatprep.subr.mxu0 0.0
      %1161 = vmatpush2.msra.mxu0 0.0
      %1162 = vmatprep.subr.mxu0 0.0
      %1163 = vmatpush2.msra.mxu0 0.0
      %1164 = vmatprep.subr.mxu0 0.0
      %1165 = vmatpush2.msra.mxu0 0.0
      %1166 = vmatprep.subr.mxu0 0.0
      %1167 = vmatpush2.msra.mxu0 0.0
      %1168 = vmatprep.subr.mxu0 0.0
      %1169 = vmatpush2.msra.mxu0 0.0
      %1170 = vmatprep.subr.mxu0 0.0
      %1171 = vmatpush2.msra.mxu0 0.0
      %1172 = vmatprep.subr.mxu0 0.0
      %1173 = vmatpush2.msra.mxu0 0.0
      %1174 = vmatprep.subr.mxu0 0.0
      %1175 = vmatpush2.msra.mxu0 0.0
      %1176 = vmatprep.subr.mxu0 0.0
      %1177 = vmatpush2.msra.mxu0 0.0
      %1178 = vmatprep.subr.mxu0 0.0
      %1179 = vmatpush2.msra.mxu0 0.0
      %1180 = vmatprep.subr.mxu0 0.0
      %1181 = vmatpush2.msra.mxu0 0.0
      %1182 = vmatprep.subr.mxu0 0.0
      %1183 = vmatpush2.msra.mxu0 0.0
      %1184 = vmatprep.subr.mxu0 0.0
      %1185 = vmatpush2.msra.mxu0 0.0
      %1186 = vmatprep.subr.mxu0 0.0
      %1187 = vmatpush2.msra.mxu0 0.0
      %1188 = vmatprep.subr.mxu0 0.0
      %1189 = vmatpush2.msra.mxu0 0.0
      %1190 = vmatprep.subr.mxu0 0.0
      %1191 = vmatpush2.msra.mxu0 0.0
      %1192 = vmatprep.mubr.f32.mxu0 0.0
      %1193 = vmatmul.mubr.f32.gmra.mxu0 %v566
      %v1194 = vpop.f32.mrf.mxu0
      %v1195 = vadd.f32 0.0, %v1194
      %v1196 = vpop.f32.mrf.mxu0
      %1197 = vmatprep.mubr.f32.mxu0 0.0
      %1198 = vmatmul.mubr.f32.gmra.mxu0 %v569
      %v1199 = vpop.f32.mrf.mxu0
      %v1200 = vadd.f32 0.0, %v1199
      %v1201 = vpop.f32.mrf.mxu0
      %1202 = vmatprep.mubr.f32.mxu0 0.0
      %1203 = vmatmul.mubr.f32.gmra.mxu0 %v572
      %v1204 = vpop.f32.mrf.mxu0
      %v1205 = vadd.f32 0.0, %v1204
      %v1206 = vpop.f32.mrf.mxu0
      %1207 = vmatprep.mubr.f32.mxu0 0.0
      %1208 = vmatmul.mubr.f32.gmra.mxu0 %v575
      %v1209 = vpop.f32.mrf.mxu0
      %v1210 = vadd.f32 0.0, %v1209
      %v1211 = vpop.f32.mrf.mxu0
      %1212 = vmatprep.mubr.f32.mxu0 0.0
      %1213 = vmatmul.mubr.f32.gmra.mxu0 %v578
      %v1214 = vpop.f32.mrf.mxu0
      %v1215 = vadd.f32 0.0, %v1214
      %v1216 = vpop.f32.mrf.mxu0
      %1217 = vmatprep.mubr.f32.mxu0 0.0
      %1218 = vmatmul.mubr.f32.gmra.mxu0 %v581
      %v1219 = vpop.f32.mrf.mxu0
      %v1220 = vadd.f32 0.0, %v1219
      %v1221 = vpop.f32.mrf.mxu0
      %1222 = vmatprep.mubr.f32.mxu0 0.0
      %1223 = vmatmul.mubr.f32.gmra.mxu0 %v584
      %v1224 = vpop.f32.mrf.mxu0
      %v1225 = vadd.f32 0.0, %v1224
      %v1226 = vpop.f32.mrf.mxu0
      %1227 = vmatprep.mubr.f32.mxu0 0.0
      %1228 = vmatmul.mubr.f32.gmra.mxu0 %v587
      %v1229 = vpop.f32.mrf.mxu0
      %v1230 = vadd.f32 0.0, %v1229
      %v1231 = vpop.f32.mrf.mxu0
      %1232 = vmatprep.mubr.f32.mxu0 0.0
      %1233 = vmatmul.mubr.f32.gmra.mxu0 %v590
      %v1234 = vpop.f32.mrf.mxu0
      %v1235 = vadd.f32 0.0, %v1234
      %v1236 = vpop.f32.mrf.mxu0
      %1237 = vmatprep.mubr.f32.mxu0 0.0
      %1238 = vmatmul.mubr.f32.gmra.mxu0 %v593
      %v1239 = vpop.f32.mrf.mxu0
      %v1240 = vadd.f32 0.0, %v1239
      %v1241 = vpop.f32.mrf.mxu0
      %1242 = vmatprep.mubr.f32.mxu0 0.0
      %1243 = vmatmul.mubr.f32.gmra.mxu0 %v596
      %v1244 = vpop.f32.mrf.mxu0
      %v1245 = vadd.f32 0.0, %v1244
      %v1246 = vpop.f32.mrf.mxu0
      %1247 = vmatprep.mubr.f32.mxu0 0.0
      %1248 = vmatmul.mubr.f32.gmra.mxu0 %v599
      %v1249 = vpop.f32.mrf.mxu0
      %v1250 = vadd.f32 0.0, %v1249
      %v1251 = vpop.f32.mrf.mxu0
      %1252 = vmatprep.mubr.f32.mxu0 0.0
      %1253 = vmatmul.mubr.f32.gmra.mxu0 %v602
      %v1254 = vpop.f32.mrf.mxu0
      %v1255 = vadd.f32 0.0, %v1254
      %v1256 = vpop.f32.mrf.mxu0
      %1257 = vmatprep.mubr.f32.mxu0 0.0
      %1258 = vmatmul.mubr.f32.gmra.mxu0 %v605
      %v1259 = vpop.f32.mrf.mxu0
      %v1260 = vadd.f32 0.0, %v1259
      %v1261 = vpop.f32.mrf.mxu0
      %1262 = vmatprep.mubr.f32.mxu0 0.0
      %1263 = vmatmul.mubr.f32.gmra.mxu0 %v608
      %v1264 = vpop.f32.mrf.mxu0
      %v1265 = vadd.f32 0.0, %v1264
      %v1266 = vpop.f32.mrf.mxu0
      %1267 = vmatprep.mubr.f32.mxu0 0.0
      %1268 = vmatmul.mubr.f32.gmra.mxu0 %v611
      %v1269 = vpop.f32.mrf.mxu0
      %v1270 = vadd.f32 0.0, %v1269
      %v1271 = vpop.f32.mrf.mxu0
      %1272 = vmatprep.mubr.f32.mxu0 0.0
      %1273 = vmatmul.mubr.f32.gmra.mxu0 %v614
      %v1274 = vpop.f32.mrf.mxu0
      %v1275 = vadd.f32 0.0, %v1274
      %v1276 = vpop.f32.mrf.mxu0
      %1277 = vmatprep.mubr.f32.mxu0 0.0
      %1278 = vmatmul.mubr.f32.gmra.mxu0 %v617
      %v1279 = vpop.f32.mrf.mxu0
      %v1280 = vadd.f32 0.0, %v1279
      %v1281 = vpop.f32.mrf.mxu0
      %1282 = vmatprep.mubr.f32.mxu0 0.0
      %1283 = vmatmul.mubr.f32.gmra.mxu0 %v620
      %v1284 = vpop.f32.mrf.mxu0
      %v1285 = vadd.f32 0.0, %v1284
      %v1286 = vpop.f32.mrf.mxu0
      %1287 = vmatprep.mubr.f32.mxu0 0.0
      %1288 = vmatmul.mubr.f32.gmra.mxu0 %v623
      %v1289 = vpop.f32.mrf.mxu0
      %v1290 = vadd.f32 0.0, %v1289
      %v1291 = vpop.f32.mrf.mxu0
      %1292 = vmatprep.mubr.f32.mxu0 0.0
      %1293 = vmatmul.mubr.f32.gmra.mxu0 %v626
      %v1294 = vpop.f32.mrf.mxu0
      %v1295 = vadd.f32 0.0, %v1294
      %v1296 = vpop.f32.mrf.mxu0
      %1297 = vmatprep.mubr.f32.mxu0 0.0
      %1298 = vmatmul.mubr.f32.gmra.mxu0 %v629
      %v1299 = vpop.f32.mrf.mxu0
      %v1300 = vadd.f32 0.0, %v1299
      %v1301 = vpop.f32.mrf.mxu0
      %1302 = vmatprep.mubr.f32.mxu0 0.0
      %1303 = vmatmul.mubr.f32.gmra.mxu0 %v632
      %v1304 = vpop.f32.mrf.mxu0
      %v1305 = vadd.f32 0.0, %v1304
      %v1306 = vpop.f32.mrf.mxu0
      %1307 = vmatprep.mubr.f32.mxu0 0.0
      %1308 = vmatmul.mubr.f32.gmra.mxu0 %v635
      %v1309 = vpop.f32.mrf.mxu0
      %v1310 = vadd.f32 0.0, %v1309
      %v1311 = vpop.f32.mrf.mxu0
      %1312 = vmatprep.mubr.f32.mxu0 0.0
      %1313 = vmatmul.mubr.f32.gmra.mxu0 %v638
      %v1314 = vpop.f32.mrf.mxu0
      %v1315 = vadd.f32 0.0, %v1314
      %v1316 = vpop.f32.mrf.mxu0
      %1317 = vmatprep.mubr.f32.mxu0 0.0
      %1318 = vmatmul.mubr.f32.gmra.mxu0 %v641
      %v1319 = vpop.f32.mrf.mxu0
      %v1320 = vadd.f32 0.0, %v1319
      %v1321 = vpop.f32.mrf.mxu0
      %1322 = vmatprep.mubr.f32.mxu0 0.0
      %1323 = vmatmul.mubr.f32.gmra.mxu0 %v644
      %v1324 = vpop.f32.mrf.mxu0
      %v1325 = vadd.f32 0.0, %v1324
      %v1326 = vpop.f32.mrf.mxu0
      %1327 = vmatprep.mubr.f32.mxu0 0.0
      %1328 = vmatmul.mubr.f32.gmra.mxu0 %v647
      %v1329 = vpop.f32.mrf.mxu0
      %v1330 = vadd.f32 0.0, %v1329
      %v1331 = vpop.f32.mrf.mxu0
      %1332 = vmatprep.mubr.f32.mxu0 0.0
      %1333 = vmatmul.mubr.f32.gmra.mxu0 %v650
      %v1334 = vpop.f32.mrf.mxu0
      %v1335 = vadd.f32 0.0, %v1334
      %v1336 = vpop.f32.mrf.mxu0
      %1337 = vmatprep.mubr.f32.mxu0 0.0
      %1338 = vmatmul.mubr.f32.gmra.mxu0 %v653
      %v1339 = vpop.f32.mrf.mxu0
      %v1340 = vadd.f32 0.0, %v1339
      %v1341 = vpop.f32.mrf.mxu0
      %1342 = vmatprep.mubr.f32.mxu0 0.0
      %1343 = vmatmul.mubr.f32.gmra.mxu0 %v1120
      %v1344 = vpop.f32.mrf.mxu0
      %v1345 = vadd.f32 0.0, %v1344
      %v1346 = vpop.f32.mrf.mxu0
      %1347 = vmatprep.mubr.f32.mxu0 0.0
      %1348 = vmatmul.mubr.f32.gmra.mxu0 %v1123
      %v1349 = vpop.f32.mrf.mxu0
      %v1350 = vadd.f32 0.0, %v1349
      %v1351 = vpop.f32.mrf.mxu0
      %1352 = vdwg.mxu0
      %v1353 = vadd.f32 %v960, %v1195
      %v1354 = vadd.f32 %v965, %v1200
      %v1355 = vadd.f32 %v970, %v1205
      %v1356 = vadd.f32 %v975, %v1210
      %v1357 = vadd.f32 %v980, %v1215
      %v1358 = vadd.f32 %v985, %v1220
      %v1359 = vadd.f32 %v990, %v1225
      %v1360 = vadd.f32 %v995, %v1230
      %v1361 = vadd.f32 %v1000, %v1235
      %v1362 = vadd.f32 %v1005, %v1240
      %v1363 = vadd.f32 %v1010, %v1245
      %v1364 = vadd.f32 %v1015, %v1250
      %v1365 = vadd.f32 %v1020, %v1255
      %v1366 = vadd.f32 %v1025, %v1260
      %v1367 = vadd.f32 %v1030, %v1265
      %v1368 = vadd.f32 %v1035, %v1270
      %v1369 = vadd.f32 %v1040, %v1275
      %v1370 = vadd.f32 %v1045, %v1280
      %v1371 = vadd.f32 %v1050, %v1285
      %v1372 = vadd.f32 %v1055, %v1290
      %v1373 = vadd.f32 %v1060, %v1295
      %v1374 = vadd.f32 %v1065, %v1300
      %v1375 = vadd.f32 %v1070, %v1305
      %v1376 = vadd.f32 %v1075, %v1310
      %v1377 = vadd.f32 %v1080, %v1315
      %v1378 = vadd.f32 %v1085, %v1320
      %v1379 = vadd.f32 %v1090, %v1325
      %v1380 = vadd.f32 %v1095, %v1330
      %v1381 = vadd.f32 %v1100, %v1335
      %v1382 = vadd.f32 %v1105, %v1340
      %v1383 = vadd.f32 %v1110, %v1345
      %v1384 = vadd.f32 %v1115, %v1350
      %v1385 = vld [vmem:[#allocation2 + $0x8] sm:$0xff]
      %v1386 = vld [vmem:[#allocation2 + $0x10] sm:$0xff]
      %v1387 = vld [vmem:[#allocation2 + $0x28] sm:$0xff]
      %v1388 = vld [vmem:[#allocation2 + $0x30] sm:$0xff]
      %v1389 = vld [vmem:[#allocation2 + $0x48] sm:$0xff]
      %v1390 = vld [vmem:[#allocation2 + $0x50] sm:$0xff]
      %v1391 = vld [vmem:[#allocation2 + $0x68] sm:$0xff]
      %v1392 = vld [vmem:[#allocation2 + $0x70] sm:$0xff]
      %v1393 = vld [vmem:[#allocation2 + $0x88] sm:$0xff]
      %v1394 = vld [vmem:[#allocation2 + $0x90] sm:$0xff]
      %v1395 = vld [vmem:[#allocation2 + $0xa8] sm:$0xff]
      %v1396 = vld [vmem:[#allocation2 + $0xb0] sm:$0xff]
      %v1397 = vld [vmem:[#allocation2 + $0xc8] sm:$0xff]
      %v1398 = vld [vmem:[#allocation2 + $0xd0] sm:$0xff]
      %v1399 = vld [vmem:[#allocation2 + $0xe8] sm:$0xff]
      %v1400 = vld [vmem:[#allocation2 + $0xf0] sm:$0xff]
      %v1401 = vld [vmem:[#allocation2 + $0x108] sm:$0xff]
      %v1402 = vld [vmem:[#allocation2 + $0x110] sm:$0xff]
      %v1403 = vld [vmem:[#allocation2 + $0x128] sm:$0xff]
      %v1404 = vld [vmem:[#allocation2 + $0x130] sm:$0xff]
      %v1405 = vld [vmem:[#allocation2 + $0x148] sm:$0xff]
      %v1406 = vld [vmem:[#allocation2 + $0x150] sm:$0xff]
      %v1407 = vld [vmem:[#allocation2 + $0x168] sm:$0xff]
      %v1408 = vld [vmem:[#allocation2 + $0x170] sm:$0xff]
      %v1409 = vld [vmem:[#allocation2 + $0x188] sm:$0xff]
      %v1410 = vld [vmem:[#allocation2 + $0x190] sm:$0xff]
      %v1411 = vld [vmem:[#allocation2 + $0x1a8] sm:$0xff]
      %v1412 = vld [vmem:[#allocation2 + $0x1b0] sm:$0xff]
      %v1413 = vld [vmem:[#allocation2 + $0x1c8] sm:$0xff]
      %v1414 = vld [vmem:[#allocation2 + $0x1d0] sm:$0xff]
      %v1415 = vld [vmem:[#allocation2 + $0x1e8] sm:$0xff]
      %v1416 = vld [vmem:[#allocation2 + $0x1f0] sm:$0xff]
      %v1417 = vld [vmem:[#allocation2 + $0x208] sm:$0xff]
      %v1418 = vld [vmem:[#allocation2 + $0x210] sm:$0xff]
      %v1419 = vld [vmem:[#allocation2 + $0x228] sm:$0xff]
      %v1420 = vld [vmem:[#allocation2 + $0x230] sm:$0xff]
      %v1421 = vld [vmem:[%s3 + $0x4] sm:$0xf]
      %v1423 = vsel %vm426, %v1385, 0
      %v1426 = vsel %vm426, %v1386, 0
      %v1429 = vsel %vm426, %v1387, 0
      %v1432 = vsel %vm426, %v1388, 0
      %v1435 = vsel %vm426, %v1389, 0
      %v1438 = vsel %vm426, %v1390, 0
      %v1441 = vsel %vm426, %v1391, 0
      %v1444 = vsel %vm426, %v1392, 0
      %v1447 = vsel %vm426, %v1393, 0
      %v1450 = vsel %vm426, %v1394, 0
      %v1453 = vsel %vm426, %v1395, 0
      %v1456 = vsel %vm426, %v1396, 0
      %v1459 = vsel %vm426, %v1397, 0
      %v1462 = vsel %vm426, %v1398, 0
      %v1465 = vsel %vm426, %v1399, 0
      %v1468 = vsel %vm426, %v1400, 0
      %v1471 = vsel %vm426, %v1401, 0
      %v1474 = vsel %vm426, %v1402, 0
      %v1477 = vsel %vm426, %v1403, 0
      %v1480 = vsel %vm426, %v1404, 0
      %v1483 = vsel %vm426, %v1405, 0
      %v1486 = vsel %vm426, %v1406, 0
      %v1489 = vsel %vm426, %v1407, 0
      %v1492 = vsel %vm426, %v1408, 0
      %v1495 = vsel %vm426, %v1409, 0
      %v1498 = vsel %vm426, %v1410, 0
      %v1501 = vsel %vm426, %v1411, 0
      %v1504 = vsel %vm426, %v1412, 0
      %v1507 = vsel %vm426, %v1413, 0
      %v1510 = vsel %vm426, %v1414, 0
      %v1513 = vsel %vm426, %v1415, 0
      %v1516 = vsel %vm426, %v1416, 0
      %v1519 = vsel %vm655, %v1421, 0
      %1521 = vmatprep.subr.mxu0 0.0
      %1522 = vmatpush1.msra.mxu0 0.0
      %1523 = vmatprep.subr.mxu0 0.0
      %1524 = vmatpush1.msra.mxu0 0.0
      %1525 = vmatprep.subr.mxu0 0.0
      %1526 = vmatpush1.msra.mxu0 0.0
      %1527 = vmatprep.subr.mxu0 0.0
      %1528 = vmatpush1.msra.mxu0 0.0
      %1529 = vmatprep.subr.mxu0 0.0
      %1530 = vmatpush1.msra.mxu0 0.0
      %1531 = vmatprep.subr.mxu0 0.0
      %1532 = vmatpush1.msra.mxu0 0.0
      %1533 = vmatprep.subr.mxu0 0.0
      %1534 = vmatpush1.msra.mxu0 0.0
      %1535 = vmatprep.subr.mxu0 0.0
      %1536 = vmatpush1.msra.mxu0 0.0
      %1537 = vmatprep.subr.mxu0 0.0
      %1538 = vmatpush1.msra.mxu0 0.0
      %1539 = vmatprep.subr.mxu0 0.0
      %1540 = vmatpush1.msra.mxu0 0.0
      %1541 = vmatprep.subr.mxu0 0.0
      %1542 = vmatpush1.msra.mxu0 0.0
      %1543 = vmatprep.subr.mxu0 0.0
      %1544 = vmatpush1.msra.mxu0 0.0
      %1545 = vmatprep.subr.mxu0 0.0
      %1546 = vmatpush1.msra.mxu0 0.0
      %1547 = vmatprep.subr.mxu0 0.0
      %1548 = vmatpush1.msra.mxu0 0.0
      %1549 = vmatprep.subr.mxu0 0.0
      %1550 = vmatpush1.msra.mxu0 0.0
      %1551 = vmatprep.subr.mxu0 0.0
      %1552 = vmatpush1.msra.mxu0 %v1519
      %1553 = vmatprep.subr.mxu0 0.0
      %1554 = vmatpush2.msra.mxu0 0.0
      %1555 = vmatprep.subr.mxu0 0.0
      %1556 = vmatpush2.msra.mxu0 0.0
      %1557 = vmatprep.subr.mxu0 0.0
      %1558 = vmatpush2.msra.mxu0 0.0
      %1559 = vmatprep.subr.mxu0 0.0
      %1560 = vmatpush2.msra.mxu0 0.0
      %1561 = vmatprep.subr.mxu0 0.0
      %1562 = vmatpush2.msra.mxu0 0.0
      %1563 = vmatprep.subr.mxu0 0.0
      %1564 = vmatpush2.msra.mxu0 0.0
      %1565 = vmatprep.subr.mxu0 0.0
      %1566 = vmatpush2.msra.mxu0 0.0
      %1567 = vmatprep.subr.mxu0 0.0
      %1568 = vmatpush2.msra.mxu0 0.0
      %1569 = vmatprep.subr.mxu0 0.0
      %1570 = vmatpush2.msra.mxu0 0.0
      %1571 = vmatprep.subr.mxu0 0.0
      %1572 = vmatpush2.msra.mxu0 0.0
      %1573 = vmatprep.subr.mxu0 0.0
      %1574 = vmatpush2.msra.mxu0 0.0
      %1575 = vmatprep.subr.mxu0 0.0
      %1576 = vmatpush2.msra.mxu0 0.0
      %1577 = vmatprep.subr.mxu0 0.0
      %1578 = vmatpush2.msra.mxu0 0.0
      %1579 = vmatprep.subr.mxu0 0.0
      %1580 = vmatpush2.msra.mxu0 0.0
      %1581 = vmatprep.subr.mxu0 0.0
      %1582 = vmatpush2.msra.mxu0 0.0
      %1583 = vmatprep.subr.mxu0 0.0
      %1584 = vmatpush2.msra.mxu0 0.0
      %1585 = vmatprep.mubr.f32.mxu0 0.0
      %1586 = vmatmul.mubr.f32.gmra.mxu0 %v1423
      %v1587 = vpop.f32.mrf.mxu0
      %v1588 = vadd.f32 0.0, %v1587
      %v1589 = vpop.f32.mrf.mxu0
      %1590 = vmatprep.mubr.f32.mxu0 0.0
      %1591 = vmatmul.mubr.f32.gmra.mxu0 %v1426
      %v1592 = vpop.f32.mrf.mxu0
      %v1593 = vadd.f32 0.0, %v1592
      %v1594 = vpop.f32.mrf.mxu0
      %1595 = vmatprep.mubr.f32.mxu0 0.0
      %1596 = vmatmul.mubr.f32.gmra.mxu0 %v1429
      %v1597 = vpop.f32.mrf.mxu0
      %v1598 = vadd.f32 0.0, %v1597
      %v1599 = vpop.f32.mrf.mxu0
      %1600 = vmatprep.mubr.f32.mxu0 0.0
      %1601 = vmatmul.mubr.f32.gmra.mxu0 %v1432
      %v1602 = vpop.f32.mrf.mxu0
      %v1603 = vadd.f32 0.0, %v1602
      %v1604 = vpop.f32.mrf.mxu0
      %1605 = vmatprep.mubr.f32.mxu0 0.0
      %1606 = vmatmul.mubr.f32.gmra.mxu0 %v1435
      %v1607 = vpop.f32.mrf.mxu0
      %v1608 = vadd.f32 0.0, %v1607
      %v1609 = vpop.f32.mrf.mxu0
      %1610 = vmatprep.mubr.f32.mxu0 0.0
      %1611 = vmatmul.mubr.f32.gmra.mxu0 %v1438
      %v1612 = vpop.f32.mrf.mxu0
      %v1613 = vadd.f32 0.0, %v1612
      %v1614 = vpop.f32.mrf.mxu0
      %1615 = vmatprep.mubr.f32.mxu0 0.0
      %1616 = vmatmul.mubr.f32.gmra.mxu0 %v1441
      %v1617 = vpop.f32.mrf.mxu0
      %v1618 = vadd.f32 0.0, %v1617
      %v1619 = vpop.f32.mrf.mxu0
      %1620 = vmatprep.mubr.f32.mxu0 0.0
      %1621 = vmatmul.mubr.f32.gmra.mxu0 %v1444
      %v1622 = vpop.f32.mrf.mxu0
      %v1623 = vadd.f32 0.0, %v1622
      %v1624 = vpop.f32.mrf.mxu0
      %1625 = vmatprep.mubr.f32.mxu0 0.0
      %1626 = vmatmul.mubr.f32.gmra.mxu0 %v1447
      %v1627 = vpop.f32.mrf.mxu0
      %v1628 = vadd.f32 0.0, %v1627
      %v1629 = vpop.f32.mrf.mxu0
      %1630 = vmatprep.mubr.f32.mxu0 0.0
      %1631 = vmatmul.mubr.f32.gmra.mxu0 %v1450
      %v1632 = vpop.f32.mrf.mxu0
      %v1633 = vadd.f32 0.0, %v1632
      %v1634 = vpop.f32.mrf.mxu0
      %1635 = vmatprep.mubr.f32.mxu0 0.0
      %1636 = vmatmul.mubr.f32.gmra.mxu0 %v1453
      %v1637 = vpop.f32.mrf.mxu0
      %v1638 = vadd.f32 0.0, %v1637
      %v1639 = vpop.f32.mrf.mxu0
      %1640 = vmatprep.mubr.f32.mxu0 0.0
      %1641 = vmatmul.mubr.f32.gmra.mxu0 %v1456
      %v1642 = vpop.f32.mrf.mxu0
      %v1643 = vadd.f32 0.0, %v1642
      %v1644 = vpop.f32.mrf.mxu0
      %1645 = vmatprep.mubr.f32.mxu0 0.0
      %1646 = vmatmul.mubr.f32.gmra.mxu0 %v1459
      %v1647 = vpop.f32.mrf.mxu0
      %v1648 = vadd.f32 0.0, %v1647
      %v1649 = vpop.f32.mrf.mxu0
      %1650 = vmatprep.mubr.f32.mxu0 0.0
      %1651 = vmatmul.mubr.f32.gmra.mxu0 %v1462
      %v1652 = vpop.f32.mrf.mxu0
      %v1653 = vadd.f32 0.0, %v1652
      %v1654 = vpop.f32.mrf.mxu0
      %1655 = vmatprep.mubr.f32.mxu0 0.0
      %1656 = vmatmul.mubr.f32.gmra.mxu0 %v1465
      %v1657 = vpop.f32.mrf.mxu0
      %v1658 = vadd.f32 0.0, %v1657
      %v1659 = vpop.f32.mrf.mxu0
      %1660 = vmatprep.mubr.f32.mxu0 0.0
      %1661 = vmatmul.mubr.f32.gmra.mxu0 %v1468
      %v1662 = vpop.f32.mrf.mxu0
      %v1663 = vadd.f32 0.0, %v1662
      %v1664 = vpop.f32.mrf.mxu0
      %1665 = vmatprep.mubr.f32.mxu0 0.0
      %1666 = vmatmul.mubr.f32.gmra.mxu0 %v1471
      %v1667 = vpop.f32.mrf.mxu0
      %v1668 = vadd.f32 0.0, %v1667
      %v1669 = vpop.f32.mrf.mxu0
      %1670 = vmatprep.mubr.f32.mxu0 0.0
      %1671 = vmatmul.mubr.f32.gmra.mxu0 %v1474
      %v1672 = vpop.f32.mrf.mxu0
      %v1673 = vadd.f32 0.0, %v1672
      %v1674 = vpop.f32.mrf.mxu0
      %1675 = vmatprep.mubr.f32.mxu0 0.0
      %1676 = vmatmul.mubr.f32.gmra.mxu0 %v1477
      %v1677 = vpop.f32.mrf.mxu0
      %v1678 = vadd.f32 0.0, %v1677
      %v1679 = vpop.f32.mrf.mxu0
      %1680 = vmatprep.mubr.f32.mxu0 0.0
      %1681 = vmatmul.mubr.f32.gmra.mxu0 %v1480
      %v1682 = vpop.f32.mrf.mxu0
      %v1683 = vadd.f32 0.0, %v1682
      %v1684 = vpop.f32.mrf.mxu0
      %1685 = vmatprep.mubr.f32.mxu0 0.0
      %1686 = vmatmul.mubr.f32.gmra.mxu0 %v1483
      %v1687 = vpop.f32.mrf.mxu0
      %v1688 = vadd.f32 0.0, %v1687
      %v1689 = vpop.f32.mrf.mxu0
      %1690 = vmatprep.mubr.f32.mxu0 0.0
      %1691 = vmatmul.mubr.f32.gmra.mxu0 %v1486
      %v1692 = vpop.f32.mrf.mxu0
      %v1693 = vadd.f32 0.0, %v1692
      %v1694 = vpop.f32.mrf.mxu0
      %1695 = vmatprep.mubr.f32.mxu0 0.0
      %1696 = vmatmul.mubr.f32.gmra.mxu0 %v1489
      %v1697 = vpop.f32.mrf.mxu0
      %v1698 = vadd.f32 0.0, %v1697
      %v1699 = vpop.f32.mrf.mxu0
      %1700 = vmatprep.mubr.f32.mxu0 0.0
      %1701 = vmatmul.mubr.f32.gmra.mxu0 %v1492
      %v1702 = vpop.f32.mrf.mxu0
      %v1703 = vadd.f32 0.0, %v1702
      %v1704 = vpop.f32.mrf.mxu0
      %1705 = vmatprep.mubr.f32.mxu0 0.0
      %1706 = vmatmul.mubr.f32.gmra.mxu0 %v1495
      %v1707 = vpop.f32.mrf.mxu0
      %v1708 = vadd.f32 0.0, %v1707
      %v1709 = vpop.f32.mrf.mxu0
      %1710 = vmatprep.mubr.f32.mxu0 0.0
      %1711 = vmatmul.mubr.f32.gmra.mxu0 %v1498
      %v1712 = vpop.f32.mrf.mxu0
      %v1713 = vadd.f32 0.0, %v1712
      %v1714 = vpop.f32.mrf.mxu0
      %1715 = vmatprep.mubr.f32.mxu0 0.0
      %1716 = vmatmul.mubr.f32.gmra.mxu0 %v1501
      %v1717 = vpop.f32.mrf.mxu0
      %v1718 = vadd.f32 0.0, %v1717
      %v1719 = vpop.f32.mrf.mxu0
      %1720 = vmatprep.mubr.f32.mxu0 0.0
      %1721 = vmatmul.mubr.f32.gmra.mxu0 %v1504
      %v1722 = vpop.f32.mrf.mxu0
      %v1723 = vadd.f32 0.0, %v1722
      %v1724 = vpop.f32.mrf.mxu0
      %1725 = vmatprep.mubr.f32.mxu0 0.0
      %1726 = vmatmul.mubr.f32.gmra.mxu0 %v1507
      %v1727 = vpop.f32.mrf.mxu0
      %v1728 = vadd.f32 0.0, %v1727
      %v1729 = vpop.f32.mrf.mxu0
      %1730 = vmatprep.mubr.f32.mxu0 0.0
      %1731 = vmatmul.mubr.f32.gmra.mxu0 %v1510
      %v1732 = vpop.f32.mrf.mxu0
      %v1733 = vadd.f32 0.0, %v1732
      %v1734 = vpop.f32.mrf.mxu0
      %1735 = vmatprep.mubr.f32.mxu0 0.0
      %1736 = vmatmul.mubr.f32.gmra.mxu0 %v1513
      %v1737 = vpop.f32.mrf.mxu0
      %v1738 = vadd.f32 0.0, %v1737
      %v1739 = vpop.f32.mrf.mxu0
      %1740 = vmatprep.mubr.f32.mxu0 0.0
      %1741 = vmatmul.mubr.f32.gmra.mxu0 %v1516
      %v1742 = vpop.f32.mrf.mxu0
      %v1743 = vadd.f32 0.0, %v1742
      %v1744 = vpop.f32.mrf.mxu0
      %1745 = vdwg.mxu0
      %v1746 = vadd.f32 %v1353, %v1588
      %v1747 = vadd.f32 %v1354, %v1593
      %v1748 = vadd.f32 %v1355, %v1598
      %v1749 = vadd.f32 %v1356, %v1603
      %v1750 = vadd.f32 %v1357, %v1608
      %v1751 = vadd.f32 %v1358, %v1613
      %v1752 = vadd.f32 %v1359, %v1618
      %v1753 = vadd.f32 %v1360, %v1623
      %v1754 = vadd.f32 %v1361, %v1628
      %v1755 = vadd.f32 %v1362, %v1633
      %v1756 = vadd.f32 %v1363, %v1638
      %v1757 = vadd.f32 %v1364, %v1643
      %v1758 = vadd.f32 %v1365, %v1648
      %v1759 = vadd.f32 %v1366, %v1653
      %v1760 = vadd.f32 %v1367, %v1658
      %v1761 = vadd.f32 %v1368, %v1663
      %v1762 = vadd.f32 %v1369, %v1668
      %v1763 = vadd.f32 %v1370, %v1673
      %v1764 = vadd.f32 %v1371, %v1678
      %v1765 = vadd.f32 %v1372, %v1683
      %v1766 = vadd.f32 %v1373, %v1688
      %v1767 = vadd.f32 %v1374, %v1693
      %v1768 = vadd.f32 %v1375, %v1698
      %v1769 = vadd.f32 %v1376, %v1703
      %v1770 = vadd.f32 %v1377, %v1708
      %v1771 = vadd.f32 %v1378, %v1713
      %v1772 = vadd.f32 %v1379, %v1718
      %v1773 = vadd.f32 %v1380, %v1723
      %v1774 = vadd.f32 %v1381, %v1728
      %v1775 = vadd.f32 %v1382, %v1733
      %v1776 = vadd.f32 %v1383, %v1738
      %v1777 = vadd.f32 %v1384, %v1743
      %v1778 = vld [vmem:[%s3 + $0x10] sm:$0xf]
      %v1780 = vsel %vm426, %v1417, 0
      %v1783 = vsel %vm426, %v1418, 0
      %v1786 = vsel %vm655, %v1778, 0
      %1788 = vmatprep.subr.mxu0 0.0
      %1789 = vmatpush1.msra.mxu0 0.0
      %1790 = vmatprep.subr.mxu0 0.0
      %1791 = vmatpush1.msra.mxu0 0.0
      %1792 = vmatprep.subr.mxu0 0.0
      %1793 = vmatpush1.msra.mxu0 0.0
      %1794 = vmatprep.subr.mxu0 0.0
      %1795 = vmatpush1.msra.mxu0 0.0
      %1796 = vmatprep.subr.mxu0 0.0
      %1797 = vmatpush1.msra.mxu0 0.0
      %1798 = vmatprep.subr.mxu0 0.0
      %1799 = vmatpush1.msra.mxu0 0.0
      %1800 = vmatprep.subr.mxu0 0.0
      %1801 = vmatpush1.msra.mxu0 0.0
      %1802 = vmatprep.subr.mxu0 0.0
      %1803 = vmatpush1.msra.mxu0 0.0
      %1804 = vmatprep.subr.mxu0 0.0
      %1805 = vmatpush1.msra.mxu0 0.0
      %1806 = vmatprep.subr.mxu0 0.0
      %1807 = vmatpush1.msra.mxu0 0.0
      %1808 = vmatprep.subr.mxu0 0.0
      %1809 = vmatpush1.msra.mxu0 0.0
      %1810 = vmatprep.subr.mxu0 0.0
      %1811 = vmatpush1.msra.mxu0 0.0
      %1812 = vmatprep.subr.mxu0 0.0
      %1813 = vmatpush1.msra.mxu0 0.0
      %1814 = vmatprep.subr.mxu0 0.0
      %1815 = vmatpush1.msra.mxu0 0.0
      %1816 = vmatprep.subr.mxu0 0.0
      %1817 = vmatpush1.msra.mxu0 0.0
      %1818 = vmatprep.subr.mxu0 0.0
      %1819 = vmatpush1.msra.mxu0 %v1786
      %1820 = vmatprep.subr.mxu0 0.0
      %1821 = vmatpush2.msra.mxu0 0.0
      %1822 = vmatprep.subr.mxu0 0.0
      %1823 = vmatpush2.msra.mxu0 0.0
      %1824 = vmatprep.subr.mxu0 0.0
      %1825 = vmatpush2.msra.mxu0 0.0
      %1826 = vmatprep.subr.mxu0 0.0
      %1827 = vmatpush2.msra.mxu0 0.0
      %1828 = vmatprep.subr.mxu0 0.0
      %1829 = vmatpush2.msra.mxu0 0.0
      %1830 = vmatprep.subr.mxu0 0.0
      %1831 = vmatpush2.msra.mxu0 0.0
      %1832 = vmatprep.subr.mxu0 0.0
      %1833 = vmatpush2.msra.mxu0 0.0
      %1834 = vmatprep.subr.mxu0 0.0
      %1835 = vmatpush2.msra.mxu0 0.0
      %1836 = vmatprep.subr.mxu0 0.0
      %1837 = vmatpush2.msra.mxu0 0.0
      %1838 = vmatprep.subr.mxu0 0.0
      %1839 = vmatpush2.msra.mxu0 0.0
      %1840 = vmatprep.subr.mxu0 0.0
      %1841 = vmatpush2.msra.mxu0 0.0
      %1842 = vmatprep.subr.mxu0 0.0
      %1843 = vmatpush2.msra.mxu0 0.0
      %1844 = vmatprep.subr.mxu0 0.0
      %1845 = vmatpush2.msra.mxu0 0.0
      %1846 = vmatprep.subr.mxu0 0.0
      %1847 = vmatpush2.msra.mxu0 0.0
      %1848 = vmatprep.subr.mxu0 0.0
      %1849 = vmatpush2.msra.mxu0 0.0
      %1850 = vmatprep.subr.mxu0 0.0
      %1851 = vmatpush2.msra.mxu0 0.0
      %1852 = vmatprep.mubr.f32.mxu0 0.0
      %1853 = vmatmul.mubr.f32.gmra.mxu0 %v1429
      %v1854 = vpop.f32.mrf.mxu0
      %v1855 = vadd.f32 0.0, %v1854
      %v1856 = vpop.f32.mrf.mxu0
      %1857 = vmatprep.mubr.f32.mxu0 0.0
      %1858 = vmatmul.mubr.f32.gmra.mxu0 %v1432
      %v1859 = vpop.f32.mrf.mxu0
      %v1860 = vadd.f32 0.0, %v1859
      %v1861 = vpop.f32.mrf.mxu0
      %1862 = vmatprep.mubr.f32.mxu0 0.0
      %1863 = vmatmul.mubr.f32.gmra.mxu0 %v1435
      %v1864 = vpop.f32.mrf.mxu0
      %v1865 = vadd.f32 0.0, %v1864
      %v1866 = vpop.f32.mrf.mxu0
      %1867 = vmatprep.mubr.f32.mxu0 0.0
      %1868 = vmatmul.mubr.f32.gmra.mxu0 %v1438
      %v1869 = vpop.f32.mrf.mxu0
      %v1870 = vadd.f32 0.0, %v1869
      %v1871 = vpop.f32.mrf.mxu0
      %1872 = vmatprep.mubr.f32.mxu0 0.0
      %1873 = vmatmul.mubr.f32.gmra.mxu0 %v1441
      %v1874 = vpop.f32.mrf.mxu0
      %v1875 = vadd.f32 0.0, %v1874
      %v1876 = vpop.f32.mrf.mxu0
      %1877 = vmatprep.mubr.f32.mxu0 0.0
      %1878 = vmatmul.mubr.f32.gmra.mxu0 %v1444
      %v1879 = vpop.f32.mrf.mxu0
      %v1880 = vadd.f32 0.0, %v1879
      %v1881 = vpop.f32.mrf.mxu0
      %1882 = vmatprep.mubr.f32.mxu0 0.0
      %1883 = vmatmul.mubr.f32.gmra.mxu0 %v1447
      %v1884 = vpop.f32.mrf.mxu0
      %v1885 = vadd.f32 0.0, %v1884
      %v1886 = vpop.f32.mrf.mxu0
      %1887 = vmatprep.mubr.f32.mxu0 0.0
      %1888 = vmatmul.mubr.f32.gmra.mxu0 %v1450
      %v1889 = vpop.f32.mrf.mxu0
      %v1890 = vadd.f32 0.0, %v1889
      %v1891 = vpop.f32.mrf.mxu0
      %1892 = vmatprep.mubr.f32.mxu0 0.0
      %1893 = vmatmul.mubr.f32.gmra.mxu0 %v1453
      %v1894 = vpop.f32.mrf.mxu0
      %v1895 = vadd.f32 0.0, %v1894
      %v1896 = vpop.f32.mrf.mxu0
      %1897 = vmatprep.mubr.f32.mxu0 0.0
      %1898 = vmatmul.mubr.f32.gmra.mxu0 %v1456
      %v1899 = vpop.f32.mrf.mxu0
      %v1900 = vadd.f32 0.0, %v1899
      %v1901 = vpop.f32.mrf.mxu0
      %1902 = vmatprep.mubr.f32.mxu0 0.0
      %1903 = vmatmul.mubr.f32.gmra.mxu0 %v1459
      %v1904 = vpop.f32.mrf.mxu0
      %v1905 = vadd.f32 0.0, %v1904
      %v1906 = vpop.f32.mrf.mxu0
      %1907 = vmatprep.mubr.f32.mxu0 0.0
      %1908 = vmatmul.mubr.f32.gmra.mxu0 %v1462
      %v1909 = vpop.f32.mrf.mxu0
      %v1910 = vadd.f32 0.0, %v1909
      %v1911 = vpop.f32.mrf.mxu0
      %1912 = vmatprep.mubr.f32.mxu0 0.0
      %1913 = vmatmul.mubr.f32.gmra.mxu0 %v1465
      %v1914 = vpop.f32.mrf.mxu0
      %v1915 = vadd.f32 0.0, %v1914
      %v1916 = vpop.f32.mrf.mxu0
      %1917 = vmatprep.mubr.f32.mxu0 0.0
      %1918 = vmatmul.mubr.f32.gmra.mxu0 %v1468
      %v1919 = vpop.f32.mrf.mxu0
      %v1920 = vadd.f32 0.0, %v1919
      %v1921 = vpop.f32.mrf.mxu0
      %1922 = vmatprep.mubr.f32.mxu0 0.0
      %1923 = vmatmul.mubr.f32.gmra.mxu0 %v1471
      %v1924 = vpop.f32.mrf.mxu0
      %v1925 = vadd.f32 0.0, %v1924
      %v1926 = vpop.f32.mrf.mxu0
      %1927 = vmatprep.mubr.f32.mxu0 0.0
      %1928 = vmatmul.mubr.f32.gmra.mxu0 %v1474
      %v1929 = vpop.f32.mrf.mxu0
      %v1930 = vadd.f32 0.0, %v1929
      %v1931 = vpop.f32.mrf.mxu0
      %1932 = vmatprep.mubr.f32.mxu0 0.0
      %1933 = vmatmul.mubr.f32.gmra.mxu0 %v1477
      %v1934 = vpop.f32.mrf.mxu0
      %v1935 = vadd.f32 0.0, %v1934
      %v1936 = vpop.f32.mrf.mxu0
      %1937 = vmatprep.mubr.f32.mxu0 0.0
      %1938 = vmatmul.mubr.f32.gmra.mxu0 %v1480
      %v1939 = vpop.f32.mrf.mxu0
      %v1940 = vadd.f32 0.0, %v1939
      %v1941 = vpop.f32.mrf.mxu0
      %1942 = vmatprep.mubr.f32.mxu0 0.0
      %1943 = vmatmul.mubr.f32.gmra.mxu0 %v1483
      %v1944 = vpop.f32.mrf.mxu0
      %v1945 = vadd.f32 0.0, %v1944
      %v1946 = vpop.f32.mrf.mxu0
      %1947 = vmatprep.mubr.f32.mxu0 0.0
      %1948 = vmatmul.mubr.f32.gmra.mxu0 %v1486
      %v1949 = vpop.f32.mrf.mxu0
      %v1950 = vadd.f32 0.0, %v1949
      %v1951 = vpop.f32.mrf.mxu0
      %1952 = vmatprep.mubr.f32.mxu0 0.0
      %1953 = vmatmul.mubr.f32.gmra.mxu0 %v1489
      %v1954 = vpop.f32.mrf.mxu0
      %v1955 = vadd.f32 0.0, %v1954
      %v1956 = vpop.f32.mrf.mxu0
      %1957 = vmatprep.mubr.f32.mxu0 0.0
      %1958 = vmatmul.mubr.f32.gmra.mxu0 %v1492
      %v1959 = vpop.f32.mrf.mxu0
      %v1960 = vadd.f32 0.0, %v1959
      %v1961 = vpop.f32.mrf.mxu0
      %1962 = vmatprep.mubr.f32.mxu0 0.0
      %1963 = vmatmul.mubr.f32.gmra.mxu0 %v1495
      %v1964 = vpop.f32.mrf.mxu0
      %v1965 = vadd.f32 0.0, %v1964
      %v1966 = vpop.f32.mrf.mxu0
      %1967 = vmatprep.mubr.f32.mxu0 0.0
      %1968 = vmatmul.mubr.f32.gmra.mxu0 %v1498
      %v1969 = vpop.f32.mrf.mxu0
      %v1970 = vadd.f32 0.0, %v1969
      %v1971 = vpop.f32.mrf.mxu0
      %1972 = vmatprep.mubr.f32.mxu0 0.0
      %1973 = vmatmul.mubr.f32.gmra.mxu0 %v1501
      %v1974 = vpop.f32.mrf.mxu0
      %v1975 = vadd.f32 0.0, %v1974
      %v1976 = vpop.f32.mrf.mxu0
      %1977 = vmatprep.mubr.f32.mxu0 0.0
      %1978 = vmatmul.mubr.f32.gmra.mxu0 %v1504
      %v1979 = vpop.f32.mrf.mxu0
      %v1980 = vadd.f32 0.0, %v1979
      %v1981 = vpop.f32.mrf.mxu0
      %1982 = vmatprep.mubr.f32.mxu0 0.0
      %1983 = vmatmul.mubr.f32.gmra.mxu0 %v1507
      %v1984 = vpop.f32.mrf.mxu0
      %v1985 = vadd.f32 0.0, %v1984
      %v1986 = vpop.f32.mrf.mxu0
      %1987 = vmatprep.mubr.f32.mxu0 0.0
      %1988 = vmatmul.mubr.f32.gmra.mxu0 %v1510
      %v1989 = vpop.f32.mrf.mxu0
      %v1990 = vadd.f32 0.0, %v1989
      %v1991 = vpop.f32.mrf.mxu0
      %1992 = vmatprep.mubr.f32.mxu0 0.0
      %1993 = vmatmul.mubr.f32.gmra.mxu0 %v1513
      %v1994 = vpop.f32.mrf.mxu0
      %v1995 = vadd.f32 0.0, %v1994
      %v1996 = vpop.f32.mrf.mxu0
      %1997 = vmatprep.mubr.f32.mxu0 0.0
      %1998 = vmatmul.mubr.f32.gmra.mxu0 %v1516
      %v1999 = vpop.f32.mrf.mxu0
      %v2000 = vadd.f32 0.0, %v1999
      %v2001 = vpop.f32.mrf.mxu0
      %2002 = vmatprep.mubr.f32.mxu0 0.0
      %2003 = vmatmul.mubr.f32.gmra.mxu0 %v1780
      %v2004 = vpop.f32.mrf.mxu0
      %v2005 = vadd.f32 0.0, %v2004
      %v2006 = vpop.f32.mrf.mxu0
      %2007 = vmatprep.mubr.f32.mxu0 0.0
      %2008 = vmatmul.mubr.f32.gmra.mxu0 %v1783
      %v2009 = vpop.f32.mrf.mxu0
      %v2010 = vadd.f32 0.0, %v2009
      %v2011 = vpop.f32.mrf.mxu0
      %2012 = vdwg.mxu0
      %v2013 = vadd.f32 %v1746, %v1855
      %v2014 = vadd.f32 %v1747, %v1860
      %v2015 = vadd.f32 %v1748, %v1865
      %v2016 = vadd.f32 %v1749, %v1870
      %v2017 = vadd.f32 %v1750, %v1875
      %v2018 = vadd.f32 %v1751, %v1880
      %v2019 = vadd.f32 %v1752, %v1885
      %v2020 = vadd.f32 %v1753, %v1890
      %v2021 = vadd.f32 %v1754, %v1895
      %v2022 = vadd.f32 %v1755, %v1900
      %v2023 = vadd.f32 %v1756, %v1905
      %v2024 = vadd.f32 %v1757, %v1910
      %v2025 = vadd.f32 %v1758, %v1915
      %v2026 = vadd.f32 %v1759, %v1920
      %v2027 = vadd.f32 %v1760, %v1925
      %v2028 = vadd.f32 %v1761, %v1930
      %v2029 = vadd.f32 %v1762, %v1935
      %v2030 = vadd.f32 %v1763, %v1940
      %v2031 = vadd.f32 %v1764, %v1945
      %v2032 = vadd.f32 %v1765, %v1950
      %v2033 = vadd.f32 %v1766, %v1955
      %v2034 = vadd.f32 %v1767, %v1960
      %v2035 = vadd.f32 %v1768, %v1965
      %v2036 = vadd.f32 %v1769, %v1970
      %v2037 = vadd.f32 %v1770, %v1975
      %v2038 = vadd.f32 %v1771, %v1980
      %v2039 = vadd.f32 %v1772, %v1985
      %v2040 = vadd.f32 %v1773, %v1990
      %v2041 = vadd.f32 %v1774, %v1995
      %v2042 = vadd.f32 %v1775, %v2000
      %v2043 = vadd.f32 %v1776, %v2005
      %v2044 = vadd.f32 %v1777, %v2010
      %v2045 = vld [vmem:[%s3 + $0x1c] sm:$0xf]
      %v2047 = vsel %vm426, %v1419, 0
      %v2050 = vsel %vm426, %v1420, 0
      %v2053 = vsel %vm655, %v2045, 0
      %2055 = vmatprep.subr.mxu0 0.0
      %2056 = vmatpush1.msra.mxu0 0.0
      %2057 = vmatprep.subr.mxu0 0.0
      %2058 = vmatpush1.msra.mxu0 0.0
      %2059 = vmatprep.subr.mxu0 0.0
      %2060 = vmatpush1.msra.mxu0 0.0
      %2061 = vmatprep.subr.mxu0 0.0
      %2062 = vmatpush1.msra.mxu0 0.0
      %2063 = vmatprep.subr.mxu0 0.0
      %2064 = vmatpush1.msra.mxu0 0.0
      %2065 = vmatprep.subr.mxu0 0.0
      %2066 = vmatpush1.msra.mxu0 0.0
      %2067 = vmatprep.subr.mxu0 0.0
      %2068 = vmatpush1.msra.mxu0 0.0
      %2069 = vmatprep.subr.mxu0 0.0
      %2070 = vmatpush1.msra.mxu0 0.0
      %2071 = vmatprep.subr.mxu0 0.0
      %2072 = vmatpush1.msra.mxu0 0.0
      %2073 = vmatprep.subr.mxu0 0.0
      %2074 = vmatpush1.msra.mxu0 0.0
      %2075 = vmatprep.subr.mxu0 0.0
      %2076 = vmatpush1.msra.mxu0 0.0
      %2077 = vmatprep.subr.mxu0 0.0
      %2078 = vmatpush1.msra.mxu0 0.0
      %2079 = vmatprep.subr.mxu0 0.0
      %2080 = vmatpush1.msra.mxu0 0.0
      %2081 = vmatprep.subr.mxu0 0.0
      %2082 = vmatpush1.msra.mxu0 0.0
      %2083 = vmatprep.subr.mxu0 0.0
      %2084 = vmatpush1.msra.mxu0 0.0
      %2085 = vmatprep.subr.mxu0 0.0
      %2086 = vmatpush1.msra.mxu0 %v2053
      %2087 = vmatprep.subr.mxu0 0.0
      %2088 = vmatpush2.msra.mxu0 0.0
      %2089 = vmatprep.subr.mxu0 0.0
      %2090 = vmatpush2.msra.mxu0 0.0
      %2091 = vmatprep.subr.mxu0 0.0
      %2092 = vmatpush2.msra.mxu0 0.0
      %2093 = vmatprep.subr.mxu0 0.0
      %2094 = vmatpush2.msra.mxu0 0.0
      %2095 = vmatprep.subr.mxu0 0.0
      %2096 = vmatpush2.msra.mxu0 0.0
      %2097 = vmatprep.subr.mxu0 0.0
      %2098 = vmatpush2.msra.mxu0 0.0
      %2099 = vmatprep.subr.mxu0 0.0
      %2100 = vmatpush2.msra.mxu0 0.0
      %2101 = vmatprep.subr.mxu0 0.0
      %2102 = vmatpush2.msra.mxu0 0.0
      %2103 = vmatprep.subr.mxu0 0.0
      %2104 = vmatpush2.msra.mxu0 0.0
      %2105 = vmatprep.subr.mxu0 0.0
      %2106 = vmatpush2.msra.mxu0 0.0
      %2107 = vmatprep.subr.mxu0 0.0
      %2108 = vmatpush2.msra.mxu0 0.0
      %2109 = vmatprep.subr.mxu0 0.0
      %2110 = vmatpush2.msra.mxu0 0.0
      %2111 = vmatprep.subr.mxu0 0.0
      %2112 = vmatpush2.msra.mxu0 0.0
      %2113 = vmatprep.subr.mxu0 0.0
      %2114 = vmatpush2.msra.mxu0 0.0
      %2115 = vmatprep.subr.mxu0 0.0
      %2116 = vmatpush2.msra.mxu0 0.0
      %2117 = vmatprep.subr.mxu0 0.0
      %2118 = vmatpush2.msra.mxu0 0.0
      %2119 = vmatprep.mubr.f32.mxu0 0.0
      %2120 = vmatmul.mubr.f32.gmra.mxu0 %v1435
      %v2121 = vpop.f32.mrf.mxu0
      %v2122 = vadd.f32 0.0, %v2121
      %v2123 = vpop.f32.mrf.mxu0
      %2124 = vmatprep.mubr.f32.mxu0 0.0
      %2125 = vmatmul.mubr.f32.gmra.mxu0 %v1438
      %v2126 = vpop.f32.mrf.mxu0
      %v2127 = vadd.f32 0.0, %v2126
      %v2128 = vpop.f32.mrf.mxu0
      %2129 = vmatprep.mubr.f32.mxu0 0.0
      %2130 = vmatmul.mubr.f32.gmra.mxu0 %v1441
      %v2131 = vpop.f32.mrf.mxu0
      %v2132 = vadd.f32 0.0, %v2131
      %v2133 = vpop.f32.mrf.mxu0
      %2134 = vmatprep.mubr.f32.mxu0 0.0
      %2135 = vmatmul.mubr.f32.gmra.mxu0 %v1444
      %v2136 = vpop.f32.mrf.mxu0
      %v2137 = vadd.f32 0.0, %v2136
      %v2138 = vpop.f32.mrf.mxu0
      %2139 = vmatprep.mubr.f32.mxu0 0.0
      %2140 = vmatmul.mubr.f32.gmra.mxu0 %v1447
      %v2141 = vpop.f32.mrf.mxu0
      %v2142 = vadd.f32 0.0, %v2141
      %v2143 = vpop.f32.mrf.mxu0
      %2144 = vmatprep.mubr.f32.mxu0 0.0
      %2145 = vmatmul.mubr.f32.gmra.mxu0 %v1450
      %v2146 = vpop.f32.mrf.mxu0
      %v2147 = vadd.f32 0.0, %v2146
      %v2148 = vpop.f32.mrf.mxu0
      %2149 = vmatprep.mubr.f32.mxu0 0.0
      %2150 = vmatmul.mubr.f32.gmra.mxu0 %v1453
      %v2151 = vpop.f32.mrf.mxu0
      %v2152 = vadd.f32 0.0, %v2151
      %v2153 = vpop.f32.mrf.mxu0
      %2154 = vmatprep.mubr.f32.mxu0 0.0
      %2155 = vmatmul.mubr.f32.gmra.mxu0 %v1456
      %v2156 = vpop.f32.mrf.mxu0
      %v2157 = vadd.f32 0.0, %v2156
      %v2158 = vpop.f32.mrf.mxu0
      %2159 = vmatprep.mubr.f32.mxu0 0.0
      %2160 = vmatmul.mubr.f32.gmra.mxu0 %v1459
      %v2161 = vpop.f32.mrf.mxu0
      %v2162 = vadd.f32 0.0, %v2161
      %v2163 = vpop.f32.mrf.mxu0
      %2164 = vmatprep.mubr.f32.mxu0 0.0
      %2165 = vmatmul.mubr.f32.gmra.mxu0 %v1462
      %v2166 = vpop.f32.mrf.mxu0
      %v2167 = vadd.f32 0.0, %v2166
      %v2168 = vpop.f32.mrf.mxu0
      %2169 = vmatprep.mubr.f32.mxu0 0.0
      %2170 = vmatmul.mubr.f32.gmra.mxu0 %v1465
      %v2171 = vpop.f32.mrf.mxu0
      %v2172 = vadd.f32 0.0, %v2171
      %v2173 = vpop.f32.mrf.mxu0
      %2174 = vmatprep.mubr.f32.mxu0 0.0
      %2175 = vmatmul.mubr.f32.gmra.mxu0 %v1468
      %v2176 = vpop.f32.mrf.mxu0
      %v2177 = vadd.f32 0.0, %v2176
      %v2178 = vpop.f32.mrf.mxu0
      %2179 = vmatprep.mubr.f32.mxu0 0.0
      %2180 = vmatmul.mubr.f32.gmra.mxu0 %v1471
      %v2181 = vpop.f32.mrf.mxu0
      %v2182 = vadd.f32 0.0, %v2181
      %v2183 = vpop.f32.mrf.mxu0
      %2184 = vmatprep.mubr.f32.mxu0 0.0
      %2185 = vmatmul.mubr.f32.gmra.mxu0 %v1474
      %v2186 = vpop.f32.mrf.mxu0
      %v2187 = vadd.f32 0.0, %v2186
      %v2188 = vpop.f32.mrf.mxu0
      %2189 = vmatprep.mubr.f32.mxu0 0.0
      %2190 = vmatmul.mubr.f32.gmra.mxu0 %v1477
      %v2191 = vpop.f32.mrf.mxu0
      %v2192 = vadd.f32 0.0, %v2191
      %v2193 = vpop.f32.mrf.mxu0
      %2194 = vmatprep.mubr.f32.mxu0 0.0
      %2195 = vmatmul.mubr.f32.gmra.mxu0 %v1480
      %v2196 = vpop.f32.mrf.mxu0
      %v2197 = vadd.f32 0.0, %v2196
      %v2198 = vpop.f32.mrf.mxu0
      %2199 = vmatprep.mubr.f32.mxu0 0.0
      %2200 = vmatmul.mubr.f32.gmra.mxu0 %v1483
      %v2201 = vpop.f32.mrf.mxu0
      %v2202 = vadd.f32 0.0, %v2201
      %v2203 = vpop.f32.mrf.mxu0
      %2204 = vmatprep.mubr.f32.mxu0 0.0
      %2205 = vmatmul.mubr.f32.gmra.mxu0 %v1486
      %v2206 = vpop.f32.mrf.mxu0
      %v2207 = vadd.f32 0.0, %v2206
      %v2208 = vpop.f32.mrf.mxu0
      %2209 = vmatprep.mubr.f32.mxu0 0.0
      %2210 = vmatmul.mubr.f32.gmra.mxu0 %v1489
      %v2211 = vpop.f32.mrf.mxu0
      %v2212 = vadd.f32 0.0, %v2211
      %v2213 = vpop.f32.mrf.mxu0
      %2214 = vmatprep.mubr.f32.mxu0 0.0
      %2215 = vmatmul.mubr.f32.gmra.mxu0 %v1492
      %v2216 = vpop.f32.mrf.mxu0
      %v2217 = vadd.f32 0.0, %v2216
      %v2218 = vpop.f32.mrf.mxu0
      %2219 = vmatprep.mubr.f32.mxu0 0.0
      %2220 = vmatmul.mubr.f32.gmra.mxu0 %v1495
      %v2221 = vpop.f32.mrf.mxu0
      %v2222 = vadd.f32 0.0, %v2221
      %v2223 = vpop.f32.mrf.mxu0
      %2224 = vmatprep.mubr.f32.mxu0 0.0
      %2225 = vmatmul.mubr.f32.gmra.mxu0 %v1498
      %v2226 = vpop.f32.mrf.mxu0
      %v2227 = vadd.f32 0.0, %v2226
      %v2228 = vpop.f32.mrf.mxu0
      %2229 = vmatprep.mubr.f32.mxu0 0.0
      %2230 = vmatmul.mubr.f32.gmra.mxu0 %v1501
      %v2231 = vpop.f32.mrf.mxu0
      %v2232 = vadd.f32 0.0, %v2231
      %v2233 = vpop.f32.mrf.mxu0
      %2234 = vmatprep.mubr.f32.mxu0 0.0
      %2235 = vmatmul.mubr.f32.gmra.mxu0 %v1504
      %v2236 = vpop.f32.mrf.mxu0
      %v2237 = vadd.f32 0.0, %v2236
      %v2238 = vpop.f32.mrf.mxu0
      %2239 = vmatprep.mubr.f32.mxu0 0.0
      %2240 = vmatmul.mubr.f32.gmra.mxu0 %v1507
      %v2241 = vpop.f32.mrf.mxu0
      %v2242 = vadd.f32 0.0, %v2241
      %v2243 = vpop.f32.mrf.mxu0
      %2244 = vmatprep.mubr.f32.mxu0 0.0
      %2245 = vmatmul.mubr.f32.gmra.mxu0 %v1510
      %v2246 = vpop.f32.mrf.mxu0
      %v2247 = vadd.f32 0.0, %v2246
      %v2248 = vpop.f32.mrf.mxu0
      %2249 = vmatprep.mubr.f32.mxu0 0.0
      %2250 = vmatmul.mubr.f32.gmra.mxu0 %v1513
      %v2251 = vpop.f32.mrf.mxu0
      %v2252 = vadd.f32 0.0, %v2251
      %v2253 = vpop.f32.mrf.mxu0
      %2254 = vmatprep.mubr.f32.mxu0 0.0
      %2255 = vmatmul.mubr.f32.gmra.mxu0 %v1516
      %v2256 = vpop.f32.mrf.mxu0
      %v2257 = vadd.f32 0.0, %v2256
      %v2258 = vpop.f32.mrf.mxu0
      %2259 = vmatprep.mubr.f32.mxu0 0.0
      %2260 = vmatmul.mubr.f32.gmra.mxu0 %v1780
      %v2261 = vpop.f32.mrf.mxu0
      %v2262 = vadd.f32 0.0, %v2261
      %v2263 = vpop.f32.mrf.mxu0
      %2264 = vmatprep.mubr.f32.mxu0 0.0
      %2265 = vmatmul.mubr.f32.gmra.mxu0 %v1783
      %v2266 = vpop.f32.mrf.mxu0
      %v2267 = vadd.f32 0.0, %v2266
      %v2268 = vpop.f32.mrf.mxu0
      %2269 = vmatprep.mubr.f32.mxu0 0.0
      %2270 = vmatmul.mubr.f32.gmra.mxu0 %v2047
      %v2271 = vpop.f32.mrf.mxu0
      %v2272 = vadd.f32 0.0, %v2271
      %v2273 = vpop.f32.mrf.mxu0
      %2274 = vmatprep.mubr.f32.mxu0 0.0
      %2275 = vmatmul.mubr.f32.gmra.mxu0 %v2050
      %v2276 = vpop.f32.mrf.mxu0
      %v2277 = vadd.f32 0.0, %v2276
      %v2278 = vpop.f32.mrf.mxu0
      %2279 = vdwg.mxu0
      %v2280 = vadd.f32 %v2013, %v2122
      %v2281 = vadd.f32 %v2014, %v2127
      %v2282 = vadd.f32 %v2015, %v2132
      %v2283 = vadd.f32 %v2016, %v2137
      %v2284 = vadd.f32 %v2017, %v2142
      %v2285 = vadd.f32 %v2018, %v2147
      %v2286 = vadd.f32 %v2019, %v2152
      %v2287 = vadd.f32 %v2020, %v2157
      %v2288 = vadd.f32 %v2021, %v2162
      %v2289 = vadd.f32 %v2022, %v2167
      %v2290 = vadd.f32 %v2023, %v2172
      %v2291 = vadd.f32 %v2024, %v2177
      %v2292 = vadd.f32 %v2025, %v2182
      %v2293 = vadd.f32 %v2026, %v2187
      %v2294 = vadd.f32 %v2027, %v2192
      %v2295 = vadd.f32 %v2028, %v2197
      %v2296 = vadd.f32 %v2029, %v2202
      %v2297 = vadd.f32 %v2030, %v2207
      %v2298 = vadd.f32 %v2031, %v2212
      %v2299 = vadd.f32 %v2032, %v2217
      %v2300 = vadd.f32 %v2033, %v2222
      %v2301 = vadd.f32 %v2034, %v2227
      %v2302 = vadd.f32 %v2035, %v2232
      %v2303 = vadd.f32 %v2036, %v2237
      %v2304 = vadd.f32 %v2037, %v2242
      %v2305 = vadd.f32 %v2038, %v2247
      %v2306 = vadd.f32 %v2039, %v2252
      %v2307 = vadd.f32 %v2040, %v2257
      %v2308 = vadd.f32 %v2041, %v2262
      %v2309 = vadd.f32 %v2042, %v2267
      %v2310 = vadd.f32 %v2043, %v2272
      %v2311 = vadd.f32 %v2044, %v2277
      %v2312 = vld [vmem:[#allocation2 + $0x9] sm:$0xff]
      %v2313 = vld [vmem:[#allocation2 + $0x11] sm:$0xff]
      %v2314 = vld [vmem:[#allocation2 + $0x29] sm:$0xff]
      %v2315 = vld [vmem:[#allocation2 + $0x31] sm:$0xff]
      %v2316 = vld [vmem:[#allocation2 + $0x49] sm:$0xff]
      %v2317 = vld [vmem:[#allocation2 + $0x51] sm:$0xff]
      %v2318 = vld [vmem:[#allocation2 + $0x69] sm:$0xff]
      %v2319 = vld [vmem:[#allocation2 + $0x71] sm:$0xff]
      %v2320 = vld [vmem:[#allocation2 + $0x89] sm:$0xff]
      %v2321 = vld [vmem:[#allocation2 + $0x91] sm:$0xff]
      %v2322 = vld [vmem:[#allocation2 + $0xa9] sm:$0xff]
      %v2323 = vld [vmem:[#allocation2 + $0xb1] sm:$0xff]
      %v2324 = vld [vmem:[#allocation2 + $0xc9] sm:$0xff]
      %v2325 = vld [vmem:[#allocation2 + $0xd1] sm:$0xff]
      %v2326 = vld [vmem:[#allocation2 + $0xe9] sm:$0xff]
      %v2327 = vld [vmem:[#allocation2 + $0xf1] sm:$0xff]
      %v2328 = vld [vmem:[#allocation2 + $0x109] sm:$0xff]
      %v2329 = vld [vmem:[#allocation2 + $0x111] sm:$0xff]
      %v2330 = vld [vmem:[#allocation2 + $0x129] sm:$0xff]
      %v2331 = vld [vmem:[#allocation2 + $0x131] sm:$0xff]
      %v2332 = vld [vmem:[#allocation2 + $0x149] sm:$0xff]
      %v2333 = vld [vmem:[#allocation2 + $0x151] sm:$0xff]
      %v2334 = vld [vmem:[#allocation2 + $0x169] sm:$0xff]
      %v2335 = vld [vmem:[#allocation2 + $0x171] sm:$0xff]
      %v2336 = vld [vmem:[#allocation2 + $0x189] sm:$0xff]
      %v2337 = vld [vmem:[#allocation2 + $0x191] sm:$0xff]
      %v2338 = vld [vmem:[#allocation2 + $0x1a9] sm:$0xff]
      %v2339 = vld [vmem:[#allocation2 + $0x1b1] sm:$0xff]
      %v2340 = vld [vmem:[#allocation2 + $0x1c9] sm:$0xff]
      %v2341 = vld [vmem:[#allocation2 + $0x1d1] sm:$0xff]
      %v2342 = vld [vmem:[#allocation2 + $0x1e9] sm:$0xff]
      %v2343 = vld [vmem:[#allocation2 + $0x1f1] sm:$0xff]
      %v2344 = vld [vmem:[#allocation2 + $0x209] sm:$0xff]
      %v2345 = vld [vmem:[#allocation2 + $0x211] sm:$0xff]
      %v2346 = vld [vmem:[#allocation2 + $0x229] sm:$0xff]
      %v2347 = vld [vmem:[#allocation2 + $0x231] sm:$0xff]
      %vm2348 = vcmp.eq.s32.totalorder %v477, 15
      %vm2349 = vcmp.eq.s32.totalorder %v478, 15
      %v2350 = vsel %vm2348, 1, 0
      %v2351 = vsel %vm2349, 1, 0
      %vm2352 = vcmp.eq.s32.totalorder %v2350, 1
      %vm2353 = vcmp.eq.s32.totalorder %v2351, 1
      %v2354 = vsel %vm2352, 0.0, %v2312
      %v2355 = vsel %vm2353, 0.0, %v2313
      %v2356 = vsel %vm2352, 0.0, %v2314
      %v2357 = vsel %vm2353, 0.0, %v2315
      %v2358 = vsel %vm2352, 0.0, %v2316
      %v2359 = vsel %vm2353, 0.0, %v2317
      %v2360 = vsel %vm2352, 0.0, %v2318
      %v2361 = vsel %vm2353, 0.0, %v2319
      %v2362 = vsel %vm2352, 0.0, %v2320
      %v2363 = vsel %vm2353, 0.0, %v2321
      %v2364 = vsel %vm2352, 0.0, %v2322
      %v2365 = vsel %vm2353, 0.0, %v2323
      %v2366 = vsel %vm2352, 0.0, %v2324
      %v2367 = vsel %vm2353, 0.0, %v2325
      %v2368 = vsel %vm2352, 0.0, %v2326
      %v2369 = vsel %vm2353, 0.0, %v2327
      %v2370 = vsel %vm2352, 0.0, %v2328
      %v2371 = vsel %vm2353, 0.0, %v2329
      %v2372 = vsel %vm2352, 0.0, %v2330
      %v2373 = vsel %vm2353, 0.0, %v2331
      %v2374 = vsel %vm2352, 0.0, %v2332
      %v2375 = vsel %vm2353, 0.0, %v2333
      %v2376 = vsel %vm2352, 0.0, %v2334
      %v2377 = vsel %vm2353, 0.0, %v2335
      %v2378 = vsel %vm2352, 0.0, %v2336
      %v2379 = vsel %vm2353, 0.0, %v2337
      %v2380 = vsel %vm2352, 0.0, %v2338
      %v2381 = vsel %vm2353, 0.0, %v2339
      %v2382 = vsel %vm2352, 0.0, %v2340
      %v2383 = vsel %vm2353, 0.0, %v2341
      %v2384 = vsel %vm2352, 0.0, %v2342
      %v2385 = vsel %vm2353, 0.0, %v2343
      %v2386 = vsel %vm2352, 0.0, %v2344
      %v2387 = vsel %vm2353, 0.0, %v2345
      %v2388 = vsel %vm2352, 0.0, %v2346
      %v2389 = vsel %vm2353, 0.0, %v2347
      %v2390 = vld [vmem:[%s3 + $0x8] sm:$0xf]
      %v2392 = vsel %vm426, %v2354, 0
      %v2395 = vsel %vm426, %v2355, 0
      %v2398 = vsel %vm426, %v2356, 0
      %v2401 = vsel %vm426, %v2357, 0
      %v2404 = vsel %vm426, %v2358, 0
      %v2407 = vsel %vm426, %v2359, 0
      %v2410 = vsel %vm426, %v2360, 0
      %v2413 = vsel %vm426, %v2361, 0
      %v2416 = vsel %vm426, %v2362, 0
      %v2419 = vsel %vm426, %v2363, 0
      %v2422 = vsel %vm426, %v2364, 0
      %v2425 = vsel %vm426, %v2365, 0
      %v2428 = vsel %vm426, %v2366, 0
      %v2431 = vsel %vm426, %v2367, 0
      %v2434 = vsel %vm426, %v2368, 0
      %v2437 = vsel %vm426, %v2369, 0
      %v2440 = vsel %vm426, %v2370, 0
      %v2443 = vsel %vm426, %v2371, 0
      %v2446 = vsel %vm426, %v2372, 0
      %v2449 = vsel %vm426, %v2373, 0
      %v2452 = vsel %vm426, %v2374, 0
      %v2455 = vsel %vm426, %v2375, 0
      %v2458 = vsel %vm426, %v2376, 0
      %v2461 = vsel %vm426, %v2377, 0
      %v2464 = vsel %vm426, %v2378, 0
      %v2467 = vsel %vm426, %v2379, 0
      %v2470 = vsel %vm426, %v2380, 0
      %v2473 = vsel %vm426, %v2381, 0
      %v2476 = vsel %vm426, %v2382, 0
      %v2479 = vsel %vm426, %v2383, 0
      %v2482 = vsel %vm426, %v2384, 0
      %v2485 = vsel %vm426, %v2385, 0
      %v2488 = vsel %vm655, %v2390, 0
      %2490 = vmatprep.subr.mxu0 0.0
      %2491 = vmatpush1.msra.mxu0 0.0
      %2492 = vmatprep.subr.mxu0 0.0
      %2493 = vmatpush1.msra.mxu0 0.0
      %2494 = vmatprep.subr.mxu0 0.0
      %2495 = vmatpush1.msra.mxu0 0.0
      %2496 = vmatprep.subr.mxu0 0.0
      %2497 = vmatpush1.msra.mxu0 0.0
      %2498 = vmatprep.subr.mxu0 0.0
      %2499 = vmatpush1.msra.mxu0 0.0
      %2500 = vmatprep.subr.mxu0 0.0
      %2501 = vmatpush1.msra.mxu0 0.0
      %2502 = vmatprep.subr.mxu0 0.0
      %2503 = vmatpush1.msra.mxu0 0.0
      %2504 = vmatprep.subr.mxu0 0.0
      %2505 = vmatpush1.msra.mxu0 0.0
      %2506 = vmatprep.subr.mxu0 0.0
      %2507 = vmatpush1.msra.mxu0 0.0
      %2508 = vmatprep.subr.mxu0 0.0
      %2509 = vmatpush1.msra.mxu0 0.0
      %2510 = vmatprep.subr.mxu0 0.0
      %2511 = vmatpush1.msra.mxu0 0.0
      %2512 = vmatprep.subr.mxu0 0.0
      %2513 = vmatpush1.msra.mxu0 0.0
      %2514 = vmatprep.subr.mxu0 0.0
      %2515 = vmatpush1.msra.mxu0 0.0
      %2516 = vmatprep.subr.mxu0 0.0
      %2517 = vmatpush1.msra.mxu0 0.0
      %2518 = vmatprep.subr.mxu0 0.0
      %2519 = vmatpush1.msra.mxu0 0.0
      %2520 = vmatprep.subr.mxu0 0.0
      %2521 = vmatpush1.msra.mxu0 %v2488
      %2522 = vmatprep.subr.mxu0 0.0
      %2523 = vmatpush2.msra.mxu0 0.0
      %2524 = vmatprep.subr.mxu0 0.0
      %2525 = vmatpush2.msra.mxu0 0.0
      %2526 = vmatprep.subr.mxu0 0.0
      %2527 = vmatpush2.msra.mxu0 0.0
      %2528 = vmatprep.subr.mxu0 0.0
      %2529 = vmatpush2.msra.mxu0 0.0
      %2530 = vmatprep.subr.mxu0 0.0
      %2531 = vmatpush2.msra.mxu0 0.0
      %2532 = vmatprep.subr.mxu0 0.0
      %2533 = vmatpush2.msra.mxu0 0.0
      %2534 = vmatprep.subr.mxu0 0.0
      %2535 = vmatpush2.msra.mxu0 0.0
      %2536 = vmatprep.subr.mxu0 0.0
      %2537 = vmatpush2.msra.mxu0 0.0
      %2538 = vmatprep.subr.mxu0 0.0
      %2539 = vmatpush2.msra.mxu0 0.0
      %2540 = vmatprep.subr.mxu0 0.0
      %2541 = vmatpush2.msra.mxu0 0.0
      %2542 = vmatprep.subr.mxu0 0.0
      %2543 = vmatpush2.msra.mxu0 0.0
      %2544 = vmatprep.subr.mxu0 0.0
      %2545 = vmatpush2.msra.mxu0 0.0
      %2546 = vmatprep.subr.mxu0 0.0
      %2547 = vmatpush2.msra.mxu0 0.0
      %2548 = vmatprep.subr.mxu0 0.0
      %2549 = vmatpush2.msra.mxu0 0.0
      %2550 = vmatprep.subr.mxu0 0.0
      %2551 = vmatpush2.msra.mxu0 0.0
      %2552 = vmatprep.subr.mxu0 0.0
      %2553 = vmatpush2.msra.mxu0 0.0
      %2554 = vmatprep.mubr.f32.mxu0 0.0
      %2555 = vmatmul.mubr.f32.gmra.mxu0 %v2392
      %v2556 = vpop.f32.mrf.mxu0
      %v2557 = vadd.f32 0.0, %v2556
      %v2558 = vpop.f32.mrf.mxu0
      %2559 = vmatprep.mubr.f32.mxu0 0.0
      %2560 = vmatmul.mubr.f32.gmra.mxu0 %v2395
      %v2561 = vpop.f32.mrf.mxu0
      %v2562 = vadd.f32 0.0, %v2561
      %v2563 = vpop.f32.mrf.mxu0
      %2564 = vmatprep.mubr.f32.mxu0 0.0
      %2565 = vmatmul.mubr.f32.gmra.mxu0 %v2398
      %v2566 = vpop.f32.mrf.mxu0
      %v2567 = vadd.f32 0.0, %v2566
      %v2568 = vpop.f32.mrf.mxu0
      %2569 = vmatprep.mubr.f32.mxu0 0.0
      %2570 = vmatmul.mubr.f32.gmra.mxu0 %v2401
      %v2571 = vpop.f32.mrf.mxu0
      %v2572 = vadd.f32 0.0, %v2571
      %v2573 = vpop.f32.mrf.mxu0
      %2574 = vmatprep.mubr.f32.mxu0 0.0
      %2575 = vmatmul.mubr.f32.gmra.mxu0 %v2404
      %v2576 = vpop.f32.mrf.mxu0
      %v2577 = vadd.f32 0.0, %v2576
      %v2578 = vpop.f32.mrf.mxu0
      %2579 = vmatprep.mubr.f32.mxu0 0.0
      %2580 = vmatmul.mubr.f32.gmra.mxu0 %v2407
      %v2581 = vpop.f32.mrf.mxu0
      %v2582 = vadd.f32 0.0, %v2581
      %v2583 = vpop.f32.mrf.mxu0
      %2584 = vmatprep.mubr.f32.mxu0 0.0
      %2585 = vmatmul.mubr.f32.gmra.mxu0 %v2410
      %v2586 = vpop.f32.mrf.mxu0
      %v2587 = vadd.f32 0.0, %v2586
      %v2588 = vpop.f32.mrf.mxu0
      %2589 = vmatprep.mubr.f32.mxu0 0.0
      %2590 = vmatmul.mubr.f32.gmra.mxu0 %v2413
      %v2591 = vpop.f32.mrf.mxu0
      %v2592 = vadd.f32 0.0, %v2591
      %v2593 = vpop.f32.mrf.mxu0
      %2594 = vmatprep.mubr.f32.mxu0 0.0
      %2595 = vmatmul.mubr.f32.gmra.mxu0 %v2416
      %v2596 = vpop.f32.mrf.mxu0
      %v2597 = vadd.f32 0.0, %v2596
      %v2598 = vpop.f32.mrf.mxu0
      %2599 = vmatprep.mubr.f32.mxu0 0.0
      %2600 = vmatmul.mubr.f32.gmra.mxu0 %v2419
      %v2601 = vpop.f32.mrf.mxu0
      %v2602 = vadd.f32 0.0, %v2601
      %v2603 = vpop.f32.mrf.mxu0
      %2604 = vmatprep.mubr.f32.mxu0 0.0
      %2605 = vmatmul.mubr.f32.gmra.mxu0 %v2422
      %v2606 = vpop.f32.mrf.mxu0
      %v2607 = vadd.f32 0.0, %v2606
      %v2608 = vpop.f32.mrf.mxu0
      %2609 = vmatprep.mubr.f32.mxu0 0.0
      %2610 = vmatmul.mubr.f32.gmra.mxu0 %v2425
      %v2611 = vpop.f32.mrf.mxu0
      %v2612 = vadd.f32 0.0, %v2611
      %v2613 = vpop.f32.mrf.mxu0
      %2614 = vmatprep.mubr.f32.mxu0 0.0
      %2615 = vmatmul.mubr.f32.gmra.mxu0 %v2428
      %v2616 = vpop.f32.mrf.mxu0
      %v2617 = vadd.f32 0.0, %v2616
      %v2618 = vpop.f32.mrf.mxu0
      %2619 = vmatprep.mubr.f32.mxu0 0.0
      %2620 = vmatmul.mubr.f32.gmra.mxu0 %v2431
      %v2621 = vpop.f32.mrf.mxu0
      %v2622 = vadd.f32 0.0, %v2621
      %v2623 = vpop.f32.mrf.mxu0
      %2624 = vmatprep.mubr.f32.mxu0 0.0
      %2625 = vmatmul.mubr.f32.gmra.mxu0 %v2434
      %v2626 = vpop.f32.mrf.mxu0
      %v2627 = vadd.f32 0.0, %v2626
      %v2628 = vpop.f32.mrf.mxu0
      %2629 = vmatprep.mubr.f32.mxu0 0.0
      %2630 = vmatmul.mubr.f32.gmra.mxu0 %v2437
      %v2631 = vpop.f32.mrf.mxu0
      %v2632 = vadd.f32 0.0, %v2631
      %v2633 = vpop.f32.mrf.mxu0
      %2634 = vmatprep.mubr.f32.mxu0 0.0
      %2635 = vmatmul.mubr.f32.gmra.mxu0 %v2440
      %v2636 = vpop.f32.mrf.mxu0
      %v2637 = vadd.f32 0.0, %v2636
      %v2638 = vpop.f32.mrf.mxu0
      %2639 = vmatprep.mubr.f32.mxu0 0.0
      %2640 = vmatmul.mubr.f32.gmra.mxu0 %v2443
      %v2641 = vpop.f32.mrf.mxu0
      %v2642 = vadd.f32 0.0, %v2641
      %v2643 = vpop.f32.mrf.mxu0
      %2644 = vmatprep.mubr.f32.mxu0 0.0
      %2645 = vmatmul.mubr.f32.gmra.mxu0 %v2446
      %v2646 = vpop.f32.mrf.mxu0
      %v2647 = vadd.f32 0.0, %v2646
      %v2648 = vpop.f32.mrf.mxu0
      %2649 = vmatprep.mubr.f32.mxu0 0.0
      %2650 = vmatmul.mubr.f32.gmra.mxu0 %v2449
      %v2651 = vpop.f32.mrf.mxu0
      %v2652 = vadd.f32 0.0, %v2651
      %v2653 = vpop.f32.mrf.mxu0
      %2654 = vmatprep.mubr.f32.mxu0 0.0
      %2655 = vmatmul.mubr.f32.gmra.mxu0 %v2452
      %v2656 = vpop.f32.mrf.mxu0
      %v2657 = vadd.f32 0.0, %v2656
      %v2658 = vpop.f32.mrf.mxu0
      %2659 = vmatprep.mubr.f32.mxu0 0.0
      %2660 = vmatmul.mubr.f32.gmra.mxu0 %v2455
      %v2661 = vpop.f32.mrf.mxu0
      %v2662 = vadd.f32 0.0, %v2661
      %v2663 = vpop.f32.mrf.mxu0
      %2664 = vmatprep.mubr.f32.mxu0 0.0
      %2665 = vmatmul.mubr.f32.gmra.mxu0 %v2458
      %v2666 = vpop.f32.mrf.mxu0
      %v2667 = vadd.f32 0.0, %v2666
      %v2668 = vpop.f32.mrf.mxu0
      %2669 = vmatprep.mubr.f32.mxu0 0.0
      %2670 = vmatmul.mubr.f32.gmra.mxu0 %v2461
      %v2671 = vpop.f32.mrf.mxu0
      %v2672 = vadd.f32 0.0, %v2671
      %v2673 = vpop.f32.mrf.mxu0
      %2674 = vmatprep.mubr.f32.mxu0 0.0
      %2675 = vmatmul.mubr.f32.gmra.mxu0 %v2464
      %v2676 = vpop.f32.mrf.mxu0
      %v2677 = vadd.f32 0.0, %v2676
      %v2678 = vpop.f32.mrf.mxu0
      %2679 = vmatprep.mubr.f32.mxu0 0.0
      %2680 = vmatmul.mubr.f32.gmra.mxu0 %v2467
      %v2681 = vpop.f32.mrf.mxu0
      %v2682 = vadd.f32 0.0, %v2681
      %v2683 = vpop.f32.mrf.mxu0
      %2684 = vmatprep.mubr.f32.mxu0 0.0
      %2685 = vmatmul.mubr.f32.gmra.mxu0 %v2470
      %v2686 = vpop.f32.mrf.mxu0
      %v2687 = vadd.f32 0.0, %v2686
      %v2688 = vpop.f32.mrf.mxu0
      %2689 = vmatprep.mubr.f32.mxu0 0.0
      %2690 = vmatmul.mubr.f32.gmra.mxu0 %v2473
      %v2691 = vpop.f32.mrf.mxu0
      %v2692 = vadd.f32 0.0, %v2691
      %v2693 = vpop.f32.mrf.mxu0
      %2694 = vmatprep.mubr.f32.mxu0 0.0
      %2695 = vmatmul.mubr.f32.gmra.mxu0 %v2476
      %v2696 = vpop.f32.mrf.mxu0
      %v2697 = vadd.f32 0.0, %v2696
      %v2698 = vpop.f32.mrf.mxu0
      %2699 = vmatprep.mubr.f32.mxu0 0.0
      %2700 = vmatmul.mubr.f32.gmra.mxu0 %v2479
      %v2701 = vpop.f32.mrf.mxu0
      %v2702 = vadd.f32 0.0, %v2701
      %v2703 = vpop.f32.mrf.mxu0
      %2704 = vmatprep.mubr.f32.mxu0 0.0
      %2705 = vmatmul.mubr.f32.gmra.mxu0 %v2482
      %v2706 = vpop.f32.mrf.mxu0
      %v2707 = vadd.f32 0.0, %v2706
      %v2708 = vpop.f32.mrf.mxu0
      %2709 = vmatprep.mubr.f32.mxu0 0.0
      %2710 = vmatmul.mubr.f32.gmra.mxu0 %v2485
      %v2711 = vpop.f32.mrf.mxu0
      %v2712 = vadd.f32 0.0, %v2711
      %v2713 = vpop.f32.mrf.mxu0
      %2714 = vdwg.mxu0
      %v2715 = vadd.f32 %v2280, %v2557
      %v2716 = vadd.f32 %v2281, %v2562
      %v2717 = vadd.f32 %v2282, %v2567
      %v2718 = vadd.f32 %v2283, %v2572
      %v2719 = vadd.f32 %v2284, %v2577
      %v2720 = vadd.f32 %v2285, %v2582
      %v2721 = vadd.f32 %v2286, %v2587
      %v2722 = vadd.f32 %v2287, %v2592
      %v2723 = vadd.f32 %v2288, %v2597
      %v2724 = vadd.f32 %v2289, %v2602
      %v2725 = vadd.f32 %v2290, %v2607
      %v2726 = vadd.f32 %v2291, %v2612
      %v2727 = vadd.f32 %v2292, %v2617
      %v2728 = vadd.f32 %v2293, %v2622
      %v2729 = vadd.f32 %v2294, %v2627
      %v2730 = vadd.f32 %v2295, %v2632
      %v2731 = vadd.f32 %v2296, %v2637
      %v2732 = vadd.f32 %v2297, %v2642
      %v2733 = vadd.f32 %v2298, %v2647
      %v2734 = vadd.f32 %v2299, %v2652
      %v2735 = vadd.f32 %v2300, %v2657
      %v2736 = vadd.f32 %v2301, %v2662
      %v2737 = vadd.f32 %v2302, %v2667
      %v2738 = vadd.f32 %v2303, %v2672
      %v2739 = vadd.f32 %v2304, %v2677
      %v2740 = vadd.f32 %v2305, %v2682
      %v2741 = vadd.f32 %v2306, %v2687
      %v2742 = vadd.f32 %v2307, %v2692
      %v2743 = vadd.f32 %v2308, %v2697
      %v2744 = vadd.f32 %v2309, %v2702
      %v2745 = vadd.f32 %v2310, %v2707
      %v2746 = vadd.f32 %v2311, %v2712
      %v2747 = vld [vmem:[%s3 + $0x14] sm:$0xf]
      %v2749 = vsel %vm426, %v2386, 0
      %v2752 = vsel %vm426, %v2387, 0
      %v2755 = vsel %vm655, %v2747, 0
      %2757 = vmatprep.subr.mxu0 0.0
      %2758 = vmatpush1.msra.mxu0 0.0
      %2759 = vmatprep.subr.mxu0 0.0
      %2760 = vmatpush1.msra.mxu0 0.0
      %2761 = vmatprep.subr.mxu0 0.0
      %2762 = vmatpush1.msra.mxu0 0.0
      %2763 = vmatprep.subr.mxu0 0.0
      %2764 = vmatpush1.msra.mxu0 0.0
      %2765 = vmatprep.subr.mxu0 0.0
      %2766 = vmatpush1.msra.mxu0 0.0
      %2767 = vmatprep.subr.mxu0 0.0
      %2768 = vmatpush1.msra.mxu0 0.0
      %2769 = vmatprep.subr.mxu0 0.0
      %2770 = vmatpush1.msra.mxu0 0.0
      %2771 = vmatprep.subr.mxu0 0.0
      %2772 = vmatpush1.msra.mxu0 0.0
      %2773 = vmatprep.subr.mxu0 0.0
      %2774 = vmatpush1.msra.mxu0 0.0
      %2775 = vmatprep.subr.mxu0 0.0
      %2776 = vmatpush1.msra.mxu0 0.0
      %2777 = vmatprep.subr.mxu0 0.0
      %2778 = vmatpush1.msra.mxu0 0.0
      %2779 = vmatprep.subr.mxu0 0.0
      %2780 = vmatpush1.msra.mxu0 0.0
      %2781 = vmatprep.subr.mxu0 0.0
      %2782 = vmatpush1.msra.mxu0 0.0
      %2783 = vmatprep.subr.mxu0 0.0
      %2784 = vmatpush1.msra.mxu0 0.0
      %2785 = vmatprep.subr.mxu0 0.0
      %2786 = vmatpush1.msra.mxu0 0.0
      %2787 = vmatprep.subr.mxu0 0.0
      %2788 = vmatpush1.msra.mxu0 %v2755
      %2789 = vmatprep.subr.mxu0 0.0
      %2790 = vmatpush2.msra.mxu0 0.0
      %2791 = vmatprep.subr.mxu0 0.0
      %2792 = vmatpush2.msra.mxu0 0.0
      %2793 = vmatprep.subr.mxu0 0.0
      %2794 = vmatpush2.msra.mxu0 0.0
      %2795 = vmatprep.subr.mxu0 0.0
      %2796 = vmatpush2.msra.mxu0 0.0
      %2797 = vmatprep.subr.mxu0 0.0
      %2798 = vmatpush2.msra.mxu0 0.0
      %2799 = vmatprep.subr.mxu0 0.0
      %2800 = vmatpush2.msra.mxu0 0.0
      %2801 = vmatprep.subr.mxu0 0.0
      %2802 = vmatpush2.msra.mxu0 0.0
      %2803 = vmatprep.subr.mxu0 0.0
      %2804 = vmatpush2.msra.mxu0 0.0
      %2805 = vmatprep.subr.mxu0 0.0
      %2806 = vmatpush2.msra.mxu0 0.0
      %2807 = vmatprep.subr.mxu0 0.0
      %2808 = vmatpush2.msra.mxu0 0.0
      %2809 = vmatprep.subr.mxu0 0.0
      %2810 = vmatpush2.msra.mxu0 0.0
      %2811 = vmatprep.subr.mxu0 0.0
      %2812 = vmatpush2.msra.mxu0 0.0
      %2813 = vmatprep.subr.mxu0 0.0
      %2814 = vmatpush2.msra.mxu0 0.0
      %2815 = vmatprep.subr.mxu0 0.0
      %2816 = vmatpush2.msra.mxu0 0.0
      %2817 = vmatprep.subr.mxu0 0.0
      %2818 = vmatpush2.msra.mxu0 0.0
      %2819 = vmatprep.subr.mxu0 0.0
      %2820 = vmatpush2.msra.mxu0 0.0
      %2821 = vmatprep.mubr.f32.mxu0 0.0
      %2822 = vmatmul.mubr.f32.gmra.mxu0 %v2398
      %v2823 = vpop.f32.mrf.mxu0
      %v2824 = vadd.f32 0.0, %v2823
      %v2825 = vpop.f32.mrf.mxu0
      %2826 = vmatprep.mubr.f32.mxu0 0.0
      %2827 = vmatmul.mubr.f32.gmra.mxu0 %v2401
      %v2828 = vpop.f32.mrf.mxu0
      %v2829 = vadd.f32 0.0, %v2828
      %v2830 = vpop.f32.mrf.mxu0
      %2831 = vmatprep.mubr.f32.mxu0 0.0
      %2832 = vmatmul.mubr.f32.gmra.mxu0 %v2404
      %v2833 = vpop.f32.mrf.mxu0
      %v2834 = vadd.f32 0.0, %v2833
      %v2835 = vpop.f32.mrf.mxu0
      %2836 = vmatprep.mubr.f32.mxu0 0.0
      %2837 = vmatmul.mubr.f32.gmra.mxu0 %v2407
      %v2838 = vpop.f32.mrf.mxu0
      %v2839 = vadd.f32 0.0, %v2838
      %v2840 = vpop.f32.mrf.mxu0
      %2841 = vmatprep.mubr.f32.mxu0 0.0
      %2842 = vmatmul.mubr.f32.gmra.mxu0 %v2410
      %v2843 = vpop.f32.mrf.mxu0
      %v2844 = vadd.f32 0.0, %v2843
      %v2845 = vpop.f32.mrf.mxu0
      %2846 = vmatprep.mubr.f32.mxu0 0.0
      %2847 = vmatmul.mubr.f32.gmra.mxu0 %v2413
      %v2848 = vpop.f32.mrf.mxu0
      %v2849 = vadd.f32 0.0, %v2848
      %v2850 = vpop.f32.mrf.mxu0
      %2851 = vmatprep.mubr.f32.mxu0 0.0
      %2852 = vmatmul.mubr.f32.gmra.mxu0 %v2416
      %v2853 = vpop.f32.mrf.mxu0
      %v2854 = vadd.f32 0.0, %v2853
      %v2855 = vpop.f32.mrf.mxu0
      %2856 = vmatprep.mubr.f32.mxu0 0.0
      %2857 = vmatmul.mubr.f32.gmra.mxu0 %v2419
      %v2858 = vpop.f32.mrf.mxu0
      %v2859 = vadd.f32 0.0, %v2858
      %v2860 = vpop.f32.mrf.mxu0
      %2861 = vmatprep.mubr.f32.mxu0 0.0
      %2862 = vmatmul.mubr.f32.gmra.mxu0 %v2422
      %v2863 = vpop.f32.mrf.mxu0
      %v2864 = vadd.f32 0.0, %v2863
      %v2865 = vpop.f32.mrf.mxu0
      %2866 = vmatprep.mubr.f32.mxu0 0.0
      %2867 = vmatmul.mubr.f32.gmra.mxu0 %v2425
      %v2868 = vpop.f32.mrf.mxu0
      %v2869 = vadd.f32 0.0, %v2868
      %v2870 = vpop.f32.mrf.mxu0
      %2871 = vmatprep.mubr.f32.mxu0 0.0
      %2872 = vmatmul.mubr.f32.gmra.mxu0 %v2428
      %v2873 = vpop.f32.mrf.mxu0
      %v2874 = vadd.f32 0.0, %v2873
      %v2875 = vpop.f32.mrf.mxu0
      %2876 = vmatprep.mubr.f32.mxu0 0.0
      %2877 = vmatmul.mubr.f32.gmra.mxu0 %v2431
      %v2878 = vpop.f32.mrf.mxu0
      %v2879 = vadd.f32 0.0, %v2878
      %v2880 = vpop.f32.mrf.mxu0
      %2881 = vmatprep.mubr.f32.mxu0 0.0
      %2882 = vmatmul.mubr.f32.gmra.mxu0 %v2434
      %v2883 = vpop.f32.mrf.mxu0
      %v2884 = vadd.f32 0.0, %v2883
      %v2885 = vpop.f32.mrf.mxu0
      %2886 = vmatprep.mubr.f32.mxu0 0.0
      %2887 = vmatmul.mubr.f32.gmra.mxu0 %v2437
      %v2888 = vpop.f32.mrf.mxu0
      %v2889 = vadd.f32 0.0, %v2888
      %v2890 = vpop.f32.mrf.mxu0
      %2891 = vmatprep.mubr.f32.mxu0 0.0
      %2892 = vmatmul.mubr.f32.gmra.mxu0 %v2440
      %v2893 = vpop.f32.mrf.mxu0
      %v2894 = vadd.f32 0.0, %v2893
      %v2895 = vpop.f32.mrf.mxu0
      %2896 = vmatprep.mubr.f32.mxu0 0.0
      %2897 = vmatmul.mubr.f32.gmra.mxu0 %v2443
      %v2898 = vpop.f32.mrf.mxu0
      %v2899 = vadd.f32 0.0, %v2898
      %v2900 = vpop.f32.mrf.mxu0
      %2901 = vmatprep.mubr.f32.mxu0 0.0
      %2902 = vmatmul.mubr.f32.gmra.mxu0 %v2446
      %v2903 = vpop.f32.mrf.mxu0
      %v2904 = vadd.f32 0.0, %v2903
      %v2905 = vpop.f32.mrf.mxu0
      %2906 = vmatprep.mubr.f32.mxu0 0.0
      %2907 = vmatmul.mubr.f32.gmra.mxu0 %v2449
      %v2908 = vpop.f32.mrf.mxu0
      %v2909 = vadd.f32 0.0, %v2908
      %v2910 = vpop.f32.mrf.mxu0
      %2911 = vmatprep.mubr.f32.mxu0 0.0
      %2912 = vmatmul.mubr.f32.gmra.mxu0 %v2452
      %v2913 = vpop.f32.mrf.mxu0
      %v2914 = vadd.f32 0.0, %v2913
      %v2915 = vpop.f32.mrf.mxu0
      %2916 = vmatprep.mubr.f32.mxu0 0.0
      %2917 = vmatmul.mubr.f32.gmra.mxu0 %v2455
      %v2918 = vpop.f32.mrf.mxu0
      %v2919 = vadd.f32 0.0, %v2918
      %v2920 = vpop.f32.mrf.mxu0
      %2921 = vmatprep.mubr.f32.mxu0 0.0
      %2922 = vmatmul.mubr.f32.gmra.mxu0 %v2458
      %v2923 = vpop.f32.mrf.mxu0
      %v2924 = vadd.f32 0.0, %v2923
      %v2925 = vpop.f32.mrf.mxu0
      %2926 = vmatprep.mubr.f32.mxu0 0.0
      %2927 = vmatmul.mubr.f32.gmra.mxu0 %v2461
      %v2928 = vpop.f32.mrf.mxu0
      %v2929 = vadd.f32 0.0, %v2928
      %v2930 = vpop.f32.mrf.mxu0
      %2931 = vmatprep.mubr.f32.mxu0 0.0
      %2932 = vmatmul.mubr.f32.gmra.mxu0 %v2464
      %v2933 = vpop.f32.mrf.mxu0
      %v2934 = vadd.f32 0.0, %v2933
      %v2935 = vpop.f32.mrf.mxu0
      %2936 = vmatprep.mubr.f32.mxu0 0.0
      %2937 = vmatmul.mubr.f32.gmra.mxu0 %v2467
      %v2938 = vpop.f32.mrf.mxu0
      %v2939 = vadd.f32 0.0, %v2938
      %v2940 = vpop.f32.mrf.mxu0
      %2941 = vmatprep.mubr.f32.mxu0 0.0
      %2942 = vmatmul.mubr.f32.gmra.mxu0 %v2470
      %v2943 = vpop.f32.mrf.mxu0
      %v2944 = vadd.f32 0.0, %v2943
      %v2945 = vpop.f32.mrf.mxu0
      %2946 = vmatprep.mubr.f32.mxu0 0.0
      %2947 = vmatmul.mubr.f32.gmra.mxu0 %v2473
      %v2948 = vpop.f32.mrf.mxu0
      %v2949 = vadd.f32 0.0, %v2948
      %v2950 = vpop.f32.mrf.mxu0
      %2951 = vmatprep.mubr.f32.mxu0 0.0
      %2952 = vmatmul.mubr.f32.gmra.mxu0 %v2476
      %v2953 = vpop.f32.mrf.mxu0
      %v2954 = vadd.f32 0.0, %v2953
      %v2955 = vpop.f32.mrf.mxu0
      %2956 = vmatprep.mubr.f32.mxu0 0.0
      %2957 = vmatmul.mubr.f32.gmra.mxu0 %v2479
      %v2958 = vpop.f32.mrf.mxu0
      %v2959 = vadd.f32 0.0, %v2958
      %v2960 = vpop.f32.mrf.mxu0
      %2961 = vmatprep.mubr.f32.mxu0 0.0
      %2962 = vmatmul.mubr.f32.gmra.mxu0 %v2482
      %v2963 = vpop.f32.mrf.mxu0
      %v2964 = vadd.f32 0.0, %v2963
      %v2965 = vpop.f32.mrf.mxu0
      %2966 = vmatprep.mubr.f32.mxu0 0.0
      %2967 = vmatmul.mubr.f32.gmra.mxu0 %v2485
      %v2968 = vpop.f32.mrf.mxu0
      %v2969 = vadd.f32 0.0, %v2968
      %v2970 = vpop.f32.mrf.mxu0
      %2971 = vmatprep.mubr.f32.mxu0 0.0
      %2972 = vmatmul.mubr.f32.gmra.mxu0 %v2749
      %v2973 = vpop.f32.mrf.mxu0
      %v2974 = vadd.f32 0.0, %v2973
      %v2975 = vpop.f32.mrf.mxu0
      %2976 = vmatprep.mubr.f32.mxu0 0.0
      %2977 = vmatmul.mubr.f32.gmra.mxu0 %v2752
      %v2978 = vpop.f32.mrf.mxu0
      %v2979 = vadd.f32 0.0, %v2978
      %v2980 = vpop.f32.mrf.mxu0
      %2981 = vdwg.mxu0
      %v2982 = vadd.f32 %v2715, %v2824
      %v2983 = vadd.f32 %v2716, %v2829
      %v2984 = vadd.f32 %v2717, %v2834
      %v2985 = vadd.f32 %v2718, %v2839
      %v2986 = vadd.f32 %v2719, %v2844
      %v2987 = vadd.f32 %v2720, %v2849
      %v2988 = vadd.f32 %v2721, %v2854
      %v2989 = vadd.f32 %v2722, %v2859
      %v2990 = vadd.f32 %v2723, %v2864
      %v2991 = vadd.f32 %v2724, %v2869
      %v2992 = vadd.f32 %v2725, %v2874
      %v2993 = vadd.f32 %v2726, %v2879
      %v2994 = vadd.f32 %v2727, %v2884
      %v2995 = vadd.f32 %v2728, %v2889
      %v2996 = vadd.f32 %v2729, %v2894
      %v2997 = vadd.f32 %v2730, %v2899
      %v2998 = vadd.f32 %v2731, %v2904
      %v2999 = vadd.f32 %v2732, %v2909
      %v3000 = vadd.f32 %v2733, %v2914
      %v3001 = vadd.f32 %v2734, %v2919
      %v3002 = vadd.f32 %v2735, %v2924
      %v3003 = vadd.f32 %v2736, %v2929
      %v3004 = vadd.f32 %v2737, %v2934
      %v3005 = vadd.f32 %v2738, %v2939
      %v3006 = vadd.f32 %v2739, %v2944
      %v3007 = vadd.f32 %v2740, %v2949
      %v3008 = vadd.f32 %v2741, %v2954
      %v3009 = vadd.f32 %v2742, %v2959
      %v3010 = vadd.f32 %v2743, %v2964
      %v3011 = vadd.f32 %v2744, %v2969
      %v3012 = vadd.f32 %v2745, %v2974
      %v3013 = vadd.f32 %v2746, %v2979
      %v3014 = vld [vmem:[%s3 + $0x20] sm:$0xf]
      %v3016 = vsel %vm426, %v2388, 0
      %v3019 = vsel %vm426, %v2389, 0
      %v3022 = vsel %vm655, %v3014, 0
      %3024 = vmatprep.subr.mxu0 0.0
      %3025 = vmatpush1.msra.mxu0 0.0
      %3026 = vmatprep.subr.mxu0 0.0
      %3027 = vmatpush1.msra.mxu0 0.0
      %3028 = vmatprep.subr.mxu0 0.0
      %3029 = vmatpush1.msra.mxu0 0.0
      %3030 = vmatprep.subr.mxu0 0.0
      %3031 = vmatpush1.msra.mxu0 0.0
      %3032 = vmatprep.subr.mxu0 0.0
      %3033 = vmatpush1.msra.mxu0 0.0
      %3034 = vmatprep.subr.mxu0 0.0
      %3035 = vmatpush1.msra.mxu0 0.0
      %3036 = vmatprep.subr.mxu0 0.0
      %3037 = vmatpush1.msra.mxu0 0.0
      %3038 = vmatprep.subr.mxu0 0.0
      %3039 = vmatpush1.msra.mxu0 0.0
      %3040 = vmatprep.subr.mxu0 0.0
      %3041 = vmatpush1.msra.mxu0 0.0
      %3042 = vmatprep.subr.mxu0 0.0
      %3043 = vmatpush1.msra.mxu0 0.0
      %3044 = vmatprep.subr.mxu0 0.0
      %3045 = vmatpush1.msra.mxu0 0.0
      %3046 = vmatprep.subr.mxu0 0.0
      %3047 = vmatpush1.msra.mxu0 0.0
      %3048 = vmatprep.subr.mxu0 0.0
      %3049 = vmatpush1.msra.mxu0 0.0
      %3050 = vmatprep.subr.mxu0 0.0
      %3051 = vmatpush1.msra.mxu0 0.0
      %3052 = vmatprep.subr.mxu0 0.0
      %3053 = vmatpush1.msra.mxu0 0.0
      %3054 = vmatprep.subr.mxu0 0.0
      %3055 = vmatpush1.msra.mxu0 %v3022
      %3056 = vmatprep.subr.mxu0 0.0
      %3057 = vmatpush2.msra.mxu0 0.0
      %3058 = vmatprep.subr.mxu0 0.0
      %3059 = vmatpush2.msra.mxu0 0.0
      %3060 = vmatprep.subr.mxu0 0.0
      %3061 = vmatpush2.msra.mxu0 0.0
      %3062 = vmatprep.subr.mxu0 0.0
      %3063 = vmatpush2.msra.mxu0 0.0
      %3064 = vmatprep.subr.mxu0 0.0
      %3065 = vmatpush2.msra.mxu0 0.0
      %3066 = vmatprep.subr.mxu0 0.0
      %3067 = vmatpush2.msra.mxu0 0.0
      %3068 = vmatprep.subr.mxu0 0.0
      %3069 = vmatpush2.msra.mxu0 0.0
      %3070 = vmatprep.subr.mxu0 0.0
      %3071 = vmatpush2.msra.mxu0 0.0
      %3072 = vmatprep.subr.mxu0 0.0
      %3073 = vmatpush2.msra.mxu0 0.0
      %3074 = vmatprep.subr.mxu0 0.0
      %3075 = vmatpush2.msra.mxu0 0.0
      %3076 = vmatprep.subr.mxu0 0.0
      %3077 = vmatpush2.msra.mxu0 0.0
      %3078 = vmatprep.subr.mxu0 0.0
      %3079 = vmatpush2.msra.mxu0 0.0
      %3080 = vmatprep.subr.mxu0 0.0
      %3081 = vmatpush2.msra.mxu0 0.0
      %3082 = vmatprep.subr.mxu0 0.0
      %3083 = vmatpush2.msra.mxu0 0.0
      %3084 = vmatprep.subr.mxu0 0.0
      %3085 = vmatpush2.msra.mxu0 0.0
      %3086 = vmatprep.subr.mxu0 0.0
      %3087 = vmatpush2.msra.mxu0 0.0
      %3088 = vmatprep.mubr.f32.mxu0 0.0
      %3089 = vmatmul.mubr.f32.gmra.mxu0 %v2404
      %v3090 = vpop.f32.mrf.mxu0
      %v3091 = vadd.f32 0.0, %v3090
      %v3092 = vpop.f32.mrf.mxu0
      %3093 = vmatprep.mubr.f32.mxu0 0.0
      %3094 = vmatmul.mubr.f32.gmra.mxu0 %v2407
      %v3095 = vpop.f32.mrf.mxu0
      %v3096 = vadd.f32 0.0, %v3095
      %v3097 = vpop.f32.mrf.mxu0
      %3098 = vmatprep.mubr.f32.mxu0 0.0
      %3099 = vmatmul.mubr.f32.gmra.mxu0 %v2410
      %v3100 = vpop.f32.mrf.mxu0
      %v3101 = vadd.f32 0.0, %v3100
      %v3102 = vpop.f32.mrf.mxu0
      %3103 = vmatprep.mubr.f32.mxu0 0.0
      %3104 = vmatmul.mubr.f32.gmra.mxu0 %v2413
      %v3105 = vpop.f32.mrf.mxu0
      %v3106 = vadd.f32 0.0, %v3105
      %v3107 = vpop.f32.mrf.mxu0
      %3108 = vmatprep.mubr.f32.mxu0 0.0
      %3109 = vmatmul.mubr.f32.gmra.mxu0 %v2416
      %v3110 = vpop.f32.mrf.mxu0
      %v3111 = vadd.f32 0.0, %v3110
      %v3112 = vpop.f32.mrf.mxu0
      %3113 = vmatprep.mubr.f32.mxu0 0.0
      %3114 = vmatmul.mubr.f32.gmra.mxu0 %v2419
      %v3115 = vpop.f32.mrf.mxu0
      %v3116 = vadd.f32 0.0, %v3115
      %v3117 = vpop.f32.mrf.mxu0
      %3118 = vmatprep.mubr.f32.mxu0 0.0
      %3119 = vmatmul.mubr.f32.gmra.mxu0 %v2422
      %v3120 = vpop.f32.mrf.mxu0
      %v3121 = vadd.f32 0.0, %v3120
      %v3122 = vpop.f32.mrf.mxu0
      %3123 = vmatprep.mubr.f32.mxu0 0.0
      %3124 = vmatmul.mubr.f32.gmra.mxu0 %v2425
      %v3125 = vpop.f32.mrf.mxu0
      %v3126 = vadd.f32 0.0, %v3125
      %v3127 = vpop.f32.mrf.mxu0
      %3128 = vmatprep.mubr.f32.mxu0 0.0
      %3129 = vmatmul.mubr.f32.gmra.mxu0 %v2428
      %v3130 = vpop.f32.mrf.mxu0
      %v3131 = vadd.f32 0.0, %v3130
      %v3132 = vpop.f32.mrf.mxu0
      %3133 = vmatprep.mubr.f32.mxu0 0.0
      %3134 = vmatmul.mubr.f32.gmra.mxu0 %v2431
      %v3135 = vpop.f32.mrf.mxu0
      %v3136 = vadd.f32 0.0, %v3135
      %v3137 = vpop.f32.mrf.mxu0
      %3138 = vmatprep.mubr.f32.mxu0 0.0
      %3139 = vmatmul.mubr.f32.gmra.mxu0 %v2434
      %v3140 = vpop.f32.mrf.mxu0
      %v3141 = vadd.f32 0.0, %v3140
      %v3142 = vpop.f32.mrf.mxu0
      %3143 = vmatprep.mubr.f32.mxu0 0.0
      %3144 = vmatmul.mubr.f32.gmra.mxu0 %v2437
      %v3145 = vpop.f32.mrf.mxu0
      %v3146 = vadd.f32 0.0, %v3145
      %v3147 = vpop.f32.mrf.mxu0
      %3148 = vmatprep.mubr.f32.mxu0 0.0
      %3149 = vmatmul.mubr.f32.gmra.mxu0 %v2440
      %v3150 = vpop.f32.mrf.mxu0
      %v3151 = vadd.f32 0.0, %v3150
      %v3152 = vpop.f32.mrf.mxu0
      %3153 = vmatprep.mubr.f32.mxu0 0.0
      %3154 = vmatmul.mubr.f32.gmra.mxu0 %v2443
      %v3155 = vpop.f32.mrf.mxu0
      %v3156 = vadd.f32 0.0, %v3155
      %v3157 = vpop.f32.mrf.mxu0
      %3158 = vmatprep.mubr.f32.mxu0 0.0
      %3159 = vmatmul.mubr.f32.gmra.mxu0 %v2446
      %v3160 = vpop.f32.mrf.mxu0
      %v3161 = vadd.f32 0.0, %v3160
      %v3162 = vpop.f32.mrf.mxu0
      %3163 = vmatprep.mubr.f32.mxu0 0.0
      %3164 = vmatmul.mubr.f32.gmra.mxu0 %v2449
      %v3165 = vpop.f32.mrf.mxu0
      %v3166 = vadd.f32 0.0, %v3165
      %v3167 = vpop.f32.mrf.mxu0
      %3168 = vmatprep.mubr.f32.mxu0 0.0
      %3169 = vmatmul.mubr.f32.gmra.mxu0 %v2452
      %v3170 = vpop.f32.mrf.mxu0
      %v3171 = vadd.f32 0.0, %v3170
      %v3172 = vpop.f32.mrf.mxu0
      %3173 = vmatprep.mubr.f32.mxu0 0.0
      %3174 = vmatmul.mubr.f32.gmra.mxu0 %v2455
      %v3175 = vpop.f32.mrf.mxu0
      %v3176 = vadd.f32 0.0, %v3175
      %v3177 = vpop.f32.mrf.mxu0
      %3178 = vmatprep.mubr.f32.mxu0 0.0
      %3179 = vmatmul.mubr.f32.gmra.mxu0 %v2458
      %v3180 = vpop.f32.mrf.mxu0
      %v3181 = vadd.f32 0.0, %v3180
      %v3182 = vpop.f32.mrf.mxu0
      %3183 = vmatprep.mubr.f32.mxu0 0.0
      %3184 = vmatmul.mubr.f32.gmra.mxu0 %v2461
      %v3185 = vpop.f32.mrf.mxu0
      %v3186 = vadd.f32 0.0, %v3185
      %v3187 = vpop.f32.mrf.mxu0
      %3188 = vmatprep.mubr.f32.mxu0 0.0
      %3189 = vmatmul.mubr.f32.gmra.mxu0 %v2464
      %v3190 = vpop.f32.mrf.mxu0
      %v3191 = vadd.f32 0.0, %v3190
      %v3192 = vpop.f32.mrf.mxu0
      %3193 = vmatprep.mubr.f32.mxu0 0.0
      %3194 = vmatmul.mubr.f32.gmra.mxu0 %v2467
      %v3195 = vpop.f32.mrf.mxu0
      %v3196 = vadd.f32 0.0, %v3195
      %v3197 = vpop.f32.mrf.mxu0
      %3198 = vmatprep.mubr.f32.mxu0 0.0
      %3199 = vmatmul.mubr.f32.gmra.mxu0 %v2470
      %v3200 = vpop.f32.mrf.mxu0
      %v3201 = vadd.f32 0.0, %v3200
      %v3202 = vpop.f32.mrf.mxu0
      %3203 = vmatprep.mubr.f32.mxu0 0.0
      %3204 = vmatmul.mubr.f32.gmra.mxu0 %v2473
      %v3205 = vpop.f32.mrf.mxu0
      %v3206 = vadd.f32 0.0, %v3205
      %v3207 = vpop.f32.mrf.mxu0
      %3208 = vmatprep.mubr.f32.mxu0 0.0
      %3209 = vmatmul.mubr.f32.gmra.mxu0 %v2476
      %v3210 = vpop.f32.mrf.mxu0
      %v3211 = vadd.f32 0.0, %v3210
      %v3212 = vpop.f32.mrf.mxu0
      %3213 = vmatprep.mubr.f32.mxu0 0.0
      %3214 = vmatmul.mubr.f32.gmra.mxu0 %v2479
      %v3215 = vpop.f32.mrf.mxu0
      %v3216 = vadd.f32 0.0, %v3215
      %v3217 = vpop.f32.mrf.mxu0
      %3218 = vmatprep.mubr.f32.mxu0 0.0
      %3219 = vmatmul.mubr.f32.gmra.mxu0 %v2482
      %v3220 = vpop.f32.mrf.mxu0
      %v3221 = vadd.f32 0.0, %v3220
      %v3222 = vpop.f32.mrf.mxu0
      %3223 = vmatprep.mubr.f32.mxu0 0.0
      %3224 = vmatmul.mubr.f32.gmra.mxu0 %v2485
      %v3225 = vpop.f32.mrf.mxu0
      %v3226 = vadd.f32 0.0, %v3225
      %v3227 = vpop.f32.mrf.mxu0
      %3228 = vmatprep.mubr.f32.mxu0 0.0
      %3229 = vmatmul.mubr.f32.gmra.mxu0 %v2749
      %v3230 = vpop.f32.mrf.mxu0
      %v3231 = vadd.f32 0.0, %v3230
      %v3232 = vpop.f32.mrf.mxu0
      %3233 = vmatprep.mubr.f32.mxu0 0.0
      %3234 = vmatmul.mubr.f32.gmra.mxu0 %v2752
      %v3235 = vpop.f32.mrf.mxu0
      %v3236 = vadd.f32 0.0, %v3235
      %v3237 = vpop.f32.mrf.mxu0
      %3238 = vmatprep.mubr.f32.mxu0 0.0
      %3239 = vmatmul.mubr.f32.gmra.mxu0 %v3016
      %v3240 = vpop.f32.mrf.mxu0
      %v3241 = vadd.f32 0.0, %v3240
      %v3242 = vpop.f32.mrf.mxu0
      %3243 = vmatprep.mubr.f32.mxu0 0.0
      %3244 = vmatmul.mubr.f32.gmra.mxu0 %v3019
      %v3245 = vpop.f32.mrf.mxu0
      %v3246 = vadd.f32 0.0, %v3245
      %v3247 = vpop.f32.mrf.mxu0
      %3248 = vdwg.mxu0
      %v3249 = vadd.f32 %v2982, %v3091
      %v3250 = vadd.f32 %v2983, %v3096
      %v3251 = vadd.f32 %v2984, %v3101
      %v3252 = vadd.f32 %v2985, %v3106
      %v3253 = vadd.f32 %v2986, %v3111
      %v3254 = vadd.f32 %v2987, %v3116
      %v3255 = vadd.f32 %v2988, %v3121
      %v3256 = vadd.f32 %v2989, %v3126
      %v3257 = vadd.f32 %v2990, %v3131
      %v3258 = vadd.f32 %v2991, %v3136
      %v3259 = vadd.f32 %v2992, %v3141
      %v3260 = vadd.f32 %v2993, %v3146
      %v3261 = vadd.f32 %v2994, %v3151
      %v3262 = vadd.f32 %v2995, %v3156
      %v3263 = vadd.f32 %v2996, %v3161
      %v3264 = vadd.f32 %v2997, %v3166
      %v3265 = vadd.f32 %v2998, %v3171
      %v3266 = vadd.f32 %v2999, %v3176
      %v3267 = vadd.f32 %v3000, %v3181
      %v3268 = vadd.f32 %v3001, %v3186
      %v3269 = vadd.f32 %v3002, %v3191
      %v3270 = vadd.f32 %v3003, %v3196
      %v3271 = vadd.f32 %v3004, %v3201
      %v3272 = vadd.f32 %v3005, %v3206
      %v3273 = vadd.f32 %v3006, %v3211
      %v3274 = vadd.f32 %v3007, %v3216
      %v3275 = vadd.f32 %v3008, %v3221
      %v3276 = vadd.f32 %v3009, %v3226
      %v3277 = vadd.f32 %v3010, %v3231
      %v3278 = vadd.f32 %v3011, %v3236
      %v3279 = vadd.f32 %v3012, %v3241
      %v3280 = vadd.f32 %v3013, %v3246
      %v3281 = vld [vmem:[%s4] sm:$0x1]
      %v3283 = vlaneseq
      %v3284 = vshrl.u32 %v3283, 7
      %v3285 = vsub.s32 0, %v3284
      %v3286 = vrot.slane %v3281, %v3285
      %v3288 = vadd.f32 %v3249, %v3286
      %v3289 = vadd.f32 %v3250, %v3286
      %v3290 = vadd.f32 %v3251, %v3286
      %v3291 = vadd.f32 %v3252, %v3286
      %v3292 = vadd.f32 %v3253, %v3286
      %v3293 = vadd.f32 %v3254, %v3286
      %v3294 = vadd.f32 %v3255, %v3286
      %v3295 = vadd.f32 %v3256, %v3286
      %v3296 = vadd.f32 %v3257, %v3286
      %v3297 = vadd.f32 %v3258, %v3286
      %v3298 = vadd.f32 %v3259, %v3286
      %v3299 = vadd.f32 %v3260, %v3286
      %v3300 = vadd.f32 %v3261, %v3286
      %v3301 = vadd.f32 %v3262, %v3286
      %v3302 = vadd.f32 %v3263, %v3286
      %v3303 = vadd.f32 %v3264, %v3286
      %v3304 = vadd.f32 %v3265, %v3286
      %v3305 = vadd.f32 %v3266, %v3286
      %v3306 = vadd.f32 %v3267, %v3286
      %v3307 = vadd.f32 %v3268, %v3286
      %v3308 = vadd.f32 %v3269, %v3286
      %v3309 = vadd.f32 %v3270, %v3286
      %v3310 = vadd.f32 %v3271, %v3286
      %v3311 = vadd.f32 %v3272, %v3286
      %v3312 = vadd.f32 %v3273, %v3286
      %v3313 = vadd.f32 %v3274, %v3286
      %v3314 = vadd.f32 %v3275, %v3286
      %v3315 = vadd.f32 %v3276, %v3286
      %v3316 = vadd.f32 %v3277, %v3286
      %v3317 = vadd.f32 %v3278, %v3286
      %v3318 = vadd.f32 %v3279, %v3286
      %v3319 = vadd.f32 %v3280, %v3286
      %v3320 = vmul.f32 %v3288, 0.5
      %v3321 = vmul.f32 %v3289, 0.5
      %v3322 = vmul.f32 %v3290, 0.5
      %v3323 = vmul.f32 %v3291, 0.5
      %v3324 = vmul.f32 %v3292, 0.5
      %v3325 = vmul.f32 %v3293, 0.5
      %v3326 = vmul.f32 %v3294, 0.5
      %v3327 = vmul.f32 %v3295, 0.5
      %v3328 = vmul.f32 %v3296, 0.5
      %v3329 = vmul.f32 %v3297, 0.5
      %v3330 = vmul.f32 %v3298, 0.5
      %v3331 = vmul.f32 %v3299, 0.5
      %v3332 = vmul.f32 %v3300, 0.5
      %v3333 = vmul.f32 %v3301, 0.5
      %v3334 = vmul.f32 %v3302, 0.5
      %v3335 = vmul.f32 %v3303, 0.5
      %v3336 = vmul.f32 %v3304, 0.5
      %v3337 = vmul.f32 %v3305, 0.5
      %v3338 = vmul.f32 %v3306, 0.5
      %v3339 = vmul.f32 %v3307, 0.5
      %v3340 = vmul.f32 %v3308, 0.5
      %v3341 = vmul.f32 %v3309, 0.5
      %v3342 = vmul.f32 %v3310, 0.5
      %v3343 = vmul.f32 %v3311, 0.5
      %v3344 = vmul.f32 %v3312, 0.5
      %v3345 = vmul.f32 %v3313, 0.5
      %v3346 = vmul.f32 %v3314, 0.5
      %v3347 = vmul.f32 %v3315, 0.5
      %v3348 = vmul.f32 %v3316, 0.5
      %v3349 = vmul.f32 %v3317, 0.5
      %v3350 = vmul.f32 %v3318, 0.5
      %v3351 = vmul.f32 %v3319, 0.5
      %v3352 = vmul.f32 %v3288, 0.70710677
      %v3353 = vmul.f32 %v3289, 0.70710677
      %v3354 = vmul.f32 %v3290, 0.70710677
      %v3355 = vmul.f32 %v3291, 0.70710677
      %v3356 = vmul.f32 %v3292, 0.70710677
      %v3357 = vmul.f32 %v3293, 0.70710677
      %v3358 = vmul.f32 %v3294, 0.70710677
      %v3359 = vmul.f32 %v3295, 0.70710677
      %v3360 = vmul.f32 %v3296, 0.70710677
      %v3361 = vmul.f32 %v3297, 0.70710677
      %v3362 = vmul.f32 %v3298, 0.70710677
      %v3363 = vmul.f32 %v3299, 0.70710677
      %v3364 = vmul.f32 %v3300, 0.70710677
      %v3365 = vmul.f32 %v3301, 0.70710677
      %v3366 = vmul.f32 %v3302, 0.70710677
      %v3367 = vmul.f32 %v3303, 0.70710677
      %v3368 = vmul.f32 %v3304, 0.70710677
      %v3369 = vmul.f32 %v3305, 0.70710677
      %v3370 = vmul.f32 %v3306, 0.70710677
      %v3371 = vmul.f32 %v3307, 0.70710677
      %v3372 = vmul.f32 %v3308, 0.70710677
      %v3373 = vmul.f32 %v3309, 0.70710677
      %v3374 = vmul.f32 %v3310, 0.70710677
      %v3375 = vmul.f32 %v3311, 0.70710677
      %v3376 = vmul.f32 %v3312, 0.70710677
      %v3377 = vmul.f32 %v3313, 0.70710677
      %v3378 = vmul.f32 %v3314, 0.70710677
      %v3379 = vmul.f32 %v3315, 0.70710677
      %v3380 = vmul.f32 %v3316, 0.70710677
      %v3381 = vmul.f32 %v3317, 0.70710677
      %v3382 = vmul.f32 %v3318, 0.70710677
      %v3383 = vmul.f32 %v3319, 0.70710677
      %v3384 = verf.f32.pop %v3352
      %v3385 = verf.f32.pop %v3353
      %v3386 = verf.f32.pop %v3354
      %v3387 = verf.f32.pop %v3355
      %v3388 = verf.f32.pop %v3356
      %v3389 = verf.f32.pop %v3357
      %v3390 = verf.f32.pop %v3358
      %v3391 = verf.f32.pop %v3359
      %v3392 = verf.f32.pop %v3360
      %v3393 = verf.f32.pop %v3361
      %v3394 = verf.f32.pop %v3362
      %v3395 = verf.f32.pop %v3363
      %v3396 = verf.f32.pop %v3364
      %v3397 = verf.f32.pop %v3365
      %v3398 = verf.f32.pop %v3366
      %v3399 = verf.f32.pop %v3367
      %v3400 = verf.f32.pop %v3368
      %v3401 = verf.f32.pop %v3369
      %v3402 = verf.f32.pop %v3370
      %v3403 = verf.f32.pop %v3371
      %v3404 = verf.f32.pop %v3372
      %v3405 = verf.f32.pop %v3373
      %v3406 = verf.f32.pop %v3374
      %v3407 = verf.f32.pop %v3375
      %v3408 = verf.f32.pop %v3376
      %v3409 = verf.f32.pop %v3377
      %v3410 = verf.f32.pop %v3378
      %v3411 = verf.f32.pop %v3379
      %v3412 = verf.f32.pop %v3380
      %v3413 = verf.f32.pop %v3381
      %v3414 = verf.f32.pop %v3382
      %v3415 = verf.f32.pop %v3383
      %v3416 = vadd.f32 %v3384, 1.0
      %v3417 = vadd.f32 %v3385, 1.0
      %v3418 = vadd.f32 %v3386, 1.0
      %v3419 = vadd.f32 %v3387, 1.0
      %v3420 = vadd.f32 %v3388, 1.0
      %v3421 = vadd.f32 %v3389, 1.0
      %v3422 = vadd.f32 %v3390, 1.0
      %v3423 = vadd.f32 %v3391, 1.0
      %v3424 = vadd.f32 %v3392, 1.0
      %v3425 = vadd.f32 %v3393, 1.0
      %v3426 = vadd.f32 %v3394, 1.0
      %v3427 = vadd.f32 %v3395, 1.0
      %v3428 = vadd.f32 %v3396, 1.0
      %v3429 = vadd.f32 %v3397, 1.0
      %v3430 = vadd.f32 %v3398, 1.0
      %v3431 = vadd.f32 %v3399, 1.0
      %v3432 = vadd.f32 %v3400, 1.0
      %v3433 = vadd.f32 %v3401, 1.0
      %v3434 = vadd.f32 %v3402, 1.0
      %v3435 = vadd.f32 %v3403, 1.0
      %v3436 = vadd.f32 %v3404, 1.0
      %v3437 = vadd.f32 %v3405, 1.0
      %v3438 = vadd.f32 %v3406, 1.0
      %v3439 = vadd.f32 %v3407, 1.0
      %v3440 = vadd.f32 %v3408, 1.0
      %v3441 = vadd.f32 %v3409, 1.0
      %v3442 = vadd.f32 %v3410, 1.0
      %v3443 = vadd.f32 %v3411, 1.0
      %v3444 = vadd.f32 %v3412, 1.0
      %v3445 = vadd.f32 %v3413, 1.0
      %v3446 = vadd.f32 %v3414, 1.0
      %v3447 = vadd.f32 %v3415, 1.0
      %v3448 = vmul.f32 %v3320, %v3416
      %v3449 = vmul.f32 %v3321, %v3417
      %v3450 = vmul.f32 %v3322, %v3418
      %v3451 = vmul.f32 %v3323, %v3419
      %v3452 = vmul.f32 %v3324, %v3420
      %v3453 = vmul.f32 %v3325, %v3421
      %v3454 = vmul.f32 %v3326, %v3422
      %v3455 = vmul.f32 %v3327, %v3423
      %v3456 = vmul.f32 %v3328, %v3424
      %v3457 = vmul.f32 %v3329, %v3425
      %v3458 = vmul.f32 %v3330, %v3426
      %v3459 = vmul.f32 %v3331, %v3427
      %v3460 = vmul.f32 %v3332, %v3428
      %v3461 = vmul.f32 %v3333, %v3429
      %v3462 = vmul.f32 %v3334, %v3430
      %v3463 = vmul.f32 %v3335, %v3431
      %v3464 = vmul.f32 %v3336, %v3432
      %v3465 = vmul.f32 %v3337, %v3433
      %v3466 = vmul.f32 %v3338, %v3434
      %v3467 = vmul.f32 %v3339, %v3435
      %v3468 = vmul.f32 %v3340, %v3436
      %v3469 = vmul.f32 %v3341, %v3437
      %v3470 = vmul.f32 %v3342, %v3438
      %v3471 = vmul.f32 %v3343, %v3439
      %v3472 = vmul.f32 %v3344, %v3440
      %v3473 = vmul.f32 %v3345, %v3441
      %v3474 = vmul.f32 %v3346, %v3442
      %v3475 = vmul.f32 %v3347, %v3443
      %v3476 = vmul.f32 %v3348, %v3444
      %v3477 = vmul.f32 %v3349, %v3445
      %v3478 = vmul.f32 %v3350, %v3446
      %v3479 = vmul.f32 %v3351, %v3447
      %vm3480 = vcmask 64512
      %3481 = vst.msk [vmem:[%s391] sm:$0xff] %vm3480, %v3448
      %3482 = vst.msk [vmem:[%s391 + $0x8] sm:$0xff] %vm3480, %v3449
      %3483 = vst.msk [vmem:[%s391 + $0x20] sm:$0xff] %vm3480, %v3450
      %3484 = vst.msk [vmem:[%s391 + $0x28] sm:$0xff] %vm3480, %v3451
      %3485 = vst.msk [vmem:[%s391 + $0x40] sm:$0xff] %vm3480, %v3452
      %3486 = vst.msk [vmem:[%s391 + $0x48] sm:$0xff] %vm3480, %v3453
      %3487 = vst.msk [vmem:[%s391 + $0x60] sm:$0xff] %vm3480, %v3454
      %3488 = vst.msk [vmem:[%s391 + $0x68] sm:$0xff] %vm3480, %v3455
      %3489 = vst.msk [vmem:[%s391 + $0x80] sm:$0xff] %vm3480, %v3456
      %3490 = vst.msk [vmem:[%s391 + $0x88] sm:$0xff] %vm3480, %v3457
      %3491 = vst.msk [vmem:[%s391 + $0xa0] sm:$0xff] %vm3480, %v3458
      %3492 = vst.msk [vmem:[%s391 + $0xa8] sm:$0xff] %vm3480, %v3459
      %3493 = vst.msk [vmem:[%s391 + $0xc0] sm:$0xff] %vm3480, %v3460
      %3494 = vst.msk [vmem:[%s391 + $0xc8] sm:$0xff] %vm3480, %v3461
      %3495 = vst.msk [vmem:[%s391 + $0xe0] sm:$0xff] %vm3480, %v3462
      %3496 = vst.msk [vmem:[%s391 + $0xe8] sm:$0xff] %vm3480, %v3463
      %3497 = vst.msk [vmem:[%s391 + $0x100] sm:$0xff] %vm3480, %v3464
      %3498 = vst.msk [vmem:[%s391 + $0x108] sm:$0xff] %vm3480, %v3465
      %3499 = vst.msk [vmem:[%s391 + $0x120] sm:$0xff] %vm3480, %v3466
      %3500 = vst.msk [vmem:[%s391 + $0x128] sm:$0xff] %vm3480, %v3467
      %3501 = vst.msk [vmem:[%s391 + $0x140] sm:$0xff] %vm3480, %v3468
      %3502 = vst.msk [vmem:[%s391 + $0x148] sm:$0xff] %vm3480, %v3469
      %3503 = vst.msk [vmem:[%s391 + $0x160] sm:$0xff] %vm3480, %v3470
      %3504 = vst.msk [vmem:[%s391 + $0x168] sm:$0xff] %vm3480, %v3471
      %3505 = vst.msk [vmem:[%s391 + $0x180] sm:$0xff] %vm3480, %v3472
      %3506 = vst.msk [vmem:[%s391 + $0x188] sm:$0xff] %vm3480, %v3473
      %3507 = vst.msk [vmem:[%s391 + $0x1a0] sm:$0xff] %vm3480, %v3474
      %3508 = vst.msk [vmem:[%s391 + $0x1a8] sm:$0xff] %vm3480, %v3475
      %3509 = vst.msk [vmem:[%s391 + $0x1c0] sm:$0xff] %vm3480, %v3476
      %3510 = vst.msk [vmem:[%s391 + $0x1c8] sm:$0xff] %vm3480, %v3477
      %3511 = vst.msk [vmem:[%s391 + $0x1e0] sm:$0xff] %vm3480, %v3478
      %3512 = vst.msk [vmem:[%s391 + $0x1e8] sm:$0xff] %vm3480, %v3479
      %3545 = vrot.lane.b32.xlu0 %v3448, 120
      %v3546 = vpop.permute.xlu0 %3545
      %3547 = vrot.lane.b32.xlu0 %v3449, 120
      %v3548 = vpop.permute.xlu0 %3547
      %3549 = vrot.lane.b32.xlu0 %v3450, 120
      %v3550 = vpop.permute.xlu0 %3549
      %3551 = vrot.lane.b32.xlu0 %v3451, 120
      %v3552 = vpop.permute.xlu0 %3551
      %3553 = vrot.lane.b32.xlu0 %v3452, 120
      %v3554 = vpop.permute.xlu0 %3553
      %3555 = vrot.lane.b32.xlu0 %v3453, 120
      %v3556 = vpop.permute.xlu0 %3555
      %3557 = vrot.lane.b32.xlu0 %v3454, 120
      %v3558 = vpop.permute.xlu0 %3557
      %3559 = vrot.lane.b32.xlu0 %v3455, 120
      %v3560 = vpop.permute.xlu0 %3559
      %3561 = vrot.lane.b32.xlu0 %v3456, 120
      %v3562 = vpop.permute.xlu0 %3561
      %3563 = vrot.lane.b32.xlu0 %v3457, 120
      %v3564 = vpop.permute.xlu0 %3563
      %3565 = vrot.lane.b32.xlu0 %v3458, 120
      %v3566 = vpop.permute.xlu0 %3565
      %3567 = vrot.lane.b32.xlu0 %v3459, 120
      %v3568 = vpop.permute.xlu0 %3567
      %3569 = vrot.lane.b32.xlu0 %v3460, 120
      %v3570 = vpop.permute.xlu0 %3569
      %3571 = vrot.lane.b32.xlu0 %v3461, 120
      %v3572 = vpop.permute.xlu0 %3571
      %3573 = vrot.lane.b32.xlu0 %v3462, 120
      %v3574 = vpop.permute.xlu0 %3573
      %3575 = vrot.lane.b32.xlu0 %v3463, 120
      %v3576 = vpop.permute.xlu0 %3575
      %3577 = vrot.lane.b32.xlu0 %v3464, 120
      %v3578 = vpop.permute.xlu0 %3577
      %3579 = vrot.lane.b32.xlu0 %v3465, 120
      %v3580 = vpop.permute.xlu0 %3579
      %3581 = vrot.lane.b32.xlu0 %v3466, 120
      %v3582 = vpop.permute.xlu0 %3581
      %3583 = vrot.lane.b32.xlu0 %v3467, 120
      %v3584 = vpop.permute.xlu0 %3583
      %3585 = vrot.lane.b32.xlu0 %v3468, 120
      %v3586 = vpop.permute.xlu0 %3585
      %3587 = vrot.lane.b32.xlu0 %v3469, 120
      %v3588 = vpop.permute.xlu0 %3587
      %3589 = vrot.lane.b32.xlu0 %v3470, 120
      %v3590 = vpop.permute.xlu0 %3589
      %3591 = vrot.lane.b32.xlu0 %v3471, 120
      %v3592 = vpop.permute.xlu0 %3591
      %3593 = vrot.lane.b32.xlu0 %v3472, 120
      %v3594 = vpop.permute.xlu0 %3593
      %3595 = vrot.lane.b32.xlu0 %v3473, 120
      %v3596 = vpop.permute.xlu0 %3595
      %3597 = vrot.lane.b32.xlu0 %v3474, 120
      %v3598 = vpop.permute.xlu0 %3597
      %3599 = vrot.lane.b32.xlu0 %v3475, 120
      %v3600 = vpop.permute.xlu0 %3599
      %3601 = vrot.lane.b32.xlu0 %v3476, 120
      %v3602 = vpop.permute.xlu0 %3601
      %3603 = vrot.lane.b32.xlu0 %v3477, 120
      %v3604 = vpop.permute.xlu0 %3603
      %3605 = vrot.lane.b32.xlu0 %v3478, 120
      %v3606 = vpop.permute.xlu0 %3605
      %3607 = vrot.lane.b32.xlu0 %v3479, 120
      %v3608 = vpop.permute.xlu0 %3607
      %s3641 = scalar_lea.vmem %s391, 16
      %3642 = vst.msk [vmem:[%s3641] sm:$0xff] %vm3480, %v3546
      %3643 = vst.msk [vmem:[%s3641 + $0x8] sm:$0xff] %vm3480, %v3548
      %3644 = vst.msk [vmem:[%s3641 + $0x20] sm:$0xff] %vm3480, %v3550
      %3645 = vst.msk [vmem:[%s3641 + $0x28] sm:$0xff] %vm3480, %v3552
      %3646 = vst.msk [vmem:[%s3641 + $0x40] sm:$0xff] %vm3480, %v3554
      %3647 = vst.msk [vmem:[%s3641 + $0x48] sm:$0xff] %vm3480, %v3556
      %3648 = vst.msk [vmem:[%s3641 + $0x60] sm:$0xff] %vm3480, %v3558
      %3649 = vst.msk [vmem:[%s3641 + $0x68] sm:$0xff] %vm3480, %v3560
      %3650 = vst.msk [vmem:[%s3641 + $0x80] sm:$0xff] %vm3480, %v3562
      %3651 = vst.msk [vmem:[%s3641 + $0x88] sm:$0xff] %vm3480, %v3564
      %3652 = vst.msk [vmem:[%s3641 + $0xa0] sm:$0xff] %vm3480, %v3566
      %3653 = vst.msk [vmem:[%s3641 + $0xa8] sm:$0xff] %vm3480, %v3568
      %3654 = vst.msk [vmem:[%s3641 + $0xc0] sm:$0xff] %vm3480, %v3570
      %3655 = vst.msk [vmem:[%s3641 + $0xc8] sm:$0xff] %vm3480, %v3572
      %3656 = vst.msk [vmem:[%s3641 + $0xe0] sm:$0xff] %vm3480, %v3574
      %3657 = vst.msk [vmem:[%s3641 + $0xe8] sm:$0xff] %vm3480, %v3576
      %3658 = vst.msk [vmem:[%s3641 + $0x100] sm:$0xff] %vm3480, %v3578
      %3659 = vst.msk [vmem:[%s3641 + $0x108] sm:$0xff] %vm3480, %v3580
      %3660 = vst.msk [vmem:[%s3641 + $0x120] sm:$0xff] %vm3480, %v3582
      %3661 = vst.msk [vmem:[%s3641 + $0x128] sm:$0xff] %vm3480, %v3584
      %3662 = vst.msk [vmem:[%s3641 + $0x140] sm:$0xff] %vm3480, %v3586
      %3663 = vst.msk [vmem:[%s3641 + $0x148] sm:$0xff] %vm3480, %v3588
      %3664 = vst.msk [vmem:[%s3641 + $0x160] sm:$0xff] %vm3480, %v3590
      %3665 = vst.msk [vmem:[%s3641 + $0x168] sm:$0xff] %vm3480, %v3592
      %3666 = vst.msk [vmem:[%s3641 + $0x180] sm:$0xff] %vm3480, %v3594
      %3667 = vst.msk [vmem:[%s3641 + $0x188] sm:$0xff] %vm3480, %v3596
      %3668 = vst.msk [vmem:[%s3641 + $0x1a0] sm:$0xff] %vm3480, %v3598
      %3669 = vst.msk [vmem:[%s3641 + $0x1a8] sm:$0xff] %vm3480, %v3600
      %3670 = vst.msk [vmem:[%s3641 + $0x1c0] sm:$0xff] %vm3480, %v3602
      %3671 = vst.msk [vmem:[%s3641 + $0x1c8] sm:$0xff] %vm3480, %v3604
      %3672 = vst.msk [vmem:[%s3641 + $0x1e0] sm:$0xff] %vm3480, %v3606
      %3673 = vst.msk [vmem:[%s3641 + $0x1e8] sm:$0xff] %vm3480, %v3608
      %s3674 = smul.u32 16, %s21
      %p3675 = scmp.lt.s32.totalorder %s20, 1
      %s3676 = scalar_select %p3675, %s20, 1
      %p3677 = scmp.lt.s32.totalorder %s3674, 15
      %s3678 = scalar_select %p3677, %s3674, 15
      %s3679 = smul.addr %s3678, 4
      %s3680 = smul.addr %s3676, 64
      %s3681 = sadd.s32 %s3679, %s3680
      %s3682 = smul.addr %s3681, 8
      %s3683 = scalar_lea.vmem %s5, %s3682
      // Predicated region
      $region41: #{tpu_custom_call.1} parent=39 // pred_check
        %p3684 = pneg %p190
      $region42: #{tpu_custom_call.1} parent=39 // pred_check_branch
        %3686 = sbr.rel (%p3684) target = $region44
      $region43: #{tpu_custom_call.1} parent=39 // pred_region
        %s3687 = smul.u32 16, %s21
      $region44: #{tpu_custom_call.1} parent=39 // pred_fallthru
        _
    $region40: #{tpu_custom_call.1} parent=5 // pred_fallthru
      _
    %p3688 = scmp.le.s32.totalorder 2, %s11
    // Predicated region
    $region45: #{tpu_custom_call.1} parent=5 // pred_check
      %p3689 = pneg %p3688
    $region46: #{tpu_custom_call.1} parent=5 // pred_check_branch
      %3691 = sbr.rel (%p3689) target = $region48
    $region47: #{tpu_custom_call.1} parent=5 // pred_region
      %s3692 = ssub.s32 %s11, 2
      // Predicated region
      $region49: #{tpu_custom_call.1} parent=47 // pred_check
        %p3693 = pneg %p196
      $region50: #{tpu_custom_call.1} parent=47 // pred_check_branch
        %3695 = sbr.rel (%p3693) target = $region52
      $region51: #{tpu_custom_call.1} parent=47 // pred_region
        %s3696 = smul.u32 16, %s23
        %p3697 = scmp.lt.s32.totalorder %s22, 1
        %s3698 = scalar_select %p3697, %s22, 1
        %p3699 = scmp.lt.s32.totalorder %s3696, 15
        %s3700 = scalar_select %p3699, %s3696, 15
        %s3701 = smul.addr %s3700, 4
        %s3702 = smul.addr %s3698, 64
        %s3703 = sadd.s32 %s3701, %s3702
        %s3704 = smul.addr %s3703, 8
        %s3705 = scalar_lea.vmem %s5, %s3704
      $region52: #{tpu_custom_call.1} parent=47 // pred_fallthru
        _
    $region48: #{tpu_custom_call.1} parent=5 // pred_fallthru
      _
  $region6: #{tpu_custom_call.1} parent=0 // loop_footer
    %s15 = sadd.s32 1, %s11
  $region7: #{tpu_custom_call.1} parent=0 // loop_footer_branch
    %10 = sbr.rel target = $region3
  $region8: #{tpu_custom_call.1} parent=0 // loop_exit
    _

// kernel: tpu_custom_call.1
$region0: #{tpu_custom_call.1}
  #allocation0 [shape = 'u32[]', space=smem, size = 0x4, offset = 0x4, fixed_abs, tag = 'smem constant byte address 0x4 - core index']
  #allocation1 [shape = 'u32[144,128]{1,0:T(1,128)}', space=vmem, size = 0x12000, scoped, tag = 'internal scratch']
  #allocation2 [shape = 'f32[18,32,4]{2,1,0:T(8,128)}', space=vmem, size = 0x48000, scoped, tag = 'scratch operand']
  %s0 = inlined_call_operand.vmem [shape: f32[2,16,16,4], index: 0, kind: input, shape index: {}]
  %s1 = inlined_call_operand.vmem [shape: f32[2,16,16,4], index: 1, kind: input, shape index: {}]
  %s2 = inlined_call_operand.vmem [shape: f32[2,16,16,4], index: 2, kind: input, shape index: {}]
  %s3 = inlined_call_operand.vmem [shape: f32[36,16], index: 3, kind: input, shape index: {}]
  %s4 = inlined_call_operand.vmem [shape: f32[1,16], index: 4, kind: input, shape index: {}]
  %s5 = inlined_call_operand.vmem [shape: f32[2,16,2,16,8], index: 5, kind: output, shape index: {}]
  %s6 = sld [smem:[#allocation0]]
  $region53: #{tpu_custom_call.1} parent=0
    _
  %s8 = ssub.s32 1, %s6
  %s9 = scalar_select 0, %s8, %s6
  loop: start=0, step=1, limit=4
  $region2: #{tpu_custom_call.1} parent=0 // loop_pre_header
    _
  $region3: #{tpu_custom_call.1} parent=0 // loop_header
    %s11 = sphi 0, %s15
    %p12 = scmp.ge.s32.totalorder %s11, 4
    %s18 = sphi 0, %s30
    %s19 = sphi 0, %s26
    %s20 = sphi 0, %s18
    %s21 = sphi 0, %s19
    %s22 = sphi 0, %s20
    %s23 = sphi 0, %s21
    %s35 = sphi 0, %s37
    %s38 = sphi 0, %s35
    %s39 = sphi 0, %s38
    %s55 = sphi 0, %s39
    %s71 = sphi 0, %s73
    %s74 = sphi 0, %s71
    %s75 = sphi 0, %s74
    %s91 = sphi 0, %s75
    %s107 = sphi 0, %s109
    %s110 = sphi 0, %s107
    %s111 = sphi 0, %s110
    %s127 = sphi 0, %s111
    %s131 = sphi 0, %s131
    %s133 = sphi 0, %s131
    %s134 = sphi 0, %s133
    %s148 = sphi 0, %s134
    %s152 = sphi 0, %s152
    %s154 = sphi 0, %s152
    %s155 = sphi 0, %s154
    %s169 = sphi 0, %s155
    %s177 = sphi 0, %s179
    %s180 = sphi 0, %s177
    %s181 = sphi 0, %s180
    %s197 = sphi 0, %s181
  $region4: #{tpu_custom_call.1} parent=0 // loop_header_branch
    %14 = sbr.rel (%p12) target = $region8
  $region5: #{tpu_custom_call.1} parent=0 // loop_body
    %s16 = ssub.s32 %s11, 1
    %s17 = ssub.s32 %s11, 2
    %s24 = sadd.s32 1, %s19
    %p25 = scmp.ge.s32.totalorder %s24, 1
    %s26 = scalar_select %p25, 0, %s24
    %s27 = sadd.s32 1, %s18
    %s28 = scalar_select %p25, %s27, %s18
    %p29 = scmp.ge.s32.totalorder %s28, 2
    %s30 = scalar_select %p29, 0, %s28
    %s31 = ssub.s32 %s18, %s30
    %s32 = ssub.s32 %s19, %s26
    %s33 = sor.u32 %s31, %s32
    %p34 = scmp.eq.s32.totalorder %s33, 0
    %s36 = sadd.s32 %s35, 1
    %s37 = scalar_select %p34, %s35, %s36
    %p40 = pneg %p34
    %p41 = scmp.eq.s32.totalorder %s11, 1
    %p42 = por %p40, %p41
    %p43 = scmp.ne.s32.totalorder %s35, %s38
    %p44 = scmp.eq.s32.totalorder %s11, 0
    %p45 = por %p43, %p44
    %p46 = scmp.ne.s32.totalorder %s35, %s38
    %p47 = scmp.eq.s32.totalorder %s16, 1
    %p48 = por %p46, %p47
    %p49 = scmp.ne.s32.totalorder %s38, %s39
    %p50 = scmp.eq.s32.totalorder %s16, 0
    %p51 = por %p49, %p50
    %p52 = scmp.ne.s32.totalorder %s38, %s39
    %p53 = scmp.eq.s32.totalorder %s17, 1
    %p54 = por %p52, %p53
    %p56 = scmp.ne.s32.totalorder %s39, %s55
    %p57 = scmp.eq.s32.totalorder %s17, 0
    %p58 = por %p56, %p57
    %s59 = smul.u32 %s19, 16
    %s60 = ssub.s32 %s59, 1
    %p61 = scmp.gt.s32.totalorder %s60, 0
    %s62 = scalar_select %p61, %s60, 0
    %s63 = smul.u32 %s26, 16
    %s64 = ssub.s32 %s63, 1
    %p65 = scmp.gt.s32.totalorder %s64, 0
    %s66 = scalar_select %p65, %s64, 0
    %s67 = ssub.s32 %s18, %s30
    %s68 = ssub.s32 %s62, %s66
    %s69 = sor.u32 %s67, %s68
    %p70 = scmp.eq.s32.totalorder %s69, 0
    %s72 = sadd.s32 %s71, 1
    %s73 = scalar_select %p70, %s71, %s72
    %p76 = pneg %p70
    %p77 = scmp.eq.s32.totalorder %s11, 1
    %p78 = por %p76, %p77
    %p79 = scmp.ne.s32.totalorder %s71, %s74
    %p80 = scmp.eq.s32.totalorder %s11, 0
    %p81 = por %p79, %p80
    %p82 = scmp.ne.s32.totalorder %s71, %s74
    %p83 = scmp.eq.s32.totalorder %s16, 1
    %p84 = por %p82, %p83
    %p85 = scmp.ne.s32.totalorder %s74, %s75
    %p86 = scmp.eq.s32.totalorder %s16, 0
    %p87 = por %p85, %p86
    %p88 = scmp.ne.s32.totalorder %s74, %s75
    %p89 = scmp.eq.s32.totalorder %s17, 1
    %p90 = por %p88, %p89
    %p92 = scmp.ne.s32.totalorder %s75, %s91
    %p93 = scmp.eq.s32.totalorder %s17, 0
    %p94 = por %p92, %p93
    %s95 = sadd.s32 %s19, 1
    %s96 = smul.u32 %s95, 16
    %p97 = scmp.lt.s32.totalorder %s96, 15
    %s98 = scalar_select %p97, %s96, 15
    %s99 = sadd.s32 %s26, 1
    %s100 = smul.u32 %s99, 16
    %p101 = scmp.lt.s32.totalorder %s100, 15
    %s102 = scalar_select %p101, %s100, 15
    %s103 = ssub.s32 %s18, %s30
    %s104 = ssub.s32 %s98, %s102
    %s105 = sor.u32 %s103, %s104
    %p106 = scmp.eq.s32.totalorder %s105, 0
    %s108 = sadd.s32 %s107, 1
    %s109 = scalar_select %p106, %s107, %s108
    %p112 = pneg %p106
    %p113 = scmp.eq.s32.totalorder %s11, 1
    %p114 = por %p112, %p113
    %p115 = scmp.ne.s32.totalorder %s107, %s110
    %p116 = scmp.eq.s32.totalorder %s11, 0
    %p117 = por %p115, %p116
    %p118 = scmp.ne.s32.totalorder %s107, %s110
    %p119 = scmp.eq.s32.totalorder %s16, 1
    %p120 = por %p118, %p119
    %p121 = scmp.ne.s32.totalorder %s110, %s111
    %p122 = scmp.eq.s32.totalorder %s16, 0
    %p123 = por %p121, %p122
    %p124 = scmp.ne.s32.totalorder %s110, %s111
    %p125 = scmp.eq.s32.totalorder %s17, 1
    %p126 = por %p124, %p125
    %p128 = scmp.ne.s32.totalorder %s111, %s127
    %p129 = scmp.eq.s32.totalorder %s17, 0
    %p130 = por %p128, %p129
    %s132 = sadd.s32 %s131, 1
    %p135 = scmp.eq.s32.totalorder %s11, 1
    %p136 = scmp.ne.s32.totalorder %s131, %s133
    %p137 = scmp.eq.s32.totalorder %s11, 0
    %p138 = por %p136, %p137
    %p139 = scmp.ne.s32.totalorder %s131, %s133
    %p140 = scmp.eq.s32.totalorder %s16, 1
    %p141 = por %p139, %p140
    %p142 = scmp.ne.s32.totalorder %s133, %s134
    %p143 = scmp.eq.s32.totalorder %s16, 0
    %p144 = por %p142, %p143
    %p145 = scmp.ne.s32.totalorder %s133, %s134
    %p146 = scmp.eq.s32.totalorder %s17, 1
    %p147 = por %p145, %p146
    %p149 = scmp.ne.s32.totalorder %s134, %s148
    %p150 = scmp.eq.s32.totalorder %s17, 0
    %p151 = por %p149, %p150
    %s153 = sadd.s32 %s152, 1
    %p156 = scmp.eq.s32.totalorder %s11, 1
    %p157 = scmp.ne.s32.totalorder %s152, %s154
    %p158 = scmp.eq.s32.totalorder %s11, 0
    %p159 = por %p157, %p158
    %p160 = scmp.ne.s32.totalorder %s152, %s154
    %p161 = scmp.eq.s32.totalorder %s16, 1
    %p162 = por %p160, %p161
    %p163 = scmp.ne.s32.totalorder %s154, %s155
    %p164 = scmp.eq.s32.totalorder %s16, 0
    %p165 = por %p163, %p164
    %p166 = scmp.ne.s32.totalorder %s154, %s155
    %p167 = scmp.eq.s32.totalorder %s17, 1
    %p168 = por %p166, %p167
    %p170 = scmp.ne.s32.totalorder %s155, %s169
    %p171 = scmp.eq.s32.totalorder %s17, 0
    %p172 = por %p170, %p171
    %s173 = ssub.s32 %s18, %s30
    %s174 = ssub.s32 %s19, %s26
    %s175 = sor.u32 %s173, %s174
    %p176 = scmp.eq.s32.totalorder %s175, 0
    %s178 = sadd.s32 %s177, 1
    %s179 = scalar_select %p176, %s177, %s178
    %p182 = pneg %p176
    %p183 = scmp.eq.s32.totalorder %s11, 1
    %p184 = por %p182, %p183
    %p185 = scmp.ne.s32.totalorder %s177, %s180
    %p186 = scmp.eq.s32.totalorder %s11, 0
    %p187 = por %p185, %p186
    %p188 = scmp.ne.s32.totalorder %s177, %s180
    %p189 = scmp.eq.s32.totalorder %s16, 1
    %p190 = por %p188, %p189
    %p191 = scmp.ne.s32.totalorder %s180, %s181
    %p192 = scmp.eq.s32.totalorder %s16, 0
    %p193 = por %p191, %p192
    %p194 = scmp.ne.s32.totalorder %s180, %s181
    %p195 = scmp.eq.s32.totalorder %s17, 1
    %p196 = por %p194, %p195
    %p198 = scmp.ne.s32.totalorder %s181, %s197
    %p199 = scmp.eq.s32.totalorder %s17, 0
    %p200 = por %p198, %p199
    %p201 = scmp.le.s32.totalorder 1, %s11
    %p202 = scmp.lt.s32.totalorder %s11, 3
    %p203 = pnand %p201, %p202
    %p204 = pneg %p203
    // Predicated region
    $region9: #{tpu_custom_call.1} parent=5 // pred_check
      _
    $region10: #{tpu_custom_call.1} parent=5 // pred_check_branch
      %206 = sbr.rel (%p203) target = $region12
    $region11: #{tpu_custom_call.1} parent=5 // pred_region
      %s207 = ssub.s32 %s11, 1
      // Predicated region
      $region13: #{tpu_custom_call.1} parent=11 // pred_check
        %p208 = pneg %p144
      $region14: #{tpu_custom_call.1} parent=11 // pred_check_branch
        %210 = sbr.rel (%p208) target = $region16
      $region15: #{tpu_custom_call.1} parent=11 // pred_region
        _
      $region16: #{tpu_custom_call.1} parent=11 // pred_fallthru
        _
      // Predicated region
      $region17: #{tpu_custom_call.1} parent=11 // pred_check
        %p211 = pneg %p165
      $region18: #{tpu_custom_call.1} parent=11 // pred_check_branch
        %213 = sbr.rel (%p211) target = $region20
      $region19: #{tpu_custom_call.1} parent=11 // pred_region
        _
      $region20: #{tpu_custom_call.1} parent=11 // pred_fallthru
        _
    $region12: #{tpu_custom_call.1} parent=5 // pred_fallthru
      _
    %p214 = scmp.lt.s32.totalorder %s11, 2
    // Predicated region
    $region21: #{tpu_custom_call.1} parent=5 // pred_check
      %p215 = pneg %p214
    $region22: #{tpu_custom_call.1} parent=5 // pred_check_branch
      %217 = sbr.rel (%p215) target = $region24
    $region23: #{tpu_custom_call.1} parent=5 // pred_region
      // Predicated region
      $region25: #{tpu_custom_call.1} parent=23 // pred_check
        %p218 = pneg %p45
      $region26: #{tpu_custom_call.1} parent=23 // pred_check_branch
        %220 = sbr.rel (%p218) target = $region28
      $region27: #{tpu_custom_call.1} parent=23 // pred_region
        %s221 = smul.u32 16, %s19
        %p222 = scmp.lt.s32.totalorder %s18, 1
        %s223 = scalar_select %p222, %s18, 1
        %p224 = scmp.lt.s32.totalorder %s221, 15
        %s225 = scalar_select %p224, %s221, 15
        %s226 = smul.addr %s225, 2
        %s227 = smul.addr %s223, 32
        %s228 = sadd.s32 %s226, %s227
        %s229 = smul.addr %s228, 8
        %s230 = scalar_lea.vmem %s0, %s229
        %s231 = smul.u32 16, %s19
      $region28: #{tpu_custom_call.1} parent=23 // pred_fallthru
        _
      // Predicated region
      $region29: #{tpu_custom_call.1} parent=23 // pred_check
        %p232 = pneg %p81
      $region30: #{tpu_custom_call.1} parent=23 // pred_check_branch
        %234 = sbr.rel (%p232) target = $region32
      $region31: #{tpu_custom_call.1} parent=23 // pred_region
        %s235 = smul.u32 %s19, 16
        %s236 = ssub.s32 %s235, 1
        %p237 = scmp.gt.s32.totalorder %s236, 0
        %s238 = scalar_select %p237, %s236, 0
        %p239 = scmp.lt.s32.totalorder %s18, 1
        %s240 = scalar_select %p239, %s18, 1
        %p241 = scmp.lt.s32.totalorder %s238, 15
        %s242 = scalar_select %p241, %s238, 15
        %s243 = smul.addr %s242, 2
        %s244 = smul.addr %s240, 32
        %s245 = sadd.s32 %s243, %s244
        %s246 = smul.addr %s245, 8
        %s247 = scalar_lea.vmem %s1, %s246
        %s248 = smul.u32 %s19, 16
        %s249 = ssub.s32 %s248, 1
        %p250 = scmp.gt.s32.totalorder %s249, 0
        %s251 = scalar_select %p250, %s249, 0
      $region32: #{tpu_custom_call.1} parent=23 // pred_fallthru
        _
      // Predicated region
      $region33: #{tpu_custom_call.1} parent=23 // pred_check
        %p252 = pneg %p117
      $region34: #{tpu_custom_call.1} parent=23 // pred_check_branch
        %254 = sbr.rel (%p252) target = $region36
      $region35: #{tpu_custom_call.1} parent=23 // pred_region
        %s255 = sadd.s32 %s19, 1
        %s256 = smul.u32 %s255, 16
        %p257 = scmp.lt.s32.totalorder %s256, 15
        %s258 = scalar_select %p257, %s256, 15
        %p259 = scmp.lt.s32.totalorder %s18, 1
        %s260 = scalar_select %p259, %s18, 1
        %p261 = scmp.lt.s32.totalorder %s258, 15
        %s262 = scalar_select %p261, %s258, 15
        %s263 = smul.addr %s262, 2
        %s264 = smul.addr %s260, 32
        %s265 = sadd.s32 %s263, %s264
        %s266 = smul.addr %s265, 8
        %s267 = scalar_lea.vmem %s2, %s266
        %s268 = sadd.s32 %s19, 1
        %s269 = smul.u32 %s268, 16
        %p270 = scmp.lt.s32.totalorder %s269, 15
        %s271 = scalar_select %p270, %s269, 15
      $region36: #{tpu_custom_call.1} parent=23 // pred_fallthru
        _
    $region24: #{tpu_custom_call.1} parent=5 // pred_fallthru
      _
    %p272 = scmp.le.s32.totalorder 1, %s11
    %p273 = scmp.lt.s32.totalorder %s11, 3
    %p274 = pnand %p272, %p273
    %p275 = pneg %p274
    // Predicated region
    $region37: #{tpu_custom_call.1} parent=5 // pred_check
      _
    $region38: #{tpu_custom_call.1} parent=5 // pred_check_branch
      %277 = sbr.rel (%p274) target = $region40
    $region39: #{tpu_custom_call.1} parent=5 // pred_region
      %s278 = ssub.s32 %s11, 1
      %s279 = smul.u32 16, %s21
      %p280 = scmp.lt.s32.totalorder %s20, 1
      %s281 = scalar_select %p280, %s20, 1
      %p282 = scmp.lt.s32.totalorder %s279, 15
      %s283 = scalar_select %p282, %s279, 15
      %s284 = smul.addr %s283, 2
      %s285 = smul.addr %s281, 32
      %s286 = sadd.s32 %s284, %s285
      %s287 = smul.addr %s286, 8
      %s288 = scalar_lea.vmem %s0, %s287
      %p289 = pneg %p51
      %p290 = pneg %p48
      %s291 = smul.u32 %s21, 16
      %s292 = ssub.s32 %s291, 1
      %p293 = scmp.gt.s32.totalorder %s292, 0
      %s294 = scalar_select %p293, %s292, 0
      %p295 = scmp.lt.s32.totalorder %s20, 1
      %s296 = scalar_select %p295, %s20, 1
      %p297 = scmp.lt.s32.totalorder %s294, 15
      %s298 = scalar_select %p297, %s294, 15
      %s299 = smul.addr %s298, 2
      %s300 = smul.addr %s296, 32
      %s301 = sadd.s32 %s299, %s300
      %s302 = smul.addr %s301, 8
      %s303 = scalar_lea.vmem %s1, %s302
      %p304 = pneg %p87
      %p305 = pneg %p84
      %s306 = sadd.s32 %s21, 1
      %s307 = smul.u32 %s306, 16
      %p308 = scmp.lt.s32.totalorder %s307, 15
      %s309 = scalar_select %p308, %s307, 15
      %p310 = scmp.lt.s32.totalorder %s20, 1
      %s311 = scalar_select %p310, %s20, 1
      %p312 = scmp.lt.s32.totalorder %s309, 15
      %s313 = scalar_select %p312, %s309, 15
      %s314 = smul.addr %s313, 2
      %s315 = smul.addr %s311, 32
      %s316 = sadd.s32 %s314, %s315
      %s317 = smul.addr %s316, 8
      %s318 = scalar_lea.vmem %s2, %s317
      %p319 = pneg %p123
      %p320 = pneg %p120
      %p321 = pneg %p144
      %p322 = pneg %p141
      %p323 = pneg %p165
      %p324 = pneg %p162
      %p325 = pneg %p193
      %p326 = pneg %p190
      %s327 = smul.u32 16, %s21
      %p328 = scmp.lt.s32.totalorder %s20, 1
      %s329 = scalar_select %p328, %s20, 1
      %p330 = scmp.lt.s32.totalorder %s327, 15
      %s331 = scalar_select %p330, %s327, 15
      %s332 = smul.addr %s331, 4
      %s333 = smul.addr %s329, 64
      %s334 = sadd.s32 %s332, %s333
      %s335 = smul.addr %s334, 8
      %s336 = scalar_lea.vmem %s5, %s335
      %s337 = smul.u32 16, %s21
      %p338 = scmp.lt.s32.totalorder %s20, 1
      %s339 = scalar_select %p338, %s20, 1
      %p340 = scmp.lt.s32.totalorder %s337, 15
      %s341 = scalar_select %p340, %s337, 15
      %s342 = smul.addr %s341, 2
      %s343 = smul.addr %s339, 32
      %s344 = sadd.s32 %s342, %s343
      %s345 = smul.addr %s344, 8
      %s346 = scalar_lea.vmem %s0, %s345
      %s347 = smul.u32 16, %s21
      %s348 = smul.u32 %s21, 16
      %s349 = ssub.s32 %s348, 1
      %p350 = scmp.gt.s32.totalorder %s349, 0
      %s351 = scalar_select %p350, %s349, 0
      %p352 = scmp.lt.s32.totalorder %s20, 1
      %s353 = scalar_select %p352, %s20, 1
      %p354 = scmp.lt.s32.totalorder %s351, 15
      %s355 = scalar_select %p354, %s351, 15
      %s356 = smul.addr %s355, 2
      %s357 = smul.addr %s353, 32
      %s358 = sadd.s32 %s356, %s357
      %s359 = smul.addr %s358, 8
      %s360 = scalar_lea.vmem %s1, %s359
      %s361 = smul.u32 %s21, 16
      %s362 = ssub.s32 %s361, 1
      %p363 = scmp.gt.s32.totalorder %s362, 0
      %s364 = scalar_select %p363, %s362, 0
      %s365 = sadd.s32 %s21, 1
      %s366 = smul.u32 %s365, 16
      %p367 = scmp.lt.s32.totalorder %s366, 15
      %s368 = scalar_select %p367, %s366, 15
      %p369 = scmp.lt.s32.totalorder %s20, 1
      %s370 = scalar_select %p369, %s20, 1
      %p371 = scmp.lt.s32.totalorder %s368, 15
      %s372 = scalar_select %p371, %s368, 15
      %s373 = smul.addr %s372, 2
      %s374 = smul.addr %s370, 32
      %s375 = sadd.s32 %s373, %s374
      %s376 = smul.addr %s375, 8
      %s377 = scalar_lea.vmem %s2, %s376
      %s378 = sadd.s32 %s21, 1
      %s379 = smul.u32 %s378, 16
      %p380 = scmp.lt.s32.totalorder %s379, 15
      %s381 = scalar_select %p380, %s379, 15
      %s382 = smul.u32 16, %s21
      %p383 = scmp.lt.s32.totalorder %s20, 1
      %s384 = scalar_select %p383, %s20, 1
      %p385 = scmp.lt.s32.totalorder %s382, 15
      %s386 = scalar_select %p385, %s382, 15
      %s387 = smul.addr %s386, 4
      %s388 = smul.addr %s384, 64
      %s389 = sadd.s32 %s387, %s388
      %s390 = smul.addr %s389, 8
      %s391 = scalar_lea.vmem %s5, %s390
      %s392 = smul.u32 16, %s21
      %v393 = vld [vmem:[%s346] sm:$0xff]
      %v394 = vld [vmem:[%s346 + $0x8] sm:$0xff]
      %v395 = vld [vmem:[%s346 + $0x10] sm:$0xff]
      %v396 = vld [vmem:[%s346 + $0x18] sm:$0xff]
      %v397 = vld [vmem:[%s346 + $0x20] sm:$0xff]
      %v398 = vld [vmem:[%s346 + $0x28] sm:$0xff]
      %v399 = vld [vmem:[%s346 + $0x30] sm:$0xff]
      %v400 = vld [vmem:[%s346 + $0x38] sm:$0xff]
      %v401 = vld [vmem:[%s346 + $0x40] sm:$0xff]
      %v402 = vld [vmem:[%s346 + $0x48] sm:$0xff]
      %v403 = vld [vmem:[%s346 + $0x50] sm:$0xff]
      %v404 = vld [vmem:[%s346 + $0x58] sm:$0xff]
      %v405 = vld [vmem:[%s346 + $0x60] sm:$0xff]
      %v406 = vld [vmem:[%s346 + $0x68] sm:$0xff]
      %v407 = vld [vmem:[%s346 + $0x70] sm:$0xff]
      %v408 = vld [vmem:[%s346 + $0x78] sm:$0xff]
      %v409 = vld [vmem:[%s346 + $0x80] sm:$0xff]
      %v410 = vld [vmem:[%s346 + $0x88] sm:$0xff]
      %v411 = vld [vmem:[%s346 + $0x90] sm:$0xff]
      %v412 = vld [vmem:[%s346 + $0x98] sm:$0xff]
      %v413 = vld [vmem:[%s346 + $0xa0] sm:$0xff]
      %v414 = vld [vmem:[%s346 + $0xa8] sm:$0xff]
      %v415 = vld [vmem:[%s346 + $0xb0] sm:$0xff]
      %v416 = vld [vmem:[%s346 + $0xb8] sm:$0xff]
      %v417 = vld [vmem:[%s346 + $0xc0] sm:$0xff]
      %v418 = vld [vmem:[%s346 + $0xc8] sm:$0xff]
      %v419 = vld [vmem:[%s346 + $0xd0] sm:$0xff]
      %v420 = vld [vmem:[%s346 + $0xd8] sm:$0xff]
      %v421 = vld [vmem:[%s346 + $0xe0] sm:$0xff]
      %v422 = vld [vmem:[%s346 + $0xe8] sm:$0xff]
      %v423 = vld [vmem:[%s346 + $0xf0] sm:$0xff]
      %v424 = vld [vmem:[%s346 + $0xf8] sm:$0xff]
      %s425 = scalar_lea.vmem [#allocation2], 32
      %vm426 = vcmask 31744
      %427 = vst.msk [vmem:[%s425 + $0x8] sm:$0xff] %vm426, %v393
      %428 = vst.msk [vmem:[%s425 + $0x10] sm:$0xff] %vm426, %v394
      %429 = vst.msk [vmem:[%s425 + $0x28] sm:$0xff] %vm426, %v395
      %430 = vst.msk [vmem:[%s425 + $0x30] sm:$0xff] %vm426, %v396
      %431 = vst.msk [vmem:[%s425 + $0x48] sm:$0xff] %vm426, %v397
      %432 = vst.msk [vmem:[%s425 + $0x50] sm:$0xff] %vm426, %v398
      %433 = vst.msk [vmem:[%s425 + $0x68] sm:$0xff] %vm426, %v399
      %434 = vst.msk [vmem:[%s425 + $0x70] sm:$0xff] %vm426, %v400
      %435 = vst.msk [vmem:[%s425 + $0x88] sm:$0xff] %vm426, %v401
      %436 = vst.msk [vmem:[%s425 + $0x90] sm:$0xff] %vm426, %v402
      %437 = vst.msk [vmem:[%s425 + $0xa8] sm:$0xff] %vm426, %v403
      %438 = vst.msk [vmem:[%s425 + $0xb0] sm:$0xff] %vm426, %v404
      %439 = vst.msk [vmem:[%s425 + $0xc8] sm:$0xff] %vm426, %v405
      %440 = vst.msk [vmem:[%s425 + $0xd0] sm:$0xff] %vm426, %v406
      %441 = vst.msk [vmem:[%s425 + $0xe8] sm:$0xff] %vm426, %v407
      %442 = vst.msk [vmem:[%s425 + $0xf0] sm:$0xff] %vm426, %v408
      %443 = vst.msk [vmem:[%s425 + $0x108] sm:$0xff] %vm426, %v409
      %444 = vst.msk [vmem:[%s425 + $0x110] sm:$0xff] %vm426, %v410
      %445 = vst.msk [vmem:[%s425 + $0x128] sm:$0xff] %vm426, %v411
      %446 = vst.msk [vmem:[%s425 + $0x130] sm:$0xff] %vm426, %v412
      %447 = vst.msk [vmem:[%s425 + $0x148] sm:$0xff] %vm426, %v413
      %448 = vst.msk [vmem:[%s425 + $0x150] sm:$0xff] %vm426, %v414
      %449 = vst.msk [vmem:[%s425 + $0x168] sm:$0xff] %vm426, %v415
      %450 = vst.msk [vmem:[%s425 + $0x170] sm:$0xff] %vm426, %v416
      %451 = vst.msk [vmem:[%s425 + $0x188] sm:$0xff] %vm426, %v417
      %452 = vst.msk [vmem:[%s425 + $0x190] sm:$0xff] %vm426, %v418
      %453 = vst.msk [vmem:[%s425 + $0x1a8] sm:$0xff] %vm426, %v419
      %454 = vst.msk [vmem:[%s425 + $0x1b0] sm:$0xff] %vm426, %v420
      %455 = vst.msk [vmem:[%s425 + $0x1c8] sm:$0xff] %vm426, %v421
      %456 = vst.msk [vmem:[%s425 + $0x1d0] sm:$0xff] %vm426, %v422
      %457 = vst.msk [vmem:[%s425 + $0x1e8] sm:$0xff] %vm426, %v423
      %458 = vst.msk [vmem:[%s425 + $0x1f0] sm:$0xff] %vm426, %v424
      %v459 = vld [vmem:[%s360] sm:$0xff]
      %v460 = vld [vmem:[%s360 + $0x8] sm:$0xff]
      %v461 = vld [vmem:[%s377] sm:$0xff]
      %v462 = vld [vmem:[%s377 + $0x8] sm:$0xff]
      %p463 = scmp.eq.s32.totalorder %s21, 0
      %s464 = scalar_select %p463, 1, 0
      %v465 = vstv %s464
      %vm466 = vcmp.eq.s32.totalorder %v465, 1
      %v467 = vsel %vm466, 0.0, %v459
      %v468 = vsel %vm466, 0.0, %v460
      %469 = vst.msk [vmem:[#allocation2 + $0x8] sm:$0xff] %vm426, %v467
      %470 = vst.msk [vmem:[#allocation2 + $0x10] sm:$0xff] %vm426, %v468
      %v471 = vsel %vm466, 0.0, %v461
      %v472 = vsel %vm466, 0.0, %v462
      %s473 = scalar_lea.vmem [#allocation2], 544
      %474 = vst.msk [vmem:[%s473 + $0x8] sm:$0xff] %vm426, %v471
      %475 = vst.msk [vmem:[%s473 + $0x10] sm:$0xff] %vm426, %v472
      %v476 = vlaneseq
      %v477 = vshrl.u32 %v476, 7
      %v478 = vadd.s32 %v477, 8
      %v479 = vld [vmem:[#allocation2 + $0x7] sm:$0xff]
      %v480 = vld [vmem:[#allocation2 + $0xf] sm:$0xff]
      %v481 = vld [vmem:[#allocation2 + $0x27] sm:$0xff]
      %v482 = vld [vmem:[#allocation2 + $0x2f] sm:$0xff]
      %v483 = vld [vmem:[#allocation2 + $0x47] sm:$0xff]
      %v484 = vld [vmem:[#allocation2 + $0x4f] sm:$0xff]
      %v485 = vld [vmem:[#allocation2 + $0x67] sm:$0xff]
      %v486 = vld [vmem:[#allocation2 + $0x6f] sm:$0xff]
      %v487 = vld [vmem:[#allocation2 + $0x87] sm:$0xff]
      %v488 = vld [vmem:[#allocation2 + $0x8f] sm:$0xff]
      %v489 = vld [vmem:[#allocation2 + $0xa7] sm:$0xff]
      %v490 = vld [vmem:[#allocation2 + $0xaf] sm:$0xff]
      %v491 = vld [vmem:[#allocation2 + $0xc7] sm:$0xff]
      %v492 = vld [vmem:[#allocation2 + $0xcf] sm:$0xff]
      %v493 = vld [vmem:[#allocation2 + $0xe7] sm:$0xff]
      %v494 = vld [vmem:[#allocation2 + $0xef] sm:$0xff]
      %v495 = vld [vmem:[#allocation2 + $0x107] sm:$0xff]
      %v496 = vld [vmem:[#allocation2 + $0x10f] sm:$0xff]
      %v497 = vld [vmem:[#allocation2 + $0x127] sm:$0xff]
      %v498 = vld [vmem:[#allocation2 + $0x12f] sm:$0xff]
      %v499 = vld [vmem:[#allocation2 + $0x147] sm:$0xff]
      %v500 = vld [vmem:[#allocation2 + $0x14f] sm:$0xff]
      %v501 = vld [vmem:[#allocation2 + $0x167] sm:$0xff]
      %v502 = vld [vmem:[#allocation2 + $0x16f] sm:$0xff]
      %v503 = vld [vmem:[#allocation2 + $0x187] sm:$0xff]
      %v504 = vld [vmem:[#allocation2 + $0x18f] sm:$0xff]
      %v505 = vld [vmem:[#allocation2 + $0x1a7] sm:$0xff]
      %v506 = vld [vmem:[#allocation2 + $0x1af] sm:$0xff]
      %v507 = vld [vmem:[#allocation2 + $0x1c7] sm:$0xff]
      %v508 = vld [vmem:[#allocation2 + $0x1cf] sm:$0xff]
      %v509 = vld [vmem:[#allocation2 + $0x1e7] sm:$0xff]
      %v510 = vld [vmem:[#allocation2 + $0x1ef] sm:$0xff]
      %v511 = vld [vmem:[#allocation2 + $0x207] sm:$0xff]
      %v512 = vld [vmem:[#allocation2 + $0x20f] sm:$0xff]
      %v513 = vld [vmem:[#allocation2 + $0x227] sm:$0xff]
      %v514 = vld [vmem:[#allocation2 + $0x22f] sm:$0xff]
      %vm515 = vcmp.eq.s32.totalorder %v477, 0
      %vm516 = vcmp.eq.s32.totalorder %v478, 0
      %v517 = vsel %vm515, 1, 0
      %v518 = vsel %vm516, 1, 0
      %vm519 = vcmp.eq.s32.totalorder %v517, 1
      %vm520 = vcmp.eq.s32.totalorder %v518, 1
      %v521 = vsel %vm519, 0.0, %v479
      %v522 = vsel %vm520, 0.0, %v480
      %v523 = vsel %vm519, 0.0, %v481
      %v524 = vsel %vm520, 0.0, %v482
      %v525 = vsel %vm519, 0.0, %v483
      %v526 = vsel %vm520, 0.0, %v484
      %v527 = vsel %vm519, 0.0, %v485
      %v528 = vsel %vm520, 0.0, %v486
      %v529 = vsel %vm519, 0.0, %v487
      %v530 = vsel %vm520, 0.0, %v488
      %v531 = vsel %vm519, 0.0, %v489
      %v532 = vsel %vm520, 0.0, %v490
      %v533 = vsel %vm519, 0.0, %v491
      %v534 = vsel %vm520, 0.0, %v492
      %v535 = vsel %vm519, 0.0, %v493
      %v536 = vsel %vm520, 0.0, %v494
      %v537 = vsel %vm519, 0.0, %v495
      %v538 = vsel %vm520, 0.0, %v496
      %v539 = vsel %vm519, 0.0, %v497
      %v540 = vsel %vm520, 0.0, %v498
      %v541 = vsel %vm519, 0.0, %v499
      %v542 = vsel %vm520, 0.0, %v500
      %v543 = vsel %vm519, 0.0, %v501
      %v544 = vsel %vm520, 0.0, %v502
      %v545 = vsel %vm519, 0.0, %v503
      %v546 = vsel %vm520, 0.0, %v504
      %v547 = vsel %vm519, 0.0, %v505
      %v548 = vsel %vm520, 0.0, %v506
      %v549 = vsel %vm519, 0.0, %v507
      %v550 = vsel %vm520, 0.0, %v508
      %v551 = vsel %vm519, 0.0, %v509
      %v552 = vsel %vm520, 0.0, %v510
      %v553 = vsel %vm519, 0.0, %v511
      %v554 = vsel %vm520, 0.0, %v512
      %v555 = vsel %vm519, 0.0, %v513
      %v556 = vsel %vm520, 0.0, %v514
      %v557 = vld [vmem:[%s3] sm:$0xf]
      %v558 = vld [vmem:[%s3 + $0xc] sm:$0xf]
      %v560 = vsel %vm426, %v523, 0
      %v563 = vsel %vm426, %v524, 0
      %v566 = vsel %vm426, %v525, 0
      %v569 = vsel %vm426, %v526, 0
      %v572 = vsel %vm426, %v527, 0
      %v575 = vsel %vm426, %v528, 0
      %v578 = vsel %vm426, %v529, 0
      %v581 = vsel %vm426, %v530, 0
      %v584 = vsel %vm426, %v531, 0
      %v587 = vsel %vm426, %v532, 0
      %v590 = vsel %vm426, %v533, 0
      %v593 = vsel %vm426, %v534, 0
      %v596 = vsel %vm426, %v535, 0
      %v599 = vsel %vm426, %v536, 0
      %v602 = vsel %vm426, %v537, 0
      %v605 = vsel %vm426, %v538, 0
      %v608 = vsel %vm426, %v539, 0
      %v611 = vsel %vm426, %v540, 0
      %v614 = vsel %vm426, %v541, 0
      %v617 = vsel %vm426, %v542, 0
      %v620 = vsel %vm426, %v543, 0
      %v623 = vsel %vm426, %v544, 0
      %v626 = vsel %vm426, %v545, 0
      %v629 = vsel %vm426, %v546, 0
      %v632 = vsel %vm426, %v547, 0
      %v635 = vsel %vm426, %v548, 0
      %v638 = vsel %vm426, %v549, 0
      %v641 = vsel %vm426, %v550, 0
      %v644 = vsel %vm426, %v551, 0
      %v647 = vsel %vm426, %v552, 0
      %v650 = vsel %vm426, %v553, 0
      %v653 = vsel %vm426, %v554, 0
      %vm655 = vcmask 1043456
      %v657 = vsel %vm655, %v558, 0
      %659 = vmatprep.subr.mxu0 0.0
      %660 = vmatpush1.msra.mxu0 0.0
      %661 = vmatprep.subr.mxu0 0.0
      %662 = vmatpush1.msra.mxu0 0.0
      %663 = vmatprep.subr.mxu0 0.0
      %664 = vmatpush1.msra.mxu0 0.0
      %665 = vmatprep.subr.mxu0 0.0
      %666 = vmatpush1.msra.mxu0 0.0
      %667 = vmatprep.subr.mxu0 0.0
      %668 = vmatpush1.msra.mxu0 0.0
      %669 = vmatprep.subr.mxu0 0.0
      %670 = vmatpush1.msra.mxu0 0.0
      %671 = vmatprep.subr.mxu0 0.0
      %672 = vmatpush1.msra.mxu0 0.0
      %673 = vmatprep.subr.mxu0 0.0
      %674 = vmatpush1.msra.mxu0 0.0
      %675 = vmatprep.subr.mxu0 0.0
      %676 = vmatpush1.msra.mxu0 0.0
      %677 = vmatprep.subr.mxu0 0.0
      %678 = vmatpush1.msra.mxu0 0.0
      %679 = vmatprep.subr.mxu0 0.0
      %680 = vmatpush1.msra.mxu0 0.0
      %681 = vmatprep.subr.mxu0 0.0
      %682 = vmatpush1.msra.mxu0 0.0
      %683 = vmatprep.subr.mxu0 0.0
      %684 = vmatpush1.msra.mxu0 0.0
      %685 = vmatprep.subr.mxu0 0.0
      %686 = vmatpush1.msra.mxu0 0.0
      %687 = vmatprep.subr.mxu0 0.0
      %688 = vmatpush1.msra.mxu0 0.0
      %689 = vmatprep.subr.mxu0 0.0
      %690 = vmatpush1.msra.mxu0 %v657
      %691 = vmatprep.subr.mxu0 0.0
      %692 = vmatpush2.msra.mxu0 0.0
      %693 = vmatprep.subr.mxu0 0.0
      %694 = vmatpush2.msra.mxu0 0.0
      %695 = vmatprep.subr.mxu0 0.0
      %696 = vmatpush2.msra.mxu0 0.0
      %697 = vmatprep.subr.mxu0 0.0
      %698 = vmatpush2.msra.mxu0 0.0
      %699 = vmatprep.subr.mxu0 0.0
      %700 = vmatpush2.msra.mxu0 0.0
      %701 = vmatprep.subr.mxu0 0.0
      %702 = vmatpush2.msra.mxu0 0.0
      %703 = vmatprep.subr.mxu0 0.0
      %704 = vmatpush2.msra.mxu0 0.0
      %705 = vmatprep.subr.mxu0 0.0
      %706 = vmatpush2.msra.mxu0 0.0
      %707 = vmatprep.subr.mxu0 0.0
      %708 = vmatpush2.msra.mxu0 0.0
      %709 = vmatprep.subr.mxu0 0.0
      %710 = vmatpush2.msra.mxu0 0.0
      %711 = vmatprep.subr.mxu0 0.0
      %712 = vmatpush2.msra.mxu0 0.0
      %713 = vmatprep.subr.mxu0 0.0
      %714 = vmatpush2.msra.mxu0 0.0
      %715 = vmatprep.subr.mxu0 0.0
      %716 = vmatpush2.msra.mxu0 0.0
      %717 = vmatprep.subr.mxu0 0.0
      %718 = vmatpush2.msra.mxu0 0.0
      %719 = vmatprep.subr.mxu0 0.0
      %720 = vmatpush2.msra.mxu0 0.0
      %721 = vmatprep.subr.mxu0 0.0
      %722 = vmatpush2.msra.mxu0 0.0
      %723 = vmatprep.mubr.f32.mxu0 0.0
      %724 = vmatmul.mubr.f32.gmra.mxu0 %v560
      %v725 = vpop.f32.mrf.mxu0
      %v726 = vadd.f32 0.0, %v725
      %v727 = vpop.f32.mrf.mxu0
      %728 = vmatprep.mubr.f32.mxu0 0.0
      %729 = vmatmul.mubr.f32.gmra.mxu0 %v563
      %v730 = vpop.f32.mrf.mxu0
      %v731 = vadd.f32 0.0, %v730
      %v732 = vpop.f32.mrf.mxu0
      %733 = vmatprep.mubr.f32.mxu0 0.0
      %734 = vmatmul.mubr.f32.gmra.mxu0 %v566
      %v735 = vpop.f32.mrf.mxu0
      %v736 = vadd.f32 0.0, %v735
      %v737 = vpop.f32.mrf.mxu0
      %738 = vmatprep.mubr.f32.mxu0 0.0
      %739 = vmatmul.mubr.f32.gmra.mxu0 %v569
      %v740 = vpop.f32.mrf.mxu0
      %v741 = vadd.f32 0.0, %v740
      %v742 = vpop.f32.mrf.mxu0
      %743 = vmatprep.mubr.f32.mxu0 0.0
      %744 = vmatmul.mubr.f32.gmra.mxu0 %v572
      %v745 = vpop.f32.mrf.mxu0
      %v746 = vadd.f32 0.0, %v745
      %v747 = vpop.f32.mrf.mxu0
      %748 = vmatprep.mubr.f32.mxu0 0.0
      %749 = vmatmul.mubr.f32.gmra.mxu0 %v575
      %v750 = vpop.f32.mrf.mxu0
      %v751 = vadd.f32 0.0, %v750
      %v752 = vpop.f32.mrf.mxu0
      %753 = vmatprep.mubr.f32.mxu0 0.0
      %754 = vmatmul.mubr.f32.gmra.mxu0 %v578
      %v755 = vpop.f32.mrf.mxu0
      %v756 = vadd.f32 0.0, %v755
      %v757 = vpop.f32.mrf.mxu0
      %758 = vmatprep.mubr.f32.mxu0 0.0
      %759 = vmatmul.mubr.f32.gmra.mxu0 %v581
      %v760 = vpop.f32.mrf.mxu0
      %v761 = vadd.f32 0.0, %v760
      %v762 = vpop.f32.mrf.mxu0
      %763 = vmatprep.mubr.f32.mxu0 0.0
      %764 = vmatmul.mubr.f32.gmra.mxu0 %v584
      %v765 = vpop.f32.mrf.mxu0
      %v766 = vadd.f32 0.0, %v765
      %v767 = vpop.f32.mrf.mxu0
      %768 = vmatprep.mubr.f32.mxu0 0.0
      %769 = vmatmul.mubr.f32.gmra.mxu0 %v587
      %v770 = vpop.f32.mrf.mxu0
      %v771 = vadd.f32 0.0, %v770
      %v772 = vpop.f32.mrf.mxu0
      %773 = vmatprep.mubr.f32.mxu0 0.0
      %774 = vmatmul.mubr.f32.gmra.mxu0 %v590
      %v775 = vpop.f32.mrf.mxu0
      %v776 = vadd.f32 0.0, %v775
      %v777 = vpop.f32.mrf.mxu0
      %778 = vmatprep.mubr.f32.mxu0 0.0
      %779 = vmatmul.mubr.f32.gmra.mxu0 %v593
      %v780 = vpop.f32.mrf.mxu0
      %v781 = vadd.f32 0.0, %v780
      %v782 = vpop.f32.mrf.mxu0
      %783 = vmatprep.mubr.f32.mxu0 0.0
      %784 = vmatmul.mubr.f32.gmra.mxu0 %v596
      %v785 = vpop.f32.mrf.mxu0
      %v786 = vadd.f32 0.0, %v785
      %v787 = vpop.f32.mrf.mxu0
      %788 = vmatprep.mubr.f32.mxu0 0.0
      %789 = vmatmul.mubr.f32.gmra.mxu0 %v599
      %v790 = vpop.f32.mrf.mxu0
      %v791 = vadd.f32 0.0, %v790
      %v792 = vpop.f32.mrf.mxu0
      %793 = vmatprep.mubr.f32.mxu0 0.0
      %794 = vmatmul.mubr.f32.gmra.mxu0 %v602
      %v795 = vpop.f32.mrf.mxu0
      %v796 = vadd.f32 0.0, %v795
      %v797 = vpop.f32.mrf.mxu0
      %798 = vmatprep.mubr.f32.mxu0 0.0
      %799 = vmatmul.mubr.f32.gmra.mxu0 %v605
      %v800 = vpop.f32.mrf.mxu0
      %v801 = vadd.f32 0.0, %v800
      %v802 = vpop.f32.mrf.mxu0
      %803 = vmatprep.mubr.f32.mxu0 0.0
      %804 = vmatmul.mubr.f32.gmra.mxu0 %v608
      %v805 = vpop.f32.mrf.mxu0
      %v806 = vadd.f32 0.0, %v805
      %v807 = vpop.f32.mrf.mxu0
      %808 = vmatprep.mubr.f32.mxu0 0.0
      %809 = vmatmul.mubr.f32.gmra.mxu0 %v611
      %v810 = vpop.f32.mrf.mxu0
      %v811 = vadd.f32 0.0, %v810
      %v812 = vpop.f32.mrf.mxu0
      %813 = vmatprep.mubr.f32.mxu0 0.0
      %814 = vmatmul.mubr.f32.gmra.mxu0 %v614
      %v815 = vpop.f32.mrf.mxu0
      %v816 = vadd.f32 0.0, %v815
      %v817 = vpop.f32.mrf.mxu0
      %818 = vmatprep.mubr.f32.mxu0 0.0
      %819 = vmatmul.mubr.f32.gmra.mxu0 %v617
      %v820 = vpop.f32.mrf.mxu0
      %v821 = vadd.f32 0.0, %v820
      %v822 = vpop.f32.mrf.mxu0
      %823 = vmatprep.mubr.f32.mxu0 0.0
      %824 = vmatmul.mubr.f32.gmra.mxu0 %v620
      %v825 = vpop.f32.mrf.mxu0
      %v826 = vadd.f32 0.0, %v825
      %v827 = vpop.f32.mrf.mxu0
      %828 = vmatprep.mubr.f32.mxu0 0.0
      %829 = vmatmul.mubr.f32.gmra.mxu0 %v623
      %v830 = vpop.f32.mrf.mxu0
      %v831 = vadd.f32 0.0, %v830
      %v832 = vpop.f32.mrf.mxu0
      %833 = vmatprep.mubr.f32.mxu0 0.0
      %834 = vmatmul.mubr.f32.gmra.mxu0 %v626
      %v835 = vpop.f32.mrf.mxu0
      %v836 = vadd.f32 0.0, %v835
      %v837 = vpop.f32.mrf.mxu0
      %838 = vmatprep.mubr.f32.mxu0 0.0
      %839 = vmatmul.mubr.f32.gmra.mxu0 %v629
      %v840 = vpop.f32.mrf.mxu0
      %v841 = vadd.f32 0.0, %v840
      %v842 = vpop.f32.mrf.mxu0
      %843 = vmatprep.mubr.f32.mxu0 0.0
      %844 = vmatmul.mubr.f32.gmra.mxu0 %v632
      %v845 = vpop.f32.mrf.mxu0
      %v846 = vadd.f32 0.0, %v845
      %v847 = vpop.f32.mrf.mxu0
      %848 = vmatprep.mubr.f32.mxu0 0.0
      %849 = vmatmul.mubr.f32.gmra.mxu0 %v635
      %v850 = vpop.f32.mrf.mxu0
      %v851 = vadd.f32 0.0, %v850
      %v852 = vpop.f32.mrf.mxu0
      %853 = vmatprep.mubr.f32.mxu0 0.0
      %854 = vmatmul.mubr.f32.gmra.mxu0 %v638
      %v855 = vpop.f32.mrf.mxu0
      %v856 = vadd.f32 0.0, %v855
      %v857 = vpop.f32.mrf.mxu0
      %858 = vmatprep.mubr.f32.mxu0 0.0
      %859 = vmatmul.mubr.f32.gmra.mxu0 %v641
      %v860 = vpop.f32.mrf.mxu0
      %v861 = vadd.f32 0.0, %v860
      %v862 = vpop.f32.mrf.mxu0
      %863 = vmatprep.mubr.f32.mxu0 0.0
      %864 = vmatmul.mubr.f32.gmra.mxu0 %v644
      %v865 = vpop.f32.mrf.mxu0
      %v866 = vadd.f32 0.0, %v865
      %v867 = vpop.f32.mrf.mxu0
      %868 = vmatprep.mubr.f32.mxu0 0.0
      %869 = vmatmul.mubr.f32.gmra.mxu0 %v647
      %v870 = vpop.f32.mrf.mxu0
      %v871 = vadd.f32 0.0, %v870
      %v872 = vpop.f32.mrf.mxu0
      %873 = vmatprep.mubr.f32.mxu0 0.0
      %874 = vmatmul.mubr.f32.gmra.mxu0 %v650
      %v875 = vpop.f32.mrf.mxu0
      %v876 = vadd.f32 0.0, %v875
      %v877 = vpop.f32.mrf.mxu0
      %878 = vmatprep.mubr.f32.mxu0 0.0
      %879 = vmatmul.mubr.f32.gmra.mxu0 %v653
      %v880 = vpop.f32.mrf.mxu0
      %v881 = vadd.f32 0.0, %v880
      %v882 = vpop.f32.mrf.mxu0
      %883 = vdwg.mxu0
      %v885 = vsel %vm426, %v521, 0
      %v888 = vsel %vm426, %v522, 0
      %v891 = vsel %vm655, %v557, 0
      %893 = vmatprep.subr.mxu0 0.0
      %894 = vmatpush1.msra.mxu0 0.0
      %895 = vmatprep.subr.mxu0 0.0
      %896 = vmatpush1.msra.mxu0 0.0
      %897 = vmatprep.subr.mxu0 0.0
      %898 = vmatpush1.msra.mxu0 0.0
      %899 = vmatprep.subr.mxu0 0.0
      %900 = vmatpush1.msra.mxu0 0.0
      %901 = vmatprep.subr.mxu0 0.0
      %902 = vmatpush1.msra.mxu0 0.0
      %903 = vmatprep.subr.mxu0 0.0
      %904 = vmatpush1.msra.mxu0 0.0
      %905 = vmatprep.subr.mxu0 0.0
      %906 = vmatpush1.msra.mxu0 0.0
      %907 = vmatprep.subr.mxu0 0.0
      %908 = vmatpush1.msra.mxu0 0.0
      %909 = vmatprep.subr.mxu0 0.0
      %910 = vmatpush1.msra.mxu0 0.0
      %911 = vmatprep.subr.mxu0 0.0
      %912 = vmatpush1.msra.mxu0 0.0
      %913 = vmatprep.subr.mxu0 0.0
      %914 = vmatpush1.msra.mxu0 0.0
      %915 = vmatprep.subr.mxu0 0.0
      %916 = vmatpush1.msra.mxu0 0.0
      %917 = vmatprep.subr.mxu0 0.0
      %918 = vmatpush1.msra.mxu0 0.0
      %919 = vmatprep.subr.mxu0 0.0
      %920 = vmatpush1.msra.mxu0 0.0
      %921 = vmatprep.subr.mxu0 0.0
      %922 = vmatpush1.msra.mxu0 0.0
      %923 = vmatprep.subr.mxu0 0.0
      %924 = vmatpush1.msra.mxu0 %v891
      %925 = vmatprep.subr.mxu0 0.0
      %926 = vmatpush2.msra.mxu0 0.0
      %927 = vmatprep.subr.mxu0 0.0
      %928 = vmatpush2.msra.mxu0 0.0
      %929 = vmatprep.subr.mxu0 0.0
      %930 = vmatpush2.msra.mxu0 0.0
      %931 = vmatprep.subr.mxu0 0.0
      %932 = vmatpush2.msra.mxu0 0.0
      %933 = vmatprep.subr.mxu0 0.0
      %934 = vmatpush2.msra.mxu0 0.0
      %935 = vmatprep.subr.mxu0 0.0
      %936 = vmatpush2.msra.mxu0 0.0
      %937 = vmatprep.subr.mxu0 0.0
      %938 = vmatpush2.msra.mxu0 0.0
      %939 = vmatprep.subr.mxu0 0.0
      %940 = vmatpush2.msra.mxu0 0.0
      %941 = vmatprep.subr.mxu0 0.0
      %942 = vmatpush2.msra.mxu0 0.0
      %943 = vmatprep.subr.mxu0 0.0
      %944 = vmatpush2.msra.mxu0 0.0
      %945 = vmatprep.subr.mxu0 0.0
      %946 = vmatpush2.msra.mxu0 0.0
      %947 = vmatprep.subr.mxu0 0.0
      %948 = vmatpush2.msra.mxu0 0.0
      %949 = vmatprep.subr.mxu0 0.0
      %950 = vmatpush2.msra.mxu0 0.0
      %951 = vmatprep.subr.mxu0 0.0
      %952 = vmatpush2.msra.mxu0 0.0
      %953 = vmatprep.subr.mxu0 0.0
      %954 = vmatpush2.msra.mxu0 0.0
      %955 = vmatprep.subr.mxu0 0.0
      %956 = vmatpush2.msra.mxu0 0.0
      %957 = vmatprep.mubr.f32.mxu0 0.0
      %958 = vmatmul.mubr.f32.gmra.mxu0 %v885
      %v959 = vpop.f32.mrf.mxu0
      %v960 = vadd.f32 %v726, %v959
      %v961 = vpop.f32.mrf.mxu0
      %962 = vmatprep.mubr.f32.mxu0 0.0
      %963 = vmatmul.mubr.f32.gmra.mxu0 %v888
      %v964 = vpop.f32.mrf.mxu0
      %v965 = vadd.f32 %v731, %v964
      %v966 = vpop.f32.mrf.mxu0
      %967 = vmatprep.mubr.f32.mxu0 0.0
      %968 = vmatmul.mubr.f32.gmra.mxu0 %v560
      %v969 = vpop.f32.mrf.mxu0
      %v970 = vadd.f32 %v736, %v969
      %v971 = vpop.f32.mrf.mxu0
      %972 = vmatprep.mubr.f32.mxu0 0.0
      %973 = vmatmul.mubr.f32.gmra.mxu0 %v563
      %v974 = vpop.f32.mrf.mxu0
      %v975 = vadd.f32 %v741, %v974
      %v976 = vpop.f32.mrf.mxu0
      %977 = vmatprep.mubr.f32.mxu0 0.0
      %978 = vmatmul.mubr.f32.gmra.mxu0 %v566
      %v979 = vpop.f32.mrf.mxu0
      %v980 = vadd.f32 %v746, %v979
      %v981 = vpop.f32.mrf.mxu0
      %982 = vmatprep.mubr.f32.mxu0 0.0
      %983 = vmatmul.mubr.f32.gmra.mxu0 %v569
      %v984 = vpop.f32.mrf.mxu0
      %v985 = vadd.f32 %v751, %v984
      %v986 = vpop.f32.mrf.mxu0
      %987 = vmatprep.mubr.f32.mxu0 0.0
      %988 = vmatmul.mubr.f32.gmra.mxu0 %v572
      %v989 = vpop.f32.mrf.mxu0
      %v990 = vadd.f32 %v756, %v989
      %v991 = vpop.f32.mrf.mxu0
      %992 = vmatprep.mubr.f32.mxu0 0.0
      %993 = vmatmul.mubr.f32.gmra.mxu0 %v575
      %v994 = vpop.f32.mrf.mxu0
      %v995 = vadd.f32 %v761, %v994
      %v996 = vpop.f32.mrf.mxu0
      %997 = vmatprep.mubr.f32.mxu0 0.0
      %998 = vmatmul.mubr.f32.gmra.mxu0 %v578
      %v999 = vpop.f32.mrf.mxu0
      %v1000 = vadd.f32 %v766, %v999
      %v1001 = vpop.f32.mrf.mxu0
      %1002 = vmatprep.mubr.f32.mxu0 0.0
      %1003 = vmatmul.mubr.f32.gmra.mxu0 %v581
      %v1004 = vpop.f32.mrf.mxu0
      %v1005 = vadd.f32 %v771, %v1004
      %v1006 = vpop.f32.mrf.mxu0
      %1007 = vmatprep.mubr.f32.mxu0 0.0
      %1008 = vmatmul.mubr.f32.gmra.mxu0 %v584
      %v1009 = vpop.f32.mrf.mxu0
      %v1010 = vadd.f32 %v776, %v1009
      %v1011 = vpop.f32.mrf.mxu0
      %1012 = vmatprep.mubr.f32.mxu0 0.0
      %1013 = vmatmul.mubr.f32.gmra.mxu0 %v587
      %v1014 = vpop.f32.mrf.mxu0
      %v1015 = vadd.f32 %v781, %v1014
      %v1016 = vpop.f32.mrf.mxu0
      %1017 = vmatprep.mubr.f32.mxu0 0.0
      %1018 = vmatmul.mubr.f32.gmra.mxu0 %v590
      %v1019 = vpop.f32.mrf.mxu0
      %v1020 = vadd.f32 %v786, %v1019
      %v1021 = vpop.f32.mrf.mxu0
      %1022 = vmatprep.mubr.f32.mxu0 0.0
      %1023 = vmatmul.mubr.f32.gmra.mxu0 %v593
      %v1024 = vpop.f32.mrf.mxu0
      %v1025 = vadd.f32 %v791, %v1024
      %v1026 = vpop.f32.mrf.mxu0
      %1027 = vmatprep.mubr.f32.mxu0 0.0
      %1028 = vmatmul.mubr.f32.gmra.mxu0 %v596
      %v1029 = vpop.f32.mrf.mxu0
      %v1030 = vadd.f32 %v796, %v1029
      %v1031 = vpop.f32.mrf.mxu0
      %1032 = vmatprep.mubr.f32.mxu0 0.0
      %1033 = vmatmul.mubr.f32.gmra.mxu0 %v599
      %v1034 = vpop.f32.mrf.mxu0
      %v1035 = vadd.f32 %v801, %v1034
      %v1036 = vpop.f32.mrf.mxu0
      %1037 = vmatprep.mubr.f32.mxu0 0.0
      %1038 = vmatmul.mubr.f32.gmra.mxu0 %v602
      %v1039 = vpop.f32.mrf.mxu0
      %v1040 = vadd.f32 %v806, %v1039
      %v1041 = vpop.f32.mrf.mxu0
      %1042 = vmatprep.mubr.f32.mxu0 0.0
      %1043 = vmatmul.mubr.f32.gmra.mxu0 %v605
      %v1044 = vpop.f32.mrf.mxu0
      %v1045 = vadd.f32 %v811, %v1044
      %v1046 = vpop.f32.mrf.mxu0
      %1047 = vmatprep.mubr.f32.mxu0 0.0
      %1048 = vmatmul.mubr.f32.gmra.mxu0 %v608
      %v1049 = vpop.f32.mrf.mxu0
      %v1050 = vadd.f32 %v816, %v1049
      %v1051 = vpop.f32.mrf.mxu0
      %1052 = vmatprep.mubr.f32.mxu0 0.0
      %1053 = vmatmul.mubr.f32.gmra.mxu0 %v611
      %v1054 = vpop.f32.mrf.mxu0
      %v1055 = vadd.f32 %v821, %v1054
      %v1056 = vpop.f32.mrf.mxu0
      %1057 = vmatprep.mubr.f32.mxu0 0.0
      %1058 = vmatmul.mubr.f32.gmra.mxu0 %v614
      %v1059 = vpop.f32.mrf.mxu0
      %v1060 = vadd.f32 %v826, %v1059
      %v1061 = vpop.f32.mrf.mxu0
      %1062 = vmatprep.mubr.f32.mxu0 0.0
      %1063 = vmatmul.mubr.f32.gmra.mxu0 %v617
      %v1064 = vpop.f32.mrf.mxu0
      %v1065 = vadd.f32 %v831, %v1064
      %v1066 = vpop.f32.mrf.mxu0
      %1067 = vmatprep.mubr.f32.mxu0 0.0
      %1068 = vmatmul.mubr.f32.gmra.mxu0 %v620
      %v1069 = vpop.f32.mrf.mxu0
      %v1070 = vadd.f32 %v836, %v1069
      %v1071 = vpop.f32.mrf.mxu0
      %1072 = vmatprep.mubr.f32.mxu0 0.0
      %1073 = vmatmul.mubr.f32.gmra.mxu0 %v623
      %v1074 = vpop.f32.mrf.mxu0
      %v1075 = vadd.f32 %v841, %v1074
      %v1076 = vpop.f32.mrf.mxu0
      %1077 = vmatprep.mubr.f32.mxu0 0.0
      %1078 = vmatmul.mubr.f32.gmra.mxu0 %v626
      %v1079 = vpop.f32.mrf.mxu0
      %v1080 = vadd.f32 %v846, %v1079
      %v1081 = vpop.f32.mrf.mxu0
      %1082 = vmatprep.mubr.f32.mxu0 0.0
      %1083 = vmatmul.mubr.f32.gmra.mxu0 %v629
      %v1084 = vpop.f32.mrf.mxu0
      %v1085 = vadd.f32 %v851, %v1084
      %v1086 = vpop.f32.mrf.mxu0
      %1087 = vmatprep.mubr.f32.mxu0 0.0
      %1088 = vmatmul.mubr.f32.gmra.mxu0 %v632
      %v1089 = vpop.f32.mrf.mxu0
      %v1090 = vadd.f32 %v856, %v1089
      %v1091 = vpop.f32.mrf.mxu0
      %1092 = vmatprep.mubr.f32.mxu0 0.0
      %1093 = vmatmul.mubr.f32.gmra.mxu0 %v635
      %v1094 = vpop.f32.mrf.mxu0
      %v1095 = vadd.f32 %v861, %v1094
      %v1096 = vpop.f32.mrf.mxu0
      %1097 = vmatprep.mubr.f32.mxu0 0.0
      %1098 = vmatmul.mubr.f32.gmra.mxu0 %v638
      %v1099 = vpop.f32.mrf.mxu0
      %v1100 = vadd.f32 %v866, %v1099
      %v1101 = vpop.f32.mrf.mxu0
      %1102 = vmatprep.mubr.f32.mxu0 0.0
      %1103 = vmatmul.mubr.f32.gmra.mxu0 %v641
      %v1104 = vpop.f32.mrf.mxu0
      %v1105 = vadd.f32 %v871, %v1104
      %v1106 = vpop.f32.mrf.mxu0
      %1107 = vmatprep.mubr.f32.mxu0 0.0
      %1108 = vmatmul.mubr.f32.gmra.mxu0 %v644
      %v1109 = vpop.f32.mrf.mxu0
      %v1110 = vadd.f32 %v876, %v1109
      %v1111 = vpop.f32.mrf.mxu0
      %1112 = vmatprep.mubr.f32.mxu0 0.0
      %1113 = vmatmul.mubr.f32.gmra.mxu0 %v647
      %v1114 = vpop.f32.mrf.mxu0
      %v1115 = vadd.f32 %v881, %v1114
      %v1116 = vpop.f32.mrf.mxu0
      %1117 = vdwg.mxu0
      %v1118 = vld [vmem:[%s3 + $0x18] sm:$0xf]
      %v1120 = vsel %vm426, %v555, 0
      %v1123 = vsel %vm426, %v556, 0
      %v1126 = vsel %vm655, %v1118, 0
      %1128 = vmatprep.subr.mxu0 0.0
      %1129 = vmatpush1.msra.mxu0 0.0
      %1130 = vmatprep.subr.mxu0 0.0
      %1131 = vmatpush1.msra.mxu0 0.0
      %1132 = vmatprep.subr.mxu0 0.0
      %1133 = vmatpush1.msra.mxu0 0.0
      %1134 = vmatprep.subr.mxu0 0.0
      %1135 = vmatpush1.msra.mxu0 0.0
      %1136 = vmatprep.subr.mxu0 0.0
      %1137 = vmatpush1.msra.mxu0 0.0
      %1138 = vmatprep.subr.mxu0 0.0
      %1139 = vmatpush1.msra.mxu0 0.0
      %1140 = vmatprep.subr.mxu0 0.0
      %1141 = vmatpush1.msra.mxu0 0.0
      %1142 = vmatprep.subr.mxu0 0.0
      %1143 = vmatpush1.msra.mxu0 0.0
      %1144 = vmatprep.subr.mxu0 0.0
      %1145 = vmatpush1.msra.mxu0 0.0
      %1146 = vmatprep.subr.mxu0 0.0
      %1147 = vmatpush1.msra.mxu0 0.0
      %1148 = vmatprep.subr.mxu0 0.0
      %1149 = vmatpush1.msra.mxu0 0.0
      %1150 = vmatprep.subr.mxu0 0.0
      %1151 = vmatpush1.msra.mxu0 0.0
      %1152 = vmatprep.subr.mxu0 0.0
      %1153 = vmatpush1.msra.mxu0 0.0
      %1154 = vmatprep.subr.mxu0 0.0
      %1155 = vmatpush1.msra.mxu0 0.0
      %1156 = vmatprep.subr.mxu0 0.0
      %1157 = vmatpush1.msra.mxu0 0.0
      %1158 = vmatprep.subr.mxu0 0.0
      %1159 = vmatpush1.msra.mxu0 %v1126
      %1160 = vmatprep.subr.mxu0 0.0
      %1161 = vmatpush2.msra.mxu0 0.0
      %1162 = vmatprep.subr.mxu0 0.0
      %1163 = vmatpush2.msra.mxu0 0.0
      %1164 = vmatprep.subr.mxu0 0.0
      %1165 = vmatpush2.msra.mxu0 0.0
      %1166 = vmatprep.subr.mxu0 0.0
      %1167 = vmatpush2.msra.mxu0 0.0
      %1168 = vmatprep.subr.mxu0 0.0
      %1169 = vmatpush2.msra.mxu0 0.0
      %1170 = vmatprep.subr.mxu0 0.0
      %1171 = vmatpush2.msra.mxu0 0.0
      %1172 = vmatprep.subr.mxu0 0.0
      %1173 = vmatpush2.msra.mxu0 0.0
      %1174 = vmatprep.subr.mxu0 0.0
      %1175 = vmatpush2.msra.mxu0 0.0
      %1176 = vmatprep.subr.mxu0 0.0
      %1177 = vmatpush2.msra.mxu0 0.0
      %1178 = vmatprep.subr.mxu0 0.0
      %1179 = vmatpush2.msra.mxu0 0.0
      %1180 = vmatprep.subr.mxu0 0.0
      %1181 = vmatpush2.msra.mxu0 0.0
      %1182 = vmatprep.subr.mxu0 0.0
      %1183 = vmatpush2.msra.mxu0 0.0
      %1184 = vmatprep.subr.mxu0 0.0
      %1185 = vmatpush2.msra.mxu0 0.0
      %1186 = vmatprep.subr.mxu0 0.0
      %1187 = vmatpush2.msra.mxu0 0.0
      %1188 = vmatprep.subr.mxu0 0.0
      %1189 = vmatpush2.msra.mxu0 0.0
      %1190 = vmatprep.subr.mxu0 0.0
      %1191 = vmatpush2.msra.mxu0 0.0
      %1192 = vmatprep.mubr.f32.mxu0 0.0
      %1193 = vmatmul.mubr.f32.gmra.mxu0 %v566
      %v1194 = vpop.f32.mrf.mxu0
      %v1195 = vadd.f32 0.0, %v1194
      %v1196 = vpop.f32.mrf.mxu0
      %1197 = vmatprep.mubr.f32.mxu0 0.0
      %1198 = vmatmul.mubr.f32.gmra.mxu0 %v569
      %v1199 = vpop.f32.mrf.mxu0
      %v1200 = vadd.f32 0.0, %v1199
      %v1201 = vpop.f32.mrf.mxu0
      %1202 = vmatprep.mubr.f32.mxu0 0.0
      %1203 = vmatmul.mubr.f32.gmra.mxu0 %v572
      %v1204 = vpop.f32.mrf.mxu0
      %v1205 = vadd.f32 0.0, %v1204
      %v1206 = vpop.f32.mrf.mxu0
      %1207 = vmatprep.mubr.f32.mxu0 0.0
      %1208 = vmatmul.mubr.f32.gmra.mxu0 %v575
      %v1209 = vpop.f32.mrf.mxu0
      %v1210 = vadd.f32 0.0, %v1209
      %v1211 = vpop.f32.mrf.mxu0
      %1212 = vmatprep.mubr.f32.mxu0 0.0
      %1213 = vmatmul.mubr.f32.gmra.mxu0 %v578
      %v1214 = vpop.f32.mrf.mxu0
      %v1215 = vadd.f32 0.0, %v1214
      %v1216 = vpop.f32.mrf.mxu0
      %1217 = vmatprep.mubr.f32.mxu0 0.0
      %1218 = vmatmul.mubr.f32.gmra.mxu0 %v581
      %v1219 = vpop.f32.mrf.mxu0
      %v1220 = vadd.f32 0.0, %v1219
      %v1221 = vpop.f32.mrf.mxu0
      %1222 = vmatprep.mubr.f32.mxu0 0.0
      %1223 = vmatmul.mubr.f32.gmra.mxu0 %v584
      %v1224 = vpop.f32.mrf.mxu0
      %v1225 = vadd.f32 0.0, %v1224
      %v1226 = vpop.f32.mrf.mxu0
      %1227 = vmatprep.mubr.f32.mxu0 0.0
      %1228 = vmatmul.mubr.f32.gmra.mxu0 %v587
      %v1229 = vpop.f32.mrf.mxu0
      %v1230 = vadd.f32 0.0, %v1229
      %v1231 = vpop.f32.mrf.mxu0
      %1232 = vmatprep.mubr.f32.mxu0 0.0
      %1233 = vmatmul.mubr.f32.gmra.mxu0 %v590
      %v1234 = vpop.f32.mrf.mxu0
      %v1235 = vadd.f32 0.0, %v1234
      %v1236 = vpop.f32.mrf.mxu0
      %1237 = vmatprep.mubr.f32.mxu0 0.0
      %1238 = vmatmul.mubr.f32.gmra.mxu0 %v593
      %v1239 = vpop.f32.mrf.mxu0
      %v1240 = vadd.f32 0.0, %v1239
      %v1241 = vpop.f32.mrf.mxu0
      %1242 = vmatprep.mubr.f32.mxu0 0.0
      %1243 = vmatmul.mubr.f32.gmra.mxu0 %v596
      %v1244 = vpop.f32.mrf.mxu0
      %v1245 = vadd.f32 0.0, %v1244
      %v1246 = vpop.f32.mrf.mxu0
      %1247 = vmatprep.mubr.f32.mxu0 0.0
      %1248 = vmatmul.mubr.f32.gmra.mxu0 %v599
      %v1249 = vpop.f32.mrf.mxu0
      %v1250 = vadd.f32 0.0, %v1249
      %v1251 = vpop.f32.mrf.mxu0
      %1252 = vmatprep.mubr.f32.mxu0 0.0
      %1253 = vmatmul.mubr.f32.gmra.mxu0 %v602
      %v1254 = vpop.f32.mrf.mxu0
      %v1255 = vadd.f32 0.0, %v1254
      %v1256 = vpop.f32.mrf.mxu0
      %1257 = vmatprep.mubr.f32.mxu0 0.0
      %1258 = vmatmul.mubr.f32.gmra.mxu0 %v605
      %v1259 = vpop.f32.mrf.mxu0
      %v1260 = vadd.f32 0.0, %v1259
      %v1261 = vpop.f32.mrf.mxu0
      %1262 = vmatprep.mubr.f32.mxu0 0.0
      %1263 = vmatmul.mubr.f32.gmra.mxu0 %v608
      %v1264 = vpop.f32.mrf.mxu0
      %v1265 = vadd.f32 0.0, %v1264
      %v1266 = vpop.f32.mrf.mxu0
      %1267 = vmatprep.mubr.f32.mxu0 0.0
      %1268 = vmatmul.mubr.f32.gmra.mxu0 %v611
      %v1269 = vpop.f32.mrf.mxu0
      %v1270 = vadd.f32 0.0, %v1269
      %v1271 = vpop.f32.mrf.mxu0
      %1272 = vmatprep.mubr.f32.mxu0 0.0
      %1273 = vmatmul.mubr.f32.gmra.mxu0 %v614
      %v1274 = vpop.f32.mrf.mxu0
      %v1275 = vadd.f32 0.0, %v1274
      %v1276 = vpop.f32.mrf.mxu0
      %1277 = vmatprep.mubr.f32.mxu0 0.0
      %1278 = vmatmul.mubr.f32.gmra.mxu0 %v617
      %v1279 = vpop.f32.mrf.mxu0
      %v1280 = vadd.f32 0.0, %v1279
      %v1281 = vpop.f32.mrf.mxu0
      %1282 = vmatprep.mubr.f32.mxu0 0.0
      %1283 = vmatmul.mubr.f32.gmra.mxu0 %v620
      %v1284 = vpop.f32.mrf.mxu0
      %v1285 = vadd.f32 0.0, %v1284
      %v1286 = vpop.f32.mrf.mxu0
      %1287 = vmatprep.mubr.f32.mxu0 0.0
      %1288 = vmatmul.mubr.f32.gmra.mxu0 %v623
      %v1289 = vpop.f32.mrf.mxu0
      %v1290 = vadd.f32 0.0, %v1289
      %v1291 = vpop.f32.mrf.mxu0
      %1292 = vmatprep.mubr.f32.mxu0 0.0
      %1293 = vmatmul.mubr.f32.gmra.mxu0 %v626
      %v1294 = vpop.f32.mrf.mxu0
      %v1295 = vadd.f32 0.0, %v1294
      %v1296 = vpop.f32.mrf.mxu0
      %1297 = vmatprep.mubr.f32.mxu0 0.0
      %1298 = vmatmul.mubr.f32.gmra.mxu0 %v629
      %v1299 = vpop.f32.mrf.mxu0
      %v1300 = vadd.f32 0.0, %v1299
      %v1301 = vpop.f32.mrf.mxu0
      %1302 = vmatprep.mubr.f32.mxu0 0.0
      %1303 = vmatmul.mubr.f32.gmra.mxu0 %v632
      %v1304 = vpop.f32.mrf.mxu0
      %v1305 = vadd.f32 0.0, %v1304
      %v1306 = vpop.f32.mrf.mxu0
      %1307 = vmatprep.mubr.f32.mxu0 0.0
      %1308 = vmatmul.mubr.f32.gmra.mxu0 %v635
      %v1309 = vpop.f32.mrf.mxu0
      %v1310 = vadd.f32 0.0, %v1309
      %v1311 = vpop.f32.mrf.mxu0
      %1312 = vmatprep.mubr.f32.mxu0 0.0
      %1313 = vmatmul.mubr.f32.gmra.mxu0 %v638
      %v1314 = vpop.f32.mrf.mxu0
      %v1315 = vadd.f32 0.0, %v1314
      %v1316 = vpop.f32.mrf.mxu0
      %1317 = vmatprep.mubr.f32.mxu0 0.0
      %1318 = vmatmul.mubr.f32.gmra.mxu0 %v641
      %v1319 = vpop.f32.mrf.mxu0
      %v1320 = vadd.f32 0.0, %v1319
      %v1321 = vpop.f32.mrf.mxu0
      %1322 = vmatprep.mubr.f32.mxu0 0.0
      %1323 = vmatmul.mubr.f32.gmra.mxu0 %v644
      %v1324 = vpop.f32.mrf.mxu0
      %v1325 = vadd.f32 0.0, %v1324
      %v1326 = vpop.f32.mrf.mxu0
      %1327 = vmatprep.mubr.f32.mxu0 0.0
      %1328 = vmatmul.mubr.f32.gmra.mxu0 %v647
      %v1329 = vpop.f32.mrf.mxu0
      %v1330 = vadd.f32 0.0, %v1329
      %v1331 = vpop.f32.mrf.mxu0
      %1332 = vmatprep.mubr.f32.mxu0 0.0
      %1333 = vmatmul.mubr.f32.gmra.mxu0 %v650
      %v1334 = vpop.f32.mrf.mxu0
      %v1335 = vadd.f32 0.0, %v1334
      %v1336 = vpop.f32.mrf.mxu0
      %1337 = vmatprep.mubr.f32.mxu0 0.0
      %1338 = vmatmul.mubr.f32.gmra.mxu0 %v653
      %v1339 = vpop.f32.mrf.mxu0
      %v1340 = vadd.f32 0.0, %v1339
      %v1341 = vpop.f32.mrf.mxu0
      %1342 = vmatprep.mubr.f32.mxu0 0.0
      %1343 = vmatmul.mubr.f32.gmra.mxu0 %v1120
      %v1344 = vpop.f32.mrf.mxu0
      %v1345 = vadd.f32 0.0, %v1344
      %v1346 = vpop.f32.mrf.mxu0
      %1347 = vmatprep.mubr.f32.mxu0 0.0
      %1348 = vmatmul.mubr.f32.gmra.mxu0 %v1123
      %v1349 = vpop.f32.mrf.mxu0
      %v1350 = vadd.f32 0.0, %v1349
      %v1351 = vpop.f32.mrf.mxu0
      %1352 = vdwg.mxu0
      %v1353 = vadd.f32 %v960, %v1195
      %v1354 = vadd.f32 %v965, %v1200
      %v1355 = vadd.f32 %v970, %v1205
      %v1356 = vadd.f32 %v975, %v1210
      %v1357 = vadd.f32 %v980, %v1215
      %v1358 = vadd.f32 %v985, %v1220
      %v1359 = vadd.f32 %v990, %v1225
      %v1360 = vadd.f32 %v995, %v1230
      %v1361 = vadd.f32 %v1000, %v1235
      %v1362 = vadd.f32 %v1005, %v1240
      %v1363 = vadd.f32 %v1010, %v1245
      %v1364 = vadd.f32 %v1015, %v1250
      %v1365 = vadd.f32 %v1020, %v1255
      %v1366 = vadd.f32 %v1025, %v1260
      %v1367 = vadd.f32 %v1030, %v1265
      %v1368 = vadd.f32 %v1035, %v1270
      %v1369 = vadd.f32 %v1040, %v1275
      %v1370 = vadd.f32 %v1045, %v1280
      %v1371 = vadd.f32 %v1050, %v1285
      %v1372 = vadd.f32 %v1055, %v1290
      %v1373 = vadd.f32 %v1060, %v1295
      %v1374 = vadd.f32 %v1065, %v1300
      %v1375 = vadd.f32 %v1070, %v1305
      %v1376 = vadd.f32 %v1075, %v1310
      %v1377 = vadd.f32 %v1080, %v1315
      %v1378 = vadd.f32 %v1085, %v1320
      %v1379 = vadd.f32 %v1090, %v1325
      %v1380 = vadd.f32 %v1095, %v1330
      %v1381 = vadd.f32 %v1100, %v1335
      %v1382 = vadd.f32 %v1105, %v1340
      %v1383 = vadd.f32 %v1110, %v1345
      %v1384 = vadd.f32 %v1115, %v1350
      %v1385 = vld [vmem:[#allocation2 + $0x8] sm:$0xff]
      %v1386 = vld [vmem:[#allocation2 + $0x10] sm:$0xff]
      %v1387 = vld [vmem:[#allocation2 + $0x28] sm:$0xff]
      %v1388 = vld [vmem:[#allocation2 + $0x30] sm:$0xff]
      %v1389 = vld [vmem:[#allocation2 + $0x48] sm:$0xff]
      %v1390 = vld [vmem:[#allocation2 + $0x50] sm:$0xff]
      %v1391 = vld [vmem:[#allocation2 + $0x68] sm:$0xff]
      %v1392 = vld [vmem:[#allocation2 + $0x70] sm:$0xff]
      %v1393 = vld [vmem:[#allocation2 + $0x88] sm:$0xff]
      %v1394 = vld [vmem:[#allocation2 + $0x90] sm:$0xff]
      %v1395 = vld [vmem:[#allocation2 + $0xa8] sm:$0xff]
      %v1396 = vld [vmem:[#allocation2 + $0xb0] sm:$0xff]
      %v1397 = vld [vmem:[#allocation2 + $0xc8] sm:$0xff]
      %v1398 = vld [vmem:[#allocation2 + $0xd0] sm:$0xff]
      %v1399 = vld [vmem:[#allocation2 + $0xe8] sm:$0xff]
      %v1400 = vld [vmem:[#allocation2 + $0xf0] sm:$0xff]
      %v1401 = vld [vmem:[#allocation2 + $0x108] sm:$0xff]
      %v1402 = vld [vmem:[#allocation2 + $0x110] sm:$0xff]
      %v1403 = vld [vmem:[#allocation2 + $0x128] sm:$0xff]
      %v1404 = vld [vmem:[#allocation2 + $0x130] sm:$0xff]
      %v1405 = vld [vmem:[#allocation2 + $0x148] sm:$0xff]
      %v1406 = vld [vmem:[#allocation2 + $0x150] sm:$0xff]
      %v1407 = vld [vmem:[#allocation2 + $0x168] sm:$0xff]
      %v1408 = vld [vmem:[#allocation2 + $0x170] sm:$0xff]
      %v1409 = vld [vmem:[#allocation2 + $0x188] sm:$0xff]
      %v1410 = vld [vmem:[#allocation2 + $0x190] sm:$0xff]
      %v1411 = vld [vmem:[#allocation2 + $0x1a8] sm:$0xff]
      %v1412 = vld [vmem:[#allocation2 + $0x1b0] sm:$0xff]
      %v1413 = vld [vmem:[#allocation2 + $0x1c8] sm:$0xff]
      %v1414 = vld [vmem:[#allocation2 + $0x1d0] sm:$0xff]
      %v1415 = vld [vmem:[#allocation2 + $0x1e8] sm:$0xff]
      %v1416 = vld [vmem:[#allocation2 + $0x1f0] sm:$0xff]
      %v1417 = vld [vmem:[#allocation2 + $0x208] sm:$0xff]
      %v1418 = vld [vmem:[#allocation2 + $0x210] sm:$0xff]
      %v1419 = vld [vmem:[#allocation2 + $0x228] sm:$0xff]
      %v1420 = vld [vmem:[#allocation2 + $0x230] sm:$0xff]
      %v1421 = vld [vmem:[%s3 + $0x4] sm:$0xf]
      %v1423 = vsel %vm426, %v1385, 0
      %v1426 = vsel %vm426, %v1386, 0
      %v1429 = vsel %vm426, %v1387, 0
      %v1432 = vsel %vm426, %v1388, 0
      %v1435 = vsel %vm426, %v1389, 0
      %v1438 = vsel %vm426, %v1390, 0
      %v1441 = vsel %vm426, %v1391, 0
      %v1444 = vsel %vm426, %v1392, 0
      %v1447 = vsel %vm426, %v1393, 0
      %v1450 = vsel %vm426, %v1394, 0
      %v1453 = vsel %vm426, %v1395, 0
      %v1456 = vsel %vm426, %v1396, 0
      %v1459 = vsel %vm426, %v1397, 0
      %v1462 = vsel %vm426, %v1398, 0
      %v1465 = vsel %vm426, %v1399, 0
      %v1468 = vsel %vm426, %v1400, 0
      %v1471 = vsel %vm426, %v1401, 0
      %v1474 = vsel %vm426, %v1402, 0
      %v1477 = vsel %vm426, %v1403, 0
      %v1480 = vsel %vm426, %v1404, 0
      %v1483 = vsel %vm426, %v1405, 0
      %v1486 = vsel %vm426, %v1406, 0
      %v1489 = vsel %vm426, %v1407, 0
      %v1492 = vsel %vm426, %v1408, 0
      %v1495 = vsel %vm426, %v1409, 0
      %v1498 = vsel %vm426, %v1410, 0
      %v1501 = vsel %vm426, %v1411, 0
      %v1504 = vsel %vm426, %v1412, 0
      %v1507 = vsel %vm426, %v1413, 0
      %v1510 = vsel %vm426, %v1414, 0
      %v1513 = vsel %vm426, %v1415, 0
      %v1516 = vsel %vm426, %v1416, 0
      %v1519 = vsel %vm655, %v1421, 0
      %1521 = vmatprep.subr.mxu0 0.0
      %1522 = vmatpush1.msra.mxu0 0.0
      %1523 = vmatprep.subr.mxu0 0.0
      %1524 = vmatpush1.msra.mxu0 0.0
      %1525 = vmatprep.subr.mxu0 0.0
      %1526 = vmatpush1.msra.mxu0 0.0
      %1527 = vmatprep.subr.mxu0 0.0
      %1528 = vmatpush1.msra.mxu0 0.0
      %1529 = vmatprep.subr.mxu0 0.0
      %1530 = vmatpush1.msra.mxu0 0.0
      %1531 = vmatprep.subr.mxu0 0.0
      %1532 = vmatpush1.msra.mxu0 0.0
      %1533 = vmatprep.subr.mxu0 0.0
      %1534 = vmatpush1.msra.mxu0 0.0
      %1535 = vmatprep.subr.mxu0 0.0
      %1536 = vmatpush1.msra.mxu0 0.0
      %1537 = vmatprep.subr.mxu0 0.0
      %1538 = vmatpush1.msra.mxu0 0.0
      %1539 = vmatprep.subr.mxu0 0.0
      %1540 = vmatpush1.msra.mxu0 0.0
      %1541 = vmatprep.subr.mxu0 0.0
      %1542 = vmatpush1.msra.mxu0 0.0
      %1543 = vmatprep.subr.mxu0 0.0
      %1544 = vmatpush1.msra.mxu0 0.0
      %1545 = vmatprep.subr.mxu0 0.0
      %1546 = vmatpush1.msra.mxu0 0.0
      %1547 = vmatprep.subr.mxu0 0.0
      %1548 = vmatpush1.msra.mxu0 0.0
      %1549 = vmatprep.subr.mxu0 0.0
      %1550 = vmatpush1.msra.mxu0 0.0
      %1551 = vmatprep.subr.mxu0 0.0
      %1552 = vmatpush1.msra.mxu0 %v1519
      %1553 = vmatprep.subr.mxu0 0.0
      %1554 = vmatpush2.msra.mxu0 0.0
      %1555 = vmatprep.subr.mxu0 0.0
      %1556 = vmatpush2.msra.mxu0 0.0
      %1557 = vmatprep.subr.mxu0 0.0
      %1558 = vmatpush2.msra.mxu0 0.0
      %1559 = vmatprep.subr.mxu0 0.0
      %1560 = vmatpush2.msra.mxu0 0.0
      %1561 = vmatprep.subr.mxu0 0.0
      %1562 = vmatpush2.msra.mxu0 0.0
      %1563 = vmatprep.subr.mxu0 0.0
      %1564 = vmatpush2.msra.mxu0 0.0
      %1565 = vmatprep.subr.mxu0 0.0
      %1566 = vmatpush2.msra.mxu0 0.0
      %1567 = vmatprep.subr.mxu0 0.0
      %1568 = vmatpush2.msra.mxu0 0.0
      %1569 = vmatprep.subr.mxu0 0.0
      %1570 = vmatpush2.msra.mxu0 0.0
      %1571 = vmatprep.subr.mxu0 0.0
      %1572 = vmatpush2.msra.mxu0 0.0
      %1573 = vmatprep.subr.mxu0 0.0
      %1574 = vmatpush2.msra.mxu0 0.0
      %1575 = vmatprep.subr.mxu0 0.0
      %1576 = vmatpush2.msra.mxu0 0.0
      %1577 = vmatprep.subr.mxu0 0.0
      %1578 = vmatpush2.msra.mxu0 0.0
      %1579 = vmatprep.subr.mxu0 0.0
      %1580 = vmatpush2.msra.mxu0 0.0
      %1581 = vmatprep.subr.mxu0 0.0
      %1582 = vmatpush2.msra.mxu0 0.0
      %1583 = vmatprep.subr.mxu0 0.0
      %1584 = vmatpush2.msra.mxu0 0.0
      %1585 = vmatprep.mubr.f32.mxu0 0.0
      %1586 = vmatmul.mubr.f32.gmra.mxu0 %v1423
      %v1587 = vpop.f32.mrf.mxu0
      %v1588 = vadd.f32 0.0, %v1587
      %v1589 = vpop.f32.mrf.mxu0
      %1590 = vmatprep.mubr.f32.mxu0 0.0
      %1591 = vmatmul.mubr.f32.gmra.mxu0 %v1426
      %v1592 = vpop.f32.mrf.mxu0
      %v1593 = vadd.f32 0.0, %v1592
      %v1594 = vpop.f32.mrf.mxu0
      %1595 = vmatprep.mubr.f32.mxu0 0.0
      %1596 = vmatmul.mubr.f32.gmra.mxu0 %v1429
      %v1597 = vpop.f32.mrf.mxu0
      %v1598 = vadd.f32 0.0, %v1597
      %v1599 = vpop.f32.mrf.mxu0
      %1600 = vmatprep.mubr.f32.mxu0 0.0
      %1601 = vmatmul.mubr.f32.gmra.mxu0 %v1432
      %v1602 = vpop.f32.mrf.mxu0
      %v1603 = vadd.f32 0.0, %v1602
      %v1604 = vpop.f32.mrf.mxu0
      %1605 = vmatprep.mubr.f32.mxu0 0.0
      %1606 = vmatmul.mubr.f32.gmra.mxu0 %v1435
      %v1607 = vpop.f32.mrf.mxu0
      %v1608 = vadd.f32 0.0, %v1607
      %v1609 = vpop.f32.mrf.mxu0
      %1610 = vmatprep.mubr.f32.mxu0 0.0
      %1611 = vmatmul.mubr.f32.gmra.mxu0 %v1438
      %v1612 = vpop.f32.mrf.mxu0
      %v1613 = vadd.f32 0.0, %v1612
      %v1614 = vpop.f32.mrf.mxu0
      %1615 = vmatprep.mubr.f32.mxu0 0.0
      %1616 = vmatmul.mubr.f32.gmra.mxu0 %v1441
      %v1617 = vpop.f32.mrf.mxu0
      %v1618 = vadd.f32 0.0, %v1617
      %v1619 = vpop.f32.mrf.mxu0
      %1620 = vmatprep.mubr.f32.mxu0 0.0
      %1621 = vmatmul.mubr.f32.gmra.mxu0 %v1444
      %v1622 = vpop.f32.mrf.mxu0
      %v1623 = vadd.f32 0.0, %v1622
      %v1624 = vpop.f32.mrf.mxu0
      %1625 = vmatprep.mubr.f32.mxu0 0.0
      %1626 = vmatmul.mubr.f32.gmra.mxu0 %v1447
      %v1627 = vpop.f32.mrf.mxu0
      %v1628 = vadd.f32 0.0, %v1627
      %v1629 = vpop.f32.mrf.mxu0
      %1630 = vmatprep.mubr.f32.mxu0 0.0
      %1631 = vmatmul.mubr.f32.gmra.mxu0 %v1450
      %v1632 = vpop.f32.mrf.mxu0
      %v1633 = vadd.f32 0.0, %v1632
      %v1634 = vpop.f32.mrf.mxu0
      %1635 = vmatprep.mubr.f32.mxu0 0.0
      %1636 = vmatmul.mubr.f32.gmra.mxu0 %v1453
      %v1637 = vpop.f32.mrf.mxu0
      %v1638 = vadd.f32 0.0, %v1637
      %v1639 = vpop.f32.mrf.mxu0
      %1640 = vmatprep.mubr.f32.mxu0 0.0
      %1641 = vmatmul.mubr.f32.gmra.mxu0 %v1456
      %v1642 = vpop.f32.mrf.mxu0
      %v1643 = vadd.f32 0.0, %v1642
      %v1644 = vpop.f32.mrf.mxu0
      %1645 = vmatprep.mubr.f32.mxu0 0.0
      %1646 = vmatmul.mubr.f32.gmra.mxu0 %v1459
      %v1647 = vpop.f32.mrf.mxu0
      %v1648 = vadd.f32 0.0, %v1647
      %v1649 = vpop.f32.mrf.mxu0
      %1650 = vmatprep.mubr.f32.mxu0 0.0
      %1651 = vmatmul.mubr.f32.gmra.mxu0 %v1462
      %v1652 = vpop.f32.mrf.mxu0
      %v1653 = vadd.f32 0.0, %v1652
      %v1654 = vpop.f32.mrf.mxu0
      %1655 = vmatprep.mubr.f32.mxu0 0.0
      %1656 = vmatmul.mubr.f32.gmra.mxu0 %v1465
      %v1657 = vpop.f32.mrf.mxu0
      %v1658 = vadd.f32 0.0, %v1657
      %v1659 = vpop.f32.mrf.mxu0
      %1660 = vmatprep.mubr.f32.mxu0 0.0
      %1661 = vmatmul.mubr.f32.gmra.mxu0 %v1468
      %v1662 = vpop.f32.mrf.mxu0
      %v1663 = vadd.f32 0.0, %v1662
      %v1664 = vpop.f32.mrf.mxu0
      %1665 = vmatprep.mubr.f32.mxu0 0.0
      %1666 = vmatmul.mubr.f32.gmra.mxu0 %v1471
      %v1667 = vpop.f32.mrf.mxu0
      %v1668 = vadd.f32 0.0, %v1667
      %v1669 = vpop.f32.mrf.mxu0
      %1670 = vmatprep.mubr.f32.mxu0 0.0
      %1671 = vmatmul.mubr.f32.gmra.mxu0 %v1474
      %v1672 = vpop.f32.mrf.mxu0
      %v1673 = vadd.f32 0.0, %v1672
      %v1674 = vpop.f32.mrf.mxu0
      %1675 = vmatprep.mubr.f32.mxu0 0.0
      %1676 = vmatmul.mubr.f32.gmra.mxu0 %v1477
      %v1677 = vpop.f32.mrf.mxu0
      %v1678 = vadd.f32 0.0, %v1677
      %v1679 = vpop.f32.mrf.mxu0
      %1680 = vmatprep.mubr.f32.mxu0 0.0
      %1681 = vmatmul.mubr.f32.gmra.mxu0 %v1480
      %v1682 = vpop.f32.mrf.mxu0
      %v1683 = vadd.f32 0.0, %v1682
      %v1684 = vpop.f32.mrf.mxu0
      %1685 = vmatprep.mubr.f32.mxu0 0.0
      %1686 = vmatmul.mubr.f32.gmra.mxu0 %v1483
      %v1687 = vpop.f32.mrf.mxu0
      %v1688 = vadd.f32 0.0, %v1687
      %v1689 = vpop.f32.mrf.mxu0
      %1690 = vmatprep.mubr.f32.mxu0 0.0
      %1691 = vmatmul.mubr.f32.gmra.mxu0 %v1486
      %v1692 = vpop.f32.mrf.mxu0
      %v1693 = vadd.f32 0.0, %v1692
      %v1694 = vpop.f32.mrf.mxu0
      %1695 = vmatprep.mubr.f32.mxu0 0.0
      %1696 = vmatmul.mubr.f32.gmra.mxu0 %v1489
      %v1697 = vpop.f32.mrf.mxu0
      %v1698 = vadd.f32 0.0, %v1697
      %v1699 = vpop.f32.mrf.mxu0
      %1700 = vmatprep.mubr.f32.mxu0 0.0
      %1701 = vmatmul.mubr.f32.gmra.mxu0 %v1492
      %v1702 = vpop.f32.mrf.mxu0
      %v1703 = vadd.f32 0.0, %v1702
      %v1704 = vpop.f32.mrf.mxu0
      %1705 = vmatprep.mubr.f32.mxu0 0.0
      %1706 = vmatmul.mubr.f32.gmra.mxu0 %v1495
      %v1707 = vpop.f32.mrf.mxu0
      %v1708 = vadd.f32 0.0, %v1707
      %v1709 = vpop.f32.mrf.mxu0
      %1710 = vmatprep.mubr.f32.mxu0 0.0
      %1711 = vmatmul.mubr.f32.gmra.mxu0 %v1498
      %v1712 = vpop.f32.mrf.mxu0
      %v1713 = vadd.f32 0.0, %v1712
      %v1714 = vpop.f32.mrf.mxu0
      %1715 = vmatprep.mubr.f32.mxu0 0.0
      %1716 = vmatmul.mubr.f32.gmra.mxu0 %v1501
      %v1717 = vpop.f32.mrf.mxu0
      %v1718 = vadd.f32 0.0, %v1717
      %v1719 = vpop.f32.mrf.mxu0
      %1720 = vmatprep.mubr.f32.mxu0 0.0
      %1721 = vmatmul.mubr.f32.gmra.mxu0 %v1504
      %v1722 = vpop.f32.mrf.mxu0
      %v1723 = vadd.f32 0.0, %v1722
      %v1724 = vpop.f32.mrf.mxu0
      %1725 = vmatprep.mubr.f32.mxu0 0.0
      %1726 = vmatmul.mubr.f32.gmra.mxu0 %v1507
      %v1727 = vpop.f32.mrf.mxu0
      %v1728 = vadd.f32 0.0, %v1727
      %v1729 = vpop.f32.mrf.mxu0
      %1730 = vmatprep.mubr.f32.mxu0 0.0
      %1731 = vmatmul.mubr.f32.gmra.mxu0 %v1510
      %v1732 = vpop.f32.mrf.mxu0
      %v1733 = vadd.f32 0.0, %v1732
      %v1734 = vpop.f32.mrf.mxu0
      %1735 = vmatprep.mubr.f32.mxu0 0.0
      %1736 = vmatmul.mubr.f32.gmra.mxu0 %v1513
      %v1737 = vpop.f32.mrf.mxu0
      %v1738 = vadd.f32 0.0, %v1737
      %v1739 = vpop.f32.mrf.mxu0
      %1740 = vmatprep.mubr.f32.mxu0 0.0
      %1741 = vmatmul.mubr.f32.gmra.mxu0 %v1516
      %v1742 = vpop.f32.mrf.mxu0
      %v1743 = vadd.f32 0.0, %v1742
      %v1744 = vpop.f32.mrf.mxu0
      %1745 = vdwg.mxu0
      %v1746 = vadd.f32 %v1353, %v1588
      %v1747 = vadd.f32 %v1354, %v1593
      %v1748 = vadd.f32 %v1355, %v1598
      %v1749 = vadd.f32 %v1356, %v1603
      %v1750 = vadd.f32 %v1357, %v1608
      %v1751 = vadd.f32 %v1358, %v1613
      %v1752 = vadd.f32 %v1359, %v1618
      %v1753 = vadd.f32 %v1360, %v1623
      %v1754 = vadd.f32 %v1361, %v1628
      %v1755 = vadd.f32 %v1362, %v1633
      %v1756 = vadd.f32 %v1363, %v1638
      %v1757 = vadd.f32 %v1364, %v1643
      %v1758 = vadd.f32 %v1365, %v1648
      %v1759 = vadd.f32 %v1366, %v1653
      %v1760 = vadd.f32 %v1367, %v1658
      %v1761 = vadd.f32 %v1368, %v1663
      %v1762 = vadd.f32 %v1369, %v1668
      %v1763 = vadd.f32 %v1370, %v1673
      %v1764 = vadd.f32 %v1371, %v1678
      %v1765 = vadd.f32 %v1372, %v1683
      %v1766 = vadd.f32 %v1373, %v1688
      %v1767 = vadd.f32 %v1374, %v1693
      %v1768 = vadd.f32 %v1375, %v1698
      %v1769 = vadd.f32 %v1376, %v1703
      %v1770 = vadd.f32 %v1377, %v1708
      %v1771 = vadd.f32 %v1378, %v1713
      %v1772 = vadd.f32 %v1379, %v1718
      %v1773 = vadd.f32 %v1380, %v1723
      %v1774 = vadd.f32 %v1381, %v1728
      %v1775 = vadd.f32 %v1382, %v1733
      %v1776 = vadd.f32 %v1383, %v1738
      %v1777 = vadd.f32 %v1384, %v1743
      %v1778 = vld [vmem:[%s3 + $0x10] sm:$0xf]
      %v1780 = vsel %vm426, %v1417, 0
      %v1783 = vsel %vm426, %v1418, 0
      %v1786 = vsel %vm655, %v1778, 0
      %1788 = vmatprep.subr.mxu0 0.0
      %1789 = vmatpush1.msra.mxu0 0.0
      %1790 = vmatprep.subr.mxu0 0.0
      %1791 = vmatpush1.msra.mxu0 0.0
      %1792 = vmatprep.subr.mxu0 0.0
      %1793 = vmatpush1.msra.mxu0 0.0
      %1794 = vmatprep.subr.mxu0 0.0
      %1795 = vmatpush1.msra.mxu0 0.0
      %1796 = vmatprep.subr.mxu0 0.0
      %1797 = vmatpush1.msra.mxu0 0.0
      %1798 = vmatprep.subr.mxu0 0.0
      %1799 = vmatpush1.msra.mxu0 0.0
      %1800 = vmatprep.subr.mxu0 0.0
      %1801 = vmatpush1.msra.mxu0 0.0
      %1802 = vmatprep.subr.mxu0 0.0
      %1803 = vmatpush1.msra.mxu0 0.0
      %1804 = vmatprep.subr.mxu0 0.0
      %1805 = vmatpush1.msra.mxu0 0.0
      %1806 = vmatprep.subr.mxu0 0.0
      %1807 = vmatpush1.msra.mxu0 0.0
      %1808 = vmatprep.subr.mxu0 0.0
      %1809 = vmatpush1.msra.mxu0 0.0
      %1810 = vmatprep.subr.mxu0 0.0
      %1811 = vmatpush1.msra.mxu0 0.0
      %1812 = vmatprep.subr.mxu0 0.0
      %1813 = vmatpush1.msra.mxu0 0.0
      %1814 = vmatprep.subr.mxu0 0.0
      %1815 = vmatpush1.msra.mxu0 0.0
      %1816 = vmatprep.subr.mxu0 0.0
      %1817 = vmatpush1.msra.mxu0 0.0
      %1818 = vmatprep.subr.mxu0 0.0
      %1819 = vmatpush1.msra.mxu0 %v1786
      %1820 = vmatprep.subr.mxu0 0.0
      %1821 = vmatpush2.msra.mxu0 0.0
      %1822 = vmatprep.subr.mxu0 0.0
      %1823 = vmatpush2.msra.mxu0 0.0
      %1824 = vmatprep.subr.mxu0 0.0
      %1825 = vmatpush2.msra.mxu0 0.0
      %1826 = vmatprep.subr.mxu0 0.0
      %1827 = vmatpush2.msra.mxu0 0.0
      %1828 = vmatprep.subr.mxu0 0.0
      %1829 = vmatpush2.msra.mxu0 0.0
      %1830 = vmatprep.subr.mxu0 0.0
      %1831 = vmatpush2.msra.mxu0 0.0
      %1832 = vmatprep.subr.mxu0 0.0
      %1833 = vmatpush2.msra.mxu0 0.0
      %1834 = vmatprep.subr.mxu0 0.0
      %1835 = vmatpush2.msra.mxu0 0.0
      %1836 = vmatprep.subr.mxu0 0.0
      %1837 = vmatpush2.msra.mxu0 0.0
      %1838 = vmatprep.subr.mxu0 0.0
      %1839 = vmatpush2.msra.mxu0 0.0
      %1840 = vmatprep.subr.mxu0 0.0
      %1841 = vmatpush2.msra.mxu0 0.0
      %1842 = vmatprep.subr.mxu0 0.0
      %1843 = vmatpush2.msra.mxu0 0.0
      %1844 = vmatprep.subr.mxu0 0.0
      %1845 = vmatpush2.msra.mxu0 0.0
      %1846 = vmatprep.subr.mxu0 0.0
      %1847 = vmatpush2.msra.mxu0 0.0
      %1848 = vmatprep.subr.mxu0 0.0
      %1849 = vmatpush2.msra.mxu0 0.0
      %1850 = vmatprep.subr.mxu0 0.0
      %1851 = vmatpush2.msra.mxu0 0.0
      %1852 = vmatprep.mubr.f32.mxu0 0.0
      %1853 = vmatmul.mubr.f32.gmra.mxu0 %v1429
      %v1854 = vpop.f32.mrf.mxu0
      %v1855 = vadd.f32 0.0, %v1854
      %v1856 = vpop.f32.mrf.mxu0
      %1857 = vmatprep.mubr.f32.mxu0 0.0
      %1858 = vmatmul.mubr.f32.gmra.mxu0 %v1432
      %v1859 = vpop.f32.mrf.mxu0
      %v1860 = vadd.f32 0.0, %v1859
      %v1861 = vpop.f32.mrf.mxu0
      %1862 = vmatprep.mubr.f32.mxu0 0.0
      %1863 = vmatmul.mubr.f32.gmra.mxu0 %v1435
      %v1864 = vpop.f32.mrf.mxu0
      %v1865 = vadd.f32 0.0, %v1864
      %v1866 = vpop.f32.mrf.mxu0
      %1867 = vmatprep.mubr.f32.mxu0 0.0
      %1868 = vmatmul.mubr.f32.gmra.mxu0 %v1438
      %v1869 = vpop.f32.mrf.mxu0
      %v1870 = vadd.f32 0.0, %v1869
      %v1871 = vpop.f32.mrf.mxu0
      %1872 = vmatprep.mubr.f32.mxu0 0.0
      %1873 = vmatmul.mubr.f32.gmra.mxu0 %v1441
      %v1874 = vpop.f32.mrf.mxu0
      %v1875 = vadd.f32 0.0, %v1874
      %v1876 = vpop.f32.mrf.mxu0
      %1877 = vmatprep.mubr.f32.mxu0 0.0
      %1878 = vmatmul.mubr.f32.gmra.mxu0 %v1444
      %v1879 = vpop.f32.mrf.mxu0
      %v1880 = vadd.f32 0.0, %v1879
      %v1881 = vpop.f32.mrf.mxu0
      %1882 = vmatprep.mubr.f32.mxu0 0.0
      %1883 = vmatmul.mubr.f32.gmra.mxu0 %v1447
      %v1884 = vpop.f32.mrf.mxu0
      %v1885 = vadd.f32 0.0, %v1884
      %v1886 = vpop.f32.mrf.mxu0
      %1887 = vmatprep.mubr.f32.mxu0 0.0
      %1888 = vmatmul.mubr.f32.gmra.mxu0 %v1450
      %v1889 = vpop.f32.mrf.mxu0
      %v1890 = vadd.f32 0.0, %v1889
      %v1891 = vpop.f32.mrf.mxu0
      %1892 = vmatprep.mubr.f32.mxu0 0.0
      %1893 = vmatmul.mubr.f32.gmra.mxu0 %v1453
      %v1894 = vpop.f32.mrf.mxu0
      %v1895 = vadd.f32 0.0, %v1894
      %v1896 = vpop.f32.mrf.mxu0
      %1897 = vmatprep.mubr.f32.mxu0 0.0
      %1898 = vmatmul.mubr.f32.gmra.mxu0 %v1456
      %v1899 = vpop.f32.mrf.mxu0
      %v1900 = vadd.f32 0.0, %v1899
      %v1901 = vpop.f32.mrf.mxu0
      %1902 = vmatprep.mubr.f32.mxu0 0.0
      %1903 = vmatmul.mubr.f32.gmra.mxu0 %v1459
      %v1904 = vpop.f32.mrf.mxu0
      %v1905 = vadd.f32 0.0, %v1904
      %v1906 = vpop.f32.mrf.mxu0
      %1907 = vmatprep.mubr.f32.mxu0 0.0
      %1908 = vmatmul.mubr.f32.gmra.mxu0 %v1462
      %v1909 = vpop.f32.mrf.mxu0
      %v1910 = vadd.f32 0.0, %v1909
      %v1911 = vpop.f32.mrf.mxu0
      %1912 = vmatprep.mubr.f32.mxu0 0.0
      %1913 = vmatmul.mubr.f32.gmra.mxu0 %v1465
      %v1914 = vpop.f32.mrf.mxu0
      %v1915 = vadd.f32 0.0, %v1914
      %v1916 = vpop.f32.mrf.mxu0
      %1917 = vmatprep.mubr.f32.mxu0 0.0
      %1918 = vmatmul.mubr.f32.gmra.mxu0 %v1468
      %v1919 = vpop.f32.mrf.mxu0
      %v1920 = vadd.f32 0.0, %v1919
      %v1921 = vpop.f32.mrf.mxu0
      %1922 = vmatprep.mubr.f32.mxu0 0.0
      %1923 = vmatmul.mubr.f32.gmra.mxu0 %v1471
      %v1924 = vpop.f32.mrf.mxu0
      %v1925 = vadd.f32 0.0, %v1924
      %v1926 = vpop.f32.mrf.mxu0
      %1927 = vmatprep.mubr.f32.mxu0 0.0
      %1928 = vmatmul.mubr.f32.gmra.mxu0 %v1474
      %v1929 = vpop.f32.mrf.mxu0
      %v1930 = vadd.f32 0.0, %v1929
      %v1931 = vpop.f32.mrf.mxu0
      %1932 = vmatprep.mubr.f32.mxu0 0.0
      %1933 = vmatmul.mubr.f32.gmra.mxu0 %v1477
      %v1934 = vpop.f32.mrf.mxu0
      %v1935 = vadd.f32 0.0, %v1934
      %v1936 = vpop.f32.mrf.mxu0
      %1937 = vmatprep.mubr.f32.mxu0 0.0
      %1938 = vmatmul.mubr.f32.gmra.mxu0 %v1480
      %v1939 = vpop.f32.mrf.mxu0
      %v1940 = vadd.f32 0.0, %v1939
      %v1941 = vpop.f32.mrf.mxu0
      %1942 = vmatprep.mubr.f32.mxu0 0.0
      %1943 = vmatmul.mubr.f32.gmra.mxu0 %v1483
      %v1944 = vpop.f32.mrf.mxu0
      %v1945 = vadd.f32 0.0, %v1944
      %v1946 = vpop.f32.mrf.mxu0
      %1947 = vmatprep.mubr.f32.mxu0 0.0
      %1948 = vmatmul.mubr.f32.gmra.mxu0 %v1486
      %v1949 = vpop.f32.mrf.mxu0
      %v1950 = vadd.f32 0.0, %v1949
      %v1951 = vpop.f32.mrf.mxu0
      %1952 = vmatprep.mubr.f32.mxu0 0.0
      %1953 = vmatmul.mubr.f32.gmra.mxu0 %v1489
      %v1954 = vpop.f32.mrf.mxu0
      %v1955 = vadd.f32 0.0, %v1954
      %v1956 = vpop.f32.mrf.mxu0
      %1957 = vmatprep.mubr.f32.mxu0 0.0
      %1958 = vmatmul.mubr.f32.gmra.mxu0 %v1492
      %v1959 = vpop.f32.mrf.mxu0
      %v1960 = vadd.f32 0.0, %v1959
      %v1961 = vpop.f32.mrf.mxu0
      %1962 = vmatprep.mubr.f32.mxu0 0.0
      %1963 = vmatmul.mubr.f32.gmra.mxu0 %v1495
      %v1964 = vpop.f32.mrf.mxu0
      %v1965 = vadd.f32 0.0, %v1964
      %v1966 = vpop.f32.mrf.mxu0
      %1967 = vmatprep.mubr.f32.mxu0 0.0
      %1968 = vmatmul.mubr.f32.gmra.mxu0 %v1498
      %v1969 = vpop.f32.mrf.mxu0
      %v1970 = vadd.f32 0.0, %v1969
      %v1971 = vpop.f32.mrf.mxu0
      %1972 = vmatprep.mubr.f32.mxu0 0.0
      %1973 = vmatmul.mubr.f32.gmra.mxu0 %v1501
      %v1974 = vpop.f32.mrf.mxu0
      %v1975 = vadd.f32 0.0, %v1974
      %v1976 = vpop.f32.mrf.mxu0
      %1977 = vmatprep.mubr.f32.mxu0 0.0
      %1978 = vmatmul.mubr.f32.gmra.mxu0 %v1504
      %v1979 = vpop.f32.mrf.mxu0
      %v1980 = vadd.f32 0.0, %v1979
      %v1981 = vpop.f32.mrf.mxu0
      %1982 = vmatprep.mubr.f32.mxu0 0.0
      %1983 = vmatmul.mubr.f32.gmra.mxu0 %v1507
      %v1984 = vpop.f32.mrf.mxu0
      %v1985 = vadd.f32 0.0, %v1984
      %v1986 = vpop.f32.mrf.mxu0
      %1987 = vmatprep.mubr.f32.mxu0 0.0
      %1988 = vmatmul.mubr.f32.gmra.mxu0 %v1510
      %v1989 = vpop.f32.mrf.mxu0
      %v1990 = vadd.f32 0.0, %v1989
      %v1991 = vpop.f32.mrf.mxu0
      %1992 = vmatprep.mubr.f32.mxu0 0.0
      %1993 = vmatmul.mubr.f32.gmra.mxu0 %v1513
      %v1994 = vpop.f32.mrf.mxu0
      %v1995 = vadd.f32 0.0, %v1994
      %v1996 = vpop.f32.mrf.mxu0
      %1997 = vmatprep.mubr.f32.mxu0 0.0
      %1998 = vmatmul.mubr.f32.gmra.mxu0 %v1516
      %v1999 = vpop.f32.mrf.mxu0
      %v2000 = vadd.f32 0.0, %v1999
      %v2001 = vpop.f32.mrf.mxu0
      %2002 = vmatprep.mubr.f32.mxu0 0.0
      %2003 = vmatmul.mubr.f32.gmra.mxu0 %v1780
      %v2004 = vpop.f32.mrf.mxu0
      %v2005 = vadd.f32 0.0, %v2004
      %v2006 = vpop.f32.mrf.mxu0
      %2007 = vmatprep.mubr.f32.mxu0 0.0
      %2008 = vmatmul.mubr.f32.gmra.mxu0 %v1783
      %v2009 = vpop.f32.mrf.mxu0
      %v2010 = vadd.f32 0.0, %v2009
      %v2011 = vpop.f32.mrf.mxu0
      %2012 = vdwg.mxu0
      %v2013 = vadd.f32 %v1746, %v1855
      %v2014 = vadd.f32 %v1747, %v1860
      %v2015 = vadd.f32 %v1748, %v1865
      %v2016 = vadd.f32 %v1749, %v1870
      %v2017 = vadd.f32 %v1750, %v1875
      %v2018 = vadd.f32 %v1751, %v1880
      %v2019 = vadd.f32 %v1752, %v1885
      %v2020 = vadd.f32 %v1753, %v1890
      %v2021 = vadd.f32 %v1754, %v1895
      %v2022 = vadd.f32 %v1755, %v1900
      %v2023 = vadd.f32 %v1756, %v1905
      %v2024 = vadd.f32 %v1757, %v1910
      %v2025 = vadd.f32 %v1758, %v1915
      %v2026 = vadd.f32 %v1759, %v1920
      %v2027 = vadd.f32 %v1760, %v1925
      %v2028 = vadd.f32 %v1761, %v1930
      %v2029 = vadd.f32 %v1762, %v1935
      %v2030 = vadd.f32 %v1763, %v1940
      %v2031 = vadd.f32 %v1764, %v1945
      %v2032 = vadd.f32 %v1765, %v1950
      %v2033 = vadd.f32 %v1766, %v1955
      %v2034 = vadd.f32 %v1767, %v1960
      %v2035 = vadd.f32 %v1768, %v1965
      %v2036 = vadd.f32 %v1769, %v1970
      %v2037 = vadd.f32 %v1770, %v1975
      %v2038 = vadd.f32 %v1771, %v1980
      %v2039 = vadd.f32 %v1772, %v1985
      %v2040 = vadd.f32 %v1773, %v1990
      %v2041 = vadd.f32 %v1774, %v1995
      %v2042 = vadd.f32 %v1775, %v2000
      %v2043 = vadd.f32 %v1776, %v2005
      %v2044 = vadd.f32 %v1777, %v2010
      %v2045 = vld [vmem:[%s3 + $0x1c] sm:$0xf]
      %v2047 = vsel %vm426, %v1419, 0
      %v2050 = vsel %vm426, %v1420, 0
      %v2053 = vsel %vm655, %v2045, 0
      %2055 = vmatprep.subr.mxu0 0.0
      %2056 = vmatpush1.msra.mxu0 0.0
      %2057 = vmatprep.subr.mxu0 0.0
      %2058 = vmatpush1.msra.mxu0 0.0
      %2059 = vmatprep.subr.mxu0 0.0
      %2060 = vmatpush1.msra.mxu0 0.0
      %2061 = vmatprep.subr.mxu0 0.0
      %2062 = vmatpush1.msra.mxu0 0.0
      %2063 = vmatprep.subr.mxu0 0.0
      %2064 = vmatpush1.msra.mxu0 0.0
      %2065 = vmatprep.subr.mxu0 0.0
      %2066 = vmatpush1.msra.mxu0 0.0
      %2067 = vmatprep.subr.mxu0 0.0
      %2068 = vmatpush1.msra.mxu0 0.0
      %2069 = vmatprep.subr.mxu0 0.0
      %2070 = vmatpush1.msra.mxu0 0.0
      %2071 = vmatprep.subr.mxu0 0.0
      %2072 = vmatpush1.msra.mxu0 0.0
      %2073 = vmatprep.subr.mxu0 0.0
      %2074 = vmatpush1.msra.mxu0 0.0
      %2075 = vmatprep.subr.mxu0 0.0
      %2076 = vmatpush1.msra.mxu0 0.0
      %2077 = vmatprep.subr.mxu0 0.0
      %2078 = vmatpush1.msra.mxu0 0.0
      %2079 = vmatprep.subr.mxu0 0.0
      %2080 = vmatpush1.msra.mxu0 0.0
      %2081 = vmatprep.subr.mxu0 0.0
      %2082 = vmatpush1.msra.mxu0 0.0
      %2083 = vmatprep.subr.mxu0 0.0
      %2084 = vmatpush1.msra.mxu0 0.0
      %2085 = vmatprep.subr.mxu0 0.0
      %2086 = vmatpush1.msra.mxu0 %v2053
      %2087 = vmatprep.subr.mxu0 0.0
      %2088 = vmatpush2.msra.mxu0 0.0
      %2089 = vmatprep.subr.mxu0 0.0
      %2090 = vmatpush2.msra.mxu0 0.0
      %2091 = vmatprep.subr.mxu0 0.0
      %2092 = vmatpush2.msra.mxu0 0.0
      %2093 = vmatprep.subr.mxu0 0.0
      %2094 = vmatpush2.msra.mxu0 0.0
      %2095 = vmatprep.subr.mxu0 0.0
      %2096 = vmatpush2.msra.mxu0 0.0
      %2097 = vmatprep.subr.mxu0 0.0
      %2098 = vmatpush2.msra.mxu0 0.0
      %2099 = vmatprep.subr.mxu0 0.0
      %2100 = vmatpush2.msra.mxu0 0.0
      %2101 = vmatprep.subr.mxu0 0.0
      %2102 = vmatpush2.msra.mxu0 0.0
      %2103 = vmatprep.subr.mxu0 0.0
      %2104 = vmatpush2.msra.mxu0 0.0
      %2105 = vmatprep.subr.mxu0 0.0
      %2106 = vmatpush2.msra.mxu0 0.0
      %2107 = vmatprep.subr.mxu0 0.0
      %2108 = vmatpush2.msra.mxu0 0.0
      %2109 = vmatprep.subr.mxu0 0.0
      %2110 = vmatpush2.msra.mxu0 0.0
      %2111 = vmatprep.subr.mxu0 0.0
      %2112 = vmatpush2.msra.mxu0 0.0
      %2113 = vmatprep.subr.mxu0 0.0
      %2114 = vmatpush2.msra.mxu0 0.0
      %2115 = vmatprep.subr.mxu0 0.0
      %2116 = vmatpush2.msra.mxu0 0.0
      %2117 = vmatprep.subr.mxu0 0.0
      %2118 = vmatpush2.msra.mxu0 0.0
      %2119 = vmatprep.mubr.f32.mxu0 0.0
      %2120 = vmatmul.mubr.f32.gmra.mxu0 %v1435
      %v2121 = vpop.f32.mrf.mxu0
      %v2122 = vadd.f32 0.0, %v2121
      %v2123 = vpop.f32.mrf.mxu0
      %2124 = vmatprep.mubr.f32.mxu0 0.0
      %2125 = vmatmul.mubr.f32.gmra.mxu0 %v1438
      %v2126 = vpop.f32.mrf.mxu0
      %v2127 = vadd.f32 0.0, %v2126
      %v2128 = vpop.f32.mrf.mxu0
      %2129 = vmatprep.mubr.f32.mxu0 0.0
      %2130 = vmatmul.mubr.f32.gmra.mxu0 %v1441
      %v2131 = vpop.f32.mrf.mxu0
      %v2132 = vadd.f32 0.0, %v2131
      %v2133 = vpop.f32.mrf.mxu0
      %2134 = vmatprep.mubr.f32.mxu0 0.0
      %2135 = vmatmul.mubr.f32.gmra.mxu0 %v1444
      %v2136 = vpop.f32.mrf.mxu0
      %v2137 = vadd.f32 0.0, %v2136
      %v2138 = vpop.f32.mrf.mxu0
      %2139 = vmatprep.mubr.f32.mxu0 0.0
      %2140 = vmatmul.mubr.f32.gmra.mxu0 %v1447
      %v2141 = vpop.f32.mrf.mxu0
      %v2142 = vadd.f32 0.0, %v2141
      %v2143 = vpop.f32.mrf.mxu0
      %2144 = vmatprep.mubr.f32.mxu0 0.0
      %2145 = vmatmul.mubr.f32.gmra.mxu0 %v1450
      %v2146 = vpop.f32.mrf.mxu0
      %v2147 = vadd.f32 0.0, %v2146
      %v2148 = vpop.f32.mrf.mxu0
      %2149 = vmatprep.mubr.f32.mxu0 0.0
      %2150 = vmatmul.mubr.f32.gmra.mxu0 %v1453
      %v2151 = vpop.f32.mrf.mxu0
      %v2152 = vadd.f32 0.0, %v2151
      %v2153 = vpop.f32.mrf.mxu0
      %2154 = vmatprep.mubr.f32.mxu0 0.0
      %2155 = vmatmul.mubr.f32.gmra.mxu0 %v1456
      %v2156 = vpop.f32.mrf.mxu0
      %v2157 = vadd.f32 0.0, %v2156
      %v2158 = vpop.f32.mrf.mxu0
      %2159 = vmatprep.mubr.f32.mxu0 0.0
      %2160 = vmatmul.mubr.f32.gmra.mxu0 %v1459
      %v2161 = vpop.f32.mrf.mxu0
      %v2162 = vadd.f32 0.0, %v2161
      %v2163 = vpop.f32.mrf.mxu0
      %2164 = vmatprep.mubr.f32.mxu0 0.0
      %2165 = vmatmul.mubr.f32.gmra.mxu0 %v1462
      %v2166 = vpop.f32.mrf.mxu0
      %v2167 = vadd.f32 0.0, %v2166
      %v2168 = vpop.f32.mrf.mxu0
      %2169 = vmatprep.mubr.f32.mxu0 0.0
      %2170 = vmatmul.mubr.f32.gmra.mxu0 %v1465
      %v2171 = vpop.f32.mrf.mxu0
      %v2172 = vadd.f32 0.0, %v2171
      %v2173 = vpop.f32.mrf.mxu0
      %2174 = vmatprep.mubr.f32.mxu0 0.0
      %2175 = vmatmul.mubr.f32.gmra.mxu0 %v1468
      %v2176 = vpop.f32.mrf.mxu0
      %v2177 = vadd.f32 0.0, %v2176
      %v2178 = vpop.f32.mrf.mxu0
      %2179 = vmatprep.mubr.f32.mxu0 0.0
      %2180 = vmatmul.mubr.f32.gmra.mxu0 %v1471
      %v2181 = vpop.f32.mrf.mxu0
      %v2182 = vadd.f32 0.0, %v2181
      %v2183 = vpop.f32.mrf.mxu0
      %2184 = vmatprep.mubr.f32.mxu0 0.0
      %2185 = vmatmul.mubr.f32.gmra.mxu0 %v1474
      %v2186 = vpop.f32.mrf.mxu0
      %v2187 = vadd.f32 0.0, %v2186
      %v2188 = vpop.f32.mrf.mxu0
      %2189 = vmatprep.mubr.f32.mxu0 0.0
      %2190 = vmatmul.mubr.f32.gmra.mxu0 %v1477
      %v2191 = vpop.f32.mrf.mxu0
      %v2192 = vadd.f32 0.0, %v2191
      %v2193 = vpop.f32.mrf.mxu0
      %2194 = vmatprep.mubr.f32.mxu0 0.0
      %2195 = vmatmul.mubr.f32.gmra.mxu0 %v1480
      %v2196 = vpop.f32.mrf.mxu0
      %v2197 = vadd.f32 0.0, %v2196
      %v2198 = vpop.f32.mrf.mxu0
      %2199 = vmatprep.mubr.f32.mxu0 0.0
      %2200 = vmatmul.mubr.f32.gmra.mxu0 %v1483
      %v2201 = vpop.f32.mrf.mxu0
      %v2202 = vadd.f32 0.0, %v2201
      %v2203 = vpop.f32.mrf.mxu0
      %2204 = vmatprep.mubr.f32.mxu0 0.0
      %2205 = vmatmul.mubr.f32.gmra.mxu0 %v1486
      %v2206 = vpop.f32.mrf.mxu0
      %v2207 = vadd.f32 0.0, %v2206
      %v2208 = vpop.f32.mrf.mxu0
      %2209 = vmatprep.mubr.f32.mxu0 0.0
      %2210 = vmatmul.mubr.f32.gmra.mxu0 %v1489
      %v2211 = vpop.f32.mrf.mxu0
      %v2212 = vadd.f32 0.0, %v2211
      %v2213 = vpop.f32.mrf.mxu0
      %2214 = vmatprep.mubr.f32.mxu0 0.0
      %2215 = vmatmul.mubr.f32.gmra.mxu0 %v1492
      %v2216 = vpop.f32.mrf.mxu0
      %v2217 = vadd.f32 0.0, %v2216
      %v2218 = vpop.f32.mrf.mxu0
      %2219 = vmatprep.mubr.f32.mxu0 0.0
      %2220 = vmatmul.mubr.f32.gmra.mxu0 %v1495
      %v2221 = vpop.f32.mrf.mxu0
      %v2222 = vadd.f32 0.0, %v2221
      %v2223 = vpop.f32.mrf.mxu0
      %2224 = vmatprep.mubr.f32.mxu0 0.0
      %2225 = vmatmul.mubr.f32.gmra.mxu0 %v1498
      %v2226 = vpop.f32.mrf.mxu0
      %v2227 = vadd.f32 0.0, %v2226
      %v2228 = vpop.f32.mrf.mxu0
      %2229 = vmatprep.mubr.f32.mxu0 0.0
      %2230 = vmatmul.mubr.f32.gmra.mxu0 %v1501
      %v2231 = vpop.f32.mrf.mxu0
      %v2232 = vadd.f32 0.0, %v2231
      %v2233 = vpop.f32.mrf.mxu0
      %2234 = vmatprep.mubr.f32.mxu0 0.0
      %2235 = vmatmul.mubr.f32.gmra.mxu0 %v1504
      %v2236 = vpop.f32.mrf.mxu0
      %v2237 = vadd.f32 0.0, %v2236
      %v2238 = vpop.f32.mrf.mxu0
      %2239 = vmatprep.mubr.f32.mxu0 0.0
      %2240 = vmatmul.mubr.f32.gmra.mxu0 %v1507
      %v2241 = vpop.f32.mrf.mxu0
      %v2242 = vadd.f32 0.0, %v2241
      %v2243 = vpop.f32.mrf.mxu0
      %2244 = vmatprep.mubr.f32.mxu0 0.0
      %2245 = vmatmul.mubr.f32.gmra.mxu0 %v1510
      %v2246 = vpop.f32.mrf.mxu0
      %v2247 = vadd.f32 0.0, %v2246
      %v2248 = vpop.f32.mrf.mxu0
      %2249 = vmatprep.mubr.f32.mxu0 0.0
      %2250 = vmatmul.mubr.f32.gmra.mxu0 %v1513
      %v2251 = vpop.f32.mrf.mxu0
      %v2252 = vadd.f32 0.0, %v2251
      %v2253 = vpop.f32.mrf.mxu0
      %2254 = vmatprep.mubr.f32.mxu0 0.0
      %2255 = vmatmul.mubr.f32.gmra.mxu0 %v1516
      %v2256 = vpop.f32.mrf.mxu0
      %v2257 = vadd.f32 0.0, %v2256
      %v2258 = vpop.f32.mrf.mxu0
      %2259 = vmatprep.mubr.f32.mxu0 0.0
      %2260 = vmatmul.mubr.f32.gmra.mxu0 %v1780
      %v2261 = vpop.f32.mrf.mxu0
      %v2262 = vadd.f32 0.0, %v2261
      %v2263 = vpop.f32.mrf.mxu0
      %2264 = vmatprep.mubr.f32.mxu0 0.0
      %2265 = vmatmul.mubr.f32.gmra.mxu0 %v1783
      %v2266 = vpop.f32.mrf.mxu0
      %v2267 = vadd.f32 0.0, %v2266
      %v2268 = vpop.f32.mrf.mxu0
      %2269 = vmatprep.mubr.f32.mxu0 0.0
      %2270 = vmatmul.mubr.f32.gmra.mxu0 %v2047
      %v2271 = vpop.f32.mrf.mxu0
      %v2272 = vadd.f32 0.0, %v2271
      %v2273 = vpop.f32.mrf.mxu0
      %2274 = vmatprep.mubr.f32.mxu0 0.0
      %2275 = vmatmul.mubr.f32.gmra.mxu0 %v2050
      %v2276 = vpop.f32.mrf.mxu0
      %v2277 = vadd.f32 0.0, %v2276
      %v2278 = vpop.f32.mrf.mxu0
      %2279 = vdwg.mxu0
      %v2280 = vadd.f32 %v2013, %v2122
      %v2281 = vadd.f32 %v2014, %v2127
      %v2282 = vadd.f32 %v2015, %v2132
      %v2283 = vadd.f32 %v2016, %v2137
      %v2284 = vadd.f32 %v2017, %v2142
      %v2285 = vadd.f32 %v2018, %v2147
      %v2286 = vadd.f32 %v2019, %v2152
      %v2287 = vadd.f32 %v2020, %v2157
      %v2288 = vadd.f32 %v2021, %v2162
      %v2289 = vadd.f32 %v2022, %v2167
      %v2290 = vadd.f32 %v2023, %v2172
      %v2291 = vadd.f32 %v2024, %v2177
      %v2292 = vadd.f32 %v2025, %v2182
      %v2293 = vadd.f32 %v2026, %v2187
      %v2294 = vadd.f32 %v2027, %v2192
      %v2295 = vadd.f32 %v2028, %v2197
      %v2296 = vadd.f32 %v2029, %v2202
      %v2297 = vadd.f32 %v2030, %v2207
      %v2298 = vadd.f32 %v2031, %v2212
      %v2299 = vadd.f32 %v2032, %v2217
      %v2300 = vadd.f32 %v2033, %v2222
      %v2301 = vadd.f32 %v2034, %v2227
      %v2302 = vadd.f32 %v2035, %v2232
      %v2303 = vadd.f32 %v2036, %v2237
      %v2304 = vadd.f32 %v2037, %v2242
      %v2305 = vadd.f32 %v2038, %v2247
      %v2306 = vadd.f32 %v2039, %v2252
      %v2307 = vadd.f32 %v2040, %v2257
      %v2308 = vadd.f32 %v2041, %v2262
      %v2309 = vadd.f32 %v2042, %v2267
      %v2310 = vadd.f32 %v2043, %v2272
      %v2311 = vadd.f32 %v2044, %v2277
      %v2312 = vld [vmem:[#allocation2 + $0x9] sm:$0xff]
      %v2313 = vld [vmem:[#allocation2 + $0x11] sm:$0xff]
      %v2314 = vld [vmem:[#allocation2 + $0x29] sm:$0xff]
      %v2315 = vld [vmem:[#allocation2 + $0x31] sm:$0xff]
      %v2316 = vld [vmem:[#allocation2 + $0x49] sm:$0xff]
      %v2317 = vld [vmem:[#allocation2 + $0x51] sm:$0xff]
      %v2318 = vld [vmem:[#allocation2 + $0x69] sm:$0xff]
      %v2319 = vld [vmem:[#allocation2 + $0x71] sm:$0xff]
      %v2320 = vld [vmem:[#allocation2 + $0x89] sm:$0xff]
      %v2321 = vld [vmem:[#allocation2 + $0x91] sm:$0xff]
      %v2322 = vld [vmem:[#allocation2 + $0xa9] sm:$0xff]
      %v2323 = vld [vmem:[#allocation2 + $0xb1] sm:$0xff]
      %v2324 = vld [vmem:[#allocation2 + $0xc9] sm:$0xff]
      %v2325 = vld [vmem:[#allocation2 + $0xd1] sm:$0xff]
      %v2326 = vld [vmem:[#allocation2 + $0xe9] sm:$0xff]
      %v2327 = vld [vmem:[#allocation2 + $0xf1] sm:$0xff]
      %v2328 = vld [vmem:[#allocation2 + $0x109] sm:$0xff]
      %v2329 = vld [vmem:[#allocation2 + $0x111] sm:$0xff]
      %v2330 = vld [vmem:[#allocation2 + $0x129] sm:$0xff]
      %v2331 = vld [vmem:[#allocation2 + $0x131] sm:$0xff]
      %v2332 = vld [vmem:[#allocation2 + $0x149] sm:$0xff]
      %v2333 = vld [vmem:[#allocation2 + $0x151] sm:$0xff]
      %v2334 = vld [vmem:[#allocation2 + $0x169] sm:$0xff]
      %v2335 = vld [vmem:[#allocation2 + $0x171] sm:$0xff]
      %v2336 = vld [vmem:[#allocation2 + $0x189] sm:$0xff]
      %v2337 = vld [vmem:[#allocation2 + $0x191] sm:$0xff]
      %v2338 = vld [vmem:[#allocation2 + $0x1a9] sm:$0xff]
      %v2339 = vld [vmem:[#allocation2 + $0x1b1] sm:$0xff]
      %v2340 = vld [vmem:[#allocation2 + $0x1c9] sm:$0xff]
      %v2341 = vld [vmem:[#allocation2 + $0x1d1] sm:$0xff]
      %v2342 = vld [vmem:[#allocation2 + $0x1e9] sm:$0xff]
      %v2343 = vld [vmem:[#allocation2 + $0x1f1] sm:$0xff]
      %v2344 = vld [vmem:[#allocation2 + $0x209] sm:$0xff]
      %v2345 = vld [vmem:[#allocation2 + $0x211] sm:$0xff]
      %v2346 = vld [vmem:[#allocation2 + $0x229] sm:$0xff]
      %v2347 = vld [vmem:[#allocation2 + $0x231] sm:$0xff]
      %vm2348 = vcmp.eq.s32.totalorder %v477, 15
      %vm2349 = vcmp.eq.s32.totalorder %v478, 15
      %v2350 = vsel %vm2348, 1, 0
      %v2351 = vsel %vm2349, 1, 0
      %vm2352 = vcmp.eq.s32.totalorder %v2350, 1
      %vm2353 = vcmp.eq.s32.totalorder %v2351, 1
      %v2354 = vsel %vm2352, 0.0, %v2312
      %v2355 = vsel %vm2353, 0.0, %v2313
      %v2356 = vsel %vm2352, 0.0, %v2314
      %v2357 = vsel %vm2353, 0.0, %v2315
      %v2358 = vsel %vm2352, 0.0, %v2316
      %v2359 = vsel %vm2353, 0.0, %v2317
      %v2360 = vsel %vm2352, 0.0, %v2318
      %v2361 = vsel %vm2353, 0.0, %v2319
      %v2362 = vsel %vm2352, 0.0, %v2320
      %v2363 = vsel %vm2353, 0.0, %v2321
      %v2364 = vsel %vm2352, 0.0, %v2322
      %v2365 = vsel %vm2353, 0.0, %v2323
      %v2366 = vsel %vm2352, 0.0, %v2324
      %v2367 = vsel %vm2353, 0.0, %v2325
      %v2368 = vsel %vm2352, 0.0, %v2326
      %v2369 = vsel %vm2353, 0.0, %v2327
      %v2370 = vsel %vm2352, 0.0, %v2328
      %v2371 = vsel %vm2353, 0.0, %v2329
      %v2372 = vsel %vm2352, 0.0, %v2330
      %v2373 = vsel %vm2353, 0.0, %v2331
      %v2374 = vsel %vm2352, 0.0, %v2332
      %v2375 = vsel %vm2353, 0.0, %v2333
      %v2376 = vsel %vm2352, 0.0, %v2334
      %v2377 = vsel %vm2353, 0.0, %v2335
      %v2378 = vsel %vm2352, 0.0, %v2336
      %v2379 = vsel %vm2353, 0.0, %v2337
      %v2380 = vsel %vm2352, 0.0, %v2338
      %v2381 = vsel %vm2353, 0.0, %v2339
      %v2382 = vsel %vm2352, 0.0, %v2340
      %v2383 = vsel %vm2353, 0.0, %v2341
      %v2384 = vsel %vm2352, 0.0, %v2342
      %v2385 = vsel %vm2353, 0.0, %v2343
      %v2386 = vsel %vm2352, 0.0, %v2344
      %v2387 = vsel %vm2353, 0.0, %v2345
      %v2388 = vsel %vm2352, 0.0, %v2346
      %v2389 = vsel %vm2353, 0.0, %v2347
      %v2390 = vld [vmem:[%s3 + $0x8] sm:$0xf]
      %v2392 = vsel %vm426, %v2354, 0
      %v2395 = vsel %vm426, %v2355, 0
      %v2398 = vsel %vm426, %v2356, 0
      %v2401 = vsel %vm426, %v2357, 0
      %v2404 = vsel %vm426, %v2358, 0
      %v2407 = vsel %vm426, %v2359, 0
      %v2410 = vsel %vm426, %v2360, 0
      %v2413 = vsel %vm426, %v2361, 0
      %v2416 = vsel %vm426, %v2362, 0
      %v2419 = vsel %vm426, %v2363, 0
      %v2422 = vsel %vm426, %v2364, 0
      %v2425 = vsel %vm426, %v2365, 0
      %v2428 = vsel %vm426, %v2366, 0
      %v2431 = vsel %vm426, %v2367, 0
      %v2434 = vsel %vm426, %v2368, 0
      %v2437 = vsel %vm426, %v2369, 0
      %v2440 = vsel %vm426, %v2370, 0
      %v2443 = vsel %vm426, %v2371, 0
      %v2446 = vsel %vm426, %v2372, 0
      %v2449 = vsel %vm426, %v2373, 0
      %v2452 = vsel %vm426, %v2374, 0
      %v2455 = vsel %vm426, %v2375, 0
      %v2458 = vsel %vm426, %v2376, 0
      %v2461 = vsel %vm426, %v2377, 0
      %v2464 = vsel %vm426, %v2378, 0
      %v2467 = vsel %vm426, %v2379, 0
      %v2470 = vsel %vm426, %v2380, 0
      %v2473 = vsel %vm426, %v2381, 0
      %v2476 = vsel %vm426, %v2382, 0
      %v2479 = vsel %vm426, %v2383, 0
      %v2482 = vsel %vm426, %v2384, 0
      %v2485 = vsel %vm426, %v2385, 0
      %v2488 = vsel %vm655, %v2390, 0
      %2490 = vmatprep.subr.mxu0 0.0
      %2491 = vmatpush1.msra.mxu0 0.0
      %2492 = vmatprep.subr.mxu0 0.0
      %2493 = vmatpush1.msra.mxu0 0.0
      %2494 = vmatprep.subr.mxu0 0.0
      %2495 = vmatpush1.msra.mxu0 0.0
      %2496 = vmatprep.subr.mxu0 0.0
      %2497 = vmatpush1.msra.mxu0 0.0
      %2498 = vmatprep.subr.mxu0 0.0
      %2499 = vmatpush1.msra.mxu0 0.0
      %2500 = vmatprep.subr.mxu0 0.0
      %2501 = vmatpush1.msra.mxu0 0.0
      %2502 = vmatprep.subr.mxu0 0.0
      %2503 = vmatpush1.msra.mxu0 0.0
      %2504 = vmatprep.subr.mxu0 0.0
      %2505 = vmatpush1.msra.mxu0 0.0
      %2506 = vmatprep.subr.mxu0 0.0
      %2507 = vmatpush1.msra.mxu0 0.0
      %2508 = vmatprep.subr.mxu0 0.0
      %2509 = vmatpush1.msra.mxu0 0.0
      %2510 = vmatprep.subr.mxu0 0.0
      %2511 = vmatpush1.msra.mxu0 0.0
      %2512 = vmatprep.subr.mxu0 0.0
      %2513 = vmatpush1.msra.mxu0 0.0
      %2514 = vmatprep.subr.mxu0 0.0
      %2515 = vmatpush1.msra.mxu0 0.0
      %2516 = vmatprep.subr.mxu0 0.0
      %2517 = vmatpush1.msra.mxu0 0.0
      %2518 = vmatprep.subr.mxu0 0.0
      %2519 = vmatpush1.msra.mxu0 0.0
      %2520 = vmatprep.subr.mxu0 0.0
      %2521 = vmatpush1.msra.mxu0 %v2488
      %2522 = vmatprep.subr.mxu0 0.0
      %2523 = vmatpush2.msra.mxu0 0.0
      %2524 = vmatprep.subr.mxu0 0.0
      %2525 = vmatpush2.msra.mxu0 0.0
      %2526 = vmatprep.subr.mxu0 0.0
      %2527 = vmatpush2.msra.mxu0 0.0
      %2528 = vmatprep.subr.mxu0 0.0
      %2529 = vmatpush2.msra.mxu0 0.0
      %2530 = vmatprep.subr.mxu0 0.0
      %2531 = vmatpush2.msra.mxu0 0.0
      %2532 = vmatprep.subr.mxu0 0.0
      %2533 = vmatpush2.msra.mxu0 0.0
      %2534 = vmatprep.subr.mxu0 0.0
      %2535 = vmatpush2.msra.mxu0 0.0
      %2536 = vmatprep.subr.mxu0 0.0
      %2537 = vmatpush2.msra.mxu0 0.0
      %2538 = vmatprep.subr.mxu0 0.0
      %2539 = vmatpush2.msra.mxu0 0.0
      %2540 = vmatprep.subr.mxu0 0.0
      %2541 = vmatpush2.msra.mxu0 0.0
      %2542 = vmatprep.subr.mxu0 0.0
      %2543 = vmatpush2.msra.mxu0 0.0
      %2544 = vmatprep.subr.mxu0 0.0
      %2545 = vmatpush2.msra.mxu0 0.0
      %2546 = vmatprep.subr.mxu0 0.0
      %2547 = vmatpush2.msra.mxu0 0.0
      %2548 = vmatprep.subr.mxu0 0.0
      %2549 = vmatpush2.msra.mxu0 0.0
      %2550 = vmatprep.subr.mxu0 0.0
      %2551 = vmatpush2.msra.mxu0 0.0
      %2552 = vmatprep.subr.mxu0 0.0
      %2553 = vmatpush2.msra.mxu0 0.0
      %2554 = vmatprep.mubr.f32.mxu0 0.0
      %2555 = vmatmul.mubr.f32.gmra.mxu0 %v2392
      %v2556 = vpop.f32.mrf.mxu0
      %v2557 = vadd.f32 0.0, %v2556
      %v2558 = vpop.f32.mrf.mxu0
      %2559 = vmatprep.mubr.f32.mxu0 0.0
      %2560 = vmatmul.mubr.f32.gmra.mxu0 %v2395
      %v2561 = vpop.f32.mrf.mxu0
      %v2562 = vadd.f32 0.0, %v2561
      %v2563 = vpop.f32.mrf.mxu0
      %2564 = vmatprep.mubr.f32.mxu0 0.0
      %2565 = vmatmul.mubr.f32.gmra.mxu0 %v2398
      %v2566 = vpop.f32.mrf.mxu0
      %v2567 = vadd.f32 0.0, %v2566
      %v2568 = vpop.f32.mrf.mxu0
      %2569 = vmatprep.mubr.f32.mxu0 0.0
      %2570 = vmatmul.mubr.f32.gmra.mxu0 %v2401
      %v2571 = vpop.f32.mrf.mxu0
      %v2572 = vadd.f32 0.0, %v2571
      %v2573 = vpop.f32.mrf.mxu0
      %2574 = vmatprep.mubr.f32.mxu0 0.0
      %2575 = vmatmul.mubr.f32.gmra.mxu0 %v2404
      %v2576 = vpop.f32.mrf.mxu0
      %v2577 = vadd.f32 0.0, %v2576
      %v2578 = vpop.f32.mrf.mxu0
      %2579 = vmatprep.mubr.f32.mxu0 0.0
      %2580 = vmatmul.mubr.f32.gmra.mxu0 %v2407
      %v2581 = vpop.f32.mrf.mxu0
      %v2582 = vadd.f32 0.0, %v2581
      %v2583 = vpop.f32.mrf.mxu0
      %2584 = vmatprep.mubr.f32.mxu0 0.0
      %2585 = vmatmul.mubr.f32.gmra.mxu0 %v2410
      %v2586 = vpop.f32.mrf.mxu0
      %v2587 = vadd.f32 0.0, %v2586
      %v2588 = vpop.f32.mrf.mxu0
      %2589 = vmatprep.mubr.f32.mxu0 0.0
      %2590 = vmatmul.mubr.f32.gmra.mxu0 %v2413
      %v2591 = vpop.f32.mrf.mxu0
      %v2592 = vadd.f32 0.0, %v2591
      %v2593 = vpop.f32.mrf.mxu0
      %2594 = vmatprep.mubr.f32.mxu0 0.0
      %2595 = vmatmul.mubr.f32.gmra.mxu0 %v2416
      %v2596 = vpop.f32.mrf.mxu0
      %v2597 = vadd.f32 0.0, %v2596
      %v2598 = vpop.f32.mrf.mxu0
      %2599 = vmatprep.mubr.f32.mxu0 0.0
      %2600 = vmatmul.mubr.f32.gmra.mxu0 %v2419
      %v2601 = vpop.f32.mrf.mxu0
      %v2602 = vadd.f32 0.0, %v2601
      %v2603 = vpop.f32.mrf.mxu0
      %2604 = vmatprep.mubr.f32.mxu0 0.0
      %2605 = vmatmul.mubr.f32.gmra.mxu0 %v2422
      %v2606 = vpop.f32.mrf.mxu0
      %v2607 = vadd.f32 0.0, %v2606
      %v2608 = vpop.f32.mrf.mxu0
      %2609 = vmatprep.mubr.f32.mxu0 0.0
      %2610 = vmatmul.mubr.f32.gmra.mxu0 %v2425
      %v2611 = vpop.f32.mrf.mxu0
      %v2612 = vadd.f32 0.0, %v2611
      %v2613 = vpop.f32.mrf.mxu0
      %2614 = vmatprep.mubr.f32.mxu0 0.0
      %2615 = vmatmul.mubr.f32.gmra.mxu0 %v2428
      %v2616 = vpop.f32.mrf.mxu0
      %v2617 = vadd.f32 0.0, %v2616
      %v2618 = vpop.f32.mrf.mxu0
      %2619 = vmatprep.mubr.f32.mxu0 0.0
      %2620 = vmatmul.mubr.f32.gmra.mxu0 %v2431
      %v2621 = vpop.f32.mrf.mxu0
      %v2622 = vadd.f32 0.0, %v2621
      %v2623 = vpop.f32.mrf.mxu0
      %2624 = vmatprep.mubr.f32.mxu0 0.0
      %2625 = vmatmul.mubr.f32.gmra.mxu0 %v2434
      %v2626 = vpop.f32.mrf.mxu0
      %v2627 = vadd.f32 0.0, %v2626
      %v2628 = vpop.f32.mrf.mxu0
      %2629 = vmatprep.mubr.f32.mxu0 0.0
      %2630 = vmatmul.mubr.f32.gmra.mxu0 %v2437
      %v2631 = vpop.f32.mrf.mxu0
      %v2632 = vadd.f32 0.0, %v2631
      %v2633 = vpop.f32.mrf.mxu0
      %2634 = vmatprep.mubr.f32.mxu0 0.0
      %2635 = vmatmul.mubr.f32.gmra.mxu0 %v2440
      %v2636 = vpop.f32.mrf.mxu0
      %v2637 = vadd.f32 0.0, %v2636
      %v2638 = vpop.f32.mrf.mxu0
      %2639 = vmatprep.mubr.f32.mxu0 0.0
      %2640 = vmatmul.mubr.f32.gmra.mxu0 %v2443
      %v2641 = vpop.f32.mrf.mxu0
      %v2642 = vadd.f32 0.0, %v2641
      %v2643 = vpop.f32.mrf.mxu0
      %2644 = vmatprep.mubr.f32.mxu0 0.0
      %2645 = vmatmul.mubr.f32.gmra.mxu0 %v2446
      %v2646 = vpop.f32.mrf.mxu0
      %v2647 = vadd.f32 0.0, %v2646
      %v2648 = vpop.f32.mrf.mxu0
      %2649 = vmatprep.mubr.f32.mxu0 0.0
      %2650 = vmatmul.mubr.f32.gmra.mxu0 %v2449
      %v2651 = vpop.f32.mrf.mxu0
      %v2652 = vadd.f32 0.0, %v2651
      %v2653 = vpop.f32.mrf.mxu0
      %2654 = vmatprep.mubr.f32.mxu0 0.0
      %2655 = vmatmul.mubr.f32.gmra.mxu0 %v2452
      %v2656 = vpop.f32.mrf.mxu0
      %v2657 = vadd.f32 0.0, %v2656
      %v2658 = vpop.f32.mrf.mxu0
      %2659 = vmatprep.mubr.f32.mxu0 0.0
      %2660 = vmatmul.mubr.f32.gmra.mxu0 %v2455
      %v2661 = vpop.f32.mrf.mxu0
      %v2662 = vadd.f32 0.0, %v2661
      %v2663 = vpop.f32.mrf.mxu0
      %2664 = vmatprep.mubr.f32.mxu0 0.0
      %2665 = vmatmul.mubr.f32.gmra.mxu0 %v2458
      %v2666 = vpop.f32.mrf.mxu0
      %v2667 = vadd.f32 0.0, %v2666
      %v2668 = vpop.f32.mrf.mxu0
      %2669 = vmatprep.mubr.f32.mxu0 0.0
      %2670 = vmatmul.mubr.f32.gmra.mxu0 %v2461
      %v2671 = vpop.f32.mrf.mxu0
      %v2672 = vadd.f32 0.0, %v2671
      %v2673 = vpop.f32.mrf.mxu0
      %2674 = vmatprep.mubr.f32.mxu0 0.0
      %2675 = vmatmul.mubr.f32.gmra.mxu0 %v2464
      %v2676 = vpop.f32.mrf.mxu0
      %v2677 = vadd.f32 0.0, %v2676
      %v2678 = vpop.f32.mrf.mxu0
      %2679 = vmatprep.mubr.f32.mxu0 0.0
      %2680 = vmatmul.mubr.f32.gmra.mxu0 %v2467
      %v2681 = vpop.f32.mrf.mxu0
      %v2682 = vadd.f32 0.0, %v2681
      %v2683 = vpop.f32.mrf.mxu0
      %2684 = vmatprep.mubr.f32.mxu0 0.0
      %2685 = vmatmul.mubr.f32.gmra.mxu0 %v2470
      %v2686 = vpop.f32.mrf.mxu0
      %v2687 = vadd.f32 0.0, %v2686
      %v2688 = vpop.f32.mrf.mxu0
      %2689 = vmatprep.mubr.f32.mxu0 0.0
      %2690 = vmatmul.mubr.f32.gmra.mxu0 %v2473
      %v2691 = vpop.f32.mrf.mxu0
      %v2692 = vadd.f32 0.0, %v2691
      %v2693 = vpop.f32.mrf.mxu0
      %2694 = vmatprep.mubr.f32.mxu0 0.0
      %2695 = vmatmul.mubr.f32.gmra.mxu0 %v2476
      %v2696 = vpop.f32.mrf.mxu0
      %v2697 = vadd.f32 0.0, %v2696
      %v2698 = vpop.f32.mrf.mxu0
      %2699 = vmatprep.mubr.f32.mxu0 0.0
      %2700 = vmatmul.mubr.f32.gmra.mxu0 %v2479
      %v2701 = vpop.f32.mrf.mxu0
      %v2702 = vadd.f32 0.0, %v2701
      %v2703 = vpop.f32.mrf.mxu0
      %2704 = vmatprep.mubr.f32.mxu0 0.0
      %2705 = vmatmul.mubr.f32.gmra.mxu0 %v2482
      %v2706 = vpop.f32.mrf.mxu0
      %v2707 = vadd.f32 0.0, %v2706
      %v2708 = vpop.f32.mrf.mxu0
      %2709 = vmatprep.mubr.f32.mxu0 0.0
      %2710 = vmatmul.mubr.f32.gmra.mxu0 %v2485
      %v2711 = vpop.f32.mrf.mxu0
      %v2712 = vadd.f32 0.0, %v2711
      %v2713 = vpop.f32.mrf.mxu0
      %2714 = vdwg.mxu0
      %v2715 = vadd.f32 %v2280, %v2557
      %v2716 = vadd.f32 %v2281, %v2562
      %v2717 = vadd.f32 %v2282, %v2567
      %v2718 = vadd.f32 %v2283, %v2572
      %v2719 = vadd.f32 %v2284, %v2577
      %v2720 = vadd.f32 %v2285, %v2582
      %v2721 = vadd.f32 %v2286, %v2587
      %v2722 = vadd.f32 %v2287, %v2592
      %v2723 = vadd.f32 %v2288, %v2597
      %v2724 = vadd.f32 %v2289, %v2602
      %v2725 = vadd.f32 %v2290, %v2607
      %v2726 = vadd.f32 %v2291, %v2612
      %v2727 = vadd.f32 %v2292, %v2617
      %v2728 = vadd.f32 %v2293, %v2622
      %v2729 = vadd.f32 %v2294, %v2627
      %v2730 = vadd.f32 %v2295, %v2632
      %v2731 = vadd.f32 %v2296, %v2637
      %v2732 = vadd.f32 %v2297, %v2642
      %v2733 = vadd.f32 %v2298, %v2647
      %v2734 = vadd.f32 %v2299, %v2652
      %v2735 = vadd.f32 %v2300, %v2657
      %v2736 = vadd.f32 %v2301, %v2662
      %v2737 = vadd.f32 %v2302, %v2667
      %v2738 = vadd.f32 %v2303, %v2672
      %v2739 = vadd.f32 %v2304, %v2677
      %v2740 = vadd.f32 %v2305, %v2682
      %v2741 = vadd.f32 %v2306, %v2687
      %v2742 = vadd.f32 %v2307, %v2692
      %v2743 = vadd.f32 %v2308, %v2697
      %v2744 = vadd.f32 %v2309, %v2702
      %v2745 = vadd.f32 %v2310, %v2707
      %v2746 = vadd.f32 %v2311, %v2712
      %v2747 = vld [vmem:[%s3 + $0x14] sm:$0xf]
      %v2749 = vsel %vm426, %v2386, 0
      %v2752 = vsel %vm426, %v2387, 0
      %v2755 = vsel %vm655, %v2747, 0
      %2757 = vmatprep.subr.mxu0 0.0
      %2758 = vmatpush1.msra.mxu0 0.0
      %2759 = vmatprep.subr.mxu0 0.0
      %2760 = vmatpush1.msra.mxu0 0.0
      %2761 = vmatprep.subr.mxu0 0.0
      %2762 = vmatpush1.msra.mxu0 0.0
      %2763 = vmatprep.subr.mxu0 0.0
      %2764 = vmatpush1.msra.mxu0 0.0
      %2765 = vmatprep.subr.mxu0 0.0
      %2766 = vmatpush1.msra.mxu0 0.0
      %2767 = vmatprep.subr.mxu0 0.0
      %2768 = vmatpush1.msra.mxu0 0.0
      %2769 = vmatprep.subr.mxu0 0.0
      %2770 = vmatpush1.msra.mxu0 0.0
      %2771 = vmatprep.subr.mxu0 0.0
      %2772 = vmatpush1.msra.mxu0 0.0
      %2773 = vmatprep.subr.mxu0 0.0
      %2774 = vmatpush1.msra.mxu0 0.0
      %2775 = vmatprep.subr.mxu0 0.0
      %2776 = vmatpush1.msra.mxu0 0.0
      %2777 = vmatprep.subr.mxu0 0.0
      %2778 = vmatpush1.msra.mxu0 0.0
      %2779 = vmatprep.subr.mxu0 0.0
      %2780 = vmatpush1.msra.mxu0 0.0
      %2781 = vmatprep.subr.mxu0 0.0
      %2782 = vmatpush1.msra.mxu0 0.0
      %2783 = vmatprep.subr.mxu0 0.0
      %2784 = vmatpush1.msra.mxu0 0.0
      %2785 = vmatprep.subr.mxu0 0.0
      %2786 = vmatpush1.msra.mxu0 0.0
      %2787 = vmatprep.subr.mxu0 0.0
      %2788 = vmatpush1.msra.mxu0 %v2755
      %2789 = vmatprep.subr.mxu0 0.0
      %2790 = vmatpush2.msra.mxu0 0.0
      %2791 = vmatprep.subr.mxu0 0.0
      %2792 = vmatpush2.msra.mxu0 0.0
      %2793 = vmatprep.subr.mxu0 0.0
      %2794 = vmatpush2.msra.mxu0 0.0
      %2795 = vmatprep.subr.mxu0 0.0
      %2796 = vmatpush2.msra.mxu0 0.0
      %2797 = vmatprep.subr.mxu0 0.0
      %2798 = vmatpush2.msra.mxu0 0.0
      %2799 = vmatprep.subr.mxu0 0.0
      %2800 = vmatpush2.msra.mxu0 0.0
      %2801 = vmatprep.subr.mxu0 0.0
      %2802 = vmatpush2.msra.mxu0 0.0
      %2803 = vmatprep.subr.mxu0 0.0
      %2804 = vmatpush2.msra.mxu0 0.0
      %2805 = vmatprep.subr.mxu0 0.0
      %2806 = vmatpush2.msra.mxu0 0.0
      %2807 = vmatprep.subr.mxu0 0.0
      %2808 = vmatpush2.msra.mxu0 0.0
      %2809 = vmatprep.subr.mxu0 0.0
      %2810 = vmatpush2.msra.mxu0 0.0
      %2811 = vmatprep.subr.mxu0 0.0
      %2812 = vmatpush2.msra.mxu0 0.0
      %2813 = vmatprep.subr.mxu0 0.0
      %2814 = vmatpush2.msra.mxu0 0.0
      %2815 = vmatprep.subr.mxu0 0.0
      %2816 = vmatpush2.msra.mxu0 0.0
      %2817 = vmatprep.subr.mxu0 0.0
      %2818 = vmatpush2.msra.mxu0 0.0
      %2819 = vmatprep.subr.mxu0 0.0
      %2820 = vmatpush2.msra.mxu0 0.0
      %2821 = vmatprep.mubr.f32.mxu0 0.0
      %2822 = vmatmul.mubr.f32.gmra.mxu0 %v2398
      %v2823 = vpop.f32.mrf.mxu0
      %v2824 = vadd.f32 0.0, %v2823
      %v2825 = vpop.f32.mrf.mxu0
      %2826 = vmatprep.mubr.f32.mxu0 0.0
      %2827 = vmatmul.mubr.f32.gmra.mxu0 %v2401
      %v2828 = vpop.f32.mrf.mxu0
      %v2829 = vadd.f32 0.0, %v2828
      %v2830 = vpop.f32.mrf.mxu0
      %2831 = vmatprep.mubr.f32.mxu0 0.0
      %2832 = vmatmul.mubr.f32.gmra.mxu0 %v2404
      %v2833 = vpop.f32.mrf.mxu0
      %v2834 = vadd.f32 0.0, %v2833
      %v2835 = vpop.f32.mrf.mxu0
      %2836 = vmatprep.mubr.f32.mxu0 0.0
      %2837 = vmatmul.mubr.f32.gmra.mxu0 %v2407
      %v2838 = vpop.f32.mrf.mxu0
      %v2839 = vadd.f32 0.0, %v2838
      %v2840 = vpop.f32.mrf.mxu0
      %2841 = vmatprep.mubr.f32.mxu0 0.0
      %2842 = vmatmul.mubr.f32.gmra.mxu0 %v2410
      %v2843 = vpop.f32.mrf.mxu0
      %v2844 = vadd.f32 0.0, %v2843
      %v2845 = vpop.f32.mrf.mxu0
      %2846 = vmatprep.mubr.f32.mxu0 0.0
      %2847 = vmatmul.mubr.f32.gmra.mxu0 %v2413
      %v2848 = vpop.f32.mrf.mxu0
      %v2849 = vadd.f32 0.0, %v2848
      %v2850 = vpop.f32.mrf.mxu0
      %2851 = vmatprep.mubr.f32.mxu0 0.0
      %2852 = vmatmul.mubr.f32.gmra.mxu0 %v2416
      %v2853 = vpop.f32.mrf.mxu0
      %v2854 = vadd.f32 0.0, %v2853
      %v2855 = vpop.f32.mrf.mxu0
      %2856 = vmatprep.mubr.f32.mxu0 0.0
      %2857 = vmatmul.mubr.f32.gmra.mxu0 %v2419
      %v2858 = vpop.f32.mrf.mxu0
      %v2859 = vadd.f32 0.0, %v2858
      %v2860 = vpop.f32.mrf.mxu0
      %2861 = vmatprep.mubr.f32.mxu0 0.0
      %2862 = vmatmul.mubr.f32.gmra.mxu0 %v2422
      %v2863 = vpop.f32.mrf.mxu0
      %v2864 = vadd.f32 0.0, %v2863
      %v2865 = vpop.f32.mrf.mxu0
      %2866 = vmatprep.mubr.f32.mxu0 0.0
      %2867 = vmatmul.mubr.f32.gmra.mxu0 %v2425
      %v2868 = vpop.f32.mrf.mxu0
      %v2869 = vadd.f32 0.0, %v2868
      %v2870 = vpop.f32.mrf.mxu0
      %2871 = vmatprep.mubr.f32.mxu0 0.0
      %2872 = vmatmul.mubr.f32.gmra.mxu0 %v2428
      %v2873 = vpop.f32.mrf.mxu0
      %v2874 = vadd.f32 0.0, %v2873
      %v2875 = vpop.f32.mrf.mxu0
      %2876 = vmatprep.mubr.f32.mxu0 0.0
      %2877 = vmatmul.mubr.f32.gmra.mxu0 %v2431
      %v2878 = vpop.f32.mrf.mxu0
      %v2879 = vadd.f32 0.0, %v2878
      %v2880 = vpop.f32.mrf.mxu0
      %2881 = vmatprep.mubr.f32.mxu0 0.0
      %2882 = vmatmul.mubr.f32.gmra.mxu0 %v2434
      %v2883 = vpop.f32.mrf.mxu0
      %v2884 = vadd.f32 0.0, %v2883
      %v2885 = vpop.f32.mrf.mxu0
      %2886 = vmatprep.mubr.f32.mxu0 0.0
      %2887 = vmatmul.mubr.f32.gmra.mxu0 %v2437
      %v2888 = vpop.f32.mrf.mxu0
      %v2889 = vadd.f32 0.0, %v2888
      %v2890 = vpop.f32.mrf.mxu0
      %2891 = vmatprep.mubr.f32.mxu0 0.0
      %2892 = vmatmul.mubr.f32.gmra.mxu0 %v2440
      %v2893 = vpop.f32.mrf.mxu0
      %v2894 = vadd.f32 0.0, %v2893
      %v2895 = vpop.f32.mrf.mxu0
      %2896 = vmatprep.mubr.f32.mxu0 0.0
      %2897 = vmatmul.mubr.f32.gmra.mxu0 %v2443
      %v2898 = vpop.f32.mrf.mxu0
      %v2899 = vadd.f32 0.0, %v2898
      %v2900 = vpop.f32.mrf.mxu0
      %2901 = vmatprep.mubr.f32.mxu0 0.0
      %2902 = vmatmul.mubr.f32.gmra.mxu0 %v2446
      %v2903 = vpop.f32.mrf.mxu0
      %v2904 = vadd.f32 0.0, %v2903
      %v2905 = vpop.f32.mrf.mxu0
      %2906 = vmatprep.mubr.f32.mxu0 0.0
      %2907 = vmatmul.mubr.f32.gmra.mxu0 %v2449
      %v2908 = vpop.f32.mrf.mxu0
      %v2909 = vadd.f32 0.0, %v2908
      %v2910 = vpop.f32.mrf.mxu0
      %2911 = vmatprep.mubr.f32.mxu0 0.0
      %2912 = vmatmul.mubr.f32.gmra.mxu0 %v2452
      %v2913 = vpop.f32.mrf.mxu0
      %v2914 = vadd.f32 0.0, %v2913
      %v2915 = vpop.f32.mrf.mxu0
      %2916 = vmatprep.mubr.f32.mxu0 0.0
      %2917 = vmatmul.mubr.f32.gmra.mxu0 %v2455
      %v2918 = vpop.f32.mrf.mxu0
      %v2919 = vadd.f32 0.0, %v2918
      %v2920 = vpop.f32.mrf.mxu0
      %2921 = vmatprep.mubr.f32.mxu0 0.0
      %2922 = vmatmul.mubr.f32.gmra.mxu0 %v2458
      %v2923 = vpop.f32.mrf.mxu0
      %v2924 = vadd.f32 0.0, %v2923
      %v2925 = vpop.f32.mrf.mxu0
      %2926 = vmatprep.mubr.f32.mxu0 0.0
      %2927 = vmatmul.mubr.f32.gmra.mxu0 %v2461
      %v2928 = vpop.f32.mrf.mxu0
      %v2929 = vadd.f32 0.0, %v2928
      %v2930 = vpop.f32.mrf.mxu0
      %2931 = vmatprep.mubr.f32.mxu0 0.0
      %2932 = vmatmul.mubr.f32.gmra.mxu0 %v2464
      %v2933 = vpop.f32.mrf.mxu0
      %v2934 = vadd.f32 0.0, %v2933
      %v2935 = vpop.f32.mrf.mxu0
      %2936 = vmatprep.mubr.f32.mxu0 0.0
      %2937 = vmatmul.mubr.f32.gmra.mxu0 %v2467
      %v2938 = vpop.f32.mrf.mxu0
      %v2939 = vadd.f32 0.0, %v2938
      %v2940 = vpop.f32.mrf.mxu0
      %2941 = vmatprep.mubr.f32.mxu0 0.0
      %2942 = vmatmul.mubr.f32.gmra.mxu0 %v2470
      %v2943 = vpop.f32.mrf.mxu0
      %v2944 = vadd.f32 0.0, %v2943
      %v2945 = vpop.f32.mrf.mxu0
      %2946 = vmatprep.mubr.f32.mxu0 0.0
      %2947 = vmatmul.mubr.f32.gmra.mxu0 %v2473
      %v2948 = vpop.f32.mrf.mxu0
      %v2949 = vadd.f32 0.0, %v2948
      %v2950 = vpop.f32.mrf.mxu0
      %2951 = vmatprep.mubr.f32.mxu0 0.0
      %2952 = vmatmul.mubr.f32.gmra.mxu0 %v2476
      %v2953 = vpop.f32.mrf.mxu0
      %v2954 = vadd.f32 0.0, %v2953
      %v2955 = vpop.f32.mrf.mxu0
      %2956 = vmatprep.mubr.f32.mxu0 0.0
      %2957 = vmatmul.mubr.f32.gmra.mxu0 %v2479
      %v2958 = vpop.f32.mrf.mxu0
      %v2959 = vadd.f32 0.0, %v2958
      %v2960 = vpop.f32.mrf.mxu0
      %2961 = vmatprep.mubr.f32.mxu0 0.0
      %2962 = vmatmul.mubr.f32.gmra.mxu0 %v2482
      %v2963 = vpop.f32.mrf.mxu0
      %v2964 = vadd.f32 0.0, %v2963
      %v2965 = vpop.f32.mrf.mxu0
      %2966 = vmatprep.mubr.f32.mxu0 0.0
      %2967 = vmatmul.mubr.f32.gmra.mxu0 %v2485
      %v2968 = vpop.f32.mrf.mxu0
      %v2969 = vadd.f32 0.0, %v2968
      %v2970 = vpop.f32.mrf.mxu0
      %2971 = vmatprep.mubr.f32.mxu0 0.0
      %2972 = vmatmul.mubr.f32.gmra.mxu0 %v2749
      %v2973 = vpop.f32.mrf.mxu0
      %v2974 = vadd.f32 0.0, %v2973
      %v2975 = vpop.f32.mrf.mxu0
      %2976 = vmatprep.mubr.f32.mxu0 0.0
      %2977 = vmatmul.mubr.f32.gmra.mxu0 %v2752
      %v2978 = vpop.f32.mrf.mxu0
      %v2979 = vadd.f32 0.0, %v2978
      %v2980 = vpop.f32.mrf.mxu0
      %2981 = vdwg.mxu0
      %v2982 = vadd.f32 %v2715, %v2824
      %v2983 = vadd.f32 %v2716, %v2829
      %v2984 = vadd.f32 %v2717, %v2834
      %v2985 = vadd.f32 %v2718, %v2839
      %v2986 = vadd.f32 %v2719, %v2844
      %v2987 = vadd.f32 %v2720, %v2849
      %v2988 = vadd.f32 %v2721, %v2854
      %v2989 = vadd.f32 %v2722, %v2859
      %v2990 = vadd.f32 %v2723, %v2864
      %v2991 = vadd.f32 %v2724, %v2869
      %v2992 = vadd.f32 %v2725, %v2874
      %v2993 = vadd.f32 %v2726, %v2879
      %v2994 = vadd.f32 %v2727, %v2884
      %v2995 = vadd.f32 %v2728, %v2889
      %v2996 = vadd.f32 %v2729, %v2894
      %v2997 = vadd.f32 %v2730, %v2899
      %v2998 = vadd.f32 %v2731, %v2904
      %v2999 = vadd.f32 %v2732, %v2909
      %v3000 = vadd.f32 %v2733, %v2914
      %v3001 = vadd.f32 %v2734, %v2919
      %v3002 = vadd.f32 %v2735, %v2924
      %v3003 = vadd.f32 %v2736, %v2929
      %v3004 = vadd.f32 %v2737, %v2934
      %v3005 = vadd.f32 %v2738, %v2939
      %v3006 = vadd.f32 %v2739, %v2944
      %v3007 = vadd.f32 %v2740, %v2949
      %v3008 = vadd.f32 %v2741, %v2954
      %v3009 = vadd.f32 %v2742, %v2959
      %v3010 = vadd.f32 %v2743, %v2964
      %v3011 = vadd.f32 %v2744, %v2969
      %v3012 = vadd.f32 %v2745, %v2974
      %v3013 = vadd.f32 %v2746, %v2979
      %v3014 = vld [vmem:[%s3 + $0x20] sm:$0xf]
      %v3016 = vsel %vm426, %v2388, 0
      %v3019 = vsel %vm426, %v2389, 0
      %v3022 = vsel %vm655, %v3014, 0
      %3024 = vmatprep.subr.mxu0 0.0
      %3025 = vmatpush1.msra.mxu0 0.0
      %3026 = vmatprep.subr.mxu0 0.0
      %3027 = vmatpush1.msra.mxu0 0.0
      %3028 = vmatprep.subr.mxu0 0.0
      %3029 = vmatpush1.msra.mxu0 0.0
      %3030 = vmatprep.subr.mxu0 0.0
      %3031 = vmatpush1.msra.mxu0 0.0
      %3032 = vmatprep.subr.mxu0 0.0
      %3033 = vmatpush1.msra.mxu0 0.0
      %3034 = vmatprep.subr.mxu0 0.0
      %3035 = vmatpush1.msra.mxu0 0.0
      %3036 = vmatprep.subr.mxu0 0.0
      %3037 = vmatpush1.msra.mxu0 0.0
      %3038 = vmatprep.subr.mxu0 0.0
      %3039 = vmatpush1.msra.mxu0 0.0
      %3040 = vmatprep.subr.mxu0 0.0
      %3041 = vmatpush1.msra.mxu0 0.0
      %3042 = vmatprep.subr.mxu0 0.0
      %3043 = vmatpush1.msra.mxu0 0.0
      %3044 = vmatprep.subr.mxu0 0.0
      %3045 = vmatpush1.msra.mxu0 0.0
      %3046 = vmatprep.subr.mxu0 0.0
      %3047 = vmatpush1.msra.mxu0 0.0
      %3048 = vmatprep.subr.mxu0 0.0
      %3049 = vmatpush1.msra.mxu0 0.0
      %3050 = vmatprep.subr.mxu0 0.0
      %3051 = vmatpush1.msra.mxu0 0.0
      %3052 = vmatprep.subr.mxu0 0.0
      %3053 = vmatpush1.msra.mxu0 0.0
      %3054 = vmatprep.subr.mxu0 0.0
      %3055 = vmatpush1.msra.mxu0 %v3022
      %3056 = vmatprep.subr.mxu0 0.0
      %3057 = vmatpush2.msra.mxu0 0.0
      %3058 = vmatprep.subr.mxu0 0.0
      %3059 = vmatpush2.msra.mxu0 0.0
      %3060 = vmatprep.subr.mxu0 0.0
      %3061 = vmatpush2.msra.mxu0 0.0
      %3062 = vmatprep.subr.mxu0 0.0
      %3063 = vmatpush2.msra.mxu0 0.0
      %3064 = vmatprep.subr.mxu0 0.0
      %3065 = vmatpush2.msra.mxu0 0.0
      %3066 = vmatprep.subr.mxu0 0.0
      %3067 = vmatpush2.msra.mxu0 0.0
      %3068 = vmatprep.subr.mxu0 0.0
      %3069 = vmatpush2.msra.mxu0 0.0
      %3070 = vmatprep.subr.mxu0 0.0
      %3071 = vmatpush2.msra.mxu0 0.0
      %3072 = vmatprep.subr.mxu0 0.0
      %3073 = vmatpush2.msra.mxu0 0.0
      %3074 = vmatprep.subr.mxu0 0.0
      %3075 = vmatpush2.msra.mxu0 0.0
      %3076 = vmatprep.subr.mxu0 0.0
      %3077 = vmatpush2.msra.mxu0 0.0
      %3078 = vmatprep.subr.mxu0 0.0
      %3079 = vmatpush2.msra.mxu0 0.0
      %3080 = vmatprep.subr.mxu0 0.0
      %3081 = vmatpush2.msra.mxu0 0.0
      %3082 = vmatprep.subr.mxu0 0.0
      %3083 = vmatpush2.msra.mxu0 0.0
      %3084 = vmatprep.subr.mxu0 0.0
      %3085 = vmatpush2.msra.mxu0 0.0
      %3086 = vmatprep.subr.mxu0 0.0
      %3087 = vmatpush2.msra.mxu0 0.0
      %3088 = vmatprep.mubr.f32.mxu0 0.0
      %3089 = vmatmul.mubr.f32.gmra.mxu0 %v2404
      %v3090 = vpop.f32.mrf.mxu0
      %v3091 = vadd.f32 0.0, %v3090
      %v3092 = vpop.f32.mrf.mxu0
      %3093 = vmatprep.mubr.f32.mxu0 0.0
      %3094 = vmatmul.mubr.f32.gmra.mxu0 %v2407
      %v3095 = vpop.f32.mrf.mxu0
      %v3096 = vadd.f32 0.0, %v3095
      %v3097 = vpop.f32.mrf.mxu0
      %3098 = vmatprep.mubr.f32.mxu0 0.0
      %3099 = vmatmul.mubr.f32.gmra.mxu0 %v2410
      %v3100 = vpop.f32.mrf.mxu0
      %v3101 = vadd.f32 0.0, %v3100
      %v3102 = vpop.f32.mrf.mxu0
      %3103 = vmatprep.mubr.f32.mxu0 0.0
      %3104 = vmatmul.mubr.f32.gmra.mxu0 %v2413
      %v3105 = vpop.f32.mrf.mxu0
      %v3106 = vadd.f32 0.0, %v3105
      %v3107 = vpop.f32.mrf.mxu0
      %3108 = vmatprep.mubr.f32.mxu0 0.0
      %3109 = vmatmul.mubr.f32.gmra.mxu0 %v2416
      %v3110 = vpop.f32.mrf.mxu0
      %v3111 = vadd.f32 0.0, %v3110
      %v3112 = vpop.f32.mrf.mxu0
      %3113 = vmatprep.mubr.f32.mxu0 0.0
      %3114 = vmatmul.mubr.f32.gmra.mxu0 %v2419
      %v3115 = vpop.f32.mrf.mxu0
      %v3116 = vadd.f32 0.0, %v3115
      %v3117 = vpop.f32.mrf.mxu0
      %3118 = vmatprep.mubr.f32.mxu0 0.0
      %3119 = vmatmul.mubr.f32.gmra.mxu0 %v2422
      %v3120 = vpop.f32.mrf.mxu0
      %v3121 = vadd.f32 0.0, %v3120
      %v3122 = vpop.f32.mrf.mxu0
      %3123 = vmatprep.mubr.f32.mxu0 0.0
      %3124 = vmatmul.mubr.f32.gmra.mxu0 %v2425
      %v3125 = vpop.f32.mrf.mxu0
      %v3126 = vadd.f32 0.0, %v3125
      %v3127 = vpop.f32.mrf.mxu0
      %3128 = vmatprep.mubr.f32.mxu0 0.0
      %3129 = vmatmul.mubr.f32.gmra.mxu0 %v2428
      %v3130 = vpop.f32.mrf.mxu0
      %v3131 = vadd.f32 0.0, %v3130
      %v3132 = vpop.f32.mrf.mxu0
      %3133 = vmatprep.mubr.f32.mxu0 0.0
      %3134 = vmatmul.mubr.f32.gmra.mxu0 %v2431
      %v3135 = vpop.f32.mrf.mxu0
      %v3136 = vadd.f32 0.0, %v3135
      %v3137 = vpop.f32.mrf.mxu0
      %3138 = vmatprep.mubr.f32.mxu0 0.0
      %3139 = vmatmul.mubr.f32.gmra.mxu0 %v2434
      %v3140 = vpop.f32.mrf.mxu0
      %v3141 = vadd.f32 0.0, %v3140
      %v3142 = vpop.f32.mrf.mxu0
      %3143 = vmatprep.mubr.f32.mxu0 0.0
      %3144 = vmatmul.mubr.f32.gmra.mxu0 %v2437
      %v3145 = vpop.f32.mrf.mxu0
      %v3146 = vadd.f32 0.0, %v3145
      %v3147 = vpop.f32.mrf.mxu0
      %3148 = vmatprep.mubr.f32.mxu0 0.0
      %3149 = vmatmul.mubr.f32.gmra.mxu0 %v2440
      %v3150 = vpop.f32.mrf.mxu0
      %v3151 = vadd.f32 0.0, %v3150
      %v3152 = vpop.f32.mrf.mxu0
      %3153 = vmatprep.mubr.f32.mxu0 0.0
      %3154 = vmatmul.mubr.f32.gmra.mxu0 %v2443
      %v3155 = vpop.f32.mrf.mxu0
      %v3156 = vadd.f32 0.0, %v3155
      %v3157 = vpop.f32.mrf.mxu0
      %3158 = vmatprep.mubr.f32.mxu0 0.0
      %3159 = vmatmul.mubr.f32.gmra.mxu0 %v2446
      %v3160 = vpop.f32.mrf.mxu0
      %v3161 = vadd.f32 0.0, %v3160
      %v3162 = vpop.f32.mrf.mxu0
      %3163 = vmatprep.mubr.f32.mxu0 0.0
      %3164 = vmatmul.mubr.f32.gmra.mxu0 %v2449
      %v3165 = vpop.f32.mrf.mxu0
      %v3166 = vadd.f32 0.0, %v3165
      %v3167 = vpop.f32.mrf.mxu0
      %3168 = vmatprep.mubr.f32.mxu0 0.0
      %3169 = vmatmul.mubr.f32.gmra.mxu0 %v2452
      %v3170 = vpop.f32.mrf.mxu0
      %v3171 = vadd.f32 0.0, %v3170
      %v3172 = vpop.f32.mrf.mxu0
      %3173 = vmatprep.mubr.f32.mxu0 0.0
      %3174 = vmatmul.mubr.f32.gmra.mxu0 %v2455
      %v3175 = vpop.f32.mrf.mxu0
      %v3176 = vadd.f32 0.0, %v3175
      %v3177 = vpop.f32.mrf.mxu0
      %3178 = vmatprep.mubr.f32.mxu0 0.0
      %3179 = vmatmul.mubr.f32.gmra.mxu0 %v2458
      %v3180 = vpop.f32.mrf.mxu0
      %v3181 = vadd.f32 0.0, %v3180
      %v3182 = vpop.f32.mrf.mxu0
      %3183 = vmatprep.mubr.f32.mxu0 0.0
      %3184 = vmatmul.mubr.f32.gmra.mxu0 %v2461
      %v3185 = vpop.f32.mrf.mxu0
      %v3186 = vadd.f32 0.0, %v3185
      %v3187 = vpop.f32.mrf.mxu0
      %3188 = vmatprep.mubr.f32.mxu0 0.0
      %3189 = vmatmul.mubr.f32.gmra.mxu0 %v2464
      %v3190 = vpop.f32.mrf.mxu0
      %v3191 = vadd.f32 0.0, %v3190
      %v3192 = vpop.f32.mrf.mxu0
      %3193 = vmatprep.mubr.f32.mxu0 0.0
      %3194 = vmatmul.mubr.f32.gmra.mxu0 %v2467
      %v3195 = vpop.f32.mrf.mxu0
      %v3196 = vadd.f32 0.0, %v3195
      %v3197 = vpop.f32.mrf.mxu0
      %3198 = vmatprep.mubr.f32.mxu0 0.0
      %3199 = vmatmul.mubr.f32.gmra.mxu0 %v2470
      %v3200 = vpop.f32.mrf.mxu0
      %v3201 = vadd.f32 0.0, %v3200
      %v3202 = vpop.f32.mrf.mxu0
      %3203 = vmatprep.mubr.f32.mxu0 0.0
      %3204 = vmatmul.mubr.f32.gmra.mxu0 %v2473
      %v3205 = vpop.f32.mrf.mxu0
      %v3206 = vadd.f32 0.0, %v3205
      %v3207 = vpop.f32.mrf.mxu0
      %3208 = vmatprep.mubr.f32.mxu0 0.0
      %3209 = vmatmul.mubr.f32.gmra.mxu0 %v2476
      %v3210 = vpop.f32.mrf.mxu0
      %v3211 = vadd.f32 0.0, %v3210
      %v3212 = vpop.f32.mrf.mxu0
      %3213 = vmatprep.mubr.f32.mxu0 0.0
      %3214 = vmatmul.mubr.f32.gmra.mxu0 %v2479
      %v3215 = vpop.f32.mrf.mxu0
      %v3216 = vadd.f32 0.0, %v3215
      %v3217 = vpop.f32.mrf.mxu0
      %3218 = vmatprep.mubr.f32.mxu0 0.0
      %3219 = vmatmul.mubr.f32.gmra.mxu0 %v2482
      %v3220 = vpop.f32.mrf.mxu0
      %v3221 = vadd.f32 0.0, %v3220
      %v3222 = vpop.f32.mrf.mxu0
      %3223 = vmatprep.mubr.f32.mxu0 0.0
      %3224 = vmatmul.mubr.f32.gmra.mxu0 %v2485
      %v3225 = vpop.f32.mrf.mxu0
      %v3226 = vadd.f32 0.0, %v3225
      %v3227 = vpop.f32.mrf.mxu0
      %3228 = vmatprep.mubr.f32.mxu0 0.0
      %3229 = vmatmul.mubr.f32.gmra.mxu0 %v2749
      %v3230 = vpop.f32.mrf.mxu0
      %v3231 = vadd.f32 0.0, %v3230
      %v3232 = vpop.f32.mrf.mxu0
      %3233 = vmatprep.mubr.f32.mxu0 0.0
      %3234 = vmatmul.mubr.f32.gmra.mxu0 %v2752
      %v3235 = vpop.f32.mrf.mxu0
      %v3236 = vadd.f32 0.0, %v3235
      %v3237 = vpop.f32.mrf.mxu0
      %3238 = vmatprep.mubr.f32.mxu0 0.0
      %3239 = vmatmul.mubr.f32.gmra.mxu0 %v3016
      %v3240 = vpop.f32.mrf.mxu0
      %v3241 = vadd.f32 0.0, %v3240
      %v3242 = vpop.f32.mrf.mxu0
      %3243 = vmatprep.mubr.f32.mxu0 0.0
      %3244 = vmatmul.mubr.f32.gmra.mxu0 %v3019
      %v3245 = vpop.f32.mrf.mxu0
      %v3246 = vadd.f32 0.0, %v3245
      %v3247 = vpop.f32.mrf.mxu0
      %3248 = vdwg.mxu0
      %v3249 = vadd.f32 %v2982, %v3091
      %v3250 = vadd.f32 %v2983, %v3096
      %v3251 = vadd.f32 %v2984, %v3101
      %v3252 = vadd.f32 %v2985, %v3106
      %v3253 = vadd.f32 %v2986, %v3111
      %v3254 = vadd.f32 %v2987, %v3116
      %v3255 = vadd.f32 %v2988, %v3121
      %v3256 = vadd.f32 %v2989, %v3126
      %v3257 = vadd.f32 %v2990, %v3131
      %v3258 = vadd.f32 %v2991, %v3136
      %v3259 = vadd.f32 %v2992, %v3141
      %v3260 = vadd.f32 %v2993, %v3146
      %v3261 = vadd.f32 %v2994, %v3151
      %v3262 = vadd.f32 %v2995, %v3156
      %v3263 = vadd.f32 %v2996, %v3161
      %v3264 = vadd.f32 %v2997, %v3166
      %v3265 = vadd.f32 %v2998, %v3171
      %v3266 = vadd.f32 %v2999, %v3176
      %v3267 = vadd.f32 %v3000, %v3181
      %v3268 = vadd.f32 %v3001, %v3186
      %v3269 = vadd.f32 %v3002, %v3191
      %v3270 = vadd.f32 %v3003, %v3196
      %v3271 = vadd.f32 %v3004, %v3201
      %v3272 = vadd.f32 %v3005, %v3206
      %v3273 = vadd.f32 %v3006, %v3211
      %v3274 = vadd.f32 %v3007, %v3216
      %v3275 = vadd.f32 %v3008, %v3221
      %v3276 = vadd.f32 %v3009, %v3226
      %v3277 = vadd.f32 %v3010, %v3231
      %v3278 = vadd.f32 %v3011, %v3236
      %v3279 = vadd.f32 %v3012, %v3241
      %v3280 = vadd.f32 %v3013, %v3246
      %v3281 = vld [vmem:[%s4] sm:$0x1]
      %v3283 = vlaneseq
      %v3284 = vshrl.u32 %v3283, 7
      %v3285 = vsub.s32 0, %v3284
      %v3286 = vrot.slane %v3281, %v3285
      %v3288 = vadd.f32 %v3249, %v3286
      %v3289 = vadd.f32 %v3250, %v3286
      %v3290 = vadd.f32 %v3251, %v3286
      %v3291 = vadd.f32 %v3252, %v3286
      %v3292 = vadd.f32 %v3253, %v3286
      %v3293 = vadd.f32 %v3254, %v3286
      %v3294 = vadd.f32 %v3255, %v3286
      %v3295 = vadd.f32 %v3256, %v3286
      %v3296 = vadd.f32 %v3257, %v3286
      %v3297 = vadd.f32 %v3258, %v3286
      %v3298 = vadd.f32 %v3259, %v3286
      %v3299 = vadd.f32 %v3260, %v3286
      %v3300 = vadd.f32 %v3261, %v3286
      %v3301 = vadd.f32 %v3262, %v3286
      %v3302 = vadd.f32 %v3263, %v3286
      %v3303 = vadd.f32 %v3264, %v3286
      %v3304 = vadd.f32 %v3265, %v3286
      %v3305 = vadd.f32 %v3266, %v3286
      %v3306 = vadd.f32 %v3267, %v3286
      %v3307 = vadd.f32 %v3268, %v3286
      %v3308 = vadd.f32 %v3269, %v3286
      %v3309 = vadd.f32 %v3270, %v3286
      %v3310 = vadd.f32 %v3271, %v3286
      %v3311 = vadd.f32 %v3272, %v3286
      %v3312 = vadd.f32 %v3273, %v3286
      %v3313 = vadd.f32 %v3274, %v3286
      %v3314 = vadd.f32 %v3275, %v3286
      %v3315 = vadd.f32 %v3276, %v3286
      %v3316 = vadd.f32 %v3277, %v3286
      %v3317 = vadd.f32 %v3278, %v3286
      %v3318 = vadd.f32 %v3279, %v3286
      %v3319 = vadd.f32 %v3280, %v3286
      %v3320 = vmul.f32 %v3288, 0.5
      %v3321 = vmul.f32 %v3289, 0.5
      %v3322 = vmul.f32 %v3290, 0.5
      %v3323 = vmul.f32 %v3291, 0.5
      %v3324 = vmul.f32 %v3292, 0.5
      %v3325 = vmul.f32 %v3293, 0.5
      %v3326 = vmul.f32 %v3294, 0.5
      %v3327 = vmul.f32 %v3295, 0.5
      %v3328 = vmul.f32 %v3296, 0.5
      %v3329 = vmul.f32 %v3297, 0.5
      %v3330 = vmul.f32 %v3298, 0.5
      %v3331 = vmul.f32 %v3299, 0.5
      %v3332 = vmul.f32 %v3300, 0.5
      %v3333 = vmul.f32 %v3301, 0.5
      %v3334 = vmul.f32 %v3302, 0.5
      %v3335 = vmul.f32 %v3303, 0.5
      %v3336 = vmul.f32 %v3304, 0.5
      %v3337 = vmul.f32 %v3305, 0.5
      %v3338 = vmul.f32 %v3306, 0.5
      %v3339 = vmul.f32 %v3307, 0.5
      %v3340 = vmul.f32 %v3308, 0.5
      %v3341 = vmul.f32 %v3309, 0.5
      %v3342 = vmul.f32 %v3310, 0.5
      %v3343 = vmul.f32 %v3311, 0.5
      %v3344 = vmul.f32 %v3312, 0.5
      %v3345 = vmul.f32 %v3313, 0.5
      %v3346 = vmul.f32 %v3314, 0.5
      %v3347 = vmul.f32 %v3315, 0.5
      %v3348 = vmul.f32 %v3316, 0.5
      %v3349 = vmul.f32 %v3317, 0.5
      %v3350 = vmul.f32 %v3318, 0.5
      %v3351 = vmul.f32 %v3319, 0.5
      %v3352 = vmul.f32 %v3288, 0.70710677
      %v3353 = vmul.f32 %v3289, 0.70710677
      %v3354 = vmul.f32 %v3290, 0.70710677
      %v3355 = vmul.f32 %v3291, 0.70710677
      %v3356 = vmul.f32 %v3292, 0.70710677
      %v3357 = vmul.f32 %v3293, 0.70710677
      %v3358 = vmul.f32 %v3294, 0.70710677
      %v3359 = vmul.f32 %v3295, 0.70710677
      %v3360 = vmul.f32 %v3296, 0.70710677
      %v3361 = vmul.f32 %v3297, 0.70710677
      %v3362 = vmul.f32 %v3298, 0.70710677
      %v3363 = vmul.f32 %v3299, 0.70710677
      %v3364 = vmul.f32 %v3300, 0.70710677
      %v3365 = vmul.f32 %v3301, 0.70710677
      %v3366 = vmul.f32 %v3302, 0.70710677
      %v3367 = vmul.f32 %v3303, 0.70710677
      %v3368 = vmul.f32 %v3304, 0.70710677
      %v3369 = vmul.f32 %v3305, 0.70710677
      %v3370 = vmul.f32 %v3306, 0.70710677
      %v3371 = vmul.f32 %v3307, 0.70710677
      %v3372 = vmul.f32 %v3308, 0.70710677
      %v3373 = vmul.f32 %v3309, 0.70710677
      %v3374 = vmul.f32 %v3310, 0.70710677
      %v3375 = vmul.f32 %v3311, 0.70710677
      %v3376 = vmul.f32 %v3312, 0.70710677
      %v3377 = vmul.f32 %v3313, 0.70710677
      %v3378 = vmul.f32 %v3314, 0.70710677
      %v3379 = vmul.f32 %v3315, 0.70710677
      %v3380 = vmul.f32 %v3316, 0.70710677
      %v3381 = vmul.f32 %v3317, 0.70710677
      %v3382 = vmul.f32 %v3318, 0.70710677
      %v3383 = vmul.f32 %v3319, 0.70710677
      %v3384 = verf.f32.pop %v3352
      %v3385 = verf.f32.pop %v3353
      %v3386 = verf.f32.pop %v3354
      %v3387 = verf.f32.pop %v3355
      %v3388 = verf.f32.pop %v3356
      %v3389 = verf.f32.pop %v3357
      %v3390 = verf.f32.pop %v3358
      %v3391 = verf.f32.pop %v3359
      %v3392 = verf.f32.pop %v3360
      %v3393 = verf.f32.pop %v3361
      %v3394 = verf.f32.pop %v3362
      %v3395 = verf.f32.pop %v3363
      %v3396 = verf.f32.pop %v3364
      %v3397 = verf.f32.pop %v3365
      %v3398 = verf.f32.pop %v3366
      %v3399 = verf.f32.pop %v3367
      %v3400 = verf.f32.pop %v3368
      %v3401 = verf.f32.pop %v3369
      %v3402 = verf.f32.pop %v3370
      %v3403 = verf.f32.pop %v3371
      %v3404 = verf.f32.pop %v3372
      %v3405 = verf.f32.pop %v3373
      %v3406 = verf.f32.pop %v3374
      %v3407 = verf.f32.pop %v3375
      %v3408 = verf.f32.pop %v3376
      %v3409 = verf.f32.pop %v3377
      %v3410 = verf.f32.pop %v3378
      %v3411 = verf.f32.pop %v3379
      %v3412 = verf.f32.pop %v3380
      %v3413 = verf.f32.pop %v3381
      %v3414 = verf.f32.pop %v3382
      %v3415 = verf.f32.pop %v3383
      %v3416 = vadd.f32 %v3384, 1.0
      %v3417 = vadd.f32 %v3385, 1.0
      %v3418 = vadd.f32 %v3386, 1.0
      %v3419 = vadd.f32 %v3387, 1.0
      %v3420 = vadd.f32 %v3388, 1.0
      %v3421 = vadd.f32 %v3389, 1.0
      %v3422 = vadd.f32 %v3390, 1.0
      %v3423 = vadd.f32 %v3391, 1.0
      %v3424 = vadd.f32 %v3392, 1.0
      %v3425 = vadd.f32 %v3393, 1.0
      %v3426 = vadd.f32 %v3394, 1.0
      %v3427 = vadd.f32 %v3395, 1.0
      %v3428 = vadd.f32 %v3396, 1.0
      %v3429 = vadd.f32 %v3397, 1.0
      %v3430 = vadd.f32 %v3398, 1.0
      %v3431 = vadd.f32 %v3399, 1.0
      %v3432 = vadd.f32 %v3400, 1.0
      %v3433 = vadd.f32 %v3401, 1.0
      %v3434 = vadd.f32 %v3402, 1.0
      %v3435 = vadd.f32 %v3403, 1.0
      %v3436 = vadd.f32 %v3404, 1.0
      %v3437 = vadd.f32 %v3405, 1.0
      %v3438 = vadd.f32 %v3406, 1.0
      %v3439 = vadd.f32 %v3407, 1.0
      %v3440 = vadd.f32 %v3408, 1.0
      %v3441 = vadd.f32 %v3409, 1.0
      %v3442 = vadd.f32 %v3410, 1.0
      %v3443 = vadd.f32 %v3411, 1.0
      %v3444 = vadd.f32 %v3412, 1.0
      %v3445 = vadd.f32 %v3413, 1.0
      %v3446 = vadd.f32 %v3414, 1.0
      %v3447 = vadd.f32 %v3415, 1.0
      %v3448 = vmul.f32 %v3320, %v3416
      %v3449 = vmul.f32 %v3321, %v3417
      %v3450 = vmul.f32 %v3322, %v3418
      %v3451 = vmul.f32 %v3323, %v3419
      %v3452 = vmul.f32 %v3324, %v3420
      %v3453 = vmul.f32 %v3325, %v3421
      %v3454 = vmul.f32 %v3326, %v3422
      %v3455 = vmul.f32 %v3327, %v3423
      %v3456 = vmul.f32 %v3328, %v3424
      %v3457 = vmul.f32 %v3329, %v3425
      %v3458 = vmul.f32 %v3330, %v3426
      %v3459 = vmul.f32 %v3331, %v3427
      %v3460 = vmul.f32 %v3332, %v3428
      %v3461 = vmul.f32 %v3333, %v3429
      %v3462 = vmul.f32 %v3334, %v3430
      %v3463 = vmul.f32 %v3335, %v3431
      %v3464 = vmul.f32 %v3336, %v3432
      %v3465 = vmul.f32 %v3337, %v3433
      %v3466 = vmul.f32 %v3338, %v3434
      %v3467 = vmul.f32 %v3339, %v3435
      %v3468 = vmul.f32 %v3340, %v3436
      %v3469 = vmul.f32 %v3341, %v3437
      %v3470 = vmul.f32 %v3342, %v3438
      %v3471 = vmul.f32 %v3343, %v3439
      %v3472 = vmul.f32 %v3344, %v3440
      %v3473 = vmul.f32 %v3345, %v3441
      %v3474 = vmul.f32 %v3346, %v3442
      %v3475 = vmul.f32 %v3347, %v3443
      %v3476 = vmul.f32 %v3348, %v3444
      %v3477 = vmul.f32 %v3349, %v3445
      %v3478 = vmul.f32 %v3350, %v3446
      %v3479 = vmul.f32 %v3351, %v3447
      %vm3480 = vcmask 64512
      %3481 = vst.msk [vmem:[%s391] sm:$0xff] %vm3480, %v3448
      %3482 = vst.msk [vmem:[%s391 + $0x8] sm:$0xff] %vm3480, %v3449
      %3483 = vst.msk [vmem:[%s391 + $0x20] sm:$0xff] %vm3480, %v3450
      %3484 = vst.msk [vmem:[%s391 + $0x28] sm:$0xff] %vm3480, %v3451
      %3485 = vst.msk [vmem:[%s391 + $0x40] sm:$0xff] %vm3480, %v3452
      %3486 = vst.msk [vmem:[%s391 + $0x48] sm:$0xff] %vm3480, %v3453
      %3487 = vst.msk [vmem:[%s391 + $0x60] sm:$0xff] %vm3480, %v3454
      %3488 = vst.msk [vmem:[%s391 + $0x68] sm:$0xff] %vm3480, %v3455
      %3489 = vst.msk [vmem:[%s391 + $0x80] sm:$0xff] %vm3480, %v3456
      %3490 = vst.msk [vmem:[%s391 + $0x88] sm:$0xff] %vm3480, %v3457
      %3491 = vst.msk [vmem:[%s391 + $0xa0] sm:$0xff] %vm3480, %v3458
      %3492 = vst.msk [vmem:[%s391 + $0xa8] sm:$0xff] %vm3480, %v3459
      %3493 = vst.msk [vmem:[%s391 + $0xc0] sm:$0xff] %vm3480, %v3460
      %3494 = vst.msk [vmem:[%s391 + $0xc8] sm:$0xff] %vm3480, %v3461
      %3495 = vst.msk [vmem:[%s391 + $0xe0] sm:$0xff] %vm3480, %v3462
      %3496 = vst.msk [vmem:[%s391 + $0xe8] sm:$0xff] %vm3480, %v3463
      %3497 = vst.msk [vmem:[%s391 + $0x100] sm:$0xff] %vm3480, %v3464
      %3498 = vst.msk [vmem:[%s391 + $0x108] sm:$0xff] %vm3480, %v3465
      %3499 = vst.msk [vmem:[%s391 + $0x120] sm:$0xff] %vm3480, %v3466
      %3500 = vst.msk [vmem:[%s391 + $0x128] sm:$0xff] %vm3480, %v3467
      %3501 = vst.msk [vmem:[%s391 + $0x140] sm:$0xff] %vm3480, %v3468
      %3502 = vst.msk [vmem:[%s391 + $0x148] sm:$0xff] %vm3480, %v3469
      %3503 = vst.msk [vmem:[%s391 + $0x160] sm:$0xff] %vm3480, %v3470
      %3504 = vst.msk [vmem:[%s391 + $0x168] sm:$0xff] %vm3480, %v3471
      %3505 = vst.msk [vmem:[%s391 + $0x180] sm:$0xff] %vm3480, %v3472
      %3506 = vst.msk [vmem:[%s391 + $0x188] sm:$0xff] %vm3480, %v3473
      %3507 = vst.msk [vmem:[%s391 + $0x1a0] sm:$0xff] %vm3480, %v3474
      %3508 = vst.msk [vmem:[%s391 + $0x1a8] sm:$0xff] %vm3480, %v3475
      %3509 = vst.msk [vmem:[%s391 + $0x1c0] sm:$0xff] %vm3480, %v3476
      %3510 = vst.msk [vmem:[%s391 + $0x1c8] sm:$0xff] %vm3480, %v3477
      %3511 = vst.msk [vmem:[%s391 + $0x1e0] sm:$0xff] %vm3480, %v3478
      %3512 = vst.msk [vmem:[%s391 + $0x1e8] sm:$0xff] %vm3480, %v3479
      %3545 = vrot.lane.b32.xlu0 %v3448, 120
      %v3546 = vpop.permute.xlu0 %3545
      %3547 = vrot.lane.b32.xlu0 %v3449, 120
      %v3548 = vpop.permute.xlu0 %3547
      %3549 = vrot.lane.b32.xlu0 %v3450, 120
      %v3550 = vpop.permute.xlu0 %3549
      %3551 = vrot.lane.b32.xlu0 %v3451, 120
      %v3552 = vpop.permute.xlu0 %3551
      %3553 = vrot.lane.b32.xlu0 %v3452, 120
      %v3554 = vpop.permute.xlu0 %3553
      %3555 = vrot.lane.b32.xlu0 %v3453, 120
      %v3556 = vpop.permute.xlu0 %3555
      %3557 = vrot.lane.b32.xlu0 %v3454, 120
      %v3558 = vpop.permute.xlu0 %3557
      %3559 = vrot.lane.b32.xlu0 %v3455, 120
      %v3560 = vpop.permute.xlu0 %3559
      %3561 = vrot.lane.b32.xlu0 %v3456, 120
      %v3562 = vpop.permute.xlu0 %3561
      %3563 = vrot.lane.b32.xlu0 %v3457, 120
      %v3564 = vpop.permute.xlu0 %3563
      %3565 = vrot.lane.b32.xlu0 %v3458, 120
      %v3566 = vpop.permute.xlu0 %3565
      %3567 = vrot.lane.b32.xlu0 %v3459, 120
      %v3568 = vpop.permute.xlu0 %3567
      %3569 = vrot.lane.b32.xlu0 %v3460, 120
      %v3570 = vpop.permute.xlu0 %3569
      %3571 = vrot.lane.b32.xlu0 %v3461, 120
      %v3572 = vpop.permute.xlu0 %3571
      %3573 = vrot.lane.b32.xlu0 %v3462, 120
      %v3574 = vpop.permute.xlu0 %3573
      %3575 = vrot.lane.b32.xlu0 %v3463, 120
      %v3576 = vpop.permute.xlu0 %3575
      %3577 = vrot.lane.b32.xlu0 %v3464, 120
      %v3578 = vpop.permute.xlu0 %3577
      %3579 = vrot.lane.b32.xlu0 %v3465, 120
      %v3580 = vpop.permute.xlu0 %3579
      %3581 = vrot.lane.b32.xlu0 %v3466, 120
      %v3582 = vpop.permute.xlu0 %3581
      %3583 = vrot.lane.b32.xlu0 %v3467, 120
      %v3584 = vpop.permute.xlu0 %3583
      %3585 = vrot.lane.b32.xlu0 %v3468, 120
      %v3586 = vpop.permute.xlu0 %3585
      %3587 = vrot.lane.b32.xlu0 %v3469, 120
      %v3588 = vpop.permute.xlu0 %3587
      %3589 = vrot.lane.b32.xlu0 %v3470, 120
      %v3590 = vpop.permute.xlu0 %3589
      %3591 = vrot.lane.b32.xlu0 %v3471, 120
      %v3592 = vpop.permute.xlu0 %3591
      %3593 = vrot.lane.b32.xlu0 %v3472, 120
      %v3594 = vpop.permute.xlu0 %3593
      %3595 = vrot.lane.b32.xlu0 %v3473, 120
      %v3596 = vpop.permute.xlu0 %3595
      %3597 = vrot.lane.b32.xlu0 %v3474, 120
      %v3598 = vpop.permute.xlu0 %3597
      %3599 = vrot.lane.b32.xlu0 %v3475, 120
      %v3600 = vpop.permute.xlu0 %3599
      %3601 = vrot.lane.b32.xlu0 %v3476, 120
      %v3602 = vpop.permute.xlu0 %3601
      %3603 = vrot.lane.b32.xlu0 %v3477, 120
      %v3604 = vpop.permute.xlu0 %3603
      %3605 = vrot.lane.b32.xlu0 %v3478, 120
      %v3606 = vpop.permute.xlu0 %3605
      %3607 = vrot.lane.b32.xlu0 %v3479, 120
      %v3608 = vpop.permute.xlu0 %3607
      %s3641 = scalar_lea.vmem %s391, 16
      %3642 = vst.msk [vmem:[%s3641] sm:$0xff] %vm3480, %v3546
      %3643 = vst.msk [vmem:[%s3641 + $0x8] sm:$0xff] %vm3480, %v3548
      %3644 = vst.msk [vmem:[%s3641 + $0x20] sm:$0xff] %vm3480, %v3550
      %3645 = vst.msk [vmem:[%s3641 + $0x28] sm:$0xff] %vm3480, %v3552
      %3646 = vst.msk [vmem:[%s3641 + $0x40] sm:$0xff] %vm3480, %v3554
      %3647 = vst.msk [vmem:[%s3641 + $0x48] sm:$0xff] %vm3480, %v3556
      %3648 = vst.msk [vmem:[%s3641 + $0x60] sm:$0xff] %vm3480, %v3558
      %3649 = vst.msk [vmem:[%s3641 + $0x68] sm:$0xff] %vm3480, %v3560
      %3650 = vst.msk [vmem:[%s3641 + $0x80] sm:$0xff] %vm3480, %v3562
      %3651 = vst.msk [vmem:[%s3641 + $0x88] sm:$0xff] %vm3480, %v3564
      %3652 = vst.msk [vmem:[%s3641 + $0xa0] sm:$0xff] %vm3480, %v3566
      %3653 = vst.msk [vmem:[%s3641 + $0xa8] sm:$0xff] %vm3480, %v3568
      %3654 = vst.msk [vmem:[%s3641 + $0xc0] sm:$0xff] %vm3480, %v3570
      %3655 = vst.msk [vmem:[%s3641 + $0xc8] sm:$0xff] %vm3480, %v3572
      %3656 = vst.msk [vmem:[%s3641 + $0xe0] sm:$0xff] %vm3480, %v3574
      %3657 = vst.msk [vmem:[%s3641 + $0xe8] sm:$0xff] %vm3480, %v3576
      %3658 = vst.msk [vmem:[%s3641 + $0x100] sm:$0xff] %vm3480, %v3578
      %3659 = vst.msk [vmem:[%s3641 + $0x108] sm:$0xff] %vm3480, %v3580
      %3660 = vst.msk [vmem:[%s3641 + $0x120] sm:$0xff] %vm3480, %v3582
      %3661 = vst.msk [vmem:[%s3641 + $0x128] sm:$0xff] %vm3480, %v3584
      %3662 = vst.msk [vmem:[%s3641 + $0x140] sm:$0xff] %vm3480, %v3586
      %3663 = vst.msk [vmem:[%s3641 + $0x148] sm:$0xff] %vm3480, %v3588
      %3664 = vst.msk [vmem:[%s3641 + $0x160] sm:$0xff] %vm3480, %v3590
      %3665 = vst.msk [vmem:[%s3641 + $0x168] sm:$0xff] %vm3480, %v3592
      %3666 = vst.msk [vmem:[%s3641 + $0x180] sm:$0xff] %vm3480, %v3594
      %3667 = vst.msk [vmem:[%s3641 + $0x188] sm:$0xff] %vm3480, %v3596
      %3668 = vst.msk [vmem:[%s3641 + $0x1a0] sm:$0xff] %vm3480, %v3598
      %3669 = vst.msk [vmem:[%s3641 + $0x1a8] sm:$0xff] %vm3480, %v3600
      %3670 = vst.msk [vmem:[%s3641 + $0x1c0] sm:$0xff] %vm3480, %v3602
      %3671 = vst.msk [vmem:[%s3641 + $0x1c8] sm:$0xff] %vm3480, %v3604
      %3672 = vst.msk [vmem:[%s3641 + $0x1e0] sm:$0xff] %vm3480, %v3606
      %3673 = vst.msk [vmem:[%s3641 + $0x1e8] sm:$0xff] %vm3480, %v3608
      %s3674 = smul.u32 16, %s21
      %p3675 = scmp.lt.s32.totalorder %s20, 1
      %s3676 = scalar_select %p3675, %s20, 1
      %p3677 = scmp.lt.s32.totalorder %s3674, 15
      %s3678 = scalar_select %p3677, %s3674, 15
      %s3679 = smul.addr %s3678, 4
      %s3680 = smul.addr %s3676, 64
      %s3681 = sadd.s32 %s3679, %s3680
      %s3682 = smul.addr %s3681, 8
      %s3683 = scalar_lea.vmem %s5, %s3682
      // Predicated region
      $region41: #{tpu_custom_call.1} parent=39 // pred_check
        %p3684 = pneg %p190
      $region42: #{tpu_custom_call.1} parent=39 // pred_check_branch
        %3686 = sbr.rel (%p3684) target = $region44
      $region43: #{tpu_custom_call.1} parent=39 // pred_region
        %s3687 = smul.u32 16, %s21
      $region44: #{tpu_custom_call.1} parent=39 // pred_fallthru
        _
    $region40: #{tpu_custom_call.1} parent=5 // pred_fallthru
      _
    %p3688 = scmp.le.s32.totalorder 2, %s11
    // Predicated region
    $region45: #{tpu_custom_call.1} parent=5 // pred_check
      %p3689 = pneg %p3688
    $region46: #{tpu_custom_call.1} parent=5 // pred_check_branch
      %3691 = sbr.rel (%p3689) target = $region48
    $region47: #{tpu_custom_call.1} parent=5 // pred_region
      %s3692 = ssub.s32 %s11, 2
      // Predicated region
      $region49: #{tpu_custom_call.1} parent=47 // pred_check
        %p3693 = pneg %p196
      $region50: #{tpu_custom_call.1} parent=47 // pred_check_branch
        %3695 = sbr.rel (%p3693) target = $region52
      $region51: #{tpu_custom_call.1} parent=47 // pred_region
        %s3696 = smul.u32 16, %s23
        %p3697 = scmp.lt.s32.totalorder %s22, 1
        %s3698 = scalar_select %p3697, %s22, 1
        %p3699 = scmp.lt.s32.totalorder %s3696, 15
        %s3700 = scalar_select %p3699, %s3696, 15
        %s3701 = smul.addr %s3700, 4
        %s3702 = smul.addr %s3698, 64
        %s3703 = sadd.s32 %s3701, %s3702
        %s3704 = smul.addr %s3703, 8
        %s3705 = scalar_lea.vmem %s5, %s3704
      $region52: #{tpu_custom_call.1} parent=47 // pred_fallthru
        _
    $region48: #{tpu_custom_call.1} parent=5 // pred_fallthru
      _
  $region6: #{tpu_custom_call.1} parent=0 // loop_footer
    %s15 = sadd.s32 1, %s11
  $region7: #{tpu_custom_call.1} parent=0 // loop_footer_branch
    %10 = sbr.rel target = $region3
  $region8: #{tpu_custom_call.1} parent=0 // loop_exit
    _

</llo_original>
